<compile_context>
chip_gen: v5e
topology: v5e:2x2
jax: 0.10.0
libtpu: 0.0.40
codegen_flags: <defaults>
</compile_context>

<pallas_src>
import functools

import jax
import jax.numpy as jnp
from jax.experimental import pallas as pl
from jax.experimental.pallas import tpu as pltpu

# ---------------- model hyper-parameters (from the module __init__) -----------------
IMAGE_SIZE = 56
PATCH_SIZE = 28
CHANNELS = 1
DIM = 224
DEPTH = 6
HEADS = 8
DIM_HEAD = 28
MLP_DIM = 2048
NUM_CLASSES = 42
NUM_PATCHES = (IMAGE_SIZE // PATCH_SIZE) ** 2          # 4
PATCH_DIM = CHANNELS * PATCH_SIZE * PATCH_SIZE         # 784
SEQ = NUM_PATCHES + 1                                  # 5 real tokens (cls + patches)
SEQ_PAD = 8                                            # padded to one full sublane tile
LN_EPS = 1e-5
ATTN_SCALE = DIM_HEAD ** -0.5

# rows of the packed per-layer "vec" slab (each row is DIM wide)
ROW_LN1_G, ROW_LN1_B, ROW_LN2_G, ROW_LN2_B, ROW_ATTN_B, ROW_FF_B, ROW_W2_SCALE, _ROW_PAD = range(8)


def _layer_norm(x, gamma, beta):
    mu = jnp.mean(x, axis=-1, keepdims=True)
    var = jnp.mean(jnp.square(x - mu), axis=-1, keepdims=True)
    return (x - mu) * jax.lax.rsqrt(var + LN_EPS) * gamma + beta


# ---------------- fused Pallas kernel ------------------------------------------------
def _jem_kernel(tokens_ref, patch_w_ref, init_ref,
                head_ln_ref, head_w_ref, head_b_ref,
                vec_ref, wq_ref, wk_ref, wv_ref, wo_ref,
                w1q_ref, mlp_vec_ref, w2q_ref,
                logits_ref, lse_ref, z_ref, *, batch):
    """Grid axis = transformer depth.  z_ref: padded residual stream (batch*SEQ_PAD, DIM)."""
    layer = pl.program_id(0)
    rows = batch * SEQ_PAD

    # ----- grid step 0: patch embedding + cls token + positional embedding (aligned) -----
    # tokens: rows b*8+1..b*8+4 hold the patches, the other rows are zero.
    # init  : row b*8 holds cls+pos[0], rows 1..4 hold pos+patch_bias, pad rows are zero.
    @pl.when(layer == 0)
    def _embed():
        z_ref[...] = jnp.dot(tokens_ref[...], patch_w_ref[...],
                             preferred_element_type=jnp.float32) + init_ref[...]

    z = z_ref[...]                                     # (batch*SEQ_PAD, DIM) f32 residual

    # ----- PreNorm multi-head self-attention + residual (fully batched) -----
    xa = _layer_norm(z, vec_ref[ROW_LN1_G:ROW_LN1_G + 1, :],
                     vec_ref[ROW_LN1_B:ROW_LN1_B + 1, :]).astype(jnp.bfloat16)
    q = jnp.dot(xa, wq_ref[...], preferred_element_type=jnp.float32)
    k = jnp.dot(xa, wk_ref[...], preferred_element_type=jnp.float32)
    v = jnp.dot(xa, wv_ref[...], preferred_element_type=jnp.float32)

    def split_heads(t):            # 'b n (h d) -> (b h) n d'
        t = t.reshape(batch, SEQ_PAD, HEADS, DIM_HEAD).transpose(0, 2, 1, 3)
        return t.reshape(batch * HEADS, SEQ_PAD, DIM_HEAD).astype(jnp.bfloat16)

    qh, kh, vh = split_heads(q), split_heads(k), split_heads(v)

    s = jnp.einsum('bqd,bkd->bqk', qh, kh,
                   preferred_element_type=jnp.float32) * ATTN_SCALE      # (B*H, 8, 8)
    key_idx = jax.lax.broadcasted_iota(jnp.int32, s.shape, 2)
    s = jnp.where(key_idx < SEQ, s, -1e30)             # mask padded key positions
    s = s - jnp.max(s, axis=-1, keepdims=True)
    p = jnp.exp(s)
    p = p / jnp.sum(p, axis=-1, keepdims=True)
    o = jnp.einsum('bqk,bkd->bqd', p.astype(jnp.bfloat16), vh,
                   preferred_element_type=jnp.float32)                    # (B*H, 8, 28)

    attn = (o.reshape(batch, HEADS, SEQ_PAD, DIM_HEAD)                    # '(b h) n d -> b n (h d)'
             .transpose(0, 2, 1, 3)
             .reshape(rows, DIM)).astype(jnp.bfloat16)
    z = z + jnp.dot(attn, wo_ref[...], preferred_element_type=jnp.float32) \
          + vec_ref[ROW_ATTN_B:ROW_ATTN_B + 1, :]

    # ----- PreNorm MLP (GELU); w1/w2 stored int8, per-column scale folded after the dot -----
    xm = _layer_norm(z, vec_ref[ROW_LN2_G:ROW_LN2_G + 1, :],
                     vec_ref[ROW_LN2_B:ROW_LN2_B + 1, :]).astype(jnp.bfloat16)
    hid = jnp.dot(xm, w1q_ref[...].astype(jnp.bfloat16),
                  preferred_element_type=jnp.float32)
    hid = hid * mlp_vec_ref[0:1, :] + mlp_vec_ref[1:2, :]                 # scale1, b1
    # TODO(synk): PyTorch nn.GELU() is the exact erf GELU; tanh approximation used (~1e-3 close).
    hid = jax.nn.gelu(hid, approximate=True).astype(jnp.bfloat16)
    ff = jnp.dot(hid, w2q_ref[...].astype(jnp.bfloat16),
                 preferred_element_type=jnp.float32)
    z = z + ff * vec_ref[ROW_W2_SCALE:ROW_W2_SCALE + 1, :] \
          + vec_ref[ROW_FF_B:ROW_FF_B + 1, :]
    z_ref[...] = z

    # ----- last grid step: CLS latent -> mlp_head (LN + Linear) -> logits & logsumexp -----
    @pl.when(layer == DEPTH - 1)
    def _head():
        latent = z.reshape(batch, SEQ_PAD, DIM)[:, 0, :]                  # stride-8 CLS rows
        xh = _layer_norm(latent, head_ln_ref[0:1, :], head_ln_ref[1:2, :])
        logits = jnp.dot(xh, head_w_ref[...],
                         preferred_element_type=jnp.float32) + head_b_ref[...]
        logits_ref[...] = logits
        m = jnp.max(logits, axis=-1, keepdims=True)
        lse_ref[...] = m + jnp.log(jnp.sum(jnp.exp(logits - m), axis=-1, keepdims=True))


# ---------------- pallas_call wrapper -------------------------------------------------
def jem_fused(params, tokens, init_full, batch):
    kernel = functools.partial(_jem_kernel, batch=batch)

    def const_spec(a):                                   # fetched once, stays VMEM-resident
        return pl.BlockSpec(a.shape, lambda l: (0, 0))

    def layer_spec(a):                                   # per-layer slab, depth dim squeezed
        return pl.BlockSpec((None,) + a.shape[1:], lambda l: (l, 0, 0))

    in_specs = [
        const_spec(tokens), const_spec(params["patch_w"]), const_spec(init_full),
        const_spec(params["head_ln"]), const_spec(params["head_w"]), const_spec(params["head_b"]),
        layer_spec(params["vec"]), layer_spec(params["wq"]), layer_spec(params["wk"]),
        layer_spec(params["wv"]), layer_spec(params["wo"]),
        layer_spec(params["w1q"]), layer_spec(params["mlp_vec"]), layer_spec(params["w2q"]),
    ]
    out_specs = (
        pl.BlockSpec((batch, NUM_CLASSES), lambda l: (0, 0)),
        pl.BlockSpec((batch, 1), lambda l: (0, 0)),
    )
    return pl.pallas_call(
        kernel,
        out_shape=(jax.ShapeDtypeStruct((batch, NUM_CLASSES), jnp.float32),
                   jax.ShapeDtypeStruct((batch, 1), jnp.float32)),
        grid_spec=pltpu.PrefetchScalarGridSpec(
            num_scalar_prefetch=0,
            grid=(DEPTH,),
            in_specs=in_specs,
            out_specs=out_specs,
            scratch_shapes=[pltpu.VMEM((batch * SEQ_PAD, DIM), jnp.float32)]),
        compiler_params=pltpu.CompilerParams(
            dimension_semantics=("arbitrary",),          # depth is a sequential carry
            vmem_limit_bytes=32 * 1024 * 1024),          # ~6 MB used; safe on v5e/v6e/v7x
    )(tokens, params["patch_w"], init_full,
      params["head_ln"], params["head_w"], params["head_b"],
      params["vec"], params["wq"], params["wk"], params["wv"], params["wo"],
      params["w1q"], params["mlp_vec"], params["w2q"])


# ---------------- plain-JAX glue ------------------------------------------------------
def patchify(x):
    """'b c (h p1) (w p2) -> b (h w) (p1 p2 c)'  (lucidrains patch rearrange)."""
    b, c, h, w = x.shape
    p = PATCH_SIZE
    x = x.reshape(b, c, h // p, p, w // p, p)
    x = x.transpose(0, 2, 4, 3, 5, 1)                    # b hp wp p1 p2 c
    return x.reshape(b, (h // p) * (w // p), p * p * c)


def _quantize_cols(w):
    """Symmetric per-output-column int8 quantization of a (DEPTH, in, out) stack."""
    amax = jnp.max(jnp.abs(w), axis=1, keepdims=True)
    scale = jnp.maximum(amax, 1e-8) / 127.0
    q = jnp.clip(jnp.round(w / scale), -127.0, 127.0).astype(jnp.int8)
    return q, scale[:, 0, :]                             # (DEPTH, out)


def init_params(key):
    keys = jax.random.split(key, 12)

    def nrm(k, shape, scale=0.02):
        return scale * jax.random.normal(k, shape, jnp.float32)

    cls = nrm(keys[0], (DIM,))
    pos = nrm(keys[1], (SEQ, DIM))
    patch_w = nrm(keys[2], (PATCH_DIM, DIM))
    patch_b = jnp.zeros((DIM,), jnp.float32)

    # per-image init slab in the padded layout: row0 = cls+pos0, rows1..4 = pos+patch_bias
    init_row = jnp.zeros((SEQ_PAD, DIM), jnp.float32)
    init_row = init_row.at[0].set(cls + pos[0])
    init_row = init_row.at[1:SEQ].set(pos[1:] + patch_b)

    wq = nrm(keys[3], (DEPTH, DIM, DIM))
    wk = nrm(keys[4], (DEPTH, DIM, DIM))
    wv = nrm(keys[5], (DEPTH, DIM, DIM))
    wo = nrm(keys[6], (DEPTH, DIM, DIM))
    w1 = nrm(keys[7], (DEPTH, DIM, MLP_DIM))
    w2 = nrm(keys[8], (DEPTH, MLP_DIM, DIM))
    b1 = jnp.zeros((DEPTH, MLP_DIM), jnp.float32)

    w1q, s1 = _quantize_cols(w1)                         # int8 + (DEPTH, MLP_DIM) scale
    w2q, s2 = _quantize_cols(w2)                         # int8 + (DEPTH, DIM) scale

    # packed per-layer vectors: [ln1_g, ln1_b, ln2_g, ln2_b, attn_out_b, ff_out_b, w2_scale, pad]
    vec = jnp.zeros((DEPTH, 8, DIM), jnp.float32)
    vec = vec.at[:, ROW_LN1_G, :].set(1.0).at[:, ROW_LN2_G, :].set(1.0)
    vec = vec.at[:, ROW_W2_SCALE, :].set(s2)

    mlp_vec = jnp.stack([s1, b1], axis=1)                # (DEPTH, 2, MLP_DIM): [w1_scale, b1]

    return {
        "patch_w": patch_w.astype(jnp.bfloat16),
        "init_row": init_row,
        "head_ln": jnp.concatenate([jnp.ones((1, DIM), jnp.float32),
                                    jnp.zeros((1, DIM), jnp.float32)], axis=0),
        "head_w": nrm(keys[9], (DIM, NUM_CLASSES)),      # tiny -> keep f32
        "head_b": jnp.zeros((1, NUM_CLASSES), jnp.float32),
        "vec": vec,
        "wq": wq.astype(jnp.bfloat16), "wk": wk.astype(jnp.bfloat16),    # qkv has no bias
        "wv": wv.astype(jnp.bfloat16), "wo": wo.astype(jnp.bfloat16),
        "w1q": w1q, "mlp_vec": mlp_vec, "w2q": w2q,
    }


def conditional_jem_forward(params, x, y=None):
    """Conditional_JEM.forward: logits = classify(x); logsumexp(-1) or gather(y)."""
    batch = x.shape[0]
    patches = patchify(x).astype(jnp.bfloat16)                           # (B, 4, 784)
    tokens = jnp.zeros((batch, SEQ_PAD, PATCH_DIM), jnp.bfloat16)        # padded token layout
    tokens = tokens.at[:, 1:SEQ, :].set(patches)
    tokens = tokens.reshape(batch * SEQ_PAD, PATCH_DIM)
    init_full = jnp.tile(params["init_row"], (batch, 1))                 # (B*8, DIM)

    logits, lse = jem_fused(params, tokens, init_full, batch)
    if y is not None:
        return jnp.take_along_axis(logits, y[:, None], axis=1)           # torch.gather
    return lse[:, 0]                                                     # (B,)


if __name__ == "__main__":
    key = jax.random.PRNGKey(0)
    pkey, xkey, ykey = jax.random.split(key, 3)
    params = init_params(pkey)
    # NCHW input consistent with the ViT config (channels=1, image_size=56)
    x = jax.random.normal(xkey, (2, CHANNELS, IMAGE_SIZE, IMAGE_SIZE), jnp.float32)

    out = jax.block_until_ready(conditional_jem_forward(params, x))      # logsumexp path
    assert out.shape == (2,), out.shape
    assert bool(jnp.all(jnp.isfinite(out)))

    y = jax.random.randint(ykey, (2,), 0, NUM_CLASSES)
    gathered = jax.block_until_ready(conditional_jem_forward(params, x, y))
    assert gathered.shape == (2, 1), gathered.shape
    assert bool(jnp.all(jnp.isfinite(gathered)))
    print("KERNEL_OK")
</pallas_src>

<mosaic_0001>
module attributes {stable_mosaic.version = 11 : i64} {
  func.func @_jem_kernel(%arg0: i32, %arg1: memref<16x784xbf16, #tpu.memory_space<vmem>>, %arg2: memref<784x224xbf16, #tpu.memory_space<vmem>>, %arg3: memref<16x224xf32, #tpu.memory_space<vmem>>, %arg4: memref<2x224xf32, #tpu.memory_space<vmem>>, %arg5: memref<224x42xf32, #tpu.memory_space<vmem>>, %arg6: memref<1x42xf32, #tpu.memory_space<vmem>>, %arg7: memref<1x8x224xf32, #tpu.memory_space<vmem>>, %arg8: memref<1x224x224xbf16, #tpu.memory_space<vmem>>, %arg9: memref<1x224x224xbf16, #tpu.memory_space<vmem>>, %arg10: memref<1x224x224xbf16, #tpu.memory_space<vmem>>, %arg11: memref<1x224x224xbf16, #tpu.memory_space<vmem>>, %arg12: memref<1x224x2048xi8, #tpu.memory_space<vmem>>, %arg13: memref<1x2x2048xf32, #tpu.memory_space<vmem>>, %arg14: memref<1x2048x224xi8, #tpu.memory_space<vmem>>, %arg15: memref<2x42xf32, #tpu.memory_space<vmem>>, %arg16: memref<2x1xf32, #tpu.memory_space<vmem>>, %arg17: memref<16x224xf32, #tpu.memory_space<vmem>>) attributes {dimension_semantics = [#tpu.dimension_semantics<arbitrary>], iteration_bounds = array<i64: 6>, scalar_prefetch = 0 : i64, scratch_operands = 1 : i64, tpu.core_type = #tpu.core_type<tc>, window_params = [{pipeline_mode = #tpu.pipeline_mode<synchronous>, transform_indices = @transform_0, window_bounds = array<i64: 16, 784>}, {pipeline_mode = #tpu.pipeline_mode<synchronous>, transform_indices = @transform_1, window_bounds = array<i64: 784, 224>}, {pipeline_mode = #tpu.pipeline_mode<synchronous>, transform_indices = @transform_2, window_bounds = array<i64: 16, 224>}, {pipeline_mode = #tpu.pipeline_mode<synchronous>, transform_indices = @transform_3, window_bounds = array<i64: 2, 224>}, {pipeline_mode = #tpu.pipeline_mode<synchronous>, transform_indices = @transform_4, window_bounds = array<i64: 224, 42>}, {pipeline_mode = #tpu.pipeline_mode<synchronous>, transform_indices = @transform_5, window_bounds = array<i64: 1, 42>}, {transform_indices = @transform_6, window_bounds = array<i64: 1, 8, 224>}, {transform_indices = @transform_7, window_bounds = array<i64: 1, 224, 224>}, {transform_indices = @transform_8, window_bounds = array<i64: 1, 224, 224>}, {transform_indices = @transform_9, window_bounds = array<i64: 1, 224, 224>}, {transform_indices = @transform_10, window_bounds = array<i64: 1, 224, 224>}, {transform_indices = @transform_11, window_bounds = array<i64: 1, 224, 2048>}, {transform_indices = @transform_12, window_bounds = array<i64: 1, 2, 2048>}, {transform_indices = @transform_13, window_bounds = array<i64: 1, 2048, 224>}, {pipeline_mode = #tpu.pipeline_mode<synchronous>, transform_indices = @transform_14, window_bounds = array<i64: 2, 42>}, {pipeline_mode = #tpu.pipeline_mode<synchronous>, transform_indices = @transform_15, window_bounds = array<i64: 2, 1>}]} {
    %c0_i32 = arith.constant 0 : i32
    %0 = arith.cmpi eq, %arg0, %c0_i32 : i32
    %1 = arith.extui %0 : i1 to i32
    %c0_i32_0 = arith.constant 0 : i32
    %2 = arith.cmpi ne, %1, %c0_i32_0 : i32
    scf.if %2 {
      %c0_70 = arith.constant 0 : index
      %c0_71 = arith.constant 0 : index
      %153 = vector.load %arg1[%c0_70, %c0_71] : memref<16x784xbf16, #tpu.memory_space<vmem>>, vector<16x784xbf16>
      %c0_72 = arith.constant 0 : index
      %c0_73 = arith.constant 0 : index
      %154 = vector.load %arg2[%c0_72, %c0_73] : memref<784x224xbf16, #tpu.memory_space<vmem>>, vector<784x224xbf16>
      %cst_74 = arith.constant dense<0.000000e+00> : vector<16x224xf32>
      %155 = tpu.matmul %153, %154, %cst_74 {dimension_numbers = #tpu.dot_dimension_numbers<[1], [0], [0], [1], [0, 0, 1, 1], [], []>} : vector<16x784xbf16>, vector<784x224xbf16>, vector<16x224xf32> -> vector<16x224xf32>
      %c0_75 = arith.constant 0 : index
      %c0_76 = arith.constant 0 : index
      %156 = vector.load %arg3[%c0_75, %c0_76] : memref<16x224xf32, #tpu.memory_space<vmem>>, vector<16x224xf32>
      %157 = arith.addf %155, %156 : vector<16x224xf32>
      %c0_77 = arith.constant 0 : index
      %c0_78 = arith.constant 0 : index
      %158 = vector.load %arg17[%c0_77, %c0_78] : memref<16x224xf32, #tpu.memory_space<vmem>>, vector<16x224xf32>
      tpu.vector_store %arg17[%c0_77, %c0_78], %157 {strides = array<i32>} : memref<16x224xf32, #tpu.memory_space<vmem>>, vector<16x224xf32>,
    } else {
    }
    %c0 = arith.constant 0 : index
    %c0_1 = arith.constant 0 : index
    %3 = vector.load %arg17[%c0, %c0_1] : memref<16x224xf32, #tpu.memory_space<vmem>>, vector<16x224xf32>
    %c0_2 = arith.constant 0 : index
    %c0_3 = arith.constant 0 : index
    %c0_4 = arith.constant 0 : index
    %4 = vector.load %arg7[%c0_2, %c0_3, %c0_4] : memref<1x8x224xf32, #tpu.memory_space<vmem>>, vector<1x1x224xf32>
    %5 = vector.shape_cast %4 : vector<1x1x224xf32> to vector<1x224xf32>
    %c0_5 = arith.constant 0 : index
    %c1 = arith.constant 1 : index
    %c0_6 = arith.constant 0 : index
    %6 = vector.load %arg7[%c0_5, %c1, %c0_6] : memref<1x8x224xf32, #tpu.memory_space<vmem>>, vector<1x1x224xf32>
    %7 = vector.shape_cast %6 : vector<1x1x224xf32> to vector<1x224xf32>
    %cst = arith.constant dense<0.000000e+00> : vector<16xf32>
    %8 = vector.multi_reduction <add>, %3, %cst [1] : vector<16x224xf32> to vector<16xf32>
    %9 = vector.shape_cast %8 : vector<16xf32> to vector<16x1xf32>
    %cst_7 = arith.constant 2.240000e+02 : f32
    %10 = vector.broadcast %cst_7 : f32 to vector<16x1xf32>
    %11 = arith.divf %9, %10 : vector<16x1xf32>
    %12 = vector.broadcast %11 : vector<16x1xf32> to vector<16x224xf32>
    %13 = arith.subf %3, %12 : vector<16x224xf32>
    %14 = arith.mulf %13, %13 : vector<16x224xf32>
    %cst_8 = arith.constant dense<0.000000e+00> : vector<16xf32>
    %15 = vector.multi_reduction <add>, %14, %cst_8 [1] : vector<16x224xf32> to vector<16xf32>
    %16 = vector.shape_cast %15 : vector<16xf32> to vector<16x1xf32>
    %cst_9 = arith.constant 2.240000e+02 : f32
    %17 = vector.broadcast %cst_9 : f32 to vector<16x1xf32>
    %18 = arith.divf %16, %17 : vector<16x1xf32>
    %19 = vector.broadcast %11 : vector<16x1xf32> to vector<16x224xf32>
    %20 = arith.subf %3, %19 : vector<16x224xf32>
    %cst_10 = arith.constant 9.99999974E-6 : f32
    %21 = vector.broadcast %cst_10 : f32 to vector<16x1xf32>
    %22 = arith.addf %18, %21 : vector<16x1xf32>
    %23 = math.rsqrt %22 : vector<16x1xf32>
    %24 = vector.broadcast %23 : vector<16x1xf32> to vector<16x224xf32>
    %25 = arith.mulf %20, %24 : vector<16x224xf32>
    %26 = vector.broadcast %5 : vector<1x224xf32> to vector<16x224xf32>
    %27 = arith.mulf %25, %26 : vector<16x224xf32>
    %28 = vector.broadcast %7 : vector<1x224xf32> to vector<16x224xf32>
    %29 = arith.addf %27, %28 : vector<16x224xf32>
    %30 = arith.truncf %29 : vector<16x224xf32> to vector<16x224xbf16>
    %c0_11 = arith.constant 0 : index
    %c0_12 = arith.constant 0 : index
    %c0_13 = arith.constant 0 : index
    %31 = vector.load %arg8[%c0_11, %c0_12, %c0_13] : memref<1x224x224xbf16, #tpu.memory_space<vmem>>, vector<1x224x224xbf16>
    %32 = vector.shape_cast %31 : vector<1x224x224xbf16> to vector<224x224xbf16>
    %cst_14 = arith.constant dense<0.000000e+00> : vector<16x224xf32>
    %33 = tpu.matmul %30, %32, %cst_14 {dimension_numbers = #tpu.dot_dimension_numbers<[1], [0], [0], [1], [0, 0, 1, 1], [], []>} : vector<16x224xbf16>, vector<224x224xbf16>, vector<16x224xf32> -> vector<16x224xf32>
    %c0_15 = arith.constant 0 : index
    %c0_16 = arith.constant 0 : index
    %c0_17 = arith.constant 0 : index
    %34 = vector.load %arg9[%c0_15, %c0_16, %c0_17] : memref<1x224x224xbf16, #tpu.memory_space<vmem>>, vector<1x224x224xbf16>
    %35 = vector.shape_cast %34 : vector<1x224x224xbf16> to vector<224x224xbf16>
    %cst_18 = arith.constant dense<0.000000e+00> : vector<16x224xf32>
    %36 = tpu.matmul %30, %35, %cst_18 {dimension_numbers = #tpu.dot_dimension_numbers<[1], [0], [0], [1], [0, 0, 1, 1], [], []>} : vector<16x224xbf16>, vector<224x224xbf16>, vector<16x224xf32> -> vector<16x224xf32>
    %c0_19 = arith.constant 0 : index
    %c0_20 = arith.constant 0 : index
    %c0_21 = arith.constant 0 : index
    %37 = vector.load %arg10[%c0_19, %c0_20, %c0_21] : memref<1x224x224xbf16, #tpu.memory_space<vmem>>, vector<1x224x224xbf16>
    %38 = vector.shape_cast %37 : vector<1x224x224xbf16> to vector<224x224xbf16>
    %cst_22 = arith.constant dense<0.000000e+00> : vector<16x224xf32>
    %39 = tpu.matmul %30, %38, %cst_22 {dimension_numbers = #tpu.dot_dimension_numbers<[1], [0], [0], [1], [0, 0, 1, 1], [], []>} : vector<16x224xbf16>, vector<224x224xbf16>, vector<16x224xf32> -> vector<16x224xf32>
    %40 = vector.shape_cast %33 : vector<16x224xf32> to vector<2x8x8x28xf32>
    %41 = tpu.transpose %40, [0, 2, 1, 3] : vector<2x8x8x28xf32> -> vector<2x8x8x28xf32>
    %42 = vector.shape_cast %41 : vector<2x8x8x28xf32> to vector<16x8x28xf32>
    %43 = arith.truncf %42 : vector<16x8x28xf32> to vector<16x8x28xbf16>
    %44 = vector.shape_cast %36 : vector<16x224xf32> to vector<2x8x8x28xf32>
    %45 = tpu.transpose %44, [0, 2, 1, 3] : vector<2x8x8x28xf32> -> vector<2x8x8x28xf32>
    %46 = vector.shape_cast %45 : vector<2x8x8x28xf32> to vector<16x8x28xf32>
    %47 = arith.truncf %46 : vector<16x8x28xf32> to vector<16x8x28xbf16>
    %48 = vector.shape_cast %39 : vector<16x224xf32> to vector<2x8x8x28xf32>
    %49 = tpu.transpose %48, [0, 2, 1, 3] : vector<2x8x8x28xf32> -> vector<2x8x8x28xf32>
    %50 = vector.shape_cast %49 : vector<2x8x8x28xf32> to vector<16x8x28xf32>
    %51 = arith.truncf %50 : vector<16x8x28xf32> to vector<16x8x28xbf16>
    "tpu.trace_start"() <{level = 10 : i32, message = "bqd,bkd->bqk"}> : () -> ()
    %cst_23 = arith.constant dense<0.000000e+00> : vector<16x8x8xf32>
    %52 = tpu.matmul %43, %47, %cst_23 {dimension_numbers = #tpu.dot_dimension_numbers<[2], [2], [1], [1], [0, 0, 0, 1, 1, 1], [0], [0]>} : vector<16x8x28xbf16>, vector<16x8x28xbf16>, vector<16x8x8xf32> -> vector<16x8x8xf32>
    "tpu.trace_stop"() : () -> ()
    %cst_24 = arith.constant 0.188982233 : f32
    %53 = vector.broadcast %cst_24 : f32 to vector<16x8x8xf32>
    %54 = arith.mulf %52, %53 : vector<16x8x8xf32>
    %55 = tpu.iota {dimensions = array<i32: 2>} : vector<16x8x8xi32>
    %c5_i32 = arith.constant 5 : i32
    %56 = vector.broadcast %c5_i32 : i32 to vector<16x8x8xi32>
    %57 = arith.cmpi slt, %55, %56 : vector<16x8x8xi32>
    %cst_25 = arith.constant -1.000000e+30 : f32
    %58 = vector.broadcast %cst_25 : f32 to vector<16x8x8xf32>
    %59 = arith.select %57, %54, %58 : vector<16x8x8xi1>, vector<16x8x8xf32>
    %cst_26 = arith.constant dense<0xFF800000> : vector<16x8xf32>
    %60 = vector.multi_reduction <maximumf>, %59, %cst_26 [2] : vector<16x8x8xf32> to vector<16x8xf32>
    %61 = vector.shape_cast %60 : vector<16x8xf32> to vector<16x8x1xf32>
    %62 = vector.broadcast %61 : vector<16x8x1xf32> to vector<16x8x8xf32>
    %63 = arith.subf %59, %62 : vector<16x8x8xf32>
    %64 = math.exp %63 : vector<16x8x8xf32>
    %cst_27 = arith.constant dense<0.000000e+00> : vector<16x8xf32>
    %65 = vector.multi_reduction <add>, %64, %cst_27 [2] : vector<16x8x8xf32> to vector<16x8xf32>
    %66 = vector.shape_cast %65 : vector<16x8xf32> to vector<16x8x1xf32>
    %67 = vector.broadcast %66 : vector<16x8x1xf32> to vector<16x8x8xf32>
    %68 = arith.divf %64, %67 : vector<16x8x8xf32>
    %69 = arith.truncf %68 : vector<16x8x8xf32> to vector<16x8x8xbf16>
    "tpu.trace_start"() <{level = 10 : i32, message = "bqk,bkd->bqd"}> : () -> ()
    %cst_28 = arith.constant dense<0.000000e+00> : vector<16x8x28xf32>
    %70 = tpu.matmul %69, %51, %cst_28 {dimension_numbers = #tpu.dot_dimension_numbers<[2], [1], [1], [2], [0, 0, 0, 1, 1, 2], [0], [0]>} : vector<16x8x8xbf16>, vector<16x8x28xbf16>, vector<16x8x28xf32> -> vector<16x8x28xf32>
    "tpu.trace_stop"() : () -> ()
    %71 = vector.shape_cast %70 : vector<16x8x28xf32> to vector<2x8x8x28xf32>
    %72 = tpu.transpose %71, [0, 2, 1, 3] : vector<2x8x8x28xf32> -> vector<2x8x8x28xf32>
    %73 = vector.shape_cast %72 : vector<2x8x8x28xf32> to vector<16x224xf32>
    %74 = arith.truncf %73 : vector<16x224xf32> to vector<16x224xbf16>
    %c0_29 = arith.constant 0 : index
    %c0_30 = arith.constant 0 : index
    %c0_31 = arith.constant 0 : index
    %75 = vector.load %arg11[%c0_29, %c0_30, %c0_31] : memref<1x224x224xbf16, #tpu.memory_space<vmem>>, vector<1x224x224xbf16>
    %76 = vector.shape_cast %75 : vector<1x224x224xbf16> to vector<224x224xbf16>
    %cst_32 = arith.constant dense<0.000000e+00> : vector<16x224xf32>
    %77 = tpu.matmul %74, %76, %cst_32 {dimension_numbers = #tpu.dot_dimension_numbers<[1], [0], [0], [1], [0, 0, 1, 1], [], []>} : vector<16x224xbf16>, vector<224x224xbf16>, vector<16x224xf32> -> vector<16x224xf32>
    %78 = arith.addf %3, %77 : vector<16x224xf32>
    %c0_33 = arith.constant 0 : index
    %c4 = arith.constant 4 : index
    %c0_34 = arith.constant 0 : index
    %79 = vector.load %arg7[%c0_33, %c4, %c0_34] : memref<1x8x224xf32, #tpu.memory_space<vmem>>, vector<1x1x224xf32>
    %80 = vector.shape_cast %79 : vector<1x1x224xf32> to vector<1x224xf32>
    %81 = vector.broadcast %80 : vector<1x224xf32> to vector<16x224xf32>
    %82 = arith.addf %78, %81 : vector<16x224xf32>
    %c0_35 = arith.constant 0 : index
    %c2 = arith.constant 2 : index
    %c0_36 = arith.constant 0 : index
    %83 = vector.load %arg7[%c0_35, %c2, %c0_36] : memref<1x8x224xf32, #tpu.memory_space<vmem>>, vector<1x1x224xf32>
    %84 = vector.shape_cast %83 : vector<1x1x224xf32> to vector<1x224xf32>
    %c0_37 = arith.constant 0 : index
    %c3 = arith.constant 3 : index
    %c0_38 = arith.constant 0 : index
    %85 = vector.load %arg7[%c0_37, %c3, %c0_38] : memref<1x8x224xf32, #tpu.memory_space<vmem>>, vector<1x1x224xf32>
    %86 = vector.shape_cast %85 : vector<1x1x224xf32> to vector<1x224xf32>
    %cst_39 = arith.constant dense<0.000000e+00> : vector<16xf32>
    %87 = vector.multi_reduction <add>, %82, %cst_39 [1] : vector<16x224xf32> to vector<16xf32>
    %88 = vector.shape_cast %87 : vector<16xf32> to vector<16x1xf32>
    %cst_40 = arith.constant 2.240000e+02 : f32
    %89 = vector.broadcast %cst_40 : f32 to vector<16x1xf32>
    %90 = arith.divf %88, %89 : vector<16x1xf32>
    %91 = vector.broadcast %90 : vector<16x1xf32> to vector<16x224xf32>
    %92 = arith.subf %82, %91 : vector<16x224xf32>
    %93 = arith.mulf %92, %92 : vector<16x224xf32>
    %cst_41 = arith.constant dense<0.000000e+00> : vector<16xf32>
    %94 = vector.multi_reduction <add>, %93, %cst_41 [1] : vector<16x224xf32> to vector<16xf32>
    %95 = vector.shape_cast %94 : vector<16xf32> to vector<16x1xf32>
    %cst_42 = arith.constant 2.240000e+02 : f32
    %96 = vector.broadcast %cst_42 : f32 to vector<16x1xf32>
    %97 = arith.divf %95, %96 : vector<16x1xf32>
    %98 = vector.broadcast %90 : vector<16x1xf32> to vector<16x224xf32>
    %99 = arith.subf %82, %98 : vector<16x224xf32>
    %cst_43 = arith.constant 9.99999974E-6 : f32
    %100 = vector.broadcast %cst_43 : f32 to vector<16x1xf32>
    %101 = arith.addf %97, %100 : vector<16x1xf32>
    %102 = math.rsqrt %101 : vector<16x1xf32>
    %103 = vector.broadcast %102 : vector<16x1xf32> to vector<16x224xf32>
    %104 = arith.mulf %99, %103 : vector<16x224xf32>
    %105 = vector.broadcast %84 : vector<1x224xf32> to vector<16x224xf32>
    %106 = arith.mulf %104, %105 : vector<16x224xf32>
    %107 = vector.broadcast %86 : vector<1x224xf32> to vector<16x224xf32>
    %108 = arith.addf %106, %107 : vector<16x224xf32>
    %109 = arith.truncf %108 : vector<16x224xf32> to vector<16x224xbf16>
    %c0_44 = arith.constant 0 : index
    %c0_45 = arith.constant 0 : index
    %c0_46 = arith.constant 0 : index
    %110 = vector.load %arg12[%c0_44, %c0_45, %c0_46] : memref<1x224x2048xi8, #tpu.memory_space<vmem>>, vector<1x224x2048xi8>
    %111 = vector.shape_cast %110 : vector<1x224x2048xi8> to vector<224x2048xi8>
    %112 = arith.sitofp %111 : vector<224x2048xi8> to vector<224x2048xbf16>
    %cst_47 = arith.constant dense<0.000000e+00> : vector<16x2048xf32>
    %113 = tpu.matmul %109, %112, %cst_47 {dimension_numbers = #tpu.dot_dimension_numbers<[1], [0], [0], [1], [0, 0, 1, 1], [], []>} : vector<16x224xbf16>, vector<224x2048xbf16>, vector<16x2048xf32> -> vector<16x2048xf32>
    %c0_48 = arith.constant 0 : index
    %c0_49 = arith.constant 0 : index
    %c0_50 = arith.constant 0 : index
    %114 = vector.load %arg13[%c0_48, %c0_49, %c0_50] : memref<1x2x2048xf32, #tpu.memory_space<vmem>>, vector<1x1x2048xf32>
    %115 = vector.shape_cast %114 : vector<1x1x2048xf32> to vector<1x2048xf32>
    %116 = vector.broadcast %115 : vector<1x2048xf32> to vector<16x2048xf32>
    %117 = arith.mulf %113, %116 : vector<16x2048xf32>
    %c0_51 = arith.constant 0 : index
    %c1_52 = arith.constant 1 : index
    %c0_53 = arith.constant 0 : index
    %118 = vector.load %arg13[%c0_51, %c1_52, %c0_53] : memref<1x2x2048xf32, #tpu.memory_space<vmem>>, vector<1x1x2048xf32>
    %119 = vector.shape_cast %118 : vector<1x1x2048xf32> to vector<1x2048xf32>
    %120 = vector.broadcast %119 : vector<1x2048xf32> to vector<16x2048xf32>
    %121 = arith.addf %117, %120 : vector<16x2048xf32>
    %122 = arith.mulf %121, %121 : vector<16x2048xf32>
    %123 = arith.mulf %121, %122 : vector<16x2048xf32>
    %cst_54 = arith.constant 4.471500e-02 : f32
    %124 = vector.broadcast %cst_54 : f32 to vector<16x2048xf32>
    %125 = arith.mulf %124, %123 : vector<16x2048xf32>
    %126 = arith.addf %121, %125 : vector<16x2048xf32>
    %cst_55 = arith.constant 0.797884583 : f32
    %127 = vector.broadcast %cst_55 : f32 to vector<16x2048xf32>
    %128 = arith.mulf %127, %126 : vector<16x2048xf32>
    %129 = math.tanh %128 : vector<16x2048xf32>
    %cst_56 = arith.constant 1.000000e+00 : f32
    %130 = vector.broadcast %cst_56 : f32 to vector<16x2048xf32>
    %131 = arith.addf %130, %129 : vector<16x2048xf32>
    %cst_57 = arith.constant 5.000000e-01 : f32
    %132 = vector.broadcast %cst_57 : f32 to vector<16x2048xf32>
    %133 = arith.mulf %132, %131 : vector<16x2048xf32>
    %134 = arith.mulf %121, %133 : vector<16x2048xf32>
    %135 = arith.truncf %134 : vector<16x2048xf32> to vector<16x2048xbf16>
    %c0_58 = arith.constant 0 : index
    %c0_59 = arith.constant 0 : index
    %c0_60 = arith.constant 0 : index
    %136 = vector.load %arg14[%c0_58, %c0_59, %c0_60] : memref<1x2048x224xi8, #tpu.memory_space<vmem>>, vector<1x2048x224xi8>
    %137 = vector.shape_cast %136 : vector<1x2048x224xi8> to vector<2048x224xi8>
    %138 = arith.sitofp %137 : vector<2048x224xi8> to vector<2048x224xbf16>
    %cst_61 = arith.constant dense<0.000000e+00> : vector<16x224xf32>
    %139 = tpu.matmul %135, %138, %cst_61 {dimension_numbers = #tpu.dot_dimension_numbers<[1], [0], [0], [1], [0, 0, 1, 1], [], []>} : vector<16x2048xbf16>, vector<2048x224xbf16>, vector<16x224xf32> -> vector<16x224xf32>
    %c0_62 = arith.constant 0 : index
    %c6 = arith.constant 6 : index
    %c0_63 = arith.constant 0 : index
    %140 = vector.load %arg7[%c0_62, %c6, %c0_63] : memref<1x8x224xf32, #tpu.memory_space<vmem>>, vector<1x1x224xf32>
    %141 = vector.shape_cast %140 : vector<1x1x224xf32> to vector<1x224xf32>
    %142 = vector.broadcast %141 : vector<1x224xf32> to vector<16x224xf32>
    %143 = arith.mulf %139, %142 : vector<16x224xf32>
    %144 = arith.addf %82, %143 : vector<16x224xf32>
    %c0_64 = arith.constant 0 : index
    %c5 = arith.constant 5 : index
    %c0_65 = arith.constant 0 : index
    %145 = vector.load %arg7[%c0_64, %c5, %c0_65] : memref<1x8x224xf32, #tpu.memory_space<vmem>>, vector<1x1x224xf32>
    %146 = vector.shape_cast %145 : vector<1x1x224xf32> to vector<1x224xf32>
    %147 = vector.broadcast %146 : vector<1x224xf32> to vector<16x224xf32>
    %148 = arith.addf %144, %147 : vector<16x224xf32>
    %c0_66 = arith.constant 0 : index
    %c0_67 = arith.constant 0 : index
    %149 = vector.load %arg17[%c0_66, %c0_67] : memref<16x224xf32, #tpu.memory_space<vmem>>, vector<16x224xf32>
    tpu.vector_store %arg17[%c0_66, %c0_67], %148 {strides = array<i32>} : memref<16x224xf32, #tpu.memory_space<vmem>>, vector<16x224xf32>,
    %c5_i32_68 = arith.constant 5 : i32
    %150 = arith.cmpi eq, %arg0, %c5_i32_68 : i32
    %151 = arith.extui %150 : i1 to i32
    %c0_i32_69 = arith.constant 0 : i32
    %152 = arith.cmpi ne, %151, %c0_i32_69 : i32
    scf.if %152 {
      %153 = vector.shape_cast %148 : vector<16x224xf32> to vector<2x8x224xf32>
      %154 = vector.extract_strided_slice %153 {offsets = [0, 0, 0], sizes = [2, 1, 224], strides = [1, 1, 1]} : vector<2x8x224xf32> to vector<2x1x224xf32>
      %155 = vector.shape_cast %154 : vector<2x1x224xf32> to vector<2x224xf32>
      %c0_70 = arith.constant 0 : index
      %c0_71 = arith.constant 0 : index
      %156 = vector.load %arg4[%c0_70, %c0_71] : memref<2x224xf32, #tpu.memory_space<vmem>>, vector<1x224xf32>
      %c1_72 = arith.constant 1 : index
      %c0_73 = arith.constant 0 : index
      %157 = vector.load %arg4[%c1_72, %c0_73] : memref<2x224xf32, #tpu.memory_space<vmem>>, vector<1x224xf32>
      %cst_74 = arith.constant dense<0.000000e+00> : vector<2xf32>
      %158 = vector.multi_reduction <add>, %155, %cst_74 [1] : vector<2x224xf32> to vector<2xf32>
      %159 = vector.shape_cast %158 : vector<2xf32> to vector<2x1xf32>
      %cst_75 = arith.constant 2.240000e+02 : f32
      %160 = vector.broadcast %cst_75 : f32 to vector<2x1xf32>
      %161 = arith.divf %159, %160 : vector<2x1xf32>
      %162 = vector.broadcast %161 : vector<2x1xf32> to vector<2x224xf32>
      %163 = arith.subf %155, %162 : vector<2x224xf32>
      %164 = arith.mulf %163, %163 : vector<2x224xf32>
      %cst_76 = arith.constant dense<0.000000e+00> : vector<2xf32>
      %165 = vector.multi_reduction <add>, %164, %cst_76 [1] : vector<2x224xf32> to vector<2xf32>
      %166 = vector.shape_cast %165 : vector<2xf32> to vector<2x1xf32>
      %cst_77 = arith.constant 2.240000e+02 : f32
      %167 = vector.broadcast %cst_77 : f32 to vector<2x1xf32>
      %168 = arith.divf %166, %167 : vector<2x1xf32>
      %169 = vector.broadcast %161 : vector<2x1xf32> to vector<2x224xf32>
      %170 = arith.subf %155, %169 : vector<2x224xf32>
      %cst_78 = arith.constant 9.99999974E-6 : f32
      %171 = vector.broadcast %cst_78 : f32 to vector<2x1xf32>
      %172 = arith.addf %168, %171 : vector<2x1xf32>
      %173 = math.rsqrt %172 : vector<2x1xf32>
      %174 = vector.broadcast %173 : vector<2x1xf32> to vector<2x224xf32>
      %175 = arith.mulf %170, %174 : vector<2x224xf32>
      %176 = vector.broadcast %156 : vector<1x224xf32> to vector<2x224xf32>
      %177 = arith.mulf %175, %176 : vector<2x224xf32>
      %178 = vector.broadcast %157 : vector<1x224xf32> to vector<2x224xf32>
      %179 = arith.addf %177, %178 : vector<2x224xf32>
      %c0_79 = arith.constant 0 : index
      %c0_80 = arith.constant 0 : index
      %180 = vector.load %arg5[%c0_79, %c0_80] : memref<224x42xf32, #tpu.memory_space<vmem>>, vector<224x42xf32>
      %cst_81 = arith.constant dense<0.000000e+00> : vector<2x42xf32>
      %181 = tpu.matmul %179, %180, %cst_81 {dimension_numbers = #tpu.dot_dimension_numbers<[1], [0], [0], [1], [0, 0, 1, 1], [], []>} : vector<2x224xf32>, vector<224x42xf32>, vector<2x42xf32> -> vector<2x42xf32>
      %c0_82 = arith.constant 0 : index
      %c0_83 = arith.constant 0 : index
      %182 = vector.load %arg6[%c0_82, %c0_83] : memref<1x42xf32, #tpu.memory_space<vmem>>, vector<1x42xf32>
      %183 = vector.broadcast %182 : vector<1x42xf32> to vector<2x42xf32>
      %184 = arith.addf %181, %183 : vector<2x42xf32>
      %c0_84 = arith.constant 0 : index
      %c0_85 = arith.constant 0 : index
      %185 = vector.load %arg15[%c0_84, %c0_85] : memref<2x42xf32, #tpu.memory_space<vmem>>, vector<2x42xf32>
      tpu.vector_store %arg15[%c0_84, %c0_85], %184 {strides = array<i32>} : memref<2x42xf32, #tpu.memory_space<vmem>>, vector<2x42xf32>,
      %cst_86 = arith.constant dense<0xFF800000> : vector<2xf32>
      %186 = vector.multi_reduction <maximumf>, %184, %cst_86 [1] : vector<2x42xf32> to vector<2xf32>
      %187 = vector.shape_cast %186 : vector<2xf32> to vector<2x1xf32>
      %188 = vector.broadcast %187 : vector<2x1xf32> to vector<2x42xf32>
      %189 = arith.subf %184, %188 : vector<2x42xf32>
      %190 = math.exp %189 : vector<2x42xf32>
      %cst_87 = arith.constant dense<0.000000e+00> : vector<2xf32>
      %191 = vector.multi_reduction <add>, %190, %cst_87 [1] : vector<2x42xf32> to vector<2xf32>
      %192 = vector.shape_cast %191 : vector<2xf32> to vector<2x1xf32>
      %193 = math.log %192 : vector<2x1xf32>
      %194 = arith.addf %187, %193 : vector<2x1xf32>
      %c0_88 = arith.constant 0 : index
      %c0_89 = arith.constant 0 : index
      %195 = vector.load %arg16[%c0_88, %c0_89] : memref<2x1xf32, #tpu.memory_space<vmem>>, vector<2x1xf32>
      tpu.vector_store %arg16[%c0_88, %c0_89], %194 {strides = array<i32>} : memref<2x1xf32, #tpu.memory_space<vmem>>, vector<2x1xf32>,
    } else {
    }
    return
  }
  func.func @transform_0(%arg0: i32) -> (i32, i32) {
    %c0_i32 = arith.constant 0 : i32
    %c0_i32_0 = arith.constant 0 : i32
    %c0_i32_1 = arith.constant 0 : i32
    return %c0_i32, %c0_i32_0 : i32, i32
  }
  func.func @transform_1(%arg0: i32) -> (i32, i32) {
    %c0_i32 = arith.constant 0 : i32
    %c0_i32_0 = arith.constant 0 : i32
    %c0_i32_1 = arith.constant 0 : i32
    return %c0_i32, %c0_i32_0 : i32, i32
  }
  func.func @transform_2(%arg0: i32) -> (i32, i32) {
    %c0_i32 = arith.constant 0 : i32
    %c0_i32_0 = arith.constant 0 : i32
    %c0_i32_1 = arith.constant 0 : i32
    return %c0_i32, %c0_i32_0 : i32, i32
  }
  func.func @transform_3(%arg0: i32) -> (i32, i32) {
    %c0_i32 = arith.constant 0 : i32
    %c0_i32_0 = arith.constant 0 : i32
    %c0_i32_1 = arith.constant 0 : i32
    return %c0_i32, %c0_i32_0 : i32, i32
  }
  func.func @transform_4(%arg0: i32) -> (i32, i32) {
    %c0_i32 = arith.constant 0 : i32
    %c0_i32_0 = arith.constant 0 : i32
    %c0_i32_1 = arith.constant 0 : i32
    return %c0_i32, %c0_i32_0 : i32, i32
  }
  func.func @transform_5(%arg0: i32) -> (i32, i32) {
    %c0_i32 = arith.constant 0 : i32
    %c0_i32_0 = arith.constant 0 : i32
    %c0_i32_1 = arith.constant 0 : i32
    return %c0_i32, %c0_i32_0 : i32, i32
  }
  func.func @transform_6(%arg0: i32) -> (i32, i32, i32) {
    %c0_i32 = arith.constant 0 : i32
    %c0_i32_0 = arith.constant 0 : i32
    %c0_i32_1 = arith.constant 0 : i32
    return %arg0, %c0_i32, %c0_i32_0 : i32, i32, i32
  }
  func.func @transform_7(%arg0: i32) -> (i32, i32, i32) {
    %c0_i32 = arith.constant 0 : i32
    %c0_i32_0 = arith.constant 0 : i32
    %c0_i32_1 = arith.constant 0 : i32
    return %arg0, %c0_i32, %c0_i32_0 : i32, i32, i32
  }
  func.func @transform_8(%arg0: i32) -> (i32, i32, i32) {
    %c0_i32 = arith.constant 0 : i32
    %c0_i32_0 = arith.constant 0 : i32
    %c0_i32_1 = arith.constant 0 : i32
    return %arg0, %c0_i32, %c0_i32_0 : i32, i32, i32
  }
  func.func @transform_9(%arg0: i32) -> (i32, i32, i32) {
    %c0_i32 = arith.constant 0 : i32
    %c0_i32_0 = arith.constant 0 : i32
    %c0_i32_1 = arith.constant 0 : i32
    return %arg0, %c0_i32, %c0_i32_0 : i32, i32, i32
  }
  func.func @transform_10(%arg0: i32) -> (i32, i32, i32) {
    %c0_i32 = arith.constant 0 : i32
    %c0_i32_0 = arith.constant 0 : i32
    %c0_i32_1 = arith.constant 0 : i32
    return %arg0, %c0_i32, %c0_i32_0 : i32, i32, i32
  }
  func.func @transform_11(%arg0: i32) -> (i32, i32, i32) {
    %c0_i32 = arith.constant 0 : i32
    %c0_i32_0 = arith.constant 0 : i32
    %c0_i32_1 = arith.constant 0 : i32
    return %arg0, %c0_i32, %c0_i32_0 : i32, i32, i32
  }
  func.func @transform_12(%arg0: i32) -> (i32, i32, i32) {
    %c0_i32 = arith.constant 0 : i32
    %c0_i32_0 = arith.constant 0 : i32
    %c0_i32_1 = arith.constant 0 : i32
    return %arg0, %c0_i32, %c0_i32_0 : i32, i32, i32
  }
  func.func @transform_13(%arg0: i32) -> (i32, i32, i32) {
    %c0_i32 = arith.constant 0 : i32
    %c0_i32_0 = arith.constant 0 : i32
    %c0_i32_1 = arith.constant 0 : i32
    return %arg0, %c0_i32, %c0_i32_0 : i32, i32, i32
  }
  func.func @transform_14(%arg0: i32) -> (i32, i32) {
    %c0_i32 = arith.constant 0 : i32
    %c0_i32_0 = arith.constant 0 : i32
    %c0_i32_1 = arith.constant 0 : i32
    return %c0_i32, %c0_i32_0 : i32, i32
  }
  func.func @transform_15(%arg0: i32) -> (i32, i32) {
    %c0_i32 = arith.constant 0 : i32
    %c0_i32_0 = arith.constant 0 : i32
    %c0_i32_1 = arith.constant 0 : i32
    return %c0_i32, %c0_i32_0 : i32, i32
  }
}

</mosaic_0001>

<llo_original>
// kernel: tpu_custom_call.1
$region0: #{tpu_custom_call.1}
  #allocation0 [shape = 'u32[]', space=smem, size = 0x4, offset = 0x4, fixed_abs, tag = 'smem constant byte address 0x4 - core index']
  #allocation1 [shape = 'u32[72,128]{1,0:T(1,128)}', space=vmem, size = 0x9000, scoped, tag = 'internal scratch']
  #allocation2 [shape = 'f32[16,224]{1,0:T(8,128)}', space=vmem, size = 0x4000, scoped, tag = 'scratch operand']
  %s0 = inlined_call_operand.hbm [shape: bf16[16,784], index: 0, kind: input, shape index: {}]
  %s1 = inlined_call_operand.vmem [shape: bf16[784,224], index: 1, kind: input, shape index: {}]
  %s2 = inlined_call_operand.hbm [shape: f32[16,224], index: 2, kind: input, shape index: {}]
  %s3 = inlined_call_operand.vmem [shape: f32[2,224], index: 3, kind: input, shape index: {}]
  %s4 = inlined_call_operand.vmem [shape: f32[224,42], index: 4, kind: input, shape index: {}]
  %s5 = inlined_call_operand.vmem [shape: f32[1,42], index: 5, kind: input, shape index: {}]
  %s6 = inlined_call_operand.vmem [shape: f32[6,8,224], index: 6, kind: input, shape index: {}]
  %s7 = inlined_call_operand.vmem [shape: bf16[6,224,224], index: 7, kind: input, shape index: {}]
  %s8 = inlined_call_operand.vmem [shape: bf16[6,224,224], index: 8, kind: input, shape index: {}]
  %s9 = inlined_call_operand.vmem [shape: bf16[6,224,224], index: 9, kind: input, shape index: {}]
  %s10 = inlined_call_operand.vmem [shape: bf16[6,224,224], index: 10, kind: input, shape index: {}]
  %s11 = inlined_call_operand.vmem [shape: s8[6,224,2048], index: 11, kind: input, shape index: {}]
  %s12 = inlined_call_operand.vmem [shape: f32[6,2,2048], index: 12, kind: input, shape index: {}]
  %s13 = inlined_call_operand.vmem [shape: s8[6,2048,224], index: 13, kind: input, shape index: {}]
  %s14 = inlined_call_operand.hbm [shape: f32[2,42], index: 14, kind: output, shape index: {0}]
  %s15 = inlined_call_operand.vmem [shape: f32[2,1], index: 15, kind: output, shape index: {1}]
  %16 = xla_tuple %s14, %s15
  %s17 = sld [smem:[#allocation0]]
  $region113: #{tpu_custom_call.1} parent=0
    _
  %s19 = ssub.s32 1, %s17
  %s20 = scalar_select 0, %s19, %s17
  $region1: #{tpu_custom_call.1} parent=0
    #allocation3 [shape = 'u8[28672]{0}', space=vmem, size = 0x7000, scoped, tag = 'input window, operand 0, single buffered']
    #allocation4 [shape = 's32[2]{0}', space=sflag, size = 0x8, scoped, tag = 'scoped memory for tpu_custom_call.1']
    #allocation5 [shape = 's32[2]{0}', space=sflag, size = 0x8, scoped, tag = 'scoped memory for tpu_custom_call.1']
    #allocation6 [shape = 'u8[16384]{0}', space=vmem, size = 0x4000, scoped, tag = 'input window, operand 2, single buffered']
    #allocation7 [shape = 's32[1]{0}', space=sflag, size = 0x4, scoped, tag = 'scoped memory for tpu_custom_call.1']
    #allocation8 [shape = 'u8[1024]{0}', space=vmem, size = 0x400, scoped, tag = 'output window, operand 0, single buffered']
    %21 = vsyncpa [#allocation4], 0
    %22 = vsyncpa [#allocation7], 0
    %23 = vsyncpa [#allocation5], 0
    loop: start=0, step=1, limit=8
    $region2: #{tpu_custom_call.1} parent=1 // loop_pre_header
      _
    $region3: #{tpu_custom_call.1} parent=1 // loop_header
      %s25 = sphi 0, %s29
      %p26 = scmp.ge.s32.totalorder %s25, 8
      %s33 = sphi 0, %s33
      %s35 = sphi 0, %s33
      %s36 = sphi 0, %s35
      %s50 = sphi 0, %s36
      %s54 = sphi 0, %s54
      %s56 = sphi 0, %s54
      %s57 = sphi 0, %s56
      %s71 = sphi 0, %s57
      %s75 = sphi 0, %s75
      %s77 = sphi 0, %s75
      %s78 = sphi 0, %s77
      %s92 = sphi 0, %s78
      %s96 = sphi 0, %s96
      %s98 = sphi 0, %s96
      %s99 = sphi 0, %s98
      %s113 = sphi 0, %s99
      %s117 = sphi 0, %s117
      %s119 = sphi 0, %s117
      %s120 = sphi 0, %s119
      %s134 = sphi 0, %s120
      %s138 = sphi 0, %s138
      %s140 = sphi 0, %s138
      %s141 = sphi 0, %s140
      %s155 = sphi 0, %s141
      %s161 = sphi 0, %s163
      %s164 = sphi 0, %s161
      %s165 = sphi 0, %s164
      %s181 = sphi 0, %s165
      %s187 = sphi 0, %s189
      %s190 = sphi 0, %s187
      %s191 = sphi 0, %s190
      %s207 = sphi 0, %s191
      %s213 = sphi 0, %s215
      %s216 = sphi 0, %s213
      %s217 = sphi 0, %s216
      %s233 = sphi 0, %s217
      %s239 = sphi 0, %s241
      %s242 = sphi 0, %s239
      %s243 = sphi 0, %s242
      %s259 = sphi 0, %s243
      %s265 = sphi 0, %s267
      %s268 = sphi 0, %s265
      %s269 = sphi 0, %s268
      %s285 = sphi 0, %s269
      %s291 = sphi 0, %s293
      %s294 = sphi 0, %s291
      %s295 = sphi 0, %s294
      %s311 = sphi 0, %s295
      %s317 = sphi 0, %s319
      %s320 = sphi 0, %s317
      %s321 = sphi 0, %s320
      %s337 = sphi 0, %s321
      %s343 = sphi 0, %s345
      %s346 = sphi 0, %s343
      %s347 = sphi 0, %s346
      %s363 = sphi 0, %s347
      %s367 = sphi 0, %s367
      %s369 = sphi 0, %s367
      %s370 = sphi 0, %s369
      %s384 = sphi 0, %s370
      %s388 = sphi 0, %s388
      %s390 = sphi 0, %s388
      %s391 = sphi 0, %s390
      %s405 = sphi 0, %s391
    $region4: #{tpu_custom_call.1} parent=1 // loop_header_branch
      %28 = sbr.rel (%p26) target = $region8
    $region5: #{tpu_custom_call.1} parent=1 // loop_body
      %s30 = ssub.s32 %s25, 1
      %s31 = ssub.s32 %s25, 2
      %s32 = sadd.s32 %s25, 1
      %s34 = sadd.s32 %s33, 1
      %p37 = scmp.eq.s32.totalorder %s25, 5
      %p38 = scmp.ne.s32.totalorder %s33, %s35
      %p39 = scmp.eq.s32.totalorder %s25, 0
      %p40 = por %p38, %p39
      %p41 = scmp.ne.s32.totalorder %s33, %s35
      %p42 = scmp.eq.s32.totalorder %s30, 5
      %p43 = por %p41, %p42
      %p44 = scmp.ne.s32.totalorder %s35, %s36
      %p45 = scmp.eq.s32.totalorder %s30, 0
      %p46 = por %p44, %p45
      %p47 = scmp.ne.s32.totalorder %s35, %s36
      %p48 = scmp.eq.s32.totalorder %s31, 5
      %p49 = por %p47, %p48
      %p51 = scmp.ne.s32.totalorder %s36, %s50
      %p52 = scmp.eq.s32.totalorder %s31, 0
      %p53 = por %p51, %p52
      %s55 = sadd.s32 %s54, 1
      %p58 = scmp.eq.s32.totalorder %s25, 5
      %p59 = scmp.ne.s32.totalorder %s54, %s56
      %p60 = scmp.eq.s32.totalorder %s25, 0
      %p61 = por %p59, %p60
      %p62 = scmp.ne.s32.totalorder %s54, %s56
      %p63 = scmp.eq.s32.totalorder %s30, 5
      %p64 = por %p62, %p63
      %p65 = scmp.ne.s32.totalorder %s56, %s57
      %p66 = scmp.eq.s32.totalorder %s30, 0
      %p67 = por %p65, %p66
      %p68 = scmp.ne.s32.totalorder %s56, %s57
      %p69 = scmp.eq.s32.totalorder %s31, 5
      %p70 = por %p68, %p69
      %p72 = scmp.ne.s32.totalorder %s57, %s71
      %p73 = scmp.eq.s32.totalorder %s31, 0
      %p74 = por %p72, %p73
      %s76 = sadd.s32 %s75, 1
      %p79 = scmp.eq.s32.totalorder %s25, 5
      %p80 = scmp.ne.s32.totalorder %s75, %s77
      %p81 = scmp.eq.s32.totalorder %s25, 0
      %p82 = por %p80, %p81
      %p83 = scmp.ne.s32.totalorder %s75, %s77
      %p84 = scmp.eq.s32.totalorder %s30, 5
      %p85 = por %p83, %p84
      %p86 = scmp.ne.s32.totalorder %s77, %s78
      %p87 = scmp.eq.s32.totalorder %s30, 0
      %p88 = por %p86, %p87
      %p89 = scmp.ne.s32.totalorder %s77, %s78
      %p90 = scmp.eq.s32.totalorder %s31, 5
      %p91 = por %p89, %p90
      %p93 = scmp.ne.s32.totalorder %s78, %s92
      %p94 = scmp.eq.s32.totalorder %s31, 0
      %p95 = por %p93, %p94
      %s97 = sadd.s32 %s96, 1
      %p100 = scmp.eq.s32.totalorder %s25, 5
      %p101 = scmp.ne.s32.totalorder %s96, %s98
      %p102 = scmp.eq.s32.totalorder %s25, 0
      %p103 = por %p101, %p102
      %p104 = scmp.ne.s32.totalorder %s96, %s98
      %p105 = scmp.eq.s32.totalorder %s30, 5
      %p106 = por %p104, %p105
      %p107 = scmp.ne.s32.totalorder %s98, %s99
      %p108 = scmp.eq.s32.totalorder %s30, 0
      %p109 = por %p107, %p108
      %p110 = scmp.ne.s32.totalorder %s98, %s99
      %p111 = scmp.eq.s32.totalorder %s31, 5
      %p112 = por %p110, %p111
      %p114 = scmp.ne.s32.totalorder %s99, %s113
      %p115 = scmp.eq.s32.totalorder %s31, 0
      %p116 = por %p114, %p115
      %s118 = sadd.s32 %s117, 1
      %p121 = scmp.eq.s32.totalorder %s25, 5
      %p122 = scmp.ne.s32.totalorder %s117, %s119
      %p123 = scmp.eq.s32.totalorder %s25, 0
      %p124 = por %p122, %p123
      %p125 = scmp.ne.s32.totalorder %s117, %s119
      %p126 = scmp.eq.s32.totalorder %s30, 5
      %p127 = por %p125, %p126
      %p128 = scmp.ne.s32.totalorder %s119, %s120
      %p129 = scmp.eq.s32.totalorder %s30, 0
      %p130 = por %p128, %p129
      %p131 = scmp.ne.s32.totalorder %s119, %s120
      %p132 = scmp.eq.s32.totalorder %s31, 5
      %p133 = por %p131, %p132
      %p135 = scmp.ne.s32.totalorder %s120, %s134
      %p136 = scmp.eq.s32.totalorder %s31, 0
      %p137 = por %p135, %p136
      %s139 = sadd.s32 %s138, 1
      %p142 = scmp.eq.s32.totalorder %s25, 5
      %p143 = scmp.ne.s32.totalorder %s138, %s140
      %p144 = scmp.eq.s32.totalorder %s25, 0
      %p145 = por %p143, %p144
      %p146 = scmp.ne.s32.totalorder %s138, %s140
      %p147 = scmp.eq.s32.totalorder %s30, 5
      %p148 = por %p146, %p147
      %p149 = scmp.ne.s32.totalorder %s140, %s141
      %p150 = scmp.eq.s32.totalorder %s30, 0
      %p151 = por %p149, %p150
      %p152 = scmp.ne.s32.totalorder %s140, %s141
      %p153 = scmp.eq.s32.totalorder %s31, 5
      %p154 = por %p152, %p153
      %p156 = scmp.ne.s32.totalorder %s141, %s155
      %p157 = scmp.eq.s32.totalorder %s31, 0
      %p158 = por %p156, %p157
      %s159 = ssub.s32 %s25, %s32
      %p160 = scmp.eq.s32.totalorder %s159, 0
      %s162 = sadd.s32 %s161, 1
      %s163 = scalar_select %p160, %s161, %s162
      %p166 = pneg %p160
      %p167 = scmp.eq.s32.totalorder %s25, 5
      %p168 = por %p166, %p167
      %p169 = scmp.ne.s32.totalorder %s161, %s164
      %p170 = scmp.eq.s32.totalorder %s25, 0
      %p171 = por %p169, %p170
      %p172 = scmp.ne.s32.totalorder %s161, %s164
      %p173 = scmp.eq.s32.totalorder %s30, 5
      %p174 = por %p172, %p173
      %p175 = scmp.ne.s32.totalorder %s164, %s165
      %p176 = scmp.eq.s32.totalorder %s30, 0
      %p177 = por %p175, %p176
      %p178 = scmp.ne.s32.totalorder %s164, %s165
      %p179 = scmp.eq.s32.totalorder %s31, 5
      %p180 = por %p178, %p179
      %p182 = scmp.ne.s32.totalorder %s165, %s181
      %p183 = scmp.eq.s32.totalorder %s31, 0
      %p184 = por %p182, %p183
      %s185 = ssub.s32 %s25, %s32
      %p186 = scmp.eq.s32.totalorder %s185, 0
      %s188 = sadd.s32 %s187, 1
      %s189 = scalar_select %p186, %s187, %s188
      %p192 = pneg %p186
      %p193 = scmp.eq.s32.totalorder %s25, 5
      %p194 = por %p192, %p193
      %p195 = scmp.ne.s32.totalorder %s187, %s190
      %p196 = scmp.eq.s32.totalorder %s25, 0
      %p197 = por %p195, %p196
      %p198 = scmp.ne.s32.totalorder %s187, %s190
      %p199 = scmp.eq.s32.totalorder %s30, 5
      %p200 = por %p198, %p199
      %p201 = scmp.ne.s32.totalorder %s190, %s191
      %p202 = scmp.eq.s32.totalorder %s30, 0
      %p203 = por %p201, %p202
      %p204 = scmp.ne.s32.totalorder %s190, %s191
      %p205 = scmp.eq.s32.totalorder %s31, 5
      %p206 = por %p204, %p205
      %p208 = scmp.ne.s32.totalorder %s191, %s207
      %p209 = scmp.eq.s32.totalorder %s31, 0
      %p210 = por %p208, %p209
      %s211 = ssub.s32 %s25, %s32
      %p212 = scmp.eq.s32.totalorder %s211, 0
      %s214 = sadd.s32 %s213, 1
      %s215 = scalar_select %p212, %s213, %s214
      %p218 = pneg %p212
      %p219 = scmp.eq.s32.totalorder %s25, 5
      %p220 = por %p218, %p219
      %p221 = scmp.ne.s32.totalorder %s213, %s216
      %p222 = scmp.eq.s32.totalorder %s25, 0
      %p223 = por %p221, %p222
      %p224 = scmp.ne.s32.totalorder %s213, %s216
      %p225 = scmp.eq.s32.totalorder %s30, 5
      %p226 = por %p224, %p225
      %p227 = scmp.ne.s32.totalorder %s216, %s217
      %p228 = scmp.eq.s32.totalorder %s30, 0
      %p229 = por %p227, %p228
      %p230 = scmp.ne.s32.totalorder %s216, %s217
      %p231 = scmp.eq.s32.totalorder %s31, 5
      %p232 = por %p230, %p231
      %p234 = scmp.ne.s32.totalorder %s217, %s233
      %p235 = scmp.eq.s32.totalorder %s31, 0
      %p236 = por %p234, %p235
      %s237 = ssub.s32 %s25, %s32
      %p238 = scmp.eq.s32.totalorder %s237, 0
      %s240 = sadd.s32 %s239, 1
      %s241 = scalar_select %p238, %s239, %s240
      %p244 = pneg %p238
      %p245 = scmp.eq.s32.totalorder %s25, 5
      %p246 = por %p244, %p245
      %p247 = scmp.ne.s32.totalorder %s239, %s242
      %p248 = scmp.eq.s32.totalorder %s25, 0
      %p249 = por %p247, %p248
      %p250 = scmp.ne.s32.totalorder %s239, %s242
      %p251 = scmp.eq.s32.totalorder %s30, 5
      %p252 = por %p250, %p251
      %p253 = scmp.ne.s32.totalorder %s242, %s243
      %p254 = scmp.eq.s32.totalorder %s30, 0
      %p255 = por %p253, %p254
      %p256 = scmp.ne.s32.totalorder %s242, %s243
      %p257 = scmp.eq.s32.totalorder %s31, 5
      %p258 = por %p256, %p257
      %p260 = scmp.ne.s32.totalorder %s243, %s259
      %p261 = scmp.eq.s32.totalorder %s31, 0
      %p262 = por %p260, %p261
      %s263 = ssub.s32 %s25, %s32
      %p264 = scmp.eq.s32.totalorder %s263, 0
      %s266 = sadd.s32 %s265, 1
      %s267 = scalar_select %p264, %s265, %s266
      %p270 = pneg %p264
      %p271 = scmp.eq.s32.totalorder %s25, 5
      %p272 = por %p270, %p271
      %p273 = scmp.ne.s32.totalorder %s265, %s268
      %p274 = scmp.eq.s32.totalorder %s25, 0
      %p275 = por %p273, %p274
      %p276 = scmp.ne.s32.totalorder %s265, %s268
      %p277 = scmp.eq.s32.totalorder %s30, 5
      %p278 = por %p276, %p277
      %p279 = scmp.ne.s32.totalorder %s268, %s269
      %p280 = scmp.eq.s32.totalorder %s30, 0
      %p281 = por %p279, %p280
      %p282 = scmp.ne.s32.totalorder %s268, %s269
      %p283 = scmp.eq.s32.totalorder %s31, 5
      %p284 = por %p282, %p283
      %p286 = scmp.ne.s32.totalorder %s269, %s285
      %p287 = scmp.eq.s32.totalorder %s31, 0
      %p288 = por %p286, %p287
      %s289 = ssub.s32 %s25, %s32
      %p290 = scmp.eq.s32.totalorder %s289, 0
      %s292 = sadd.s32 %s291, 1
      %s293 = scalar_select %p290, %s291, %s292
      %p296 = pneg %p290
      %p297 = scmp.eq.s32.totalorder %s25, 5
      %p298 = por %p296, %p297
      %p299 = scmp.ne.s32.totalorder %s291, %s294
      %p300 = scmp.eq.s32.totalorder %s25, 0
      %p301 = por %p299, %p300
      %p302 = scmp.ne.s32.totalorder %s291, %s294
      %p303 = scmp.eq.s32.totalorder %s30, 5
      %p304 = por %p302, %p303
      %p305 = scmp.ne.s32.totalorder %s294, %s295
      %p306 = scmp.eq.s32.totalorder %s30, 0
      %p307 = por %p305, %p306
      %p308 = scmp.ne.s32.totalorder %s294, %s295
      %p309 = scmp.eq.s32.totalorder %s31, 5
      %p310 = por %p308, %p309
      %p312 = scmp.ne.s32.totalorder %s295, %s311
      %p313 = scmp.eq.s32.totalorder %s31, 0
      %p314 = por %p312, %p313
      %s315 = ssub.s32 %s25, %s32
      %p316 = scmp.eq.s32.totalorder %s315, 0
      %s318 = sadd.s32 %s317, 1
      %s319 = scalar_select %p316, %s317, %s318
      %p322 = pneg %p316
      %p323 = scmp.eq.s32.totalorder %s25, 5
      %p324 = por %p322, %p323
      %p325 = scmp.ne.s32.totalorder %s317, %s320
      %p326 = scmp.eq.s32.totalorder %s25, 0
      %p327 = por %p325, %p326
      %p328 = scmp.ne.s32.totalorder %s317, %s320
      %p329 = scmp.eq.s32.totalorder %s30, 5
      %p330 = por %p328, %p329
      %p331 = scmp.ne.s32.totalorder %s320, %s321
      %p332 = scmp.eq.s32.totalorder %s30, 0
      %p333 = por %p331, %p332
      %p334 = scmp.ne.s32.totalorder %s320, %s321
      %p335 = scmp.eq.s32.totalorder %s31, 5
      %p336 = por %p334, %p335
      %p338 = scmp.ne.s32.totalorder %s321, %s337
      %p339 = scmp.eq.s32.totalorder %s31, 0
      %p340 = por %p338, %p339
      %s341 = ssub.s32 %s25, %s32
      %p342 = scmp.eq.s32.totalorder %s341, 0
      %s344 = sadd.s32 %s343, 1
      %s345 = scalar_select %p342, %s343, %s344
      %p348 = pneg %p342
      %p349 = scmp.eq.s32.totalorder %s25, 5
      %p350 = por %p348, %p349
      %p351 = scmp.ne.s32.totalorder %s343, %s346
      %p352 = scmp.eq.s32.totalorder %s25, 0
      %p353 = por %p351, %p352
      %p354 = scmp.ne.s32.totalorder %s343, %s346
      %p355 = scmp.eq.s32.totalorder %s30, 5
      %p356 = por %p354, %p355
      %p357 = scmp.ne.s32.totalorder %s346, %s347
      %p358 = scmp.eq.s32.totalorder %s30, 0
      %p359 = por %p357, %p358
      %p360 = scmp.ne.s32.totalorder %s346, %s347
      %p361 = scmp.eq.s32.totalorder %s31, 5
      %p362 = por %p360, %p361
      %p364 = scmp.ne.s32.totalorder %s347, %s363
      %p365 = scmp.eq.s32.totalorder %s31, 0
      %p366 = por %p364, %p365
      %s368 = sadd.s32 %s367, 1
      %p371 = scmp.eq.s32.totalorder %s25, 5
      %p372 = scmp.ne.s32.totalorder %s367, %s369
      %p373 = scmp.eq.s32.totalorder %s25, 0
      %p374 = por %p372, %p373
      %p375 = scmp.ne.s32.totalorder %s367, %s369
      %p376 = scmp.eq.s32.totalorder %s30, 5
      %p377 = por %p375, %p376
      %p378 = scmp.ne.s32.totalorder %s369, %s370
      %p379 = scmp.eq.s32.totalorder %s30, 0
      %p380 = por %p378, %p379
      %p381 = scmp.ne.s32.totalorder %s369, %s370
      %p382 = scmp.eq.s32.totalorder %s31, 5
      %p383 = por %p381, %p382
      %p385 = scmp.ne.s32.totalorder %s370, %s384
      %p386 = scmp.eq.s32.totalorder %s31, 0
      %p387 = por %p385, %p386
      %s389 = sadd.s32 %s388, 1
      %p392 = scmp.eq.s32.totalorder %s25, 5
      %p393 = scmp.ne.s32.totalorder %s388, %s390
      %p394 = scmp.eq.s32.totalorder %s25, 0
      %p395 = por %p393, %p394
      %p396 = scmp.ne.s32.totalorder %s388, %s390
      %p397 = scmp.eq.s32.totalorder %s30, 5
      %p398 = por %p396, %p397
      %p399 = scmp.ne.s32.totalorder %s390, %s391
      %p400 = scmp.eq.s32.totalorder %s30, 0
      %p401 = por %p399, %p400
      %p402 = scmp.ne.s32.totalorder %s390, %s391
      %p403 = scmp.eq.s32.totalorder %s31, 5
      %p404 = por %p402, %p403
      %p406 = scmp.ne.s32.totalorder %s391, %s405
      %p407 = scmp.eq.s32.totalorder %s31, 0
      %p408 = por %p406, %p407
      %p409 = scmp.le.s32.totalorder 1, %s25
      %p410 = scmp.lt.s32.totalorder %s25, 7
      %p411 = pnand %p409, %p410
      %p412 = pneg %p411
      // Predicated region
      $region9: #{tpu_custom_call.1} parent=5 // pred_check
        _
      $region10: #{tpu_custom_call.1} parent=5 // pred_check_branch
        %414 = sbr.rel (%p411) target = $region12
      $region11: #{tpu_custom_call.1} parent=5 // pred_region
        %s415 = ssub.s32 %s25, 1
        // Predicated region
        $region13: #{tpu_custom_call.1} parent=11 // pred_check
          %p416 = pneg %p46
        $region14: #{tpu_custom_call.1} parent=11 // pred_check_branch
          %418 = sbr.rel (%p416) target = $region16
        $region15: #{tpu_custom_call.1} parent=11 // pred_region
          %420 = vsyncadd [#allocation4], 0
          %s421 = sshll.u32 %s0, 4
          %s422 = int_to_ptr.hbm [resolvable:$true] %s421
          %s423 = sshll.u32 [#allocation3], 4
          %s424 = int_to_ptr.vmem [resolvable:$true] %s423
          %429 = dma.hbm_to_vmem [thread:$0]  %s422, 896, %s424, [#allocation4], 448, 448, 28
        $region16: #{tpu_custom_call.1} parent=11 // pred_fallthru
          _
        // Predicated region
        $region17: #{tpu_custom_call.1} parent=11 // pred_check
          %p430 = pneg %p67
        $region18: #{tpu_custom_call.1} parent=11 // pred_check_branch
          %432 = sbr.rel (%p430) target = $region20
        $region19: #{tpu_custom_call.1} parent=11 // pred_region
          _
        $region20: #{tpu_custom_call.1} parent=11 // pred_fallthru
          _
        // Predicated region
        $region21: #{tpu_custom_call.1} parent=11 // pred_check
          %p433 = pneg %p88
        $region22: #{tpu_custom_call.1} parent=11 // pred_check_branch
          %435 = sbr.rel (%p433) target = $region24
        $region23: #{tpu_custom_call.1} parent=11 // pred_region
          %437 = vsyncadd [#allocation7], 0
          %s438 = sshll.u32 %s2, 4
          %s439 = int_to_ptr.hbm [resolvable:$true] %s438
          %s440 = sshll.u32 [#allocation6], 4
          %s441 = int_to_ptr.vmem [resolvable:$true] %s440
          %446 = dma.hbm_to_vmem [thread:$0]  %s439, 512, %s441, [#allocation7], 256, 256, 16
        $region24: #{tpu_custom_call.1} parent=11 // pred_fallthru
          _
        // Predicated region
        $region25: #{tpu_custom_call.1} parent=11 // pred_check
          %p447 = pneg %p109
        $region26: #{tpu_custom_call.1} parent=11 // pred_check_branch
          %449 = sbr.rel (%p447) target = $region28
        $region27: #{tpu_custom_call.1} parent=11 // pred_region
          _
        $region28: #{tpu_custom_call.1} parent=11 // pred_fallthru
          _
        // Predicated region
        $region29: #{tpu_custom_call.1} parent=11 // pred_check
          %p450 = pneg %p130
        $region30: #{tpu_custom_call.1} parent=11 // pred_check_branch
          %452 = sbr.rel (%p450) target = $region32
        $region31: #{tpu_custom_call.1} parent=11 // pred_region
          _
        $region32: #{tpu_custom_call.1} parent=11 // pred_fallthru
          _
        // Predicated region
        $region33: #{tpu_custom_call.1} parent=11 // pred_check
          %p453 = pneg %p151
        $region34: #{tpu_custom_call.1} parent=11 // pred_check_branch
          %455 = sbr.rel (%p453) target = $region36
        $region35: #{tpu_custom_call.1} parent=11 // pred_region
          _
        $region36: #{tpu_custom_call.1} parent=11 // pred_fallthru
          _
      $region12: #{tpu_custom_call.1} parent=5 // pred_fallthru
        _
      %p456 = scmp.lt.s32.totalorder %s25, 6
      // Predicated region
      $region37: #{tpu_custom_call.1} parent=5 // pred_check
        %p457 = pneg %p456
      $region38: #{tpu_custom_call.1} parent=5 // pred_check_branch
        %459 = sbr.rel (%p457) target = $region40
      $region39: #{tpu_custom_call.1} parent=5 // pred_region
        // Predicated region
        $region41: #{tpu_custom_call.1} parent=39 // pred_check
          %p460 = pneg %p171
        $region42: #{tpu_custom_call.1} parent=39 // pred_check_branch
          %462 = sbr.rel (%p460) target = $region44
        $region43: #{tpu_custom_call.1} parent=39 // pred_region
          %p463 = scmp.lt.s32.totalorder %s25, 5
          %s464 = scalar_select %p463, %s25, 5
          %s465 = smul.addr %s464, 2
          %s466 = smul.addr %s465, 8
          %s467 = scalar_lea.vmem %s6, %s466
        $region44: #{tpu_custom_call.1} parent=39 // pred_fallthru
          _
        // Predicated region
        $region45: #{tpu_custom_call.1} parent=39 // pred_check
          %p468 = pneg %p197
        $region46: #{tpu_custom_call.1} parent=39 // pred_check_branch
          %470 = sbr.rel (%p468) target = $region48
        $region47: #{tpu_custom_call.1} parent=39 // pred_region
          %p471 = scmp.lt.s32.totalorder %s25, 5
          %s472 = scalar_select %p471, %s25, 5
          %s473 = smul.addr %s472, 56
          %s474 = smul.addr %s473, 4
          %s475 = scalar_lea.vmem %s7, %s474
        $region48: #{tpu_custom_call.1} parent=39 // pred_fallthru
          _
        // Predicated region
        $region49: #{tpu_custom_call.1} parent=39 // pred_check
          %p476 = pneg %p223
        $region50: #{tpu_custom_call.1} parent=39 // pred_check_branch
          %478 = sbr.rel (%p476) target = $region52
        $region51: #{tpu_custom_call.1} parent=39 // pred_region
          %p479 = scmp.lt.s32.totalorder %s25, 5
          %s480 = scalar_select %p479, %s25, 5
          %s481 = smul.addr %s480, 56
          %s482 = smul.addr %s481, 4
          %s483 = scalar_lea.vmem %s8, %s482
        $region52: #{tpu_custom_call.1} parent=39 // pred_fallthru
          _
        // Predicated region
        $region53: #{tpu_custom_call.1} parent=39 // pred_check
          %p484 = pneg %p249
        $region54: #{tpu_custom_call.1} parent=39 // pred_check_branch
          %486 = sbr.rel (%p484) target = $region56
        $region55: #{tpu_custom_call.1} parent=39 // pred_region
          %p487 = scmp.lt.s32.totalorder %s25, 5
          %s488 = scalar_select %p487, %s25, 5
          %s489 = smul.addr %s488, 56
          %s490 = smul.addr %s489, 4
          %s491 = scalar_lea.vmem %s9, %s490
        $region56: #{tpu_custom_call.1} parent=39 // pred_fallthru
          _
        // Predicated region
        $region57: #{tpu_custom_call.1} parent=39 // pred_check
          %p492 = pneg %p275
        $region58: #{tpu_custom_call.1} parent=39 // pred_check_branch
          %494 = sbr.rel (%p492) target = $region60
        $region59: #{tpu_custom_call.1} parent=39 // pred_region
          %p495 = scmp.lt.s32.totalorder %s25, 5
          %s496 = scalar_select %p495, %s25, 5
          %s497 = smul.addr %s496, 56
          %s498 = smul.addr %s497, 4
          %s499 = scalar_lea.vmem %s10, %s498
        $region60: #{tpu_custom_call.1} parent=39 // pred_fallthru
          _
        // Predicated region
        $region61: #{tpu_custom_call.1} parent=39 // pred_check
          %p500 = pneg %p301
        $region62: #{tpu_custom_call.1} parent=39 // pred_check_branch
          %502 = sbr.rel (%p500) target = $region64
        $region63: #{tpu_custom_call.1} parent=39 // pred_region
          %p503 = scmp.lt.s32.totalorder %s25, 5
          %s504 = scalar_select %p503, %s25, 5
          %s505 = smul.addr %s504, 112
          %s506 = smul.addr %s505, 8
          %s507 = scalar_lea.vmem %s11, %s506
        $region64: #{tpu_custom_call.1} parent=39 // pred_fallthru
          _
        // Predicated region
        $region65: #{tpu_custom_call.1} parent=39 // pred_check
          %p508 = pneg %p327
        $region66: #{tpu_custom_call.1} parent=39 // pred_check_branch
          %510 = sbr.rel (%p508) target = $region68
        $region67: #{tpu_custom_call.1} parent=39 // pred_region
          %p511 = scmp.lt.s32.totalorder %s25, 5
          %s512 = scalar_select %p511, %s25, 5
          %s513 = smul.addr %s512, 16
          %s514 = smul.addr %s513, 2
          %s515 = scalar_lea.vmem %s12, %s514
        $region68: #{tpu_custom_call.1} parent=39 // pred_fallthru
          _
        // Predicated region
        $region69: #{tpu_custom_call.1} parent=39 // pred_check
          %p516 = pneg %p353
        $region70: #{tpu_custom_call.1} parent=39 // pred_check_branch
          %518 = sbr.rel (%p516) target = $region72
        $region71: #{tpu_custom_call.1} parent=39 // pred_region
          %p519 = scmp.lt.s32.totalorder %s25, 5
          %s520 = scalar_select %p519, %s25, 5
          %s521 = smul.addr %s520, 128
          %s522 = smul.addr %s521, 8
          %s523 = scalar_lea.vmem %s13, %s522
        $region72: #{tpu_custom_call.1} parent=39 // pred_fallthru
          _
      $region40: #{tpu_custom_call.1} parent=5 // pred_fallthru
        _
      %p524 = scmp.le.s32.totalorder 1, %s25
      %p525 = scmp.lt.s32.totalorder %s25, 7
      %p526 = pnand %p524, %p525
      %p527 = pneg %p526
      // Predicated region
      $region73: #{tpu_custom_call.1} parent=5 // pred_check
        _
      $region74: #{tpu_custom_call.1} parent=5 // pred_check_branch
        %529 = sbr.rel (%p526) target = $region76
      $region75: #{tpu_custom_call.1} parent=5 // pred_region
        %s530 = ssub.s32 %s25, 1
        // Predicated region
        $region77: #{tpu_custom_call.1} parent=75 // pred_check
          %p531 = pneg %p46
        $region78: #{tpu_custom_call.1} parent=75 // pred_check_branch
          %533 = sbr.rel (%p531) target = $region80
        $region79: #{tpu_custom_call.1} parent=75 // pred_region
          %535 = dma.done [#allocation4], 896
        $region80: #{tpu_custom_call.1} parent=75 // pred_fallthru
          _
        // Predicated region
        $region81: #{tpu_custom_call.1} parent=75 // pred_check
          %p536 = pneg %p88
        $region82: #{tpu_custom_call.1} parent=75 // pred_check_branch
          %538 = sbr.rel (%p536) target = $region84
        $region83: #{tpu_custom_call.1} parent=75 // pred_region
          %540 = dma.done [#allocation7], 512
        $region84: #{tpu_custom_call.1} parent=75 // pred_fallthru
          _
        %p541 = pneg %p46
        %p542 = pneg %p43
        %p543 = pneg %p67
        %p544 = pneg %p64
        %p545 = pneg %p88
        %p546 = pneg %p85
        %p547 = pneg %p109
        %p548 = pneg %p106
        %p549 = pneg %p130
        %p550 = pneg %p127
        %p551 = pneg %p151
        %p552 = pneg %p148
        %p553 = scmp.lt.s32.totalorder %s30, 5
        %s554 = scalar_select %p553, %s30, 5
        %s555 = smul.addr %s554, 2
        %s556 = smul.addr %s555, 8
        %s557 = scalar_lea.vmem %s6, %s556
        %p558 = pneg %p177
        %p559 = pneg %p174
        %p560 = scmp.lt.s32.totalorder %s30, 5
        %s561 = scalar_select %p560, %s30, 5
        %s562 = smul.addr %s561, 56
        %s563 = smul.addr %s562, 4
        %s564 = scalar_lea.vmem %s7, %s563
        %p565 = pneg %p203
        %p566 = pneg %p200
        %p567 = scmp.lt.s32.totalorder %s30, 5
        %s568 = scalar_select %p567, %s30, 5
        %s569 = smul.addr %s568, 56
        %s570 = smul.addr %s569, 4
        %s571 = scalar_lea.vmem %s8, %s570
        %p572 = pneg %p229
        %p573 = pneg %p226
        %p574 = scmp.lt.s32.totalorder %s30, 5
        %s575 = scalar_select %p574, %s30, 5
        %s576 = smul.addr %s575, 56
        %s577 = smul.addr %s576, 4
        %s578 = scalar_lea.vmem %s9, %s577
        %p579 = pneg %p255
        %p580 = pneg %p252
        %p581 = scmp.lt.s32.totalorder %s30, 5
        %s582 = scalar_select %p581, %s30, 5
        %s583 = smul.addr %s582, 56
        %s584 = smul.addr %s583, 4
        %s585 = scalar_lea.vmem %s10, %s584
        %p586 = pneg %p281
        %p587 = pneg %p278
        %p588 = scmp.lt.s32.totalorder %s30, 5
        %s589 = scalar_select %p588, %s30, 5
        %s590 = smul.addr %s589, 112
        %s591 = smul.addr %s590, 8
        %s592 = scalar_lea.vmem %s11, %s591
        %p593 = pneg %p307
        %p594 = pneg %p304
        %p595 = scmp.lt.s32.totalorder %s30, 5
        %s596 = scalar_select %p595, %s30, 5
        %s597 = smul.addr %s596, 16
        %s598 = smul.addr %s597, 2
        %s599 = scalar_lea.vmem %s12, %s598
        %p600 = pneg %p333
        %p601 = pneg %p330
        %p602 = scmp.lt.s32.totalorder %s30, 5
        %s603 = scalar_select %p602, %s30, 5
        %s604 = smul.addr %s603, 128
        %s605 = smul.addr %s604, 8
        %s606 = scalar_lea.vmem %s13, %s605
        %p607 = pneg %p359
        %p608 = pneg %p356
        %p609 = pneg %p380
        %p610 = pneg %p377
        %p611 = pneg %p401
        %p612 = pneg %p398
        %p613 = scmp.lt.s32.totalorder %s30, 5
        %s614 = scalar_select %p613, %s30, 5
        %s615 = smul.addr %s614, 2
        %s616 = smul.addr %s615, 8
        %s617 = scalar_lea.vmem %s6, %s616
        %p618 = scmp.lt.s32.totalorder %s30, 5
        %s619 = scalar_select %p618, %s30, 5
        %s620 = smul.addr %s619, 56
        %s621 = smul.addr %s620, 4
        %s622 = scalar_lea.vmem %s7, %s621
        %p623 = scmp.lt.s32.totalorder %s30, 5
        %s624 = scalar_select %p623, %s30, 5
        %s625 = smul.addr %s624, 56
        %s626 = smul.addr %s625, 4
        %s627 = scalar_lea.vmem %s8, %s626
        %p628 = scmp.lt.s32.totalorder %s30, 5
        %s629 = scalar_select %p628, %s30, 5
        %s630 = smul.addr %s629, 56
        %s631 = smul.addr %s630, 4
        %s632 = scalar_lea.vmem %s9, %s631
        %p633 = scmp.lt.s32.totalorder %s30, 5
        %s634 = scalar_select %p633, %s30, 5
        %s635 = smul.addr %s634, 56
        %s636 = smul.addr %s635, 4
        %s637 = scalar_lea.vmem %s10, %s636
        %p638 = scmp.lt.s32.totalorder %s30, 5
        %s639 = scalar_select %p638, %s30, 5
        %s640 = smul.addr %s639, 112
        %s641 = smul.addr %s640, 8
        %s642 = scalar_lea.vmem %s11, %s641
        %p643 = scmp.lt.s32.totalorder %s30, 5
        %s644 = scalar_select %p643, %s30, 5
        %s645 = smul.addr %s644, 16
        %s646 = smul.addr %s645, 2
        %s647 = scalar_lea.vmem %s12, %s646
        %p648 = scmp.lt.s32.totalorder %s30, 5
        %s649 = scalar_select %p648, %s30, 5
        %s650 = smul.addr %s649, 128
        %s651 = smul.addr %s650, 8
        %s652 = scalar_lea.vmem %s13, %s651
        %p654 = scmp.eq.s32.totalorder %s30, 0
        // Predicated region
        $region85: #{tpu_custom_call.1} parent=75 // pred_check
          %p655 = pneg %p654
        $region86: #{tpu_custom_call.1} parent=75 // pred_check_branch
          %657 = sbr.rel (%p655) target = $region88
        $region87: #{tpu_custom_call.1} parent=75 // pred_region
          %v658 = vld [vmem:[#allocation3] sm:$0xff]
          %v659 = vld [vmem:[#allocation3 + $0x8] sm:$0xff]
          %v660 = vld [vmem:[#allocation3 + $0x10] sm:$0xff]
          %v661 = vld [vmem:[#allocation3 + $0x18] sm:$0xf]
          %v662 = vld [vmem:[#allocation3 + $0x1c] sm:$0xff]
          %v663 = vld [vmem:[#allocation3 + $0x24] sm:$0xff]
          %v664 = vld [vmem:[#allocation3 + $0x2c] sm:$0xff]
          %v665 = vld [vmem:[#allocation3 + $0x34] sm:$0xf]
          %v666 = vld [vmem:[%s1] sm:$0xff]
          %v667 = vld [vmem:[%s1 + $0x8] sm:$0xff]
          %v668 = vld [vmem:[%s1 + $0x10] sm:$0xff]
          %v669 = vld [vmem:[%s1 + $0x18] sm:$0xff]
          %v670 = vld [vmem:[%s1 + $0x20] sm:$0xff]
          %v671 = vld [vmem:[%s1 + $0x28] sm:$0xff]
          %v672 = vld [vmem:[%s1 + $0x30] sm:$0xff]
          %v673 = vld [vmem:[%s1 + $0x38] sm:$0xff]
          %v674 = vld [vmem:[%s1 + $0x40] sm:$0xff]
          %v675 = vld [vmem:[%s1 + $0x48] sm:$0xff]
          %v676 = vld [vmem:[%s1 + $0x50] sm:$0xff]
          %v677 = vld [vmem:[%s1 + $0x58] sm:$0xff]
          %v678 = vld [vmem:[%s1 + $0x60] sm:$0xff]
          %v679 = vld [vmem:[%s1 + $0x68] sm:$0xff]
          %v680 = vld [vmem:[%s1 + $0x70] sm:$0xff]
          %v681 = vld [vmem:[%s1 + $0x78] sm:$0xff]
          %v682 = vld [vmem:[%s1 + $0x80] sm:$0xff]
          %v683 = vld [vmem:[%s1 + $0x88] sm:$0xff]
          %v684 = vld [vmem:[%s1 + $0x90] sm:$0xff]
          %v685 = vld [vmem:[%s1 + $0x98] sm:$0xff]
          %v686 = vld [vmem:[%s1 + $0xa0] sm:$0xff]
          %v687 = vld [vmem:[%s1 + $0xa8] sm:$0xff]
          %v688 = vld [vmem:[%s1 + $0xb0] sm:$0xff]
          %v689 = vld [vmem:[%s1 + $0xb8] sm:$0xff]
          %v690 = vld [vmem:[%s1 + $0xc0] sm:$0xff]
          %v691 = vld [vmem:[%s1 + $0xc8] sm:$0xff]
          %v692 = vld [vmem:[%s1 + $0xd0] sm:$0xff]
          %v693 = vld [vmem:[%s1 + $0xd8] sm:$0xff]
          %v694 = vld [vmem:[%s1 + $0xe0] sm:$0xff]
          %v695 = vld [vmem:[%s1 + $0xe8] sm:$0xff]
          %v696 = vld [vmem:[%s1 + $0xf0] sm:$0xff]
          %v697 = vld [vmem:[%s1 + $0xf8] sm:$0xff]
          %v698 = vld [vmem:[%s1 + $0x100] sm:$0xff]
          %v699 = vld [vmem:[%s1 + $0x108] sm:$0xff]
          %v700 = vld [vmem:[%s1 + $0x110] sm:$0xff]
          %v701 = vld [vmem:[%s1 + $0x118] sm:$0xff]
          %v702 = vld [vmem:[%s1 + $0x120] sm:$0xff]
          %v703 = vld [vmem:[%s1 + $0x128] sm:$0xff]
          %v704 = vld [vmem:[%s1 + $0x130] sm:$0xff]
          %v705 = vld [vmem:[%s1 + $0x138] sm:$0xff]
          %v706 = vld [vmem:[%s1 + $0x140] sm:$0xff]
          %v707 = vld [vmem:[%s1 + $0x148] sm:$0xff]
          %v708 = vld [vmem:[%s1 + $0x150] sm:$0xff]
          %v709 = vld [vmem:[%s1 + $0x158] sm:$0xff]
          %v710 = vld [vmem:[%s1 + $0x160] sm:$0xff]
          %v711 = vld [vmem:[%s1 + $0x168] sm:$0xff]
          %v712 = vld [vmem:[%s1 + $0x170] sm:$0xff]
          %v713 = vld [vmem:[%s1 + $0x178] sm:$0xff]
          %v714 = vld [vmem:[%s1 + $0x180] sm:$0xff]
          %v715 = vld [vmem:[%s1 + $0x188] sm:$0xff]
          %v716 = vld [vmem:[%s1 + $0x190] sm:$0xff]
          %v717 = vld [vmem:[%s1 + $0x198] sm:$0xff]
          %v718 = vld [vmem:[%s1 + $0x1a0] sm:$0xff]
          %v719 = vld [vmem:[%s1 + $0x1a8] sm:$0xff]
          %v720 = vld [vmem:[%s1 + $0x1b0] sm:$0xff]
          %v721 = vld [vmem:[%s1 + $0x1b8] sm:$0xff]
          %v722 = vld [vmem:[%s1 + $0x1c0] sm:$0xff]
          %v723 = vld [vmem:[%s1 + $0x1c8] sm:$0xff]
          %v724 = vld [vmem:[%s1 + $0x1d0] sm:$0xff]
          %v725 = vld [vmem:[%s1 + $0x1d8] sm:$0xff]
          %v726 = vld [vmem:[%s1 + $0x1e0] sm:$0xff]
          %v727 = vld [vmem:[%s1 + $0x1e8] sm:$0xff]
          %v728 = vld [vmem:[%s1 + $0x1f0] sm:$0xff]
          %v729 = vld [vmem:[%s1 + $0x1f8] sm:$0xff]
          %v730 = vld [vmem:[%s1 + $0x200] sm:$0xff]
          %v731 = vld [vmem:[%s1 + $0x208] sm:$0xff]
          %v732 = vld [vmem:[%s1 + $0x210] sm:$0xff]
          %v733 = vld [vmem:[%s1 + $0x218] sm:$0xff]
          %v734 = vld [vmem:[%s1 + $0x220] sm:$0xff]
          %v735 = vld [vmem:[%s1 + $0x228] sm:$0xff]
          %v736 = vld [vmem:[%s1 + $0x230] sm:$0xff]
          %v737 = vld [vmem:[%s1 + $0x238] sm:$0xff]
          %v738 = vld [vmem:[%s1 + $0x240] sm:$0xff]
          %v739 = vld [vmem:[%s1 + $0x248] sm:$0xff]
          %v740 = vld [vmem:[%s1 + $0x250] sm:$0xff]
          %v741 = vld [vmem:[%s1 + $0x258] sm:$0xff]
          %v742 = vld [vmem:[%s1 + $0x260] sm:$0xff]
          %v743 = vld [vmem:[%s1 + $0x268] sm:$0xff]
          %v744 = vld [vmem:[%s1 + $0x270] sm:$0xff]
          %v745 = vld [vmem:[%s1 + $0x278] sm:$0xff]
          %v746 = vld [vmem:[%s1 + $0x280] sm:$0xff]
          %v747 = vld [vmem:[%s1 + $0x288] sm:$0xff]
          %v748 = vld [vmem:[%s1 + $0x290] sm:$0xff]
          %v749 = vld [vmem:[%s1 + $0x298] sm:$0xff]
          %v750 = vld [vmem:[%s1 + $0x2a0] sm:$0xff]
          %v751 = vld [vmem:[%s1 + $0x2a8] sm:$0xff]
          %v752 = vld [vmem:[%s1 + $0x2b0] sm:$0xff]
          %v753 = vld [vmem:[%s1 + $0x2b8] sm:$0xff]
          %v754 = vld [vmem:[%s1 + $0x2c0] sm:$0xff]
          %v755 = vld [vmem:[%s1 + $0x2c8] sm:$0xff]
          %v756 = vld [vmem:[%s1 + $0x2d0] sm:$0xff]
          %v757 = vld [vmem:[%s1 + $0x2d8] sm:$0xff]
          %v758 = vld [vmem:[%s1 + $0x2e0] sm:$0xff]
          %v759 = vld [vmem:[%s1 + $0x2e8] sm:$0xff]
          %v760 = vld [vmem:[%s1 + $0x2f0] sm:$0xff]
          %v761 = vld [vmem:[%s1 + $0x2f8] sm:$0xff]
          %v762 = vld [vmem:[%s1 + $0x300] sm:$0xff]
          %v763 = vld [vmem:[%s1 + $0x308] sm:$0xff]
          %v764 = vld [vmem:[#allocation6] sm:$0xff]
          %v765 = vld [vmem:[#allocation6 + $0x8] sm:$0xff]
          %v766 = vld [vmem:[#allocation6 + $0x10] sm:$0xff]
          %v767 = vld [vmem:[#allocation6 + $0x18] sm:$0xff]
          %v776 = vunpack.c.l.b16 %v658
          %v777 = vunpack.c.h.b16 %v658
          %v778 = vunpack.c.l.b16 %v659
          %v779 = vunpack.c.h.b16 %v659
          %v780 = vunpack.c.l.b16 %v660
          %v781 = vunpack.c.h.b16 %v660
          %v782 = vunpack.c.l.b16 %v661
          %v783 = vunpack.c.l.b16 %v662
          %v784 = vunpack.c.h.b16 %v662
          %v785 = vunpack.c.l.b16 %v663
          %v786 = vunpack.c.h.b16 %v663
          %v787 = vunpack.c.l.b16 %v664
          %v788 = vunpack.c.h.b16 %v664
          %v789 = vunpack.c.l.b16 %v665
          %v790 = vpack.c.b16 %v783, %v776
          %v791 = vpack.c.b16 %v784, %v777
          %v792 = vpack.c.b16 %v785, %v778
          %v793 = vpack.c.b16 %v786, %v779
          %v794 = vpack.c.b16 %v787, %v780
          %v795 = vpack.c.b16 %v788, %v781
          %v796 = vpack.c.b16 %v789, %v782
          %v901 = vunpack.c.l.b16 %v666
          %v902 = vunpack.c.h.b16 %v666
          %v903 = vunpack.c.l.b16 %v667
          %v904 = vunpack.c.h.b16 %v667
          %v905 = vunpack.c.l.b16 %v668
          %v906 = vunpack.c.h.b16 %v668
          %v907 = vunpack.c.l.b16 %v669
          %v908 = vunpack.c.h.b16 %v669
          %v909 = vunpack.c.l.b16 %v670
          %v910 = vunpack.c.h.b16 %v670
          %v911 = vunpack.c.l.b16 %v671
          %v912 = vunpack.c.h.b16 %v671
          %v913 = vunpack.c.l.b16 %v672
          %v914 = vunpack.c.h.b16 %v672
          %v915 = vunpack.c.l.b16 %v673
          %v916 = vunpack.c.h.b16 %v673
          %v917 = vunpack.c.l.b16 %v674
          %v918 = vunpack.c.h.b16 %v674
          %v919 = vunpack.c.l.b16 %v675
          %v920 = vunpack.c.h.b16 %v675
          %v921 = vunpack.c.l.b16 %v676
          %v922 = vunpack.c.h.b16 %v676
          %v923 = vunpack.c.l.b16 %v677
          %v924 = vunpack.c.h.b16 %v677
          %v925 = vunpack.c.l.b16 %v678
          %v926 = vunpack.c.h.b16 %v678
          %v927 = vunpack.c.l.b16 %v679
          %v928 = vunpack.c.h.b16 %v679
          %v929 = vunpack.c.l.b16 %v680
          %v930 = vunpack.c.h.b16 %v680
          %v931 = vunpack.c.l.b16 %v681
          %v932 = vunpack.c.h.b16 %v681
          %v933 = vunpack.c.l.b16 %v682
          %v934 = vunpack.c.h.b16 %v682
          %v935 = vunpack.c.l.b16 %v683
          %v936 = vunpack.c.h.b16 %v683
          %v937 = vunpack.c.l.b16 %v684
          %v938 = vunpack.c.h.b16 %v684
          %v939 = vunpack.c.l.b16 %v685
          %v940 = vunpack.c.h.b16 %v685
          %v941 = vunpack.c.l.b16 %v686
          %v942 = vunpack.c.h.b16 %v686
          %v943 = vunpack.c.l.b16 %v687
          %v944 = vunpack.c.h.b16 %v687
          %v945 = vunpack.c.l.b16 %v688
          %v946 = vunpack.c.h.b16 %v688
          %v947 = vunpack.c.l.b16 %v689
          %v948 = vunpack.c.h.b16 %v689
          %v949 = vunpack.c.l.b16 %v690
          %v950 = vunpack.c.h.b16 %v690
          %v951 = vunpack.c.l.b16 %v691
          %v952 = vunpack.c.h.b16 %v691
          %v953 = vunpack.c.l.b16 %v692
          %v954 = vunpack.c.h.b16 %v692
          %v955 = vunpack.c.l.b16 %v693
          %v956 = vunpack.c.h.b16 %v693
          %v957 = vunpack.c.l.b16 %v694
          %v958 = vunpack.c.h.b16 %v694
          %v959 = vunpack.c.l.b16 %v695
          %v960 = vunpack.c.h.b16 %v695
          %v961 = vunpack.c.l.b16 %v696
          %v962 = vunpack.c.h.b16 %v696
          %v963 = vunpack.c.l.b16 %v697
          %v964 = vunpack.c.h.b16 %v697
          %v965 = vunpack.c.l.b16 %v698
          %v966 = vunpack.c.h.b16 %v698
          %v967 = vunpack.c.l.b16 %v699
          %v968 = vunpack.c.h.b16 %v699
          %v969 = vunpack.c.l.b16 %v700
          %v970 = vunpack.c.h.b16 %v700
          %v971 = vunpack.c.l.b16 %v701
          %v972 = vunpack.c.h.b16 %v701
          %v973 = vunpack.c.l.b16 %v702
          %v974 = vunpack.c.h.b16 %v702
          %v975 = vunpack.c.l.b16 %v703
          %v976 = vunpack.c.h.b16 %v703
          %v977 = vunpack.c.l.b16 %v704
          %v978 = vunpack.c.h.b16 %v704
          %v979 = vunpack.c.l.b16 %v705
          %v980 = vunpack.c.h.b16 %v705
          %v981 = vunpack.c.l.b16 %v706
          %v982 = vunpack.c.h.b16 %v706
          %v983 = vunpack.c.l.b16 %v707
          %v984 = vunpack.c.h.b16 %v707
          %v985 = vunpack.c.l.b16 %v708
          %v986 = vunpack.c.h.b16 %v708
          %v987 = vunpack.c.l.b16 %v709
          %v988 = vunpack.c.h.b16 %v709
          %v989 = vunpack.c.l.b16 %v710
          %v990 = vunpack.c.h.b16 %v710
          %v991 = vunpack.c.l.b16 %v711
          %v992 = vunpack.c.h.b16 %v711
          %v993 = vunpack.c.l.b16 %v712
          %v994 = vunpack.c.h.b16 %v712
          %v995 = vunpack.c.l.b16 %v713
          %v996 = vunpack.c.h.b16 %v713
          %v997 = vunpack.c.l.b16 %v714
          %v998 = vunpack.c.h.b16 %v714
          %v999 = vunpack.c.l.b16 %v715
          %v1000 = vunpack.c.h.b16 %v715
          %v1001 = vunpack.c.l.b16 %v716
          %v1002 = vunpack.c.h.b16 %v716
          %v1003 = vunpack.c.l.b16 %v717
          %v1004 = vunpack.c.h.b16 %v717
          %v1005 = vunpack.c.l.b16 %v718
          %v1006 = vunpack.c.h.b16 %v718
          %v1007 = vunpack.c.l.b16 %v719
          %v1008 = vunpack.c.h.b16 %v719
          %v1009 = vunpack.c.l.b16 %v720
          %v1010 = vunpack.c.h.b16 %v720
          %v1011 = vunpack.c.l.b16 %v721
          %v1012 = vunpack.c.h.b16 %v721
          %v1013 = vunpack.c.l.b16 %v722
          %v1014 = vunpack.c.h.b16 %v722
          %v1015 = vunpack.c.l.b16 %v723
          %v1016 = vunpack.c.h.b16 %v723
          %v1017 = vunpack.c.l.b16 %v724
          %v1018 = vunpack.c.h.b16 %v724
          %v1019 = vunpack.c.l.b16 %v725
          %v1020 = vunpack.c.h.b16 %v725
          %v1021 = vunpack.c.l.b16 %v726
          %v1022 = vunpack.c.h.b16 %v726
          %v1023 = vunpack.c.l.b16 %v727
          %v1024 = vunpack.c.h.b16 %v727
          %v1025 = vunpack.c.l.b16 %v728
          %v1026 = vunpack.c.h.b16 %v728
          %v1027 = vunpack.c.l.b16 %v729
          %v1028 = vunpack.c.h.b16 %v729
          %v1029 = vunpack.c.l.b16 %v730
          %v1030 = vunpack.c.h.b16 %v730
          %v1031 = vunpack.c.l.b16 %v731
          %v1032 = vunpack.c.h.b16 %v731
          %v1033 = vunpack.c.l.b16 %v732
          %v1034 = vunpack.c.h.b16 %v732
          %v1035 = vunpack.c.l.b16 %v733
          %v1036 = vunpack.c.h.b16 %v733
          %v1037 = vunpack.c.l.b16 %v734
          %v1038 = vunpack.c.h.b16 %v734
          %v1039 = vunpack.c.l.b16 %v735
          %v1040 = vunpack.c.h.b16 %v735
          %v1041 = vunpack.c.l.b16 %v736
          %v1042 = vunpack.c.h.b16 %v736
          %v1043 = vunpack.c.l.b16 %v737
          %v1044 = vunpack.c.h.b16 %v737
          %v1045 = vunpack.c.l.b16 %v738
          %v1046 = vunpack.c.h.b16 %v738
          %v1047 = vunpack.c.l.b16 %v739
          %v1048 = vunpack.c.h.b16 %v739
          %v1049 = vunpack.c.l.b16 %v740
          %v1050 = vunpack.c.h.b16 %v740
          %v1051 = vunpack.c.l.b16 %v741
          %v1052 = vunpack.c.h.b16 %v741
          %v1053 = vunpack.c.l.b16 %v742
          %v1054 = vunpack.c.h.b16 %v742
          %v1055 = vunpack.c.l.b16 %v743
          %v1056 = vunpack.c.h.b16 %v743
          %v1057 = vunpack.c.l.b16 %v744
          %v1058 = vunpack.c.h.b16 %v744
          %v1059 = vunpack.c.l.b16 %v745
          %v1060 = vunpack.c.h.b16 %v745
          %v1061 = vunpack.c.l.b16 %v746
          %v1062 = vunpack.c.h.b16 %v746
          %v1063 = vunpack.c.l.b16 %v747
          %v1064 = vunpack.c.h.b16 %v747
          %v1065 = vunpack.c.l.b16 %v748
          %v1066 = vunpack.c.h.b16 %v748
          %v1067 = vunpack.c.l.b16 %v749
          %v1068 = vunpack.c.h.b16 %v749
          %v1069 = vunpack.c.l.b16 %v750
          %v1070 = vunpack.c.h.b16 %v750
          %v1071 = vunpack.c.l.b16 %v751
          %v1072 = vunpack.c.h.b16 %v751
          %v1073 = vunpack.c.l.b16 %v752
          %v1074 = vunpack.c.h.b16 %v752
          %v1075 = vunpack.c.l.b16 %v753
          %v1076 = vunpack.c.h.b16 %v753
          %v1077 = vunpack.c.l.b16 %v754
          %v1078 = vunpack.c.h.b16 %v754
          %v1079 = vunpack.c.l.b16 %v755
          %v1080 = vunpack.c.h.b16 %v755
          %v1081 = vunpack.c.l.b16 %v756
          %v1082 = vunpack.c.h.b16 %v756
          %v1083 = vunpack.c.l.b16 %v757
          %v1084 = vunpack.c.h.b16 %v757
          %v1085 = vunpack.c.l.b16 %v758
          %v1086 = vunpack.c.h.b16 %v758
          %v1087 = vunpack.c.l.b16 %v759
          %v1088 = vunpack.c.h.b16 %v759
          %v1089 = vunpack.c.l.b16 %v760
          %v1090 = vunpack.c.h.b16 %v760
          %v1091 = vunpack.c.l.b16 %v761
          %v1092 = vunpack.c.h.b16 %v761
          %v1093 = vunpack.c.l.b16 %v762
          %v1094 = vunpack.c.h.b16 %v762
          %v1095 = vunpack.c.l.b16 %v763
          %v1096 = vunpack.c.h.b16 %v763
          %v1097 = vpack.c.b16 %v903, %v901
          %v1098 = vpack.c.b16 %v904, %v902
          %v1099 = vpack.c.b16 %v907, %v905
          %v1100 = vpack.c.b16 %v908, %v906
          %v1101 = vpack.c.b16 %v911, %v909
          %v1102 = vpack.c.b16 %v912, %v910
          %v1103 = vpack.c.b16 %v915, %v913
          %v1104 = vpack.c.b16 %v916, %v914
          %v1105 = vpack.c.b16 %v919, %v917
          %v1106 = vpack.c.b16 %v920, %v918
          %v1107 = vpack.c.b16 %v923, %v921
          %v1108 = vpack.c.b16 %v924, %v922
          %v1109 = vpack.c.b16 %v927, %v925
          %v1110 = vpack.c.b16 %v928, %v926
          %v1111 = vpack.c.b16 %v931, %v929
          %v1112 = vpack.c.b16 %v932, %v930
          %v1113 = vpack.c.b16 %v935, %v933
          %v1114 = vpack.c.b16 %v936, %v934
          %v1115 = vpack.c.b16 %v939, %v937
          %v1116 = vpack.c.b16 %v940, %v938
          %v1117 = vpack.c.b16 %v943, %v941
          %v1118 = vpack.c.b16 %v944, %v942
          %v1119 = vpack.c.b16 %v947, %v945
          %v1120 = vpack.c.b16 %v948, %v946
          %v1121 = vpack.c.b16 %v951, %v949
          %v1122 = vpack.c.b16 %v952, %v950
          %v1123 = vpack.c.b16 %v955, %v953
          %v1124 = vpack.c.b16 %v956, %v954
          %v1125 = vpack.c.b16 %v959, %v957
          %v1126 = vpack.c.b16 %v960, %v958
          %v1127 = vpack.c.b16 %v963, %v961
          %v1128 = vpack.c.b16 %v964, %v962
          %v1129 = vpack.c.b16 %v967, %v965
          %v1130 = vpack.c.b16 %v968, %v966
          %v1131 = vpack.c.b16 %v971, %v969
          %v1132 = vpack.c.b16 %v972, %v970
          %v1133 = vpack.c.b16 %v975, %v973
          %v1134 = vpack.c.b16 %v976, %v974
          %v1135 = vpack.c.b16 %v979, %v977
          %v1136 = vpack.c.b16 %v980, %v978
          %v1137 = vpack.c.b16 %v983, %v981
          %v1138 = vpack.c.b16 %v984, %v982
          %v1139 = vpack.c.b16 %v987, %v985
          %v1140 = vpack.c.b16 %v988, %v986
          %v1141 = vpack.c.b16 %v991, %v989
          %v1142 = vpack.c.b16 %v992, %v990
          %v1143 = vpack.c.b16 %v995, %v993
          %v1144 = vpack.c.b16 %v996, %v994
          %v1145 = vpack.c.b16 %v999, %v997
          %v1146 = vpack.c.b16 %v1000, %v998
          %v1147 = vpack.c.b16 %v1003, %v1001
          %v1148 = vpack.c.b16 %v1004, %v1002
          %v1149 = vpack.c.b16 %v1007, %v1005
          %v1150 = vpack.c.b16 %v1008, %v1006
          %v1151 = vpack.c.b16 %v1011, %v1009
          %v1152 = vpack.c.b16 %v1012, %v1010
          %v1153 = vpack.c.b16 %v1015, %v1013
          %v1154 = vpack.c.b16 %v1016, %v1014
          %v1155 = vpack.c.b16 %v1019, %v1017
          %v1156 = vpack.c.b16 %v1020, %v1018
          %v1157 = vpack.c.b16 %v1023, %v1021
          %v1158 = vpack.c.b16 %v1024, %v1022
          %v1159 = vpack.c.b16 %v1027, %v1025
          %v1160 = vpack.c.b16 %v1028, %v1026
          %v1161 = vpack.c.b16 %v1031, %v1029
          %v1162 = vpack.c.b16 %v1032, %v1030
          %v1163 = vpack.c.b16 %v1035, %v1033
          %v1164 = vpack.c.b16 %v1036, %v1034
          %v1165 = vpack.c.b16 %v1039, %v1037
          %v1166 = vpack.c.b16 %v1040, %v1038
          %v1167 = vpack.c.b16 %v1043, %v1041
          %v1168 = vpack.c.b16 %v1044, %v1042
          %v1169 = vpack.c.b16 %v1047, %v1045
          %v1170 = vpack.c.b16 %v1048, %v1046
          %v1171 = vpack.c.b16 %v1051, %v1049
          %v1172 = vpack.c.b16 %v1052, %v1050
          %v1173 = vpack.c.b16 %v1055, %v1053
          %v1174 = vpack.c.b16 %v1056, %v1054
          %v1175 = vpack.c.b16 %v1059, %v1057
          %v1176 = vpack.c.b16 %v1060, %v1058
          %v1177 = vpack.c.b16 %v1063, %v1061
          %v1178 = vpack.c.b16 %v1064, %v1062
          %v1179 = vpack.c.b16 %v1067, %v1065
          %v1180 = vpack.c.b16 %v1068, %v1066
          %v1181 = vpack.c.b16 %v1071, %v1069
          %v1182 = vpack.c.b16 %v1072, %v1070
          %v1183 = vpack.c.b16 %v1075, %v1073
          %v1184 = vpack.c.b16 %v1076, %v1074
          %v1185 = vpack.c.b16 %v1079, %v1077
          %v1186 = vpack.c.b16 %v1080, %v1078
          %v1187 = vpack.c.b16 %v1083, %v1081
          %v1188 = vpack.c.b16 %v1084, %v1082
          %v1189 = vpack.c.b16 %v1087, %v1085
          %v1190 = vpack.c.b16 %v1088, %v1086
          %v1191 = vpack.c.b16 %v1091, %v1089
          %v1192 = vpack.c.b16 %v1092, %v1090
          %v1193 = vpack.c.b16 %v1095, %v1093
          %v1194 = vpack.c.b16 %v1096, %v1094
          %vm1293 = vcmask 130048
          %v1295 = vsel %vm1293, %v796, 0
          %1297 = vmatpush.bf16.msra.mxu0 %v1111
          %1298 = vmatpush.bf16.msra.mxu0 %v1109
          %1299 = vmatpush.bf16.msra.mxu0 %v1107
          %1300 = vmatpush.bf16.msra.mxu0 %v1105
          %1301 = vmatpush.bf16.msra.mxu0 %v1103
          %1302 = vmatpush.bf16.msra.mxu0 %v1101
          %1303 = vmatpush.bf16.msra.mxu0 %v1099
          %1304 = vmatpush.bf16.msra.mxu0 %v1097
          %1305 = vmatmul.bf16.gmra.mxu0 %v790
          %v1306 = vpop.f32.mrf.mxu0
          %v1307 = vadd.f32 %v764, %v1306
          %v1308 = vpop.f32.mrf.mxu0
          %v1309 = vadd.f32 %v766, %v1308
          %1310 = vdwg.mxu0
          %1311 = vmatpush.bf16.msra.mxu0 %v1127
          %1312 = vmatpush.bf16.msra.mxu0 %v1125
          %1313 = vmatpush.bf16.msra.mxu0 %v1123
          %1314 = vmatpush.bf16.msra.mxu0 %v1121
          %1315 = vmatpush.bf16.msra.mxu0 %v1119
          %1316 = vmatpush.bf16.msra.mxu0 %v1117
          %1317 = vmatpush.bf16.msra.mxu0 %v1115
          %1318 = vmatpush.bf16.msra.mxu0 %v1113
          %1319 = vmatmul.bf16.gmra.mxu0 %v791
          %v1320 = vpop.f32.mrf.mxu0
          %v1321 = vadd.f32 %v1307, %v1320
          %v1322 = vpop.f32.mrf.mxu0
          %v1323 = vadd.f32 %v1309, %v1322
          %1324 = vdwg.mxu0
          %1325 = vmatpush.bf16.msra.mxu0 %v1143
          %1326 = vmatpush.bf16.msra.mxu0 %v1141
          %1327 = vmatpush.bf16.msra.mxu0 %v1139
          %1328 = vmatpush.bf16.msra.mxu0 %v1137
          %1329 = vmatpush.bf16.msra.mxu0 %v1135
          %1330 = vmatpush.bf16.msra.mxu0 %v1133
          %1331 = vmatpush.bf16.msra.mxu0 %v1131
          %1332 = vmatpush.bf16.msra.mxu0 %v1129
          %1333 = vmatmul.bf16.gmra.mxu0 %v792
          %v1334 = vpop.f32.mrf.mxu0
          %v1335 = vadd.f32 %v1321, %v1334
          %v1336 = vpop.f32.mrf.mxu0
          %v1337 = vadd.f32 %v1323, %v1336
          %1338 = vdwg.mxu0
          %1339 = vmatpush.bf16.msra.mxu0 %v1159
          %1340 = vmatpush.bf16.msra.mxu0 %v1157
          %1341 = vmatpush.bf16.msra.mxu0 %v1155
          %1342 = vmatpush.bf16.msra.mxu0 %v1153
          %1343 = vmatpush.bf16.msra.mxu0 %v1151
          %1344 = vmatpush.bf16.msra.mxu0 %v1149
          %1345 = vmatpush.bf16.msra.mxu0 %v1147
          %1346 = vmatpush.bf16.msra.mxu0 %v1145
          %1347 = vmatmul.bf16.gmra.mxu0 %v793
          %v1348 = vpop.f32.mrf.mxu0
          %v1349 = vadd.f32 %v1335, %v1348
          %v1350 = vpop.f32.mrf.mxu0
          %v1351 = vadd.f32 %v1337, %v1350
          %1352 = vdwg.mxu0
          %1353 = vmatpush.bf16.msra.mxu0 %v1175
          %1354 = vmatpush.bf16.msra.mxu0 %v1173
          %1355 = vmatpush.bf16.msra.mxu0 %v1171
          %1356 = vmatpush.bf16.msra.mxu0 %v1169
          %1357 = vmatpush.bf16.msra.mxu0 %v1167
          %1358 = vmatpush.bf16.msra.mxu0 %v1165
          %1359 = vmatpush.bf16.msra.mxu0 %v1163
          %1360 = vmatpush.bf16.msra.mxu0 %v1161
          %1361 = vmatmul.bf16.gmra.mxu0 %v794
          %v1362 = vpop.f32.mrf.mxu0
          %v1363 = vadd.f32 %v1349, %v1362
          %v1364 = vpop.f32.mrf.mxu0
          %v1365 = vadd.f32 %v1351, %v1364
          %1366 = vdwg.mxu0
          %1367 = vmatpush.bf16.msra.mxu0 %v1191
          %1368 = vmatpush.bf16.msra.mxu0 %v1189
          %1369 = vmatpush.bf16.msra.mxu0 %v1187
          %1370 = vmatpush.bf16.msra.mxu0 %v1185
          %1371 = vmatpush.bf16.msra.mxu0 %v1183
          %1372 = vmatpush.bf16.msra.mxu0 %v1181
          %1373 = vmatpush.bf16.msra.mxu0 %v1179
          %1374 = vmatpush.bf16.msra.mxu0 %v1177
          %1375 = vmatmul.bf16.gmra.mxu0 %v795
          %v1376 = vpop.f32.mrf.mxu0
          %v1377 = vadd.f32 %v1363, %v1376
          %v1378 = vpop.f32.mrf.mxu0
          %v1379 = vadd.f32 %v1365, %v1378
          %1380 = vdwg.mxu0
          %1381 = vmatpush.bf16.msra.mxu0 0
          %1382 = vmatpush.bf16.msra.mxu0 0
          %1383 = vmatpush.bf16.msra.mxu0 0
          %1384 = vmatpush.bf16.msra.mxu0 0
          %1385 = vmatpush.bf16.msra.mxu0 0
          %1386 = vmatpush.bf16.msra.mxu0 0
          %1387 = vmatpush.bf16.msra.mxu0 0
          %1388 = vmatpush.bf16.msra.mxu0 %v1193
          %1389 = vmatmul.bf16.gmra.mxu0 %v1295
          %v1390 = vpop.f32.mrf.mxu0
          %v1391 = vadd.f32 %v1377, %v1390
          %v1392 = vpop.f32.mrf.mxu0
          %v1393 = vadd.f32 %v1379, %v1392
          %1394 = vdwg.mxu0
          %1395 = vmatpush.bf16.msra.mxu0 %v1112
          %1396 = vmatpush.bf16.msra.mxu0 %v1110
          %1397 = vmatpush.bf16.msra.mxu0 %v1108
          %1398 = vmatpush.bf16.msra.mxu0 %v1106
          %1399 = vmatpush.bf16.msra.mxu0 %v1104
          %1400 = vmatpush.bf16.msra.mxu0 %v1102
          %1401 = vmatpush.bf16.msra.mxu0 %v1100
          %1402 = vmatpush.bf16.msra.mxu0 %v1098
          %1403 = vmatmul.bf16.gmra.mxu0 %v790
          %v1404 = vpop.f32.mrf.mxu0
          %v1405 = vadd.f32 %v765, %v1404
          %v1406 = vpop.f32.mrf.mxu0
          %v1407 = vadd.f32 %v767, %v1406
          %1408 = vdwg.mxu0
          %1409 = vmatpush.bf16.msra.mxu0 %v1128
          %1410 = vmatpush.bf16.msra.mxu0 %v1126
          %1411 = vmatpush.bf16.msra.mxu0 %v1124
          %1412 = vmatpush.bf16.msra.mxu0 %v1122
          %1413 = vmatpush.bf16.msra.mxu0 %v1120
          %1414 = vmatpush.bf16.msra.mxu0 %v1118
          %1415 = vmatpush.bf16.msra.mxu0 %v1116
          %1416 = vmatpush.bf16.msra.mxu0 %v1114
          %1417 = vmatmul.bf16.gmra.mxu0 %v791
          %v1418 = vpop.f32.mrf.mxu0
          %v1419 = vadd.f32 %v1405, %v1418
          %v1420 = vpop.f32.mrf.mxu0
          %v1421 = vadd.f32 %v1407, %v1420
          %1422 = vdwg.mxu0
          %1423 = vmatpush.bf16.msra.mxu0 %v1144
          %1424 = vmatpush.bf16.msra.mxu0 %v1142
          %1425 = vmatpush.bf16.msra.mxu0 %v1140
          %1426 = vmatpush.bf16.msra.mxu0 %v1138
          %1427 = vmatpush.bf16.msra.mxu0 %v1136
          %1428 = vmatpush.bf16.msra.mxu0 %v1134
          %1429 = vmatpush.bf16.msra.mxu0 %v1132
          %1430 = vmatpush.bf16.msra.mxu0 %v1130
          %1431 = vmatmul.bf16.gmra.mxu0 %v792
          %v1432 = vpop.f32.mrf.mxu0
          %v1433 = vadd.f32 %v1419, %v1432
          %v1434 = vpop.f32.mrf.mxu0
          %v1435 = vadd.f32 %v1421, %v1434
          %1436 = vdwg.mxu0
          %1437 = vmatpush.bf16.msra.mxu0 %v1160
          %1438 = vmatpush.bf16.msra.mxu0 %v1158
          %1439 = vmatpush.bf16.msra.mxu0 %v1156
          %1440 = vmatpush.bf16.msra.mxu0 %v1154
          %1441 = vmatpush.bf16.msra.mxu0 %v1152
          %1442 = vmatpush.bf16.msra.mxu0 %v1150
          %1443 = vmatpush.bf16.msra.mxu0 %v1148
          %1444 = vmatpush.bf16.msra.mxu0 %v1146
          %1445 = vmatmul.bf16.gmra.mxu0 %v793
          %v1446 = vpop.f32.mrf.mxu0
          %v1447 = vadd.f32 %v1433, %v1446
          %v1448 = vpop.f32.mrf.mxu0
          %v1449 = vadd.f32 %v1435, %v1448
          %1450 = vdwg.mxu0
          %1451 = vmatpush.bf16.msra.mxu0 %v1176
          %1452 = vmatpush.bf16.msra.mxu0 %v1174
          %1453 = vmatpush.bf16.msra.mxu0 %v1172
          %1454 = vmatpush.bf16.msra.mxu0 %v1170
          %1455 = vmatpush.bf16.msra.mxu0 %v1168
          %1456 = vmatpush.bf16.msra.mxu0 %v1166
          %1457 = vmatpush.bf16.msra.mxu0 %v1164
          %1458 = vmatpush.bf16.msra.mxu0 %v1162
          %1459 = vmatmul.bf16.gmra.mxu0 %v794
          %v1460 = vpop.f32.mrf.mxu0
          %v1461 = vadd.f32 %v1447, %v1460
          %v1462 = vpop.f32.mrf.mxu0
          %v1463 = vadd.f32 %v1449, %v1462
          %1464 = vdwg.mxu0
          %1465 = vmatpush.bf16.msra.mxu0 %v1192
          %1466 = vmatpush.bf16.msra.mxu0 %v1190
          %1467 = vmatpush.bf16.msra.mxu0 %v1188
          %1468 = vmatpush.bf16.msra.mxu0 %v1186
          %1469 = vmatpush.bf16.msra.mxu0 %v1184
          %1470 = vmatpush.bf16.msra.mxu0 %v1182
          %1471 = vmatpush.bf16.msra.mxu0 %v1180
          %1472 = vmatpush.bf16.msra.mxu0 %v1178
          %1473 = vmatmul.bf16.gmra.mxu0 %v795
          %v1474 = vpop.f32.mrf.mxu0
          %v1475 = vadd.f32 %v1461, %v1474
          %v1476 = vpop.f32.mrf.mxu0
          %v1477 = vadd.f32 %v1463, %v1476
          %1478 = vdwg.mxu0
          %1479 = vmatpush.bf16.msra.mxu0 0
          %1480 = vmatpush.bf16.msra.mxu0 0
          %1481 = vmatpush.bf16.msra.mxu0 0
          %1482 = vmatpush.bf16.msra.mxu0 0
          %1483 = vmatpush.bf16.msra.mxu0 0
          %1484 = vmatpush.bf16.msra.mxu0 0
          %1485 = vmatpush.bf16.msra.mxu0 0
          %1486 = vmatpush.bf16.msra.mxu0 %v1194
          %1487 = vmatmul.bf16.gmra.mxu0 %v1295
          %v1488 = vpop.f32.mrf.mxu0
          %v1489 = vadd.f32 %v1475, %v1488
          %v1490 = vpop.f32.mrf.mxu0
          %v1491 = vadd.f32 %v1477, %v1490
          %1492 = vdwg.mxu0
          %1493 = vst [vmem:[#allocation2] sm:$0xff] %v1391
          %vm1494 = vcmask 785408
          %1495 = vst.msk [vmem:[#allocation2 + $0x8] sm:$0xff] %vm1494, %v1489
          %1496 = vst [vmem:[#allocation2 + $0x10] sm:$0xff] %v1393
          %1497 = vst.msk [vmem:[#allocation2 + $0x18] sm:$0xff] %vm1494, %v1491
        $region88: #{tpu_custom_call.1} parent=75 // pred_fallthru
          _
        %v1498 = vld [vmem:[#allocation2] sm:$0xff]
        %v1499 = vld [vmem:[#allocation2 + $0x8] sm:$0xff]
        %v1500 = vld [vmem:[#allocation2 + $0x10] sm:$0xff]
        %v1501 = vld [vmem:[#allocation2 + $0x18] sm:$0xff]
        %v1502 = vld [vmem:[%s617] ss:$8 sm:$0x3]
        %s1503 = scalar_lea.vmem %s617, 1
        %v1504 = vld [vmem:[%s1503] ss:$8 sm:$0x3]
        %vm1505 = vcmask 785408
        %v1506 = vsel %vm1505, %v1499, 0.0
        %v1507 = vadd.f32 %v1498, %v1506
        %1508 = vadd.xlane.f32.xlu0 %v1507
        %v1509 = vpop.xlane.xlu0 %1508
        %v1510 = vsel %vm1505, %v1501, 0.0
        %v1511 = vadd.f32 %v1500, %v1510
        %1512 = vadd.xlane.f32.xlu0 %v1511
        %v1513 = vpop.xlane.xlu0 %1512
        %v1514 = vrcp.pop 224.0
        %v1515 = vmul.f32 224.0, %v1514
        %v1516 = vsub.f32 1.0, %v1515
        %v1517 = vmul.f32 %v1514, %v1516
        %v1518 = vadd.f32 %v1514, %v1517
        %vm1519 = vweird.f32 %v1514
        %v1520 = vsel %vm1519, %v1514, %v1518
        %v1521 = vmul.f32 %v1509, %v1520
        %v1522 = vmul.f32 %v1513, %v1520
        %v1523 = vsub.f32 %v1498, %v1521
        %v1524 = vsub.f32 %v1499, %v1521
        %v1525 = vsub.f32 %v1500, %v1522
        %v1526 = vsub.f32 %v1501, %v1522
        %v1527 = vmul.f32 %v1523, %v1523
        %v1528 = vmul.f32 %v1524, %v1524
        %v1529 = vmul.f32 %v1525, %v1525
        %v1530 = vmul.f32 %v1526, %v1526
        %v1531 = vsel %vm1505, %v1528, 0.0
        %v1532 = vadd.f32 %v1527, %v1531
        %1533 = vadd.xlane.f32.xlu0 %v1532
        %v1534 = vpop.xlane.xlu0 %1533
        %v1535 = vsel %vm1505, %v1530, 0.0
        %v1536 = vadd.f32 %v1529, %v1535
        %1537 = vadd.xlane.f32.xlu0 %v1536
        %v1538 = vpop.xlane.xlu0 %1537
        %v1539 = vmul.f32 %v1534, %v1520
        %v1540 = vmul.f32 %v1538, %v1520
        %v1541 = vadd.f32 %v1539, 1e-05
        %v1542 = vadd.f32 %v1540, 1e-05
        %v1543 = vrsqrt.pop %v1541
        %v1544 = vmul.f32 %v1543, %v1541
        %v1545 = vmul.f32 %v1544, %v1543
        %v1546 = vmul.f32 0.5, %v1545
        %v1547 = vsub.f32 1.5, %v1546
        %v1548 = vmul.f32 %v1543, %v1547
        %vm1549 = vweird.f32 %v1541
        %vm1550 = vweird.f32 %v1543
        %vm1551 = vmor %vm1549, %vm1550
        %v1552 = vsel %vm1551, %v1543, %v1548
        %v1553 = vrsqrt.pop %v1542
        %v1554 = vmul.f32 %v1553, %v1542
        %v1555 = vmul.f32 %v1554, %v1553
        %v1556 = vmul.f32 0.5, %v1555
        %v1557 = vsub.f32 1.5, %v1556
        %v1558 = vmul.f32 %v1553, %v1557
        %vm1559 = vweird.f32 %v1542
        %vm1560 = vweird.f32 %v1553
        %vm1561 = vmor %vm1559, %vm1560
        %v1562 = vsel %vm1561, %v1553, %v1558
        %v1563 = vmul.f32 %v1523, %v1552
        %v1564 = vmul.f32 %v1524, %v1552
        %v1565 = vmul.f32 %v1525, %v1562
        %v1566 = vmul.f32 %v1526, %v1562
        %v1568 = vperm.slane %v1502, 0
        %v1569 = vperm.slane %v1502, 1
        %v1572 = vmul.f32 %v1563, %v1568
        %v1573 = vmul.f32 %v1564, %v1569
        %v1574 = vmul.f32 %v1565, %v1568
        %v1575 = vmul.f32 %v1566, %v1569
        %v1577 = vperm.slane %v1504, 0
        %v1578 = vperm.slane %v1504, 1
        %v1581 = vadd.f32 %v1572, %v1577
        %v1582 = vadd.f32 %v1573, %v1578
        %v1583 = vadd.f32 %v1574, %v1577
        %v1584 = vadd.f32 %v1575, %v1578
        %v1585 = vpack.c.bf16 %v1583, %v1581
        %v1586 = vpack.c.bf16 %v1584, %v1582
        %v1587 = vld [vmem:[%s622] sm:$0xff]
        %v1588 = vld [vmem:[%s622 + $0x8] sm:$0xff]
        %v1589 = vld [vmem:[%s622 + $0x10] sm:$0xff]
        %v1590 = vld [vmem:[%s622 + $0x18] sm:$0xff]
        %v1591 = vld [vmem:[%s622 + $0x20] sm:$0xff]
        %v1592 = vld [vmem:[%s622 + $0x28] sm:$0xff]
        %v1593 = vld [vmem:[%s622 + $0x30] sm:$0xff]
        %v1594 = vld [vmem:[%s622 + $0x38] sm:$0xff]
        %v1595 = vld [vmem:[%s622 + $0x40] sm:$0xff]
        %v1596 = vld [vmem:[%s622 + $0x48] sm:$0xff]
        %v1597 = vld [vmem:[%s622 + $0x50] sm:$0xff]
        %v1598 = vld [vmem:[%s622 + $0x58] sm:$0xff]
        %v1599 = vld [vmem:[%s622 + $0x60] sm:$0xff]
        %v1600 = vld [vmem:[%s622 + $0x68] sm:$0xff]
        %v1601 = vld [vmem:[%s622 + $0x70] sm:$0xff]
        %v1602 = vld [vmem:[%s622 + $0x78] sm:$0xff]
        %v1603 = vld [vmem:[%s622 + $0x80] sm:$0xff]
        %v1604 = vld [vmem:[%s622 + $0x88] sm:$0xff]
        %v1605 = vld [vmem:[%s622 + $0x90] sm:$0xff]
        %v1606 = vld [vmem:[%s622 + $0x98] sm:$0xff]
        %v1607 = vld [vmem:[%s622 + $0xa0] sm:$0xff]
        %v1608 = vld [vmem:[%s622 + $0xa8] sm:$0xff]
        %v1609 = vld [vmem:[%s622 + $0xb0] sm:$0xff]
        %v1610 = vld [vmem:[%s622 + $0xb8] sm:$0xff]
        %v1611 = vld [vmem:[%s622 + $0xc0] sm:$0xff]
        %v1612 = vld [vmem:[%s622 + $0xc8] sm:$0xff]
        %v1613 = vld [vmem:[%s622 + $0xd0] sm:$0xff]
        %v1614 = vld [vmem:[%s622 + $0xd8] sm:$0xff]
        %v1643 = vunpack.c.l.b16 %v1587
        %v1644 = vunpack.c.h.b16 %v1587
        %v1645 = vunpack.c.l.b16 %v1588
        %v1646 = vunpack.c.h.b16 %v1588
        %v1647 = vunpack.c.l.b16 %v1589
        %v1648 = vunpack.c.h.b16 %v1589
        %v1649 = vunpack.c.l.b16 %v1590
        %v1650 = vunpack.c.h.b16 %v1590
        %v1651 = vunpack.c.l.b16 %v1591
        %v1652 = vunpack.c.h.b16 %v1591
        %v1653 = vunpack.c.l.b16 %v1592
        %v1654 = vunpack.c.h.b16 %v1592
        %v1655 = vunpack.c.l.b16 %v1593
        %v1656 = vunpack.c.h.b16 %v1593
        %v1657 = vunpack.c.l.b16 %v1594
        %v1658 = vunpack.c.h.b16 %v1594
        %v1659 = vunpack.c.l.b16 %v1595
        %v1660 = vunpack.c.h.b16 %v1595
        %v1661 = vunpack.c.l.b16 %v1596
        %v1662 = vunpack.c.h.b16 %v1596
        %v1663 = vunpack.c.l.b16 %v1597
        %v1664 = vunpack.c.h.b16 %v1597
        %v1665 = vunpack.c.l.b16 %v1598
        %v1666 = vunpack.c.h.b16 %v1598
        %v1667 = vunpack.c.l.b16 %v1599
        %v1668 = vunpack.c.h.b16 %v1599
        %v1669 = vunpack.c.l.b16 %v1600
        %v1670 = vunpack.c.h.b16 %v1600
        %v1671 = vunpack.c.l.b16 %v1601
        %v1672 = vunpack.c.h.b16 %v1601
        %v1673 = vunpack.c.l.b16 %v1602
        %v1674 = vunpack.c.h.b16 %v1602
        %v1675 = vunpack.c.l.b16 %v1603
        %v1676 = vunpack.c.h.b16 %v1603
        %v1677 = vunpack.c.l.b16 %v1604
        %v1678 = vunpack.c.h.b16 %v1604
        %v1679 = vunpack.c.l.b16 %v1605
        %v1680 = vunpack.c.h.b16 %v1605
        %v1681 = vunpack.c.l.b16 %v1606
        %v1682 = vunpack.c.h.b16 %v1606
        %v1683 = vunpack.c.l.b16 %v1607
        %v1684 = vunpack.c.h.b16 %v1607
        %v1685 = vunpack.c.l.b16 %v1608
        %v1686 = vunpack.c.h.b16 %v1608
        %v1687 = vunpack.c.l.b16 %v1609
        %v1688 = vunpack.c.h.b16 %v1609
        %v1689 = vunpack.c.l.b16 %v1610
        %v1690 = vunpack.c.h.b16 %v1610
        %v1691 = vunpack.c.l.b16 %v1611
        %v1692 = vunpack.c.h.b16 %v1611
        %v1693 = vunpack.c.l.b16 %v1612
        %v1694 = vunpack.c.h.b16 %v1612
        %v1695 = vunpack.c.l.b16 %v1613
        %v1696 = vunpack.c.h.b16 %v1613
        %v1697 = vunpack.c.l.b16 %v1614
        %v1698 = vunpack.c.h.b16 %v1614
        %v1699 = vpack.c.b16 %v1645, %v1643
        %v1700 = vpack.c.b16 %v1646, %v1644
        %v1701 = vpack.c.b16 %v1649, %v1647
        %v1702 = vpack.c.b16 %v1650, %v1648
        %v1703 = vpack.c.b16 %v1653, %v1651
        %v1704 = vpack.c.b16 %v1654, %v1652
        %v1705 = vpack.c.b16 %v1657, %v1655
        %v1706 = vpack.c.b16 %v1658, %v1656
        %v1707 = vpack.c.b16 %v1661, %v1659
        %v1708 = vpack.c.b16 %v1662, %v1660
        %v1709 = vpack.c.b16 %v1665, %v1663
        %v1710 = vpack.c.b16 %v1666, %v1664
        %v1711 = vpack.c.b16 %v1669, %v1667
        %v1712 = vpack.c.b16 %v1670, %v1668
        %v1713 = vpack.c.b16 %v1673, %v1671
        %v1714 = vpack.c.b16 %v1674, %v1672
        %v1715 = vpack.c.b16 %v1677, %v1675
        %v1716 = vpack.c.b16 %v1678, %v1676
        %v1717 = vpack.c.b16 %v1681, %v1679
        %v1718 = vpack.c.b16 %v1682, %v1680
        %v1719 = vpack.c.b16 %v1685, %v1683
        %v1720 = vpack.c.b16 %v1686, %v1684
        %v1721 = vpack.c.b16 %v1689, %v1687
        %v1722 = vpack.c.b16 %v1690, %v1688
        %v1723 = vpack.c.b16 %v1693, %v1691
        %v1724 = vpack.c.b16 %v1694, %v1692
        %v1725 = vpack.c.b16 %v1697, %v1695
        %v1726 = vpack.c.b16 %v1698, %v1696
        %v1756 = vsel %vm1505, %v1586, 0
        %1758 = vmatpush.bf16.msra.mxu0 %v1713
        %1759 = vmatpush.bf16.msra.mxu0 %v1711
        %1760 = vmatpush.bf16.msra.mxu0 %v1709
        %1761 = vmatpush.bf16.msra.mxu0 %v1707
        %1762 = vmatpush.bf16.msra.mxu0 %v1705
        %1763 = vmatpush.bf16.msra.mxu0 %v1703
        %1764 = vmatpush.bf16.msra.mxu0 %v1701
        %1765 = vmatpush.bf16.msra.mxu0 %v1699
        %1766 = vmatmul.bf16.gmra.mxu0 %v1585
        %v1767 = vpop.f32.mrf.mxu0
        %v1768 = vadd.f32 0.0, %v1767
        %v1769 = vpop.f32.mrf.mxu0
        %v1770 = vadd.f32 0.0, %v1769
        %1771 = vdwg.mxu0
        %1772 = vmatpush.bf16.msra.mxu0 0
        %1773 = vmatpush.bf16.msra.mxu0 0
        %1774 = vmatpush.bf16.msra.mxu0 %v1725
        %1775 = vmatpush.bf16.msra.mxu0 %v1723
        %1776 = vmatpush.bf16.msra.mxu0 %v1721
        %1777 = vmatpush.bf16.msra.mxu0 %v1719
        %1778 = vmatpush.bf16.msra.mxu0 %v1717
        %1779 = vmatpush.bf16.msra.mxu0 %v1715
        %1780 = vmatmul.bf16.gmra.mxu0 %v1756
        %v1781 = vpop.f32.mrf.mxu0
        %v1782 = vadd.f32 %v1768, %v1781
        %v1783 = vpop.f32.mrf.mxu0
        %v1784 = vadd.f32 %v1770, %v1783
        %1785 = vdwg.mxu0
        %1786 = vmatpush.bf16.msra.mxu0 %v1714
        %1787 = vmatpush.bf16.msra.mxu0 %v1712
        %1788 = vmatpush.bf16.msra.mxu0 %v1710
        %1789 = vmatpush.bf16.msra.mxu0 %v1708
        %1790 = vmatpush.bf16.msra.mxu0 %v1706
        %1791 = vmatpush.bf16.msra.mxu0 %v1704
        %1792 = vmatpush.bf16.msra.mxu0 %v1702
        %1793 = vmatpush.bf16.msra.mxu0 %v1700
        %1794 = vmatmul.bf16.gmra.mxu0 %v1585
        %v1795 = vpop.f32.mrf.mxu0
        %v1796 = vadd.f32 0.0, %v1795
        %v1797 = vpop.f32.mrf.mxu0
        %v1798 = vadd.f32 0.0, %v1797
        %1799 = vdwg.mxu0
        %1800 = vmatpush.bf16.msra.mxu0 0
        %1801 = vmatpush.bf16.msra.mxu0 0
        %1802 = vmatpush.bf16.msra.mxu0 %v1726
        %1803 = vmatpush.bf16.msra.mxu0 %v1724
        %1804 = vmatpush.bf16.msra.mxu0 %v1722
        %1805 = vmatpush.bf16.msra.mxu0 %v1720
        %1806 = vmatpush.bf16.msra.mxu0 %v1718
        %1807 = vmatpush.bf16.msra.mxu0 %v1716
        %1808 = vmatmul.bf16.gmra.mxu0 %v1756
        %v1809 = vpop.f32.mrf.mxu0
        %v1810 = vadd.f32 %v1796, %v1809
        %v1811 = vpop.f32.mrf.mxu0
        %v1812 = vadd.f32 %v1798, %v1811
        %1813 = vdwg.mxu0
        %v1814 = vld [vmem:[%s627] sm:$0xff]
        %v1815 = vld [vmem:[%s627 + $0x8] sm:$0xff]
        %v1816 = vld [vmem:[%s627 + $0x10] sm:$0xff]
        %v1817 = vld [vmem:[%s627 + $0x18] sm:$0xff]
        %v1818 = vld [vmem:[%s627 + $0x20] sm:$0xff]
        %v1819 = vld [vmem:[%s627 + $0x28] sm:$0xff]
        %v1820 = vld [vmem:[%s627 + $0x30] sm:$0xff]
        %v1821 = vld [vmem:[%s627 + $0x38] sm:$0xff]
        %v1822 = vld [vmem:[%s627 + $0x40] sm:$0xff]
        %v1823 = vld [vmem:[%s627 + $0x48] sm:$0xff]
        %v1824 = vld [vmem:[%s627 + $0x50] sm:$0xff]
        %v1825 = vld [vmem:[%s627 + $0x58] sm:$0xff]
        %v1826 = vld [vmem:[%s627 + $0x60] sm:$0xff]
        %v1827 = vld [vmem:[%s627 + $0x68] sm:$0xff]
        %v1828 = vld [vmem:[%s627 + $0x70] sm:$0xff]
        %v1829 = vld [vmem:[%s627 + $0x78] sm:$0xff]
        %v1830 = vld [vmem:[%s627 + $0x80] sm:$0xff]
        %v1831 = vld [vmem:[%s627 + $0x88] sm:$0xff]
        %v1832 = vld [vmem:[%s627 + $0x90] sm:$0xff]
        %v1833 = vld [vmem:[%s627 + $0x98] sm:$0xff]
        %v1834 = vld [vmem:[%s627 + $0xa0] sm:$0xff]
        %v1835 = vld [vmem:[%s627 + $0xa8] sm:$0xff]
        %v1836 = vld [vmem:[%s627 + $0xb0] sm:$0xff]
        %v1837 = vld [vmem:[%s627 + $0xb8] sm:$0xff]
        %v1838 = vld [vmem:[%s627 + $0xc0] sm:$0xff]
        %v1839 = vld [vmem:[%s627 + $0xc8] sm:$0xff]
        %v1840 = vld [vmem:[%s627 + $0xd0] sm:$0xff]
        %v1841 = vld [vmem:[%s627 + $0xd8] sm:$0xff]
        %v1870 = vunpack.c.l.b16 %v1814
        %v1871 = vunpack.c.h.b16 %v1814
        %v1872 = vunpack.c.l.b16 %v1815
        %v1873 = vunpack.c.h.b16 %v1815
        %v1874 = vunpack.c.l.b16 %v1816
        %v1875 = vunpack.c.h.b16 %v1816
        %v1876 = vunpack.c.l.b16 %v1817
        %v1877 = vunpack.c.h.b16 %v1817
        %v1878 = vunpack.c.l.b16 %v1818
        %v1879 = vunpack.c.h.b16 %v1818
        %v1880 = vunpack.c.l.b16 %v1819
        %v1881 = vunpack.c.h.b16 %v1819
        %v1882 = vunpack.c.l.b16 %v1820
        %v1883 = vunpack.c.h.b16 %v1820
        %v1884 = vunpack.c.l.b16 %v1821
        %v1885 = vunpack.c.h.b16 %v1821
        %v1886 = vunpack.c.l.b16 %v1822
        %v1887 = vunpack.c.h.b16 %v1822
        %v1888 = vunpack.c.l.b16 %v1823
        %v1889 = vunpack.c.h.b16 %v1823
        %v1890 = vunpack.c.l.b16 %v1824
        %v1891 = vunpack.c.h.b16 %v1824
        %v1892 = vunpack.c.l.b16 %v1825
        %v1893 = vunpack.c.h.b16 %v1825
        %v1894 = vunpack.c.l.b16 %v1826
        %v1895 = vunpack.c.h.b16 %v1826
        %v1896 = vunpack.c.l.b16 %v1827
        %v1897 = vunpack.c.h.b16 %v1827
        %v1898 = vunpack.c.l.b16 %v1828
        %v1899 = vunpack.c.h.b16 %v1828
        %v1900 = vunpack.c.l.b16 %v1829
        %v1901 = vunpack.c.h.b16 %v1829
        %v1902 = vunpack.c.l.b16 %v1830
        %v1903 = vunpack.c.h.b16 %v1830
        %v1904 = vunpack.c.l.b16 %v1831
        %v1905 = vunpack.c.h.b16 %v1831
        %v1906 = vunpack.c.l.b16 %v1832
        %v1907 = vunpack.c.h.b16 %v1832
        %v1908 = vunpack.c.l.b16 %v1833
        %v1909 = vunpack.c.h.b16 %v1833
        %v1910 = vunpack.c.l.b16 %v1834
        %v1911 = vunpack.c.h.b16 %v1834
        %v1912 = vunpack.c.l.b16 %v1835
        %v1913 = vunpack.c.h.b16 %v1835
        %v1914 = vunpack.c.l.b16 %v1836
        %v1915 = vunpack.c.h.b16 %v1836
        %v1916 = vunpack.c.l.b16 %v1837
        %v1917 = vunpack.c.h.b16 %v1837
        %v1918 = vunpack.c.l.b16 %v1838
        %v1919 = vunpack.c.h.b16 %v1838
        %v1920 = vunpack.c.l.b16 %v1839
        %v1921 = vunpack.c.h.b16 %v1839
        %v1922 = vunpack.c.l.b16 %v1840
        %v1923 = vunpack.c.h.b16 %v1840
        %v1924 = vunpack.c.l.b16 %v1841
        %v1925 = vunpack.c.h.b16 %v1841
        %v1926 = vpack.c.b16 %v1872, %v1870
        %v1927 = vpack.c.b16 %v1873, %v1871
        %v1928 = vpack.c.b16 %v1876, %v1874
        %v1929 = vpack.c.b16 %v1877, %v1875
        %v1930 = vpack.c.b16 %v1880, %v1878
        %v1931 = vpack.c.b16 %v1881, %v1879
        %v1932 = vpack.c.b16 %v1884, %v1882
        %v1933 = vpack.c.b16 %v1885, %v1883
        %v1934 = vpack.c.b16 %v1888, %v1886
        %v1935 = vpack.c.b16 %v1889, %v1887
        %v1936 = vpack.c.b16 %v1892, %v1890
        %v1937 = vpack.c.b16 %v1893, %v1891
        %v1938 = vpack.c.b16 %v1896, %v1894
        %v1939 = vpack.c.b16 %v1897, %v1895
        %v1940 = vpack.c.b16 %v1900, %v1898
        %v1941 = vpack.c.b16 %v1901, %v1899
        %v1942 = vpack.c.b16 %v1904, %v1902
        %v1943 = vpack.c.b16 %v1905, %v1903
        %v1944 = vpack.c.b16 %v1908, %v1906
        %v1945 = vpack.c.b16 %v1909, %v1907
        %v1946 = vpack.c.b16 %v1912, %v1910
        %v1947 = vpack.c.b16 %v1913, %v1911
        %v1948 = vpack.c.b16 %v1916, %v1914
        %v1949 = vpack.c.b16 %v1917, %v1915
        %v1950 = vpack.c.b16 %v1920, %v1918
        %v1951 = vpack.c.b16 %v1921, %v1919
        %v1952 = vpack.c.b16 %v1924, %v1922
        %v1953 = vpack.c.b16 %v1925, %v1923
        %1982 = vmatpush.bf16.msra.mxu0 %v1940
        %1983 = vmatpush.bf16.msra.mxu0 %v1938
        %1984 = vmatpush.bf16.msra.mxu0 %v1936
        %1985 = vmatpush.bf16.msra.mxu0 %v1934
        %1986 = vmatpush.bf16.msra.mxu0 %v1932
        %1987 = vmatpush.bf16.msra.mxu0 %v1930
        %1988 = vmatpush.bf16.msra.mxu0 %v1928
        %1989 = vmatpush.bf16.msra.mxu0 %v1926
        %1990 = vmatmul.bf16.gmra.mxu0 %v1585
        %v1991 = vpop.f32.mrf.mxu0
        %v1992 = vadd.f32 0.0, %v1991
        %v1993 = vpop.f32.mrf.mxu0
        %v1994 = vadd.f32 0.0, %v1993
        %1995 = vdwg.mxu0
        %1996 = vmatpush.bf16.msra.mxu0 0
        %1997 = vmatpush.bf16.msra.mxu0 0
        %1998 = vmatpush.bf16.msra.mxu0 %v1952
        %1999 = vmatpush.bf16.msra.mxu0 %v1950
        %2000 = vmatpush.bf16.msra.mxu0 %v1948
        %2001 = vmatpush.bf16.msra.mxu0 %v1946
        %2002 = vmatpush.bf16.msra.mxu0 %v1944
        %2003 = vmatpush.bf16.msra.mxu0 %v1942
        %2004 = vmatmul.bf16.gmra.mxu0 %v1756
        %v2005 = vpop.f32.mrf.mxu0
        %v2006 = vadd.f32 %v1992, %v2005
        %v2007 = vpop.f32.mrf.mxu0
        %v2008 = vadd.f32 %v1994, %v2007
        %2009 = vdwg.mxu0
        %2010 = vmatpush.bf16.msra.mxu0 %v1941
        %2011 = vmatpush.bf16.msra.mxu0 %v1939
        %2012 = vmatpush.bf16.msra.mxu0 %v1937
        %2013 = vmatpush.bf16.msra.mxu0 %v1935
        %2014 = vmatpush.bf16.msra.mxu0 %v1933
        %2015 = vmatpush.bf16.msra.mxu0 %v1931
        %2016 = vmatpush.bf16.msra.mxu0 %v1929
        %2017 = vmatpush.bf16.msra.mxu0 %v1927
        %2018 = vmatmul.bf16.gmra.mxu0 %v1585
        %v2019 = vpop.f32.mrf.mxu0
        %v2020 = vadd.f32 0.0, %v2019
        %v2021 = vpop.f32.mrf.mxu0
        %v2022 = vadd.f32 0.0, %v2021
        %2023 = vdwg.mxu0
        %2024 = vmatpush.bf16.msra.mxu0 0
        %2025 = vmatpush.bf16.msra.mxu0 0
        %2026 = vmatpush.bf16.msra.mxu0 %v1953
        %2027 = vmatpush.bf16.msra.mxu0 %v1951
        %2028 = vmatpush.bf16.msra.mxu0 %v1949
        %2029 = vmatpush.bf16.msra.mxu0 %v1947
        %2030 = vmatpush.bf16.msra.mxu0 %v1945
        %2031 = vmatpush.bf16.msra.mxu0 %v1943
        %2032 = vmatmul.bf16.gmra.mxu0 %v1756
        %v2033 = vpop.f32.mrf.mxu0
        %v2034 = vadd.f32 %v2020, %v2033
        %v2035 = vpop.f32.mrf.mxu0
        %v2036 = vadd.f32 %v2022, %v2035
        %2037 = vdwg.mxu0
        %v2038 = vld [vmem:[%s632] sm:$0xff]
        %v2039 = vld [vmem:[%s632 + $0x8] sm:$0xff]
        %v2040 = vld [vmem:[%s632 + $0x10] sm:$0xff]
        %v2041 = vld [vmem:[%s632 + $0x18] sm:$0xff]
        %v2042 = vld [vmem:[%s632 + $0x20] sm:$0xff]
        %v2043 = vld [vmem:[%s632 + $0x28] sm:$0xff]
        %v2044 = vld [vmem:[%s632 + $0x30] sm:$0xff]
        %v2045 = vld [vmem:[%s632 + $0x38] sm:$0xff]
        %v2046 = vld [vmem:[%s632 + $0x40] sm:$0xff]
        %v2047 = vld [vmem:[%s632 + $0x48] sm:$0xff]
        %v2048 = vld [vmem:[%s632 + $0x50] sm:$0xff]
        %v2049 = vld [vmem:[%s632 + $0x58] sm:$0xff]
        %v2050 = vld [vmem:[%s632 + $0x60] sm:$0xff]
        %v2051 = vld [vmem:[%s632 + $0x68] sm:$0xff]
        %v2052 = vld [vmem:[%s632 + $0x70] sm:$0xff]
        %v2053 = vld [vmem:[%s632 + $0x78] sm:$0xff]
        %v2054 = vld [vmem:[%s632 + $0x80] sm:$0xff]
        %v2055 = vld [vmem:[%s632 + $0x88] sm:$0xff]
        %v2056 = vld [vmem:[%s632 + $0x90] sm:$0xff]
        %v2057 = vld [vmem:[%s632 + $0x98] sm:$0xff]
        %v2058 = vld [vmem:[%s632 + $0xa0] sm:$0xff]
        %v2059 = vld [vmem:[%s632 + $0xa8] sm:$0xff]
        %v2060 = vld [vmem:[%s632 + $0xb0] sm:$0xff]
        %v2061 = vld [vmem:[%s632 + $0xb8] sm:$0xff]
        %v2062 = vld [vmem:[%s632 + $0xc0] sm:$0xff]
        %v2063 = vld [vmem:[%s632 + $0xc8] sm:$0xff]
        %v2064 = vld [vmem:[%s632 + $0xd0] sm:$0xff]
        %v2065 = vld [vmem:[%s632 + $0xd8] sm:$0xff]
        %v2094 = vunpack.c.l.b16 %v2038
        %v2095 = vunpack.c.h.b16 %v2038
        %v2096 = vunpack.c.l.b16 %v2039
        %v2097 = vunpack.c.h.b16 %v2039
        %v2098 = vunpack.c.l.b16 %v2040
        %v2099 = vunpack.c.h.b16 %v2040
        %v2100 = vunpack.c.l.b16 %v2041
        %v2101 = vunpack.c.h.b16 %v2041
        %v2102 = vunpack.c.l.b16 %v2042
        %v2103 = vunpack.c.h.b16 %v2042
        %v2104 = vunpack.c.l.b16 %v2043
        %v2105 = vunpack.c.h.b16 %v2043
        %v2106 = vunpack.c.l.b16 %v2044
        %v2107 = vunpack.c.h.b16 %v2044
        %v2108 = vunpack.c.l.b16 %v2045
        %v2109 = vunpack.c.h.b16 %v2045
        %v2110 = vunpack.c.l.b16 %v2046
        %v2111 = vunpack.c.h.b16 %v2046
        %v2112 = vunpack.c.l.b16 %v2047
        %v2113 = vunpack.c.h.b16 %v2047
        %v2114 = vunpack.c.l.b16 %v2048
        %v2115 = vunpack.c.h.b16 %v2048
        %v2116 = vunpack.c.l.b16 %v2049
        %v2117 = vunpack.c.h.b16 %v2049
        %v2118 = vunpack.c.l.b16 %v2050
        %v2119 = vunpack.c.h.b16 %v2050
        %v2120 = vunpack.c.l.b16 %v2051
        %v2121 = vunpack.c.h.b16 %v2051
        %v2122 = vunpack.c.l.b16 %v2052
        %v2123 = vunpack.c.h.b16 %v2052
        %v2124 = vunpack.c.l.b16 %v2053
        %v2125 = vunpack.c.h.b16 %v2053
        %v2126 = vunpack.c.l.b16 %v2054
        %v2127 = vunpack.c.h.b16 %v2054
        %v2128 = vunpack.c.l.b16 %v2055
        %v2129 = vunpack.c.h.b16 %v2055
        %v2130 = vunpack.c.l.b16 %v2056
        %v2131 = vunpack.c.h.b16 %v2056
        %v2132 = vunpack.c.l.b16 %v2057
        %v2133 = vunpack.c.h.b16 %v2057
        %v2134 = vunpack.c.l.b16 %v2058
        %v2135 = vunpack.c.h.b16 %v2058
        %v2136 = vunpack.c.l.b16 %v2059
        %v2137 = vunpack.c.h.b16 %v2059
        %v2138 = vunpack.c.l.b16 %v2060
        %v2139 = vunpack.c.h.b16 %v2060
        %v2140 = vunpack.c.l.b16 %v2061
        %v2141 = vunpack.c.h.b16 %v2061
        %v2142 = vunpack.c.l.b16 %v2062
        %v2143 = vunpack.c.h.b16 %v2062
        %v2144 = vunpack.c.l.b16 %v2063
        %v2145 = vunpack.c.h.b16 %v2063
        %v2146 = vunpack.c.l.b16 %v2064
        %v2147 = vunpack.c.h.b16 %v2064
        %v2148 = vunpack.c.l.b16 %v2065
        %v2149 = vunpack.c.h.b16 %v2065
        %v2150 = vpack.c.b16 %v2096, %v2094
        %v2151 = vpack.c.b16 %v2097, %v2095
        %v2152 = vpack.c.b16 %v2100, %v2098
        %v2153 = vpack.c.b16 %v2101, %v2099
        %v2154 = vpack.c.b16 %v2104, %v2102
        %v2155 = vpack.c.b16 %v2105, %v2103
        %v2156 = vpack.c.b16 %v2108, %v2106
        %v2157 = vpack.c.b16 %v2109, %v2107
        %v2158 = vpack.c.b16 %v2112, %v2110
        %v2159 = vpack.c.b16 %v2113, %v2111
        %v2160 = vpack.c.b16 %v2116, %v2114
        %v2161 = vpack.c.b16 %v2117, %v2115
        %v2162 = vpack.c.b16 %v2120, %v2118
        %v2163 = vpack.c.b16 %v2121, %v2119
        %v2164 = vpack.c.b16 %v2124, %v2122
        %v2165 = vpack.c.b16 %v2125, %v2123
        %v2166 = vpack.c.b16 %v2128, %v2126
        %v2167 = vpack.c.b16 %v2129, %v2127
        %v2168 = vpack.c.b16 %v2132, %v2130
        %v2169 = vpack.c.b16 %v2133, %v2131
        %v2170 = vpack.c.b16 %v2136, %v2134
        %v2171 = vpack.c.b16 %v2137, %v2135
        %v2172 = vpack.c.b16 %v2140, %v2138
        %v2173 = vpack.c.b16 %v2141, %v2139
        %v2174 = vpack.c.b16 %v2144, %v2142
        %v2175 = vpack.c.b16 %v2145, %v2143
        %v2176 = vpack.c.b16 %v2148, %v2146
        %v2177 = vpack.c.b16 %v2149, %v2147
        %2206 = vmatpush.bf16.msra.mxu0 %v2164
        %2207 = vmatpush.bf16.msra.mxu0 %v2162
        %2208 = vmatpush.bf16.msra.mxu0 %v2160
        %2209 = vmatpush.bf16.msra.mxu0 %v2158
        %2210 = vmatpush.bf16.msra.mxu0 %v2156
        %2211 = vmatpush.bf16.msra.mxu0 %v2154
        %2212 = vmatpush.bf16.msra.mxu0 %v2152
        %2213 = vmatpush.bf16.msra.mxu0 %v2150
        %2214 = vmatmul.bf16.gmra.mxu0 %v1585
        %v2215 = vpop.f32.mrf.mxu0
        %v2216 = vadd.f32 0.0, %v2215
        %v2217 = vpop.f32.mrf.mxu0
        %v2218 = vadd.f32 0.0, %v2217
        %2219 = vdwg.mxu0
        %2220 = vmatpush.bf16.msra.mxu0 0
        %2221 = vmatpush.bf16.msra.mxu0 0
        %2222 = vmatpush.bf16.msra.mxu0 %v2176
        %2223 = vmatpush.bf16.msra.mxu0 %v2174
        %2224 = vmatpush.bf16.msra.mxu0 %v2172
        %2225 = vmatpush.bf16.msra.mxu0 %v2170
        %2226 = vmatpush.bf16.msra.mxu0 %v2168
        %2227 = vmatpush.bf16.msra.mxu0 %v2166
        %2228 = vmatmul.bf16.gmra.mxu0 %v1756
        %v2229 = vpop.f32.mrf.mxu0
        %v2230 = vadd.f32 %v2216, %v2229
        %v2231 = vpop.f32.mrf.mxu0
        %v2232 = vadd.f32 %v2218, %v2231
        %2233 = vdwg.mxu0
        %2234 = vmatpush.bf16.msra.mxu0 %v2165
        %2235 = vmatpush.bf16.msra.mxu0 %v2163
        %2236 = vmatpush.bf16.msra.mxu0 %v2161
        %2237 = vmatpush.bf16.msra.mxu0 %v2159
        %2238 = vmatpush.bf16.msra.mxu0 %v2157
        %2239 = vmatpush.bf16.msra.mxu0 %v2155
        %2240 = vmatpush.bf16.msra.mxu0 %v2153
        %2241 = vmatpush.bf16.msra.mxu0 %v2151
        %2242 = vmatmul.bf16.gmra.mxu0 %v1585
        %v2243 = vpop.f32.mrf.mxu0
        %v2244 = vadd.f32 0.0, %v2243
        %v2245 = vpop.f32.mrf.mxu0
        %v2246 = vadd.f32 0.0, %v2245
        %2247 = vdwg.mxu0
        %2248 = vmatpush.bf16.msra.mxu0 0
        %2249 = vmatpush.bf16.msra.mxu0 0
        %2250 = vmatpush.bf16.msra.mxu0 %v2177
        %2251 = vmatpush.bf16.msra.mxu0 %v2175
        %2252 = vmatpush.bf16.msra.mxu0 %v2173
        %2253 = vmatpush.bf16.msra.mxu0 %v2171
        %2254 = vmatpush.bf16.msra.mxu0 %v2169
        %2255 = vmatpush.bf16.msra.mxu0 %v2167
        %2256 = vmatmul.bf16.gmra.mxu0 %v1756
        %v2257 = vpop.f32.mrf.mxu0
        %v2258 = vadd.f32 %v2244, %v2257
        %v2259 = vpop.f32.mrf.mxu0
        %v2260 = vadd.f32 %v2246, %v2259
        %2261 = vdwg.mxu0
        %2264 = vrot.lane.b32.xlu0 %v1782, 100
        %v2265 = vpop.permute.xlu0 %2264
        %2266 = vrot.lane.b32.xlu0 %v1784, 100
        %v2267 = vpop.permute.xlu0 %2266
        %2270 = vrot.lane.b32.xlu0 %v1782, 72
        %v2271 = vpop.permute.xlu0 %2270
        %2272 = vrot.lane.b32.xlu0 %v1784, 72
        %v2273 = vpop.permute.xlu0 %2272
        %2276 = vrot.lane.b32.xlu0 %v1782, 44
        %v2277 = vpop.permute.xlu0 %2276
        %2278 = vrot.lane.b32.xlu0 %v1784, 44
        %v2279 = vpop.permute.xlu0 %2278
        %2284 = vrot.lane.b32.xlu0 %v1782, 16
        %v2285 = vpop.permute.xlu0 %2284
        %2286 = vrot.lane.b32.xlu0 %v1810, 16
        %v2287 = vpop.permute.xlu0 %2286
        %2288 = vrot.lane.b32.xlu0 %v1784, 16
        %v2289 = vpop.permute.xlu0 %2288
        %2290 = vrot.lane.b32.xlu0 %v1812, 16
        %v2291 = vpop.permute.xlu0 %2290
        %vm2292 = vcmask 130048
        %v2293 = vsel %vm2292, %v2285, %v2287
        %v2294 = vsel %vm2292, %v2289, %v2291
        %2297 = vrot.lane.b32.xlu0 %v1810, 116
        %v2298 = vpop.permute.xlu0 %2297
        %2299 = vrot.lane.b32.xlu0 %v1812, 116
        %v2300 = vpop.permute.xlu0 %2299
        %2303 = vrot.lane.b32.xlu0 %v1810, 88
        %v2304 = vpop.permute.xlu0 %2303
        %2305 = vrot.lane.b32.xlu0 %v1812, 88
        %v2306 = vpop.permute.xlu0 %2305
        %2309 = vrot.lane.b32.xlu0 %v1810, 60
        %v2310 = vpop.permute.xlu0 %2309
        %2311 = vrot.lane.b32.xlu0 %v1812, 60
        %v2312 = vpop.permute.xlu0 %2311
        %v2315 = vrot.slane %v2271, 4
        %vm2316 = vcmask 1047556
        %v2317 = vsel %vm2316, %v2315, %v1782
        %v2318 = vrot.slane %v1782, 4
        %v2319 = vsel %vm2316, %v2271, %v2318
        %v2321 = vunpack.c.l.s4 1983009808
        %v2322 = vunpack.c.0.s8 %v2321
        %v2323 = vperm.slane %v2317, %v2322
        %v2325 = vunpack.c.l.s4 1983009808
        %v2326 = vunpack.c.0.s8 %v2325
        %v2327 = vperm.slane %v2319, %v2326
        %v2328 = vrot.slane %v2277, 4
        %v2329 = vsel %vm2316, %v2328, %v2265
        %v2330 = vrot.slane %v2265, 4
        %v2331 = vsel %vm2316, %v2277, %v2330
        %v2333 = vunpack.c.l.s4 1983009808
        %v2334 = vunpack.c.0.s8 %v2333
        %v2335 = vperm.slane %v2329, %v2334
        %v2337 = vunpack.c.l.s4 1983009808
        %v2338 = vunpack.c.0.s8 %v2337
        %v2339 = vperm.slane %v2331, %v2338
        %v2340 = vrot.slane %v2304, 4
        %v2341 = vsel %vm2316, %v2340, %v2293
        %v2342 = vrot.slane %v2293, 4
        %v2343 = vsel %vm2316, %v2304, %v2342
        %v2345 = vunpack.c.l.s4 1983009808
        %v2346 = vunpack.c.0.s8 %v2345
        %v2347 = vperm.slane %v2341, %v2346
        %v2349 = vunpack.c.l.s4 1983009808
        %v2350 = vunpack.c.0.s8 %v2349
        %v2351 = vperm.slane %v2343, %v2350
        %v2352 = vrot.slane %v2310, 4
        %v2353 = vsel %vm2316, %v2352, %v2298
        %v2354 = vrot.slane %v2298, 4
        %v2355 = vsel %vm2316, %v2310, %v2354
        %v2357 = vunpack.c.l.s4 1983009808
        %v2358 = vunpack.c.0.s8 %v2357
        %v2359 = vperm.slane %v2353, %v2358
        %v2361 = vunpack.c.l.s4 1983009808
        %v2362 = vunpack.c.0.s8 %v2361
        %v2363 = vperm.slane %v2355, %v2362
        %v2364 = vrot.slane %v2335, 4
        %v2365 = vsel %vm2316, %v2364, %v2323
        %v2366 = vrot.slane %v2323, 4
        %v2367 = vsel %vm2316, %v2335, %v2366
        %v2369 = vunpack.c.l.s4 1934713408
        %v2370 = vunpack.c.0.s8 %v2369
        %v2371 = vperm.slane %v2365, %v2370
        %v2373 = vunpack.c.l.s4 1934713408
        %v2374 = vunpack.c.0.s8 %v2373
        %v2375 = vperm.slane %v2367, %v2374
        %v2376 = vrot.slane %v2339, 4
        %v2377 = vsel %vm2316, %v2376, %v2327
        %v2378 = vrot.slane %v2327, 4
        %v2379 = vsel %vm2316, %v2339, %v2378
        %v2381 = vunpack.c.l.s4 1934713408
        %v2382 = vunpack.c.0.s8 %v2381
        %v2383 = vperm.slane %v2377, %v2382
        %v2385 = vunpack.c.l.s4 1934713408
        %v2386 = vunpack.c.0.s8 %v2385
        %v2387 = vperm.slane %v2379, %v2386
        %v2388 = vrot.slane %v2359, 4
        %v2389 = vsel %vm2316, %v2388, %v2347
        %v2390 = vrot.slane %v2347, 4
        %v2391 = vsel %vm2316, %v2359, %v2390
        %v2393 = vunpack.c.l.s4 1934713408
        %v2394 = vunpack.c.0.s8 %v2393
        %v2395 = vperm.slane %v2389, %v2394
        %v2397 = vunpack.c.l.s4 1934713408
        %v2398 = vunpack.c.0.s8 %v2397
        %v2399 = vperm.slane %v2391, %v2398
        %v2400 = vrot.slane %v2363, 4
        %v2401 = vsel %vm2316, %v2400, %v2351
        %v2402 = vrot.slane %v2351, 4
        %v2403 = vsel %vm2316, %v2363, %v2402
        %v2405 = vunpack.c.l.s4 1934713408
        %v2406 = vunpack.c.0.s8 %v2405
        %v2407 = vperm.slane %v2401, %v2406
        %v2409 = vunpack.c.l.s4 1934713408
        %v2410 = vunpack.c.0.s8 %v2409
        %v2411 = vperm.slane %v2403, %v2410
        %v2412 = vrot.slane %v2395, 4
        %v2413 = vsel %vm2316, %v2412, %v2371
        %v2414 = vrot.slane %v2371, 4
        %v2415 = vsel %vm2316, %v2395, %v2414
        %v2416 = vrot.slane %v2399, 4
        %v2417 = vsel %vm2316, %v2416, %v2375
        %v2418 = vrot.slane %v2375, 4
        %v2419 = vsel %vm2316, %v2399, %v2418
        %v2420 = vrot.slane %v2407, 4
        %v2421 = vsel %vm2316, %v2420, %v2383
        %v2422 = vrot.slane %v2383, 4
        %v2423 = vsel %vm2316, %v2407, %v2422
        %v2424 = vrot.slane %v2411, 4
        %v2425 = vsel %vm2316, %v2424, %v2387
        %v2426 = vrot.slane %v2387, 4
        %v2427 = vsel %vm2316, %v2411, %v2426
        %v2428 = vrot.slane %v2273, 4
        %v2429 = vsel %vm2316, %v2428, %v1784
        %v2430 = vrot.slane %v1784, 4
        %v2431 = vsel %vm2316, %v2273, %v2430
        %v2433 = vunpack.c.l.s4 1983009808
        %v2434 = vunpack.c.0.s8 %v2433
        %v2435 = vperm.slane %v2429, %v2434
        %v2437 = vunpack.c.l.s4 1983009808
        %v2438 = vunpack.c.0.s8 %v2437
        %v2439 = vperm.slane %v2431, %v2438
        %v2440 = vrot.slane %v2279, 4
        %v2441 = vsel %vm2316, %v2440, %v2267
        %v2442 = vrot.slane %v2267, 4
        %v2443 = vsel %vm2316, %v2279, %v2442
        %v2445 = vunpack.c.l.s4 1983009808
        %v2446 = vunpack.c.0.s8 %v2445
        %v2447 = vperm.slane %v2441, %v2446
        %v2449 = vunpack.c.l.s4 1983009808
        %v2450 = vunpack.c.0.s8 %v2449
        %v2451 = vperm.slane %v2443, %v2450
        %v2452 = vrot.slane %v2306, 4
        %v2453 = vsel %vm2316, %v2452, %v2294
        %v2454 = vrot.slane %v2294, 4
        %v2455 = vsel %vm2316, %v2306, %v2454
        %v2457 = vunpack.c.l.s4 1983009808
        %v2458 = vunpack.c.0.s8 %v2457
        %v2459 = vperm.slane %v2453, %v2458
        %v2461 = vunpack.c.l.s4 1983009808
        %v2462 = vunpack.c.0.s8 %v2461
        %v2463 = vperm.slane %v2455, %v2462
        %v2464 = vrot.slane %v2312, 4
        %v2465 = vsel %vm2316, %v2464, %v2300
        %v2466 = vrot.slane %v2300, 4
        %v2467 = vsel %vm2316, %v2312, %v2466
        %v2469 = vunpack.c.l.s4 1983009808
        %v2470 = vunpack.c.0.s8 %v2469
        %v2471 = vperm.slane %v2465, %v2470
        %v2473 = vunpack.c.l.s4 1983009808
        %v2474 = vunpack.c.0.s8 %v2473
        %v2475 = vperm.slane %v2467, %v2474
        %v2476 = vrot.slane %v2447, 4
        %v2477 = vsel %vm2316, %v2476, %v2435
        %v2478 = vrot.slane %v2435, 4
        %v2479 = vsel %vm2316, %v2447, %v2478
        %v2481 = vunpack.c.l.s4 1934713408
        %v2482 = vunpack.c.0.s8 %v2481
        %v2483 = vperm.slane %v2477, %v2482
        %v2485 = vunpack.c.l.s4 1934713408
        %v2486 = vunpack.c.0.s8 %v2485
        %v2487 = vperm.slane %v2479, %v2486
        %v2488 = vrot.slane %v2451, 4
        %v2489 = vsel %vm2316, %v2488, %v2439
        %v2490 = vrot.slane %v2439, 4
        %v2491 = vsel %vm2316, %v2451, %v2490
        %v2493 = vunpack.c.l.s4 1934713408
        %v2494 = vunpack.c.0.s8 %v2493
        %v2495 = vperm.slane %v2489, %v2494
        %v2497 = vunpack.c.l.s4 1934713408
        %v2498 = vunpack.c.0.s8 %v2497
        %v2499 = vperm.slane %v2491, %v2498
        %v2500 = vrot.slane %v2471, 4
        %v2501 = vsel %vm2316, %v2500, %v2459
        %v2502 = vrot.slane %v2459, 4
        %v2503 = vsel %vm2316, %v2471, %v2502
        %v2505 = vunpack.c.l.s4 1934713408
        %v2506 = vunpack.c.0.s8 %v2505
        %v2507 = vperm.slane %v2501, %v2506
        %v2509 = vunpack.c.l.s4 1934713408
        %v2510 = vunpack.c.0.s8 %v2509
        %v2511 = vperm.slane %v2503, %v2510
        %v2512 = vrot.slane %v2475, 4
        %v2513 = vsel %vm2316, %v2512, %v2463
        %v2514 = vrot.slane %v2463, 4
        %v2515 = vsel %vm2316, %v2475, %v2514
        %v2517 = vunpack.c.l.s4 1934713408
        %v2518 = vunpack.c.0.s8 %v2517
        %v2519 = vperm.slane %v2513, %v2518
        %v2521 = vunpack.c.l.s4 1934713408
        %v2522 = vunpack.c.0.s8 %v2521
        %v2523 = vperm.slane %v2515, %v2522
        %v2524 = vrot.slane %v2507, 4
        %v2525 = vsel %vm2316, %v2524, %v2483
        %v2526 = vrot.slane %v2483, 4
        %v2527 = vsel %vm2316, %v2507, %v2526
        %v2528 = vrot.slane %v2511, 4
        %v2529 = vsel %vm2316, %v2528, %v2487
        %v2530 = vrot.slane %v2487, 4
        %v2531 = vsel %vm2316, %v2511, %v2530
        %v2532 = vrot.slane %v2519, 4
        %v2533 = vsel %vm2316, %v2532, %v2495
        %v2534 = vrot.slane %v2495, 4
        %v2535 = vsel %vm2316, %v2519, %v2534
        %v2536 = vrot.slane %v2523, 4
        %v2537 = vsel %vm2316, %v2536, %v2499
        %v2538 = vrot.slane %v2499, 4
        %v2539 = vsel %vm2316, %v2523, %v2538
        %v2540 = vrot.slane %v2417, 4
        %v2541 = vsel %vm2316, %v2540, %v2413
        %v2542 = vrot.slane %v2413, 4
        %v2543 = vsel %vm2316, %v2417, %v2542
        %v2545 = vunpack.c.l.s4 1983009808
        %v2546 = vunpack.c.0.s8 %v2545
        %v2547 = vperm.slane %v2541, %v2546
        %v2549 = vunpack.c.l.s4 1983009808
        %v2550 = vunpack.c.0.s8 %v2549
        %v2551 = vperm.slane %v2543, %v2550
        %v2552 = vrot.slane %v2419, 4
        %v2553 = vsel %vm2316, %v2552, %v2415
        %v2554 = vrot.slane %v2415, 4
        %v2555 = vsel %vm2316, %v2419, %v2554
        %v2557 = vunpack.c.l.s4 1983009808
        %v2558 = vunpack.c.0.s8 %v2557
        %v2559 = vperm.slane %v2553, %v2558
        %v2561 = vunpack.c.l.s4 1983009808
        %v2562 = vunpack.c.0.s8 %v2561
        %v2563 = vperm.slane %v2555, %v2562
        %v2564 = vrot.slane %v2425, 4
        %v2565 = vsel %vm2316, %v2564, %v2421
        %v2566 = vrot.slane %v2421, 4
        %v2567 = vsel %vm2316, %v2425, %v2566
        %v2569 = vunpack.c.l.s4 1983009808
        %v2570 = vunpack.c.0.s8 %v2569
        %v2571 = vperm.slane %v2565, %v2570
        %v2573 = vunpack.c.l.s4 1983009808
        %v2574 = vunpack.c.0.s8 %v2573
        %v2575 = vperm.slane %v2567, %v2574
        %v2576 = vrot.slane %v2427, 4
        %v2577 = vsel %vm2316, %v2576, %v2423
        %v2578 = vrot.slane %v2423, 4
        %v2579 = vsel %vm2316, %v2427, %v2578
        %v2581 = vunpack.c.l.s4 1983009808
        %v2582 = vunpack.c.0.s8 %v2581
        %v2583 = vperm.slane %v2577, %v2582
        %v2585 = vunpack.c.l.s4 1983009808
        %v2586 = vunpack.c.0.s8 %v2585
        %v2587 = vperm.slane %v2579, %v2586
        %v2588 = vrot.slane %v2559, 4
        %v2589 = vsel %vm2316, %v2588, %v2547
        %v2590 = vrot.slane %v2547, 4
        %v2591 = vsel %vm2316, %v2559, %v2590
        %v2593 = vunpack.c.l.s4 1934713408
        %v2594 = vunpack.c.0.s8 %v2593
        %v2595 = vperm.slane %v2589, %v2594
        %v2597 = vunpack.c.l.s4 1934713408
        %v2598 = vunpack.c.0.s8 %v2597
        %v2599 = vperm.slane %v2591, %v2598
        %v2600 = vrot.slane %v2563, 4
        %v2601 = vsel %vm2316, %v2600, %v2551
        %v2602 = vrot.slane %v2551, 4
        %v2603 = vsel %vm2316, %v2563, %v2602
        %v2605 = vunpack.c.l.s4 1934713408
        %v2606 = vunpack.c.0.s8 %v2605
        %v2607 = vperm.slane %v2601, %v2606
        %v2609 = vunpack.c.l.s4 1934713408
        %v2610 = vunpack.c.0.s8 %v2609
        %v2611 = vperm.slane %v2603, %v2610
        %v2612 = vrot.slane %v2583, 4
        %v2613 = vsel %vm2316, %v2612, %v2571
        %v2614 = vrot.slane %v2571, 4
        %v2615 = vsel %vm2316, %v2583, %v2614
        %v2617 = vunpack.c.l.s4 1934713408
        %v2618 = vunpack.c.0.s8 %v2617
        %v2619 = vperm.slane %v2613, %v2618
        %v2621 = vunpack.c.l.s4 1934713408
        %v2622 = vunpack.c.0.s8 %v2621
        %v2623 = vperm.slane %v2615, %v2622
        %v2624 = vrot.slane %v2587, 4
        %v2625 = vsel %vm2316, %v2624, %v2575
        %v2626 = vrot.slane %v2575, 4
        %v2627 = vsel %vm2316, %v2587, %v2626
        %v2629 = vunpack.c.l.s4 1934713408
        %v2630 = vunpack.c.0.s8 %v2629
        %v2631 = vperm.slane %v2625, %v2630
        %v2633 = vunpack.c.l.s4 1934713408
        %v2634 = vunpack.c.0.s8 %v2633
        %v2635 = vperm.slane %v2627, %v2634
        %v2636 = vrot.slane %v2619, 4
        %v2637 = vsel %vm2316, %v2636, %v2595
        %v2638 = vrot.slane %v2595, 4
        %v2639 = vsel %vm2316, %v2619, %v2638
        %v2640 = vrot.slane %v2623, 4
        %v2641 = vsel %vm2316, %v2640, %v2599
        %v2642 = vrot.slane %v2599, 4
        %v2643 = vsel %vm2316, %v2623, %v2642
        %v2644 = vrot.slane %v2631, 4
        %v2645 = vsel %vm2316, %v2644, %v2607
        %v2646 = vrot.slane %v2607, 4
        %v2647 = vsel %vm2316, %v2631, %v2646
        %v2648 = vrot.slane %v2635, 4
        %v2649 = vsel %vm2316, %v2648, %v2611
        %v2650 = vrot.slane %v2611, 4
        %v2651 = vsel %vm2316, %v2635, %v2650
        %v2652 = vrot.slane %v2529, 4
        %v2653 = vsel %vm2316, %v2652, %v2525
        %v2654 = vrot.slane %v2525, 4
        %v2655 = vsel %vm2316, %v2529, %v2654
        %v2657 = vunpack.c.l.s4 1983009808
        %v2658 = vunpack.c.0.s8 %v2657
        %v2659 = vperm.slane %v2653, %v2658
        %v2661 = vunpack.c.l.s4 1983009808
        %v2662 = vunpack.c.0.s8 %v2661
        %v2663 = vperm.slane %v2655, %v2662
        %v2664 = vrot.slane %v2531, 4
        %v2665 = vsel %vm2316, %v2664, %v2527
        %v2666 = vrot.slane %v2527, 4
        %v2667 = vsel %vm2316, %v2531, %v2666
        %v2669 = vunpack.c.l.s4 1983009808
        %v2670 = vunpack.c.0.s8 %v2669
        %v2671 = vperm.slane %v2665, %v2670
        %v2673 = vunpack.c.l.s4 1983009808
        %v2674 = vunpack.c.0.s8 %v2673
        %v2675 = vperm.slane %v2667, %v2674
        %v2676 = vrot.slane %v2537, 4
        %v2677 = vsel %vm2316, %v2676, %v2533
        %v2678 = vrot.slane %v2533, 4
        %v2679 = vsel %vm2316, %v2537, %v2678
        %v2681 = vunpack.c.l.s4 1983009808
        %v2682 = vunpack.c.0.s8 %v2681
        %v2683 = vperm.slane %v2677, %v2682
        %v2685 = vunpack.c.l.s4 1983009808
        %v2686 = vunpack.c.0.s8 %v2685
        %v2687 = vperm.slane %v2679, %v2686
        %v2688 = vrot.slane %v2539, 4
        %v2689 = vsel %vm2316, %v2688, %v2535
        %v2690 = vrot.slane %v2535, 4
        %v2691 = vsel %vm2316, %v2539, %v2690
        %v2693 = vunpack.c.l.s4 1983009808
        %v2694 = vunpack.c.0.s8 %v2693
        %v2695 = vperm.slane %v2689, %v2694
        %v2697 = vunpack.c.l.s4 1983009808
        %v2698 = vunpack.c.0.s8 %v2697
        %v2699 = vperm.slane %v2691, %v2698
        %v2700 = vrot.slane %v2671, 4
        %v2701 = vsel %vm2316, %v2700, %v2659
        %v2702 = vrot.slane %v2659, 4
        %v2703 = vsel %vm2316, %v2671, %v2702
        %v2705 = vunpack.c.l.s4 1934713408
        %v2706 = vunpack.c.0.s8 %v2705
        %v2707 = vperm.slane %v2701, %v2706
        %v2709 = vunpack.c.l.s4 1934713408
        %v2710 = vunpack.c.0.s8 %v2709
        %v2711 = vperm.slane %v2703, %v2710
        %v2712 = vrot.slane %v2675, 4
        %v2713 = vsel %vm2316, %v2712, %v2663
        %v2714 = vrot.slane %v2663, 4
        %v2715 = vsel %vm2316, %v2675, %v2714
        %v2717 = vunpack.c.l.s4 1934713408
        %v2718 = vunpack.c.0.s8 %v2717
        %v2719 = vperm.slane %v2713, %v2718
        %v2721 = vunpack.c.l.s4 1934713408
        %v2722 = vunpack.c.0.s8 %v2721
        %v2723 = vperm.slane %v2715, %v2722
        %v2724 = vrot.slane %v2695, 4
        %v2725 = vsel %vm2316, %v2724, %v2683
        %v2726 = vrot.slane %v2683, 4
        %v2727 = vsel %vm2316, %v2695, %v2726
        %v2729 = vunpack.c.l.s4 1934713408
        %v2730 = vunpack.c.0.s8 %v2729
        %v2731 = vperm.slane %v2725, %v2730
        %v2733 = vunpack.c.l.s4 1934713408
        %v2734 = vunpack.c.0.s8 %v2733
        %v2735 = vperm.slane %v2727, %v2734
        %v2736 = vrot.slane %v2699, 4
        %v2737 = vsel %vm2316, %v2736, %v2687
        %v2738 = vrot.slane %v2687, 4
        %v2739 = vsel %vm2316, %v2699, %v2738
        %v2741 = vunpack.c.l.s4 1934713408
        %v2742 = vunpack.c.0.s8 %v2741
        %v2743 = vperm.slane %v2737, %v2742
        %v2745 = vunpack.c.l.s4 1934713408
        %v2746 = vunpack.c.0.s8 %v2745
        %v2747 = vperm.slane %v2739, %v2746
        %v2748 = vrot.slane %v2731, 4
        %v2749 = vsel %vm2316, %v2748, %v2707
        %v2750 = vrot.slane %v2707, 4
        %v2751 = vsel %vm2316, %v2731, %v2750
        %v2752 = vrot.slane %v2735, 4
        %v2753 = vsel %vm2316, %v2752, %v2711
        %v2754 = vrot.slane %v2711, 4
        %v2755 = vsel %vm2316, %v2735, %v2754
        %v2756 = vrot.slane %v2743, 4
        %v2757 = vsel %vm2316, %v2756, %v2719
        %v2758 = vrot.slane %v2719, 4
        %v2759 = vsel %vm2316, %v2743, %v2758
        %v2760 = vrot.slane %v2747, 4
        %v2761 = vsel %vm2316, %v2760, %v2723
        %v2762 = vrot.slane %v2723, 4
        %v2763 = vsel %vm2316, %v2747, %v2762
        %v2764 = vpack.c.bf16 %v2637, %v2637
        %v2765 = vpack.c.bf16 %v2639, %v2639
        %v2766 = vpack.c.bf16 %v2641, %v2641
        %v2767 = vpack.c.bf16 %v2643, %v2643
        %v2768 = vpack.c.bf16 %v2645, %v2645
        %v2769 = vpack.c.bf16 %v2647, %v2647
        %v2770 = vpack.c.bf16 %v2649, %v2649
        %v2771 = vpack.c.bf16 %v2651, %v2651
        %v2772 = vpack.c.bf16 %v2749, %v2749
        %v2773 = vpack.c.bf16 %v2751, %v2751
        %v2774 = vpack.c.bf16 %v2753, %v2753
        %v2775 = vpack.c.bf16 %v2755, %v2755
        %v2776 = vpack.c.bf16 %v2757, %v2757
        %v2777 = vpack.c.bf16 %v2759, %v2759
        %v2778 = vpack.c.bf16 %v2761, %v2761
        %v2779 = vpack.c.bf16 %v2763, %v2763
        %2782 = vrot.lane.b32.xlu0 %v2006, 100
        %v2783 = vpop.permute.xlu0 %2782
        %2784 = vrot.lane.b32.xlu0 %v2008, 100
        %v2785 = vpop.permute.xlu0 %2784
        %2788 = vrot.lane.b32.xlu0 %v2006, 72
        %v2789 = vpop.permute.xlu0 %2788
        %2790 = vrot.lane.b32.xlu0 %v2008, 72
        %v2791 = vpop.permute.xlu0 %2790
        %2794 = vrot.lane.b32.xlu0 %v2006, 44
        %v2795 = vpop.permute.xlu0 %2794
        %2796 = vrot.lane.b32.xlu0 %v2008, 44
        %v2797 = vpop.permute.xlu0 %2796
        %2802 = vrot.lane.b32.xlu0 %v2006, 16
        %v2803 = vpop.permute.xlu0 %2802
        %2804 = vrot.lane.b32.xlu0 %v2034, 16
        %v2805 = vpop.permute.xlu0 %2804
        %2806 = vrot.lane.b32.xlu0 %v2008, 16
        %v2807 = vpop.permute.xlu0 %2806
        %2808 = vrot.lane.b32.xlu0 %v2036, 16
        %v2809 = vpop.permute.xlu0 %2808
        %v2810 = vsel %vm2292, %v2803, %v2805
        %v2811 = vsel %vm2292, %v2807, %v2809
        %2814 = vrot.lane.b32.xlu0 %v2034, 116
        %v2815 = vpop.permute.xlu0 %2814
        %2816 = vrot.lane.b32.xlu0 %v2036, 116
        %v2817 = vpop.permute.xlu0 %2816
        %2820 = vrot.lane.b32.xlu0 %v2034, 88
        %v2821 = vpop.permute.xlu0 %2820
        %2822 = vrot.lane.b32.xlu0 %v2036, 88
        %v2823 = vpop.permute.xlu0 %2822
        %2826 = vrot.lane.b32.xlu0 %v2034, 60
        %v2827 = vpop.permute.xlu0 %2826
        %2828 = vrot.lane.b32.xlu0 %v2036, 60
        %v2829 = vpop.permute.xlu0 %2828
        %v2832 = vrot.slane %v2789, 4
        %v2833 = vsel %vm2316, %v2832, %v2006
        %v2834 = vrot.slane %v2006, 4
        %v2835 = vsel %vm2316, %v2789, %v2834
        %v2837 = vunpack.c.l.s4 1983009808
        %v2838 = vunpack.c.0.s8 %v2837
        %v2839 = vperm.slane %v2833, %v2838
        %v2841 = vunpack.c.l.s4 1983009808
        %v2842 = vunpack.c.0.s8 %v2841
        %v2843 = vperm.slane %v2835, %v2842
        %v2844 = vrot.slane %v2795, 4
        %v2845 = vsel %vm2316, %v2844, %v2783
        %v2846 = vrot.slane %v2783, 4
        %v2847 = vsel %vm2316, %v2795, %v2846
        %v2849 = vunpack.c.l.s4 1983009808
        %v2850 = vunpack.c.0.s8 %v2849
        %v2851 = vperm.slane %v2845, %v2850
        %v2853 = vunpack.c.l.s4 1983009808
        %v2854 = vunpack.c.0.s8 %v2853
        %v2855 = vperm.slane %v2847, %v2854
        %v2856 = vrot.slane %v2821, 4
        %v2857 = vsel %vm2316, %v2856, %v2810
        %v2858 = vrot.slane %v2810, 4
        %v2859 = vsel %vm2316, %v2821, %v2858
        %v2861 = vunpack.c.l.s4 1983009808
        %v2862 = vunpack.c.0.s8 %v2861
        %v2863 = vperm.slane %v2857, %v2862
        %v2865 = vunpack.c.l.s4 1983009808
        %v2866 = vunpack.c.0.s8 %v2865
        %v2867 = vperm.slane %v2859, %v2866
        %v2868 = vrot.slane %v2827, 4
        %v2869 = vsel %vm2316, %v2868, %v2815
        %v2870 = vrot.slane %v2815, 4
        %v2871 = vsel %vm2316, %v2827, %v2870
        %v2873 = vunpack.c.l.s4 1983009808
        %v2874 = vunpack.c.0.s8 %v2873
        %v2875 = vperm.slane %v2869, %v2874
        %v2877 = vunpack.c.l.s4 1983009808
        %v2878 = vunpack.c.0.s8 %v2877
        %v2879 = vperm.slane %v2871, %v2878
        %v2880 = vrot.slane %v2851, 4
        %v2881 = vsel %vm2316, %v2880, %v2839
        %v2882 = vrot.slane %v2839, 4
        %v2883 = vsel %vm2316, %v2851, %v2882
        %v2885 = vunpack.c.l.s4 1934713408
        %v2886 = vunpack.c.0.s8 %v2885
        %v2887 = vperm.slane %v2881, %v2886
        %v2889 = vunpack.c.l.s4 1934713408
        %v2890 = vunpack.c.0.s8 %v2889
        %v2891 = vperm.slane %v2883, %v2890
        %v2892 = vrot.slane %v2855, 4
        %v2893 = vsel %vm2316, %v2892, %v2843
        %v2894 = vrot.slane %v2843, 4
        %v2895 = vsel %vm2316, %v2855, %v2894
        %v2897 = vunpack.c.l.s4 1934713408
        %v2898 = vunpack.c.0.s8 %v2897
        %v2899 = vperm.slane %v2893, %v2898
        %v2901 = vunpack.c.l.s4 1934713408
        %v2902 = vunpack.c.0.s8 %v2901
        %v2903 = vperm.slane %v2895, %v2902
        %v2904 = vrot.slane %v2875, 4
        %v2905 = vsel %vm2316, %v2904, %v2863
        %v2906 = vrot.slane %v2863, 4
        %v2907 = vsel %vm2316, %v2875, %v2906
        %v2909 = vunpack.c.l.s4 1934713408
        %v2910 = vunpack.c.0.s8 %v2909
        %v2911 = vperm.slane %v2905, %v2910
        %v2913 = vunpack.c.l.s4 1934713408
        %v2914 = vunpack.c.0.s8 %v2913
        %v2915 = vperm.slane %v2907, %v2914
        %v2916 = vrot.slane %v2879, 4
        %v2917 = vsel %vm2316, %v2916, %v2867
        %v2918 = vrot.slane %v2867, 4
        %v2919 = vsel %vm2316, %v2879, %v2918
        %v2921 = vunpack.c.l.s4 1934713408
        %v2922 = vunpack.c.0.s8 %v2921
        %v2923 = vperm.slane %v2917, %v2922
        %v2925 = vunpack.c.l.s4 1934713408
        %v2926 = vunpack.c.0.s8 %v2925
        %v2927 = vperm.slane %v2919, %v2926
        %v2928 = vrot.slane %v2911, 4
        %v2929 = vsel %vm2316, %v2928, %v2887
        %v2930 = vrot.slane %v2887, 4
        %v2931 = vsel %vm2316, %v2911, %v2930
        %v2932 = vrot.slane %v2915, 4
        %v2933 = vsel %vm2316, %v2932, %v2891
        %v2934 = vrot.slane %v2891, 4
        %v2935 = vsel %vm2316, %v2915, %v2934
        %v2936 = vrot.slane %v2923, 4
        %v2937 = vsel %vm2316, %v2936, %v2899
        %v2938 = vrot.slane %v2899, 4
        %v2939 = vsel %vm2316, %v2923, %v2938
        %v2940 = vrot.slane %v2927, 4
        %v2941 = vsel %vm2316, %v2940, %v2903
        %v2942 = vrot.slane %v2903, 4
        %v2943 = vsel %vm2316, %v2927, %v2942
        %v2944 = vrot.slane %v2791, 4
        %v2945 = vsel %vm2316, %v2944, %v2008
        %v2946 = vrot.slane %v2008, 4
        %v2947 = vsel %vm2316, %v2791, %v2946
        %v2949 = vunpack.c.l.s4 1983009808
        %v2950 = vunpack.c.0.s8 %v2949
        %v2951 = vperm.slane %v2945, %v2950
        %v2953 = vunpack.c.l.s4 1983009808
        %v2954 = vunpack.c.0.s8 %v2953
        %v2955 = vperm.slane %v2947, %v2954
        %v2956 = vrot.slane %v2797, 4
        %v2957 = vsel %vm2316, %v2956, %v2785
        %v2958 = vrot.slane %v2785, 4
        %v2959 = vsel %vm2316, %v2797, %v2958
        %v2961 = vunpack.c.l.s4 1983009808
        %v2962 = vunpack.c.0.s8 %v2961
        %v2963 = vperm.slane %v2957, %v2962
        %v2965 = vunpack.c.l.s4 1983009808
        %v2966 = vunpack.c.0.s8 %v2965
        %v2967 = vperm.slane %v2959, %v2966
        %v2968 = vrot.slane %v2823, 4
        %v2969 = vsel %vm2316, %v2968, %v2811
        %v2970 = vrot.slane %v2811, 4
        %v2971 = vsel %vm2316, %v2823, %v2970
        %v2973 = vunpack.c.l.s4 1983009808
        %v2974 = vunpack.c.0.s8 %v2973
        %v2975 = vperm.slane %v2969, %v2974
        %v2977 = vunpack.c.l.s4 1983009808
        %v2978 = vunpack.c.0.s8 %v2977
        %v2979 = vperm.slane %v2971, %v2978
        %v2980 = vrot.slane %v2829, 4
        %v2981 = vsel %vm2316, %v2980, %v2817
        %v2982 = vrot.slane %v2817, 4
        %v2983 = vsel %vm2316, %v2829, %v2982
        %v2985 = vunpack.c.l.s4 1983009808
        %v2986 = vunpack.c.0.s8 %v2985
        %v2987 = vperm.slane %v2981, %v2986
        %v2989 = vunpack.c.l.s4 1983009808
        %v2990 = vunpack.c.0.s8 %v2989
        %v2991 = vperm.slane %v2983, %v2990
        %v2992 = vrot.slane %v2963, 4
        %v2993 = vsel %vm2316, %v2992, %v2951
        %v2994 = vrot.slane %v2951, 4
        %v2995 = vsel %vm2316, %v2963, %v2994
        %v2997 = vunpack.c.l.s4 1934713408
        %v2998 = vunpack.c.0.s8 %v2997
        %v2999 = vperm.slane %v2993, %v2998
        %v3001 = vunpack.c.l.s4 1934713408
        %v3002 = vunpack.c.0.s8 %v3001
        %v3003 = vperm.slane %v2995, %v3002
        %v3004 = vrot.slane %v2967, 4
        %v3005 = vsel %vm2316, %v3004, %v2955
        %v3006 = vrot.slane %v2955, 4
        %v3007 = vsel %vm2316, %v2967, %v3006
        %v3009 = vunpack.c.l.s4 1934713408
        %v3010 = vunpack.c.0.s8 %v3009
        %v3011 = vperm.slane %v3005, %v3010
        %v3013 = vunpack.c.l.s4 1934713408
        %v3014 = vunpack.c.0.s8 %v3013
        %v3015 = vperm.slane %v3007, %v3014
        %v3016 = vrot.slane %v2987, 4
        %v3017 = vsel %vm2316, %v3016, %v2975
        %v3018 = vrot.slane %v2975, 4
        %v3019 = vsel %vm2316, %v2987, %v3018
        %v3021 = vunpack.c.l.s4 1934713408
        %v3022 = vunpack.c.0.s8 %v3021
        %v3023 = vperm.slane %v3017, %v3022
        %v3025 = vunpack.c.l.s4 1934713408
        %v3026 = vunpack.c.0.s8 %v3025
        %v3027 = vperm.slane %v3019, %v3026
        %v3028 = vrot.slane %v2991, 4
        %v3029 = vsel %vm2316, %v3028, %v2979
        %v3030 = vrot.slane %v2979, 4
        %v3031 = vsel %vm2316, %v2991, %v3030
        %v3033 = vunpack.c.l.s4 1934713408
        %v3034 = vunpack.c.0.s8 %v3033
        %v3035 = vperm.slane %v3029, %v3034
        %v3037 = vunpack.c.l.s4 1934713408
        %v3038 = vunpack.c.0.s8 %v3037
        %v3039 = vperm.slane %v3031, %v3038
        %v3040 = vrot.slane %v3023, 4
        %v3041 = vsel %vm2316, %v3040, %v2999
        %v3042 = vrot.slane %v2999, 4
        %v3043 = vsel %vm2316, %v3023, %v3042
        %v3044 = vrot.slane %v3027, 4
        %v3045 = vsel %vm2316, %v3044, %v3003
        %v3046 = vrot.slane %v3003, 4
        %v3047 = vsel %vm2316, %v3027, %v3046
        %v3048 = vrot.slane %v3035, 4
        %v3049 = vsel %vm2316, %v3048, %v3011
        %v3050 = vrot.slane %v3011, 4
        %v3051 = vsel %vm2316, %v3035, %v3050
        %v3052 = vrot.slane %v3039, 4
        %v3053 = vsel %vm2316, %v3052, %v3015
        %v3054 = vrot.slane %v3015, 4
        %v3055 = vsel %vm2316, %v3039, %v3054
        %v3056 = vrot.slane %v2933, 4
        %v3057 = vsel %vm2316, %v3056, %v2929
        %v3058 = vrot.slane %v2929, 4
        %v3059 = vsel %vm2316, %v2933, %v3058
        %v3061 = vunpack.c.l.s4 1983009808
        %v3062 = vunpack.c.0.s8 %v3061
        %v3063 = vperm.slane %v3057, %v3062
        %v3065 = vunpack.c.l.s4 1983009808
        %v3066 = vunpack.c.0.s8 %v3065
        %v3067 = vperm.slane %v3059, %v3066
        %v3068 = vrot.slane %v2935, 4
        %v3069 = vsel %vm2316, %v3068, %v2931
        %v3070 = vrot.slane %v2931, 4
        %v3071 = vsel %vm2316, %v2935, %v3070
        %v3073 = vunpack.c.l.s4 1983009808
        %v3074 = vunpack.c.0.s8 %v3073
        %v3075 = vperm.slane %v3069, %v3074
        %v3077 = vunpack.c.l.s4 1983009808
        %v3078 = vunpack.c.0.s8 %v3077
        %v3079 = vperm.slane %v3071, %v3078
        %v3080 = vrot.slane %v2941, 4
        %v3081 = vsel %vm2316, %v3080, %v2937
        %v3082 = vrot.slane %v2937, 4
        %v3083 = vsel %vm2316, %v2941, %v3082
        %v3085 = vunpack.c.l.s4 1983009808
        %v3086 = vunpack.c.0.s8 %v3085
        %v3087 = vperm.slane %v3081, %v3086
        %v3089 = vunpack.c.l.s4 1983009808
        %v3090 = vunpack.c.0.s8 %v3089
        %v3091 = vperm.slane %v3083, %v3090
        %v3092 = vrot.slane %v2943, 4
        %v3093 = vsel %vm2316, %v3092, %v2939
        %v3094 = vrot.slane %v2939, 4
        %v3095 = vsel %vm2316, %v2943, %v3094
        %v3097 = vunpack.c.l.s4 1983009808
        %v3098 = vunpack.c.0.s8 %v3097
        %v3099 = vperm.slane %v3093, %v3098
        %v3101 = vunpack.c.l.s4 1983009808
        %v3102 = vunpack.c.0.s8 %v3101
        %v3103 = vperm.slane %v3095, %v3102
        %v3104 = vrot.slane %v3075, 4
        %v3105 = vsel %vm2316, %v3104, %v3063
        %v3106 = vrot.slane %v3063, 4
        %v3107 = vsel %vm2316, %v3075, %v3106
        %v3109 = vunpack.c.l.s4 1934713408
        %v3110 = vunpack.c.0.s8 %v3109
        %v3111 = vperm.slane %v3105, %v3110
        %v3113 = vunpack.c.l.s4 1934713408
        %v3114 = vunpack.c.0.s8 %v3113
        %v3115 = vperm.slane %v3107, %v3114
        %v3116 = vrot.slane %v3079, 4
        %v3117 = vsel %vm2316, %v3116, %v3067
        %v3118 = vrot.slane %v3067, 4
        %v3119 = vsel %vm2316, %v3079, %v3118
        %v3121 = vunpack.c.l.s4 1934713408
        %v3122 = vunpack.c.0.s8 %v3121
        %v3123 = vperm.slane %v3117, %v3122
        %v3125 = vunpack.c.l.s4 1934713408
        %v3126 = vunpack.c.0.s8 %v3125
        %v3127 = vperm.slane %v3119, %v3126
        %v3128 = vrot.slane %v3099, 4
        %v3129 = vsel %vm2316, %v3128, %v3087
        %v3130 = vrot.slane %v3087, 4
        %v3131 = vsel %vm2316, %v3099, %v3130
        %v3133 = vunpack.c.l.s4 1934713408
        %v3134 = vunpack.c.0.s8 %v3133
        %v3135 = vperm.slane %v3129, %v3134
        %v3137 = vunpack.c.l.s4 1934713408
        %v3138 = vunpack.c.0.s8 %v3137
        %v3139 = vperm.slane %v3131, %v3138
        %v3140 = vrot.slane %v3103, 4
        %v3141 = vsel %vm2316, %v3140, %v3091
        %v3142 = vrot.slane %v3091, 4
        %v3143 = vsel %vm2316, %v3103, %v3142
        %v3145 = vunpack.c.l.s4 1934713408
        %v3146 = vunpack.c.0.s8 %v3145
        %v3147 = vperm.slane %v3141, %v3146
        %v3149 = vunpack.c.l.s4 1934713408
        %v3150 = vunpack.c.0.s8 %v3149
        %v3151 = vperm.slane %v3143, %v3150
        %v3152 = vrot.slane %v3135, 4
        %v3153 = vsel %vm2316, %v3152, %v3111
        %v3154 = vrot.slane %v3111, 4
        %v3155 = vsel %vm2316, %v3135, %v3154
        %v3156 = vrot.slane %v3139, 4
        %v3157 = vsel %vm2316, %v3156, %v3115
        %v3158 = vrot.slane %v3115, 4
        %v3159 = vsel %vm2316, %v3139, %v3158
        %v3160 = vrot.slane %v3147, 4
        %v3161 = vsel %vm2316, %v3160, %v3123
        %v3162 = vrot.slane %v3123, 4
        %v3163 = vsel %vm2316, %v3147, %v3162
        %v3164 = vrot.slane %v3151, 4
        %v3165 = vsel %vm2316, %v3164, %v3127
        %v3166 = vrot.slane %v3127, 4
        %v3167 = vsel %vm2316, %v3151, %v3166
        %v3168 = vrot.slane %v3045, 4
        %v3169 = vsel %vm2316, %v3168, %v3041
        %v3170 = vrot.slane %v3041, 4
        %v3171 = vsel %vm2316, %v3045, %v3170
        %v3173 = vunpack.c.l.s4 1983009808
        %v3174 = vunpack.c.0.s8 %v3173
        %v3175 = vperm.slane %v3169, %v3174
        %v3177 = vunpack.c.l.s4 1983009808
        %v3178 = vunpack.c.0.s8 %v3177
        %v3179 = vperm.slane %v3171, %v3178
        %v3180 = vrot.slane %v3047, 4
        %v3181 = vsel %vm2316, %v3180, %v3043
        %v3182 = vrot.slane %v3043, 4
        %v3183 = vsel %vm2316, %v3047, %v3182
        %v3185 = vunpack.c.l.s4 1983009808
        %v3186 = vunpack.c.0.s8 %v3185
        %v3187 = vperm.slane %v3181, %v3186
        %v3189 = vunpack.c.l.s4 1983009808
        %v3190 = vunpack.c.0.s8 %v3189
        %v3191 = vperm.slane %v3183, %v3190
        %v3192 = vrot.slane %v3053, 4
        %v3193 = vsel %vm2316, %v3192, %v3049
        %v3194 = vrot.slane %v3049, 4
        %v3195 = vsel %vm2316, %v3053, %v3194
        %v3197 = vunpack.c.l.s4 1983009808
        %v3198 = vunpack.c.0.s8 %v3197
        %v3199 = vperm.slane %v3193, %v3198
        %v3201 = vunpack.c.l.s4 1983009808
        %v3202 = vunpack.c.0.s8 %v3201
        %v3203 = vperm.slane %v3195, %v3202
        %v3204 = vrot.slane %v3055, 4
        %v3205 = vsel %vm2316, %v3204, %v3051
        %v3206 = vrot.slane %v3051, 4
        %v3207 = vsel %vm2316, %v3055, %v3206
        %v3209 = vunpack.c.l.s4 1983009808
        %v3210 = vunpack.c.0.s8 %v3209
        %v3211 = vperm.slane %v3205, %v3210
        %v3213 = vunpack.c.l.s4 1983009808
        %v3214 = vunpack.c.0.s8 %v3213
        %v3215 = vperm.slane %v3207, %v3214
        %v3216 = vrot.slane %v3187, 4
        %v3217 = vsel %vm2316, %v3216, %v3175
        %v3218 = vrot.slane %v3175, 4
        %v3219 = vsel %vm2316, %v3187, %v3218
        %v3221 = vunpack.c.l.s4 1934713408
        %v3222 = vunpack.c.0.s8 %v3221
        %v3223 = vperm.slane %v3217, %v3222
        %v3225 = vunpack.c.l.s4 1934713408
        %v3226 = vunpack.c.0.s8 %v3225
        %v3227 = vperm.slane %v3219, %v3226
        %v3228 = vrot.slane %v3191, 4
        %v3229 = vsel %vm2316, %v3228, %v3179
        %v3230 = vrot.slane %v3179, 4
        %v3231 = vsel %vm2316, %v3191, %v3230
        %v3233 = vunpack.c.l.s4 1934713408
        %v3234 = vunpack.c.0.s8 %v3233
        %v3235 = vperm.slane %v3229, %v3234
        %v3237 = vunpack.c.l.s4 1934713408
        %v3238 = vunpack.c.0.s8 %v3237
        %v3239 = vperm.slane %v3231, %v3238
        %v3240 = vrot.slane %v3211, 4
        %v3241 = vsel %vm2316, %v3240, %v3199
        %v3242 = vrot.slane %v3199, 4
        %v3243 = vsel %vm2316, %v3211, %v3242
        %v3245 = vunpack.c.l.s4 1934713408
        %v3246 = vunpack.c.0.s8 %v3245
        %v3247 = vperm.slane %v3241, %v3246
        %v3249 = vunpack.c.l.s4 1934713408
        %v3250 = vunpack.c.0.s8 %v3249
        %v3251 = vperm.slane %v3243, %v3250
        %v3252 = vrot.slane %v3215, 4
        %v3253 = vsel %vm2316, %v3252, %v3203
        %v3254 = vrot.slane %v3203, 4
        %v3255 = vsel %vm2316, %v3215, %v3254
        %v3257 = vunpack.c.l.s4 1934713408
        %v3258 = vunpack.c.0.s8 %v3257
        %v3259 = vperm.slane %v3253, %v3258
        %v3261 = vunpack.c.l.s4 1934713408
        %v3262 = vunpack.c.0.s8 %v3261
        %v3263 = vperm.slane %v3255, %v3262
        %v3264 = vrot.slane %v3247, 4
        %v3265 = vsel %vm2316, %v3264, %v3223
        %v3266 = vrot.slane %v3223, 4
        %v3267 = vsel %vm2316, %v3247, %v3266
        %v3268 = vrot.slane %v3251, 4
        %v3269 = vsel %vm2316, %v3268, %v3227
        %v3270 = vrot.slane %v3227, 4
        %v3271 = vsel %vm2316, %v3251, %v3270
        %v3272 = vrot.slane %v3259, 4
        %v3273 = vsel %vm2316, %v3272, %v3235
        %v3274 = vrot.slane %v3235, 4
        %v3275 = vsel %vm2316, %v3259, %v3274
        %v3276 = vrot.slane %v3263, 4
        %v3277 = vsel %vm2316, %v3276, %v3239
        %v3278 = vrot.slane %v3239, 4
        %v3279 = vsel %vm2316, %v3263, %v3278
        %v3280 = vpack.c.bf16 %v3153, %v3153
        %v3281 = vpack.c.bf16 %v3155, %v3155
        %v3282 = vpack.c.bf16 %v3157, %v3157
        %v3283 = vpack.c.bf16 %v3159, %v3159
        %v3284 = vpack.c.bf16 %v3161, %v3161
        %v3285 = vpack.c.bf16 %v3163, %v3163
        %v3286 = vpack.c.bf16 %v3165, %v3165
        %v3287 = vpack.c.bf16 %v3167, %v3167
        %v3288 = vpack.c.bf16 %v3265, %v3265
        %v3289 = vpack.c.bf16 %v3267, %v3267
        %v3290 = vpack.c.bf16 %v3269, %v3269
        %v3291 = vpack.c.bf16 %v3271, %v3271
        %v3292 = vpack.c.bf16 %v3273, %v3273
        %v3293 = vpack.c.bf16 %v3275, %v3275
        %v3294 = vpack.c.bf16 %v3277, %v3277
        %v3295 = vpack.c.bf16 %v3279, %v3279
        %3298 = vrot.lane.b32.xlu0 %v2230, 100
        %v3299 = vpop.permute.xlu0 %3298
        %3300 = vrot.lane.b32.xlu0 %v2232, 100
        %v3301 = vpop.permute.xlu0 %3300
        %3304 = vrot.lane.b32.xlu0 %v2230, 72
        %v3305 = vpop.permute.xlu0 %3304
        %3306 = vrot.lane.b32.xlu0 %v2232, 72
        %v3307 = vpop.permute.xlu0 %3306
        %3310 = vrot.lane.b32.xlu0 %v2230, 44
        %v3311 = vpop.permute.xlu0 %3310
        %3312 = vrot.lane.b32.xlu0 %v2232, 44
        %v3313 = vpop.permute.xlu0 %3312
        %3318 = vrot.lane.b32.xlu0 %v2230, 16
        %v3319 = vpop.permute.xlu0 %3318
        %3320 = vrot.lane.b32.xlu0 %v2258, 16
        %v3321 = vpop.permute.xlu0 %3320
        %3322 = vrot.lane.b32.xlu0 %v2232, 16
        %v3323 = vpop.permute.xlu0 %3322
        %3324 = vrot.lane.b32.xlu0 %v2260, 16
        %v3325 = vpop.permute.xlu0 %3324
        %v3326 = vsel %vm2292, %v3319, %v3321
        %v3327 = vsel %vm2292, %v3323, %v3325
        %3330 = vrot.lane.b32.xlu0 %v2258, 116
        %v3331 = vpop.permute.xlu0 %3330
        %3332 = vrot.lane.b32.xlu0 %v2260, 116
        %v3333 = vpop.permute.xlu0 %3332
        %3336 = vrot.lane.b32.xlu0 %v2258, 88
        %v3337 = vpop.permute.xlu0 %3336
        %3338 = vrot.lane.b32.xlu0 %v2260, 88
        %v3339 = vpop.permute.xlu0 %3338
        %3342 = vrot.lane.b32.xlu0 %v2258, 60
        %v3343 = vpop.permute.xlu0 %3342
        %3344 = vrot.lane.b32.xlu0 %v2260, 60
        %v3345 = vpop.permute.xlu0 %3344
        %v3348 = vrot.slane %v3305, 4
        %v3349 = vsel %vm2316, %v3348, %v2230
        %v3350 = vrot.slane %v2230, 4
        %v3351 = vsel %vm2316, %v3305, %v3350
        %v3353 = vunpack.c.l.s4 1983009808
        %v3354 = vunpack.c.0.s8 %v3353
        %v3355 = vperm.slane %v3349, %v3354
        %v3357 = vunpack.c.l.s4 1983009808
        %v3358 = vunpack.c.0.s8 %v3357
        %v3359 = vperm.slane %v3351, %v3358
        %v3360 = vrot.slane %v3311, 4
        %v3361 = vsel %vm2316, %v3360, %v3299
        %v3362 = vrot.slane %v3299, 4
        %v3363 = vsel %vm2316, %v3311, %v3362
        %v3365 = vunpack.c.l.s4 1983009808
        %v3366 = vunpack.c.0.s8 %v3365
        %v3367 = vperm.slane %v3361, %v3366
        %v3369 = vunpack.c.l.s4 1983009808
        %v3370 = vunpack.c.0.s8 %v3369
        %v3371 = vperm.slane %v3363, %v3370
        %v3372 = vrot.slane %v3337, 4
        %v3373 = vsel %vm2316, %v3372, %v3326
        %v3374 = vrot.slane %v3326, 4
        %v3375 = vsel %vm2316, %v3337, %v3374
        %v3377 = vunpack.c.l.s4 1983009808
        %v3378 = vunpack.c.0.s8 %v3377
        %v3379 = vperm.slane %v3373, %v3378
        %v3381 = vunpack.c.l.s4 1983009808
        %v3382 = vunpack.c.0.s8 %v3381
        %v3383 = vperm.slane %v3375, %v3382
        %v3384 = vrot.slane %v3343, 4
        %v3385 = vsel %vm2316, %v3384, %v3331
        %v3386 = vrot.slane %v3331, 4
        %v3387 = vsel %vm2316, %v3343, %v3386
        %v3389 = vunpack.c.l.s4 1983009808
        %v3390 = vunpack.c.0.s8 %v3389
        %v3391 = vperm.slane %v3385, %v3390
        %v3393 = vunpack.c.l.s4 1983009808
        %v3394 = vunpack.c.0.s8 %v3393
        %v3395 = vperm.slane %v3387, %v3394
        %v3396 = vrot.slane %v3367, 4
        %v3397 = vsel %vm2316, %v3396, %v3355
        %v3398 = vrot.slane %v3355, 4
        %v3399 = vsel %vm2316, %v3367, %v3398
        %v3401 = vunpack.c.l.s4 1934713408
        %v3402 = vunpack.c.0.s8 %v3401
        %v3403 = vperm.slane %v3397, %v3402
        %v3405 = vunpack.c.l.s4 1934713408
        %v3406 = vunpack.c.0.s8 %v3405
        %v3407 = vperm.slane %v3399, %v3406
        %v3408 = vrot.slane %v3371, 4
        %v3409 = vsel %vm2316, %v3408, %v3359
        %v3410 = vrot.slane %v3359, 4
        %v3411 = vsel %vm2316, %v3371, %v3410
        %v3413 = vunpack.c.l.s4 1934713408
        %v3414 = vunpack.c.0.s8 %v3413
        %v3415 = vperm.slane %v3409, %v3414
        %v3417 = vunpack.c.l.s4 1934713408
        %v3418 = vunpack.c.0.s8 %v3417
        %v3419 = vperm.slane %v3411, %v3418
        %v3420 = vrot.slane %v3391, 4
        %v3421 = vsel %vm2316, %v3420, %v3379
        %v3422 = vrot.slane %v3379, 4
        %v3423 = vsel %vm2316, %v3391, %v3422
        %v3425 = vunpack.c.l.s4 1934713408
        %v3426 = vunpack.c.0.s8 %v3425
        %v3427 = vperm.slane %v3421, %v3426
        %v3429 = vunpack.c.l.s4 1934713408
        %v3430 = vunpack.c.0.s8 %v3429
        %v3431 = vperm.slane %v3423, %v3430
        %v3432 = vrot.slane %v3395, 4
        %v3433 = vsel %vm2316, %v3432, %v3383
        %v3434 = vrot.slane %v3383, 4
        %v3435 = vsel %vm2316, %v3395, %v3434
        %v3437 = vunpack.c.l.s4 1934713408
        %v3438 = vunpack.c.0.s8 %v3437
        %v3439 = vperm.slane %v3433, %v3438
        %v3441 = vunpack.c.l.s4 1934713408
        %v3442 = vunpack.c.0.s8 %v3441
        %v3443 = vperm.slane %v3435, %v3442
        %v3444 = vrot.slane %v3427, 4
        %v3445 = vsel %vm2316, %v3444, %v3403
        %v3446 = vrot.slane %v3403, 4
        %v3447 = vsel %vm2316, %v3427, %v3446
        %v3448 = vrot.slane %v3431, 4
        %v3449 = vsel %vm2316, %v3448, %v3407
        %v3450 = vrot.slane %v3407, 4
        %v3451 = vsel %vm2316, %v3431, %v3450
        %v3452 = vrot.slane %v3439, 4
        %v3453 = vsel %vm2316, %v3452, %v3415
        %v3454 = vrot.slane %v3415, 4
        %v3455 = vsel %vm2316, %v3439, %v3454
        %v3456 = vrot.slane %v3443, 4
        %v3457 = vsel %vm2316, %v3456, %v3419
        %v3458 = vrot.slane %v3419, 4
        %v3459 = vsel %vm2316, %v3443, %v3458
        %v3460 = vrot.slane %v3307, 4
        %v3461 = vsel %vm2316, %v3460, %v2232
        %v3462 = vrot.slane %v2232, 4
        %v3463 = vsel %vm2316, %v3307, %v3462
        %v3465 = vunpack.c.l.s4 1983009808
        %v3466 = vunpack.c.0.s8 %v3465
        %v3467 = vperm.slane %v3461, %v3466
        %v3469 = vunpack.c.l.s4 1983009808
        %v3470 = vunpack.c.0.s8 %v3469
        %v3471 = vperm.slane %v3463, %v3470
        %v3472 = vrot.slane %v3313, 4
        %v3473 = vsel %vm2316, %v3472, %v3301
        %v3474 = vrot.slane %v3301, 4
        %v3475 = vsel %vm2316, %v3313, %v3474
        %v3477 = vunpack.c.l.s4 1983009808
        %v3478 = vunpack.c.0.s8 %v3477
        %v3479 = vperm.slane %v3473, %v3478
        %v3481 = vunpack.c.l.s4 1983009808
        %v3482 = vunpack.c.0.s8 %v3481
        %v3483 = vperm.slane %v3475, %v3482
        %v3484 = vrot.slane %v3339, 4
        %v3485 = vsel %vm2316, %v3484, %v3327
        %v3486 = vrot.slane %v3327, 4
        %v3487 = vsel %vm2316, %v3339, %v3486
        %v3489 = vunpack.c.l.s4 1983009808
        %v3490 = vunpack.c.0.s8 %v3489
        %v3491 = vperm.slane %v3485, %v3490
        %v3493 = vunpack.c.l.s4 1983009808
        %v3494 = vunpack.c.0.s8 %v3493
        %v3495 = vperm.slane %v3487, %v3494
        %v3496 = vrot.slane %v3345, 4
        %v3497 = vsel %vm2316, %v3496, %v3333
        %v3498 = vrot.slane %v3333, 4
        %v3499 = vsel %vm2316, %v3345, %v3498
        %v3501 = vunpack.c.l.s4 1983009808
        %v3502 = vunpack.c.0.s8 %v3501
        %v3503 = vperm.slane %v3497, %v3502
        %v3505 = vunpack.c.l.s4 1983009808
        %v3506 = vunpack.c.0.s8 %v3505
        %v3507 = vperm.slane %v3499, %v3506
        %v3508 = vrot.slane %v3479, 4
        %v3509 = vsel %vm2316, %v3508, %v3467
        %v3510 = vrot.slane %v3467, 4
        %v3511 = vsel %vm2316, %v3479, %v3510
        %v3513 = vunpack.c.l.s4 1934713408
        %v3514 = vunpack.c.0.s8 %v3513
        %v3515 = vperm.slane %v3509, %v3514
        %v3517 = vunpack.c.l.s4 1934713408
        %v3518 = vunpack.c.0.s8 %v3517
        %v3519 = vperm.slane %v3511, %v3518
        %v3520 = vrot.slane %v3483, 4
        %v3521 = vsel %vm2316, %v3520, %v3471
        %v3522 = vrot.slane %v3471, 4
        %v3523 = vsel %vm2316, %v3483, %v3522
        %v3525 = vunpack.c.l.s4 1934713408
        %v3526 = vunpack.c.0.s8 %v3525
        %v3527 = vperm.slane %v3521, %v3526
        %v3529 = vunpack.c.l.s4 1934713408
        %v3530 = vunpack.c.0.s8 %v3529
        %v3531 = vperm.slane %v3523, %v3530
        %v3532 = vrot.slane %v3503, 4
        %v3533 = vsel %vm2316, %v3532, %v3491
        %v3534 = vrot.slane %v3491, 4
        %v3535 = vsel %vm2316, %v3503, %v3534
        %v3537 = vunpack.c.l.s4 1934713408
        %v3538 = vunpack.c.0.s8 %v3537
        %v3539 = vperm.slane %v3533, %v3538
        %v3541 = vunpack.c.l.s4 1934713408
        %v3542 = vunpack.c.0.s8 %v3541
        %v3543 = vperm.slane %v3535, %v3542
        %v3544 = vrot.slane %v3507, 4
        %v3545 = vsel %vm2316, %v3544, %v3495
        %v3546 = vrot.slane %v3495, 4
        %v3547 = vsel %vm2316, %v3507, %v3546
        %v3549 = vunpack.c.l.s4 1934713408
        %v3550 = vunpack.c.0.s8 %v3549
        %v3551 = vperm.slane %v3545, %v3550
        %v3553 = vunpack.c.l.s4 1934713408
        %v3554 = vunpack.c.0.s8 %v3553
        %v3555 = vperm.slane %v3547, %v3554
        %v3556 = vrot.slane %v3539, 4
        %v3557 = vsel %vm2316, %v3556, %v3515
        %v3558 = vrot.slane %v3515, 4
        %v3559 = vsel %vm2316, %v3539, %v3558
        %v3560 = vrot.slane %v3543, 4
        %v3561 = vsel %vm2316, %v3560, %v3519
        %v3562 = vrot.slane %v3519, 4
        %v3563 = vsel %vm2316, %v3543, %v3562
        %v3564 = vrot.slane %v3551, 4
        %v3565 = vsel %vm2316, %v3564, %v3527
        %v3566 = vrot.slane %v3527, 4
        %v3567 = vsel %vm2316, %v3551, %v3566
        %v3568 = vrot.slane %v3555, 4
        %v3569 = vsel %vm2316, %v3568, %v3531
        %v3570 = vrot.slane %v3531, 4
        %v3571 = vsel %vm2316, %v3555, %v3570
        %v3572 = vrot.slane %v3449, 4
        %v3573 = vsel %vm2316, %v3572, %v3445
        %v3574 = vrot.slane %v3445, 4
        %v3575 = vsel %vm2316, %v3449, %v3574
        %v3577 = vunpack.c.l.s4 1983009808
        %v3578 = vunpack.c.0.s8 %v3577
        %v3579 = vperm.slane %v3573, %v3578
        %v3581 = vunpack.c.l.s4 1983009808
        %v3582 = vunpack.c.0.s8 %v3581
        %v3583 = vperm.slane %v3575, %v3582
        %v3584 = vrot.slane %v3451, 4
        %v3585 = vsel %vm2316, %v3584, %v3447
        %v3586 = vrot.slane %v3447, 4
        %v3587 = vsel %vm2316, %v3451, %v3586
        %v3589 = vunpack.c.l.s4 1983009808
        %v3590 = vunpack.c.0.s8 %v3589
        %v3591 = vperm.slane %v3585, %v3590
        %v3593 = vunpack.c.l.s4 1983009808
        %v3594 = vunpack.c.0.s8 %v3593
        %v3595 = vperm.slane %v3587, %v3594
        %v3596 = vrot.slane %v3457, 4
        %v3597 = vsel %vm2316, %v3596, %v3453
        %v3598 = vrot.slane %v3453, 4
        %v3599 = vsel %vm2316, %v3457, %v3598
        %v3601 = vunpack.c.l.s4 1983009808
        %v3602 = vunpack.c.0.s8 %v3601
        %v3603 = vperm.slane %v3597, %v3602
        %v3605 = vunpack.c.l.s4 1983009808
        %v3606 = vunpack.c.0.s8 %v3605
        %v3607 = vperm.slane %v3599, %v3606
        %v3608 = vrot.slane %v3459, 4
        %v3609 = vsel %vm2316, %v3608, %v3455
        %v3610 = vrot.slane %v3455, 4
        %v3611 = vsel %vm2316, %v3459, %v3610
        %v3613 = vunpack.c.l.s4 1983009808
        %v3614 = vunpack.c.0.s8 %v3613
        %v3615 = vperm.slane %v3609, %v3614
        %v3617 = vunpack.c.l.s4 1983009808
        %v3618 = vunpack.c.0.s8 %v3617
        %v3619 = vperm.slane %v3611, %v3618
        %v3620 = vrot.slane %v3591, 4
        %v3621 = vsel %vm2316, %v3620, %v3579
        %v3622 = vrot.slane %v3579, 4
        %v3623 = vsel %vm2316, %v3591, %v3622
        %v3625 = vunpack.c.l.s4 1934713408
        %v3626 = vunpack.c.0.s8 %v3625
        %v3627 = vperm.slane %v3621, %v3626
        %v3629 = vunpack.c.l.s4 1934713408
        %v3630 = vunpack.c.0.s8 %v3629
        %v3631 = vperm.slane %v3623, %v3630
        %v3632 = vrot.slane %v3595, 4
        %v3633 = vsel %vm2316, %v3632, %v3583
        %v3634 = vrot.slane %v3583, 4
        %v3635 = vsel %vm2316, %v3595, %v3634
        %v3637 = vunpack.c.l.s4 1934713408
        %v3638 = vunpack.c.0.s8 %v3637
        %v3639 = vperm.slane %v3633, %v3638
        %v3641 = vunpack.c.l.s4 1934713408
        %v3642 = vunpack.c.0.s8 %v3641
        %v3643 = vperm.slane %v3635, %v3642
        %v3644 = vrot.slane %v3615, 4
        %v3645 = vsel %vm2316, %v3644, %v3603
        %v3646 = vrot.slane %v3603, 4
        %v3647 = vsel %vm2316, %v3615, %v3646
        %v3649 = vunpack.c.l.s4 1934713408
        %v3650 = vunpack.c.0.s8 %v3649
        %v3651 = vperm.slane %v3645, %v3650
        %v3653 = vunpack.c.l.s4 1934713408
        %v3654 = vunpack.c.0.s8 %v3653
        %v3655 = vperm.slane %v3647, %v3654
        %v3656 = vrot.slane %v3619, 4
        %v3657 = vsel %vm2316, %v3656, %v3607
        %v3658 = vrot.slane %v3607, 4
        %v3659 = vsel %vm2316, %v3619, %v3658
        %v3661 = vunpack.c.l.s4 1934713408
        %v3662 = vunpack.c.0.s8 %v3661
        %v3663 = vperm.slane %v3657, %v3662
        %v3665 = vunpack.c.l.s4 1934713408
        %v3666 = vunpack.c.0.s8 %v3665
        %v3667 = vperm.slane %v3659, %v3666
        %v3668 = vrot.slane %v3651, 4
        %v3669 = vsel %vm2316, %v3668, %v3627
        %v3670 = vrot.slane %v3627, 4
        %v3671 = vsel %vm2316, %v3651, %v3670
        %v3672 = vrot.slane %v3655, 4
        %v3673 = vsel %vm2316, %v3672, %v3631
        %v3674 = vrot.slane %v3631, 4
        %v3675 = vsel %vm2316, %v3655, %v3674
        %v3676 = vrot.slane %v3663, 4
        %v3677 = vsel %vm2316, %v3676, %v3639
        %v3678 = vrot.slane %v3639, 4
        %v3679 = vsel %vm2316, %v3663, %v3678
        %v3680 = vrot.slane %v3667, 4
        %v3681 = vsel %vm2316, %v3680, %v3643
        %v3682 = vrot.slane %v3643, 4
        %v3683 = vsel %vm2316, %v3667, %v3682
        %v3684 = vrot.slane %v3561, 4
        %v3685 = vsel %vm2316, %v3684, %v3557
        %v3686 = vrot.slane %v3557, 4
        %v3687 = vsel %vm2316, %v3561, %v3686
        %v3689 = vunpack.c.l.s4 1983009808
        %v3690 = vunpack.c.0.s8 %v3689
        %v3691 = vperm.slane %v3685, %v3690
        %v3693 = vunpack.c.l.s4 1983009808
        %v3694 = vunpack.c.0.s8 %v3693
        %v3695 = vperm.slane %v3687, %v3694
        %v3696 = vrot.slane %v3563, 4
        %v3697 = vsel %vm2316, %v3696, %v3559
        %v3698 = vrot.slane %v3559, 4
        %v3699 = vsel %vm2316, %v3563, %v3698
        %v3701 = vunpack.c.l.s4 1983009808
        %v3702 = vunpack.c.0.s8 %v3701
        %v3703 = vperm.slane %v3697, %v3702
        %v3705 = vunpack.c.l.s4 1983009808
        %v3706 = vunpack.c.0.s8 %v3705
        %v3707 = vperm.slane %v3699, %v3706
        %v3708 = vrot.slane %v3569, 4
        %v3709 = vsel %vm2316, %v3708, %v3565
        %v3710 = vrot.slane %v3565, 4
        %v3711 = vsel %vm2316, %v3569, %v3710
        %v3713 = vunpack.c.l.s4 1983009808
        %v3714 = vunpack.c.0.s8 %v3713
        %v3715 = vperm.slane %v3709, %v3714
        %v3717 = vunpack.c.l.s4 1983009808
        %v3718 = vunpack.c.0.s8 %v3717
        %v3719 = vperm.slane %v3711, %v3718
        %v3720 = vrot.slane %v3571, 4
        %v3721 = vsel %vm2316, %v3720, %v3567
        %v3722 = vrot.slane %v3567, 4
        %v3723 = vsel %vm2316, %v3571, %v3722
        %v3725 = vunpack.c.l.s4 1983009808
        %v3726 = vunpack.c.0.s8 %v3725
        %v3727 = vperm.slane %v3721, %v3726
        %v3729 = vunpack.c.l.s4 1983009808
        %v3730 = vunpack.c.0.s8 %v3729
        %v3731 = vperm.slane %v3723, %v3730
        %v3732 = vrot.slane %v3703, 4
        %v3733 = vsel %vm2316, %v3732, %v3691
        %v3734 = vrot.slane %v3691, 4
        %v3735 = vsel %vm2316, %v3703, %v3734
        %v3737 = vunpack.c.l.s4 1934713408
        %v3738 = vunpack.c.0.s8 %v3737
        %v3739 = vperm.slane %v3733, %v3738
        %v3741 = vunpack.c.l.s4 1934713408
        %v3742 = vunpack.c.0.s8 %v3741
        %v3743 = vperm.slane %v3735, %v3742
        %v3744 = vrot.slane %v3707, 4
        %v3745 = vsel %vm2316, %v3744, %v3695
        %v3746 = vrot.slane %v3695, 4
        %v3747 = vsel %vm2316, %v3707, %v3746
        %v3749 = vunpack.c.l.s4 1934713408
        %v3750 = vunpack.c.0.s8 %v3749
        %v3751 = vperm.slane %v3745, %v3750
        %v3753 = vunpack.c.l.s4 1934713408
        %v3754 = vunpack.c.0.s8 %v3753
        %v3755 = vperm.slane %v3747, %v3754
        %v3756 = vrot.slane %v3727, 4
        %v3757 = vsel %vm2316, %v3756, %v3715
        %v3758 = vrot.slane %v3715, 4
        %v3759 = vsel %vm2316, %v3727, %v3758
        %v3761 = vunpack.c.l.s4 1934713408
        %v3762 = vunpack.c.0.s8 %v3761
        %v3763 = vperm.slane %v3757, %v3762
        %v3765 = vunpack.c.l.s4 1934713408
        %v3766 = vunpack.c.0.s8 %v3765
        %v3767 = vperm.slane %v3759, %v3766
        %v3768 = vrot.slane %v3731, 4
        %v3769 = vsel %vm2316, %v3768, %v3719
        %v3770 = vrot.slane %v3719, 4
        %v3771 = vsel %vm2316, %v3731, %v3770
        %v3773 = vunpack.c.l.s4 1934713408
        %v3774 = vunpack.c.0.s8 %v3773
        %v3775 = vperm.slane %v3769, %v3774
        %v3777 = vunpack.c.l.s4 1934713408
        %v3778 = vunpack.c.0.s8 %v3777
        %v3779 = vperm.slane %v3771, %v3778
        %v3780 = vrot.slane %v3763, 4
        %v3781 = vsel %vm2316, %v3780, %v3739
        %v3782 = vrot.slane %v3739, 4
        %v3783 = vsel %vm2316, %v3763, %v3782
        %v3784 = vrot.slane %v3767, 4
        %v3785 = vsel %vm2316, %v3784, %v3743
        %v3786 = vrot.slane %v3743, 4
        %v3787 = vsel %vm2316, %v3767, %v3786
        %v3788 = vrot.slane %v3775, 4
        %v3789 = vsel %vm2316, %v3788, %v3751
        %v3790 = vrot.slane %v3751, 4
        %v3791 = vsel %vm2316, %v3775, %v3790
        %v3792 = vrot.slane %v3779, 4
        %v3793 = vsel %vm2316, %v3792, %v3755
        %v3794 = vrot.slane %v3755, 4
        %v3795 = vsel %vm2316, %v3779, %v3794
        %v3796 = vpack.c.bf16 %v3669, %v3669
        %v3797 = vpack.c.bf16 %v3671, %v3671
        %v3798 = vpack.c.bf16 %v3673, %v3673
        %v3799 = vpack.c.bf16 %v3675, %v3675
        %v3800 = vpack.c.bf16 %v3677, %v3677
        %v3801 = vpack.c.bf16 %v3679, %v3679
        %v3802 = vpack.c.bf16 %v3681, %v3681
        %v3803 = vpack.c.bf16 %v3683, %v3683
        %v3804 = vpack.c.bf16 %v3781, %v3781
        %v3805 = vpack.c.bf16 %v3783, %v3783
        %v3806 = vpack.c.bf16 %v3785, %v3785
        %v3807 = vpack.c.bf16 %v3787, %v3787
        %v3808 = vpack.c.bf16 %v3789, %v3789
        %v3809 = vpack.c.bf16 %v3791, %v3791
        %v3810 = vpack.c.bf16 %v3793, %v3793
        %v3811 = vpack.c.bf16 %v3795, %v3795
        %vm3812 = vcmask 228352
        %v3814 = vsel %vm3812, %v2764, 0
        %v3817 = vsel %vm3812, %v3280, 0
        %3819 = vmatpush.bf16.xpose.msra.mxu0 0
        %3820 = vmatpush.bf16.xpose.msra.mxu0 0
        %3821 = vmatpush.bf16.xpose.msra.mxu0 0
        %3822 = vmatpush.bf16.xpose.msra.mxu0 0
        %3823 = vmatpush.bf16.xpose.msra.mxu0 0
        %3824 = vmatpush.bf16.xpose.msra.mxu0 0
        %3825 = vmatpush.bf16.xpose.msra.mxu0 0
        %3826 = vmatpush.bf16.xpose.msra.mxu0 %v3817
        %3827 = vmatmul.bf16.gmra.mxu0 %v3814
        %v3828 = vpop.f32.mrf.mxu0
        %v3829 = vadd.f32 0.0, %v3828
        %v3830 = vpop.f32.mrf.mxu0
        %3831 = vdwg.mxu0
        %v3833 = vsel %vm3812, %v2765, 0
        %v3836 = vsel %vm3812, %v3281, 0
        %3838 = vmatpush.bf16.xpose.msra.mxu0 0
        %3839 = vmatpush.bf16.xpose.msra.mxu0 0
        %3840 = vmatpush.bf16.xpose.msra.mxu0 0
        %3841 = vmatpush.bf16.xpose.msra.mxu0 0
        %3842 = vmatpush.bf16.xpose.msra.mxu0 0
        %3843 = vmatpush.bf16.xpose.msra.mxu0 0
        %3844 = vmatpush.bf16.xpose.msra.mxu0 0
        %3845 = vmatpush.bf16.xpose.msra.mxu0 %v3836
        %3846 = vmatmul.bf16.gmra.mxu0 %v3833
        %v3847 = vpop.f32.mrf.mxu0
        %v3848 = vadd.f32 0.0, %v3847
        %v3849 = vpop.f32.mrf.mxu0
        %3850 = vdwg.mxu0
        %v3852 = vsel %vm3812, %v2766, 0
        %v3855 = vsel %vm3812, %v3282, 0
        %3857 = vmatpush.bf16.xpose.msra.mxu0 0
        %3858 = vmatpush.bf16.xpose.msra.mxu0 0
        %3859 = vmatpush.bf16.xpose.msra.mxu0 0
        %3860 = vmatpush.bf16.xpose.msra.mxu0 0
        %3861 = vmatpush.bf16.xpose.msra.mxu0 0
        %3862 = vmatpush.bf16.xpose.msra.mxu0 0
        %3863 = vmatpush.bf16.xpose.msra.mxu0 0
        %3864 = vmatpush.bf16.xpose.msra.mxu0 %v3855
        %3865 = vmatmul.bf16.gmra.mxu0 %v3852
        %v3866 = vpop.f32.mrf.mxu0
        %v3867 = vadd.f32 0.0, %v3866
        %v3868 = vpop.f32.mrf.mxu0
        %3869 = vdwg.mxu0
        %v3871 = vsel %vm3812, %v2767, 0
        %v3874 = vsel %vm3812, %v3283, 0
        %3876 = vmatpush.bf16.xpose.msra.mxu0 0
        %3877 = vmatpush.bf16.xpose.msra.mxu0 0
        %3878 = vmatpush.bf16.xpose.msra.mxu0 0
        %3879 = vmatpush.bf16.xpose.msra.mxu0 0
        %3880 = vmatpush.bf16.xpose.msra.mxu0 0
        %3881 = vmatpush.bf16.xpose.msra.mxu0 0
        %3882 = vmatpush.bf16.xpose.msra.mxu0 0
        %3883 = vmatpush.bf16.xpose.msra.mxu0 %v3874
        %3884 = vmatmul.bf16.gmra.mxu0 %v3871
        %v3885 = vpop.f32.mrf.mxu0
        %v3886 = vadd.f32 0.0, %v3885
        %v3887 = vpop.f32.mrf.mxu0
        %3888 = vdwg.mxu0
        %v3890 = vsel %vm3812, %v2768, 0
        %v3893 = vsel %vm3812, %v3284, 0
        %3895 = vmatpush.bf16.xpose.msra.mxu0 0
        %3896 = vmatpush.bf16.xpose.msra.mxu0 0
        %3897 = vmatpush.bf16.xpose.msra.mxu0 0
        %3898 = vmatpush.bf16.xpose.msra.mxu0 0
        %3899 = vmatpush.bf16.xpose.msra.mxu0 0
        %3900 = vmatpush.bf16.xpose.msra.mxu0 0
        %3901 = vmatpush.bf16.xpose.msra.mxu0 0
        %3902 = vmatpush.bf16.xpose.msra.mxu0 %v3893
        %3903 = vmatmul.bf16.gmra.mxu0 %v3890
        %v3904 = vpop.f32.mrf.mxu0
        %v3905 = vadd.f32 0.0, %v3904
        %v3906 = vpop.f32.mrf.mxu0
        %3907 = vdwg.mxu0
        %v3909 = vsel %vm3812, %v2769, 0
        %v3912 = vsel %vm3812, %v3285, 0
        %3914 = vmatpush.bf16.xpose.msra.mxu0 0
        %3915 = vmatpush.bf16.xpose.msra.mxu0 0
        %3916 = vmatpush.bf16.xpose.msra.mxu0 0
        %3917 = vmatpush.bf16.xpose.msra.mxu0 0
        %3918 = vmatpush.bf16.xpose.msra.mxu0 0
        %3919 = vmatpush.bf16.xpose.msra.mxu0 0
        %3920 = vmatpush.bf16.xpose.msra.mxu0 0
        %3921 = vmatpush.bf16.xpose.msra.mxu0 %v3912
        %3922 = vmatmul.bf16.gmra.mxu0 %v3909
        %v3923 = vpop.f32.mrf.mxu0
        %v3924 = vadd.f32 0.0, %v3923
        %v3925 = vpop.f32.mrf.mxu0
        %3926 = vdwg.mxu0
        %v3928 = vsel %vm3812, %v2770, 0
        %v3931 = vsel %vm3812, %v3286, 0
        %3933 = vmatpush.bf16.xpose.msra.mxu0 0
        %3934 = vmatpush.bf16.xpose.msra.mxu0 0
        %3935 = vmatpush.bf16.xpose.msra.mxu0 0
        %3936 = vmatpush.bf16.xpose.msra.mxu0 0
        %3937 = vmatpush.bf16.xpose.msra.mxu0 0
        %3938 = vmatpush.bf16.xpose.msra.mxu0 0
        %3939 = vmatpush.bf16.xpose.msra.mxu0 0
        %3940 = vmatpush.bf16.xpose.msra.mxu0 %v3931
        %3941 = vmatmul.bf16.gmra.mxu0 %v3928
        %v3942 = vpop.f32.mrf.mxu0
        %v3943 = vadd.f32 0.0, %v3942
        %v3944 = vpop.f32.mrf.mxu0
        %3945 = vdwg.mxu0
        %v3947 = vsel %vm3812, %v2771, 0
        %v3950 = vsel %vm3812, %v3287, 0
        %3952 = vmatpush.bf16.xpose.msra.mxu0 0
        %3953 = vmatpush.bf16.xpose.msra.mxu0 0
        %3954 = vmatpush.bf16.xpose.msra.mxu0 0
        %3955 = vmatpush.bf16.xpose.msra.mxu0 0
        %3956 = vmatpush.bf16.xpose.msra.mxu0 0
        %3957 = vmatpush.bf16.xpose.msra.mxu0 0
        %3958 = vmatpush.bf16.xpose.msra.mxu0 0
        %3959 = vmatpush.bf16.xpose.msra.mxu0 %v3950
        %3960 = vmatmul.bf16.gmra.mxu0 %v3947
        %v3961 = vpop.f32.mrf.mxu0
        %v3962 = vadd.f32 0.0, %v3961
        %v3963 = vpop.f32.mrf.mxu0
        %3964 = vdwg.mxu0
        %v3966 = vsel %vm3812, %v2772, 0
        %v3969 = vsel %vm3812, %v3288, 0
        %3971 = vmatpush.bf16.xpose.msra.mxu0 0
        %3972 = vmatpush.bf16.xpose.msra.mxu0 0
        %3973 = vmatpush.bf16.xpose.msra.mxu0 0
        %3974 = vmatpush.bf16.xpose.msra.mxu0 0
        %3975 = vmatpush.bf16.xpose.msra.mxu0 0
        %3976 = vmatpush.bf16.xpose.msra.mxu0 0
        %3977 = vmatpush.bf16.xpose.msra.mxu0 0
        %3978 = vmatpush.bf16.xpose.msra.mxu0 %v3969
        %3979 = vmatmul.bf16.gmra.mxu0 %v3966
        %v3980 = vpop.f32.mrf.mxu0
        %v3981 = vadd.f32 0.0, %v3980
        %v3982 = vpop.f32.mrf.mxu0
        %3983 = vdwg.mxu0
        %v3985 = vsel %vm3812, %v2773, 0
        %v3988 = vsel %vm3812, %v3289, 0
        %3990 = vmatpush.bf16.xpose.msra.mxu0 0
        %3991 = vmatpush.bf16.xpose.msra.mxu0 0
        %3992 = vmatpush.bf16.xpose.msra.mxu0 0
        %3993 = vmatpush.bf16.xpose.msra.mxu0 0
        %3994 = vmatpush.bf16.xpose.msra.mxu0 0
        %3995 = vmatpush.bf16.xpose.msra.mxu0 0
        %3996 = vmatpush.bf16.xpose.msra.mxu0 0
        %3997 = vmatpush.bf16.xpose.msra.mxu0 %v3988
        %3998 = vmatmul.bf16.gmra.mxu0 %v3985
        %v3999 = vpop.f32.mrf.mxu0
        %v4000 = vadd.f32 0.0, %v3999
        %v4001 = vpop.f32.mrf.mxu0
        %4002 = vdwg.mxu0
        %v4004 = vsel %vm3812, %v2774, 0
        %v4007 = vsel %vm3812, %v3290, 0
        %4009 = vmatpush.bf16.xpose.msra.mxu0 0
        %4010 = vmatpush.bf16.xpose.msra.mxu0 0
        %4011 = vmatpush.bf16.xpose.msra.mxu0 0
        %4012 = vmatpush.bf16.xpose.msra.mxu0 0
        %4013 = vmatpush.bf16.xpose.msra.mxu0 0
        %4014 = vmatpush.bf16.xpose.msra.mxu0 0
        %4015 = vmatpush.bf16.xpose.msra.mxu0 0
        %4016 = vmatpush.bf16.xpose.msra.mxu0 %v4007
        %4017 = vmatmul.bf16.gmra.mxu0 %v4004
        %v4018 = vpop.f32.mrf.mxu0
        %v4019 = vadd.f32 0.0, %v4018
        %v4020 = vpop.f32.mrf.mxu0
        %4021 = vdwg.mxu0
        %v4023 = vsel %vm3812, %v2775, 0
        %v4026 = vsel %vm3812, %v3291, 0
        %4028 = vmatpush.bf16.xpose.msra.mxu0 0
        %4029 = vmatpush.bf16.xpose.msra.mxu0 0
        %4030 = vmatpush.bf16.xpose.msra.mxu0 0
        %4031 = vmatpush.bf16.xpose.msra.mxu0 0
        %4032 = vmatpush.bf16.xpose.msra.mxu0 0
        %4033 = vmatpush.bf16.xpose.msra.mxu0 0
        %4034 = vmatpush.bf16.xpose.msra.mxu0 0
        %4035 = vmatpush.bf16.xpose.msra.mxu0 %v4026
        %4036 = vmatmul.bf16.gmra.mxu0 %v4023
        %v4037 = vpop.f32.mrf.mxu0
        %v4038 = vadd.f32 0.0, %v4037
        %v4039 = vpop.f32.mrf.mxu0
        %4040 = vdwg.mxu0
        %v4042 = vsel %vm3812, %v2776, 0
        %v4045 = vsel %vm3812, %v3292, 0
        %4047 = vmatpush.bf16.xpose.msra.mxu0 0
        %4048 = vmatpush.bf16.xpose.msra.mxu0 0
        %4049 = vmatpush.bf16.xpose.msra.mxu0 0
        %4050 = vmatpush.bf16.xpose.msra.mxu0 0
        %4051 = vmatpush.bf16.xpose.msra.mxu0 0
        %4052 = vmatpush.bf16.xpose.msra.mxu0 0
        %4053 = vmatpush.bf16.xpose.msra.mxu0 0
        %4054 = vmatpush.bf16.xpose.msra.mxu0 %v4045
        %4055 = vmatmul.bf16.gmra.mxu0 %v4042
        %v4056 = vpop.f32.mrf.mxu0
        %v4057 = vadd.f32 0.0, %v4056
        %v4058 = vpop.f32.mrf.mxu0
        %4059 = vdwg.mxu0
        %v4061 = vsel %vm3812, %v2777, 0
        %v4064 = vsel %vm3812, %v3293, 0
        %4066 = vmatpush.bf16.xpose.msra.mxu0 0
        %4067 = vmatpush.bf16.xpose.msra.mxu0 0
        %4068 = vmatpush.bf16.xpose.msra.mxu0 0
        %4069 = vmatpush.bf16.xpose.msra.mxu0 0
        %4070 = vmatpush.bf16.xpose.msra.mxu0 0
        %4071 = vmatpush.bf16.xpose.msra.mxu0 0
        %4072 = vmatpush.bf16.xpose.msra.mxu0 0
        %4073 = vmatpush.bf16.xpose.msra.mxu0 %v4064
        %4074 = vmatmul.bf16.gmra.mxu0 %v4061
        %v4075 = vpop.f32.mrf.mxu0
        %v4076 = vadd.f32 0.0, %v4075
        %v4077 = vpop.f32.mrf.mxu0
        %4078 = vdwg.mxu0
        %v4080 = vsel %vm3812, %v2778, 0
        %v4083 = vsel %vm3812, %v3294, 0
        %4085 = vmatpush.bf16.xpose.msra.mxu0 0
        %4086 = vmatpush.bf16.xpose.msra.mxu0 0
        %4087 = vmatpush.bf16.xpose.msra.mxu0 0
        %4088 = vmatpush.bf16.xpose.msra.mxu0 0
        %4089 = vmatpush.bf16.xpose.msra.mxu0 0
        %4090 = vmatpush.bf16.xpose.msra.mxu0 0
        %4091 = vmatpush.bf16.xpose.msra.mxu0 0
        %4092 = vmatpush.bf16.xpose.msra.mxu0 %v4083
        %4093 = vmatmul.bf16.gmra.mxu0 %v4080
        %v4094 = vpop.f32.mrf.mxu0
        %v4095 = vadd.f32 0.0, %v4094
        %v4096 = vpop.f32.mrf.mxu0
        %4097 = vdwg.mxu0
        %v4099 = vsel %vm3812, %v2779, 0
        %v4102 = vsel %vm3812, %v3295, 0
        %4104 = vmatpush.bf16.xpose.msra.mxu0 0
        %4105 = vmatpush.bf16.xpose.msra.mxu0 0
        %4106 = vmatpush.bf16.xpose.msra.mxu0 0
        %4107 = vmatpush.bf16.xpose.msra.mxu0 0
        %4108 = vmatpush.bf16.xpose.msra.mxu0 0
        %4109 = vmatpush.bf16.xpose.msra.mxu0 0
        %4110 = vmatpush.bf16.xpose.msra.mxu0 0
        %4111 = vmatpush.bf16.xpose.msra.mxu0 %v4102
        %4112 = vmatmul.bf16.gmra.mxu0 %v4099
        %v4113 = vpop.f32.mrf.mxu0
        %v4114 = vadd.f32 0.0, %v4113
        %v4115 = vpop.f32.mrf.mxu0
        %4116 = vdwg.mxu0
        %v4117 = vmul.f32 %v3829, 0.18898223
        %v4118 = vmul.f32 %v3848, 0.18898223
        %v4119 = vmul.f32 %v3867, 0.18898223
        %v4120 = vmul.f32 %v3886, 0.18898223
        %v4121 = vmul.f32 %v3905, 0.18898223
        %v4122 = vmul.f32 %v3924, 0.18898223
        %v4123 = vmul.f32 %v3943, 0.18898223
        %v4124 = vmul.f32 %v3962, 0.18898223
        %v4125 = vmul.f32 %v3981, 0.18898223
        %v4126 = vmul.f32 %v4000, 0.18898223
        %v4127 = vmul.f32 %v4019, 0.18898223
        %v4128 = vmul.f32 %v4038, 0.18898223
        %v4129 = vmul.f32 %v4057, 0.18898223
        %v4130 = vmul.f32 %v4076, 0.18898223
        %v4131 = vmul.f32 %v4095, 0.18898223
        %v4132 = vmul.f32 %v4114, 0.18898223
        %v4133 = vlaneseq
        %v4134 = vand.u32 %v4133, 127
        %vm4135 = vcmp.lt.s32.totalorder %v4134, 5
        %v4136 = vsel %vm4135, %v4117, -1e+30
        %v4137 = vsel %vm4135, %v4118, -1e+30
        %v4138 = vsel %vm4135, %v4119, -1e+30
        %v4139 = vsel %vm4135, %v4120, -1e+30
        %v4140 = vsel %vm4135, %v4121, -1e+30
        %v4141 = vsel %vm4135, %v4122, -1e+30
        %v4142 = vsel %vm4135, %v4123, -1e+30
        %v4143 = vsel %vm4135, %v4124, -1e+30
        %v4144 = vsel %vm4135, %v4125, -1e+30
        %v4145 = vsel %vm4135, %v4126, -1e+30
        %v4146 = vsel %vm4135, %v4127, -1e+30
        %v4147 = vsel %vm4135, %v4128, -1e+30
        %v4148 = vsel %vm4135, %v4129, -1e+30
        %v4149 = vsel %vm4135, %v4130, -1e+30
        %v4150 = vsel %vm4135, %v4131, -1e+30
        %v4151 = vsel %vm4135, %v4132, -1e+30
        %vm4152 = vcmask 64512
        %v4153 = vsel %vm4152, %v4136, -inf
        %4154 = vmax.xlane.f32.xlu0 %v4153
        %v4155 = vpop.xlane.xlu0 %4154
        %v4156 = vsel %vm4152, %v4137, -inf
        %4157 = vmax.xlane.f32.xlu0 %v4156
        %v4158 = vpop.xlane.xlu0 %4157
        %v4159 = vsel %vm4152, %v4138, -inf
        %4160 = vmax.xlane.f32.xlu0 %v4159
        %v4161 = vpop.xlane.xlu0 %4160
        %v4162 = vsel %vm4152, %v4139, -inf
        %4163 = vmax.xlane.f32.xlu0 %v4162
        %v4164 = vpop.xlane.xlu0 %4163
        %v4165 = vsel %vm4152, %v4140, -inf
        %4166 = vmax.xlane.f32.xlu0 %v4165
        %v4167 = vpop.xlane.xlu0 %4166
        %v4168 = vsel %vm4152, %v4141, -inf
        %4169 = vmax.xlane.f32.xlu0 %v4168
        %v4170 = vpop.xlane.xlu0 %4169
        %v4171 = vsel %vm4152, %v4142, -inf
        %4172 = vmax.xlane.f32.xlu0 %v4171
        %v4173 = vpop.xlane.xlu0 %4172
        %v4174 = vsel %vm4152, %v4143, -inf
        %4175 = vmax.xlane.f32.xlu0 %v4174
        %v4176 = vpop.xlane.xlu0 %4175
        %v4177 = vsel %vm4152, %v4144, -inf
        %4178 = vmax.xlane.f32.xlu0 %v4177
        %v4179 = vpop.xlane.xlu0 %4178
        %v4180 = vsel %vm4152, %v4145, -inf
        %4181 = vmax.xlane.f32.xlu0 %v4180
        %v4182 = vpop.xlane.xlu0 %4181
        %v4183 = vsel %vm4152, %v4146, -inf
        %4184 = vmax.xlane.f32.xlu0 %v4183
        %v4185 = vpop.xlane.xlu0 %4184
        %v4186 = vsel %vm4152, %v4147, -inf
        %4187 = vmax.xlane.f32.xlu0 %v4186
        %v4188 = vpop.xlane.xlu0 %4187
        %v4189 = vsel %vm4152, %v4148, -inf
        %4190 = vmax.xlane.f32.xlu0 %v4189
        %v4191 = vpop.xlane.xlu0 %4190
        %v4192 = vsel %vm4152, %v4149, -inf
        %4193 = vmax.xlane.f32.xlu0 %v4192
        %v4194 = vpop.xlane.xlu0 %4193
        %v4195 = vsel %vm4152, %v4150, -inf
        %4196 = vmax.xlane.f32.xlu0 %v4195
        %v4197 = vpop.xlane.xlu0 %4196
        %v4198 = vsel %vm4152, %v4151, -inf
        %4199 = vmax.xlane.f32.xlu0 %v4198
        %v4200 = vpop.xlane.xlu0 %4199
        %v4201 = vsub.f32 %v4136, %v4155
        %v4202 = vsub.f32 %v4137, %v4158
        %v4203 = vsub.f32 %v4138, %v4161
        %v4204 = vsub.f32 %v4139, %v4164
        %v4205 = vsub.f32 %v4140, %v4167
        %v4206 = vsub.f32 %v4141, %v4170
        %v4207 = vsub.f32 %v4142, %v4173
        %v4208 = vsub.f32 %v4143, %v4176
        %v4209 = vsub.f32 %v4144, %v4179
        %v4210 = vsub.f32 %v4145, %v4182
        %v4211 = vsub.f32 %v4146, %v4185
        %v4212 = vsub.f32 %v4147, %v4188
        %v4213 = vsub.f32 %v4148, %v4191
        %v4214 = vsub.f32 %v4149, %v4194
        %v4215 = vsub.f32 %v4150, %v4197
        %v4216 = vsub.f32 %v4151, %v4200
        %v4217 = vmul.f32 %v4201, 1.442695
        %v4218 = vpow.pop %v4217
        %v4219 = vmul.f32 %v4202, 1.442695
        %v4220 = vpow.pop %v4219
        %v4221 = vmul.f32 %v4203, 1.442695
        %v4222 = vpow.pop %v4221
        %v4223 = vmul.f32 %v4204, 1.442695
        %v4224 = vpow.pop %v4223
        %v4225 = vmul.f32 %v4205, 1.442695
        %v4226 = vpow.pop %v4225
        %v4227 = vmul.f32 %v4206, 1.442695
        %v4228 = vpow.pop %v4227
        %v4229 = vmul.f32 %v4207, 1.442695
        %v4230 = vpow.pop %v4229
        %v4231 = vmul.f32 %v4208, 1.442695
        %v4232 = vpow.pop %v4231
        %v4233 = vmul.f32 %v4209, 1.442695
        %v4234 = vpow.pop %v4233
        %v4235 = vmul.f32 %v4210, 1.442695
        %v4236 = vpow.pop %v4235
        %v4237 = vmul.f32 %v4211, 1.442695
        %v4238 = vpow.pop %v4237
        %v4239 = vmul.f32 %v4212, 1.442695
        %v4240 = vpow.pop %v4239
        %v4241 = vmul.f32 %v4213, 1.442695
        %v4242 = vpow.pop %v4241
        %v4243 = vmul.f32 %v4214, 1.442695
        %v4244 = vpow.pop %v4243
        %v4245 = vmul.f32 %v4215, 1.442695
        %v4246 = vpow.pop %v4245
        %v4247 = vmul.f32 %v4216, 1.442695
        %v4248 = vpow.pop %v4247
        %v4249 = vsel %vm4152, %v4218, 0.0
        %4250 = vadd.xlane.f32.xlu0 %v4249
        %v4251 = vpop.xlane.xlu0 %4250
        %v4252 = vsel %vm4152, %v4220, 0.0
        %4253 = vadd.xlane.f32.xlu0 %v4252
        %v4254 = vpop.xlane.xlu0 %4253
        %v4255 = vsel %vm4152, %v4222, 0.0
        %4256 = vadd.xlane.f32.xlu0 %v4255
        %v4257 = vpop.xlane.xlu0 %4256
        %v4258 = vsel %vm4152, %v4224, 0.0
        %4259 = vadd.xlane.f32.xlu0 %v4258
        %v4260 = vpop.xlane.xlu0 %4259
        %v4261 = vsel %vm4152, %v4226, 0.0
        %4262 = vadd.xlane.f32.xlu0 %v4261
        %v4263 = vpop.xlane.xlu0 %4262
        %v4264 = vsel %vm4152, %v4228, 0.0
        %4265 = vadd.xlane.f32.xlu0 %v4264
        %v4266 = vpop.xlane.xlu0 %4265
        %v4267 = vsel %vm4152, %v4230, 0.0
        %4268 = vadd.xlane.f32.xlu0 %v4267
        %v4269 = vpop.xlane.xlu0 %4268
        %v4270 = vsel %vm4152, %v4232, 0.0
        %4271 = vadd.xlane.f32.xlu0 %v4270
        %v4272 = vpop.xlane.xlu0 %4271
        %v4273 = vsel %vm4152, %v4234, 0.0
        %4274 = vadd.xlane.f32.xlu0 %v4273
        %v4275 = vpop.xlane.xlu0 %4274
        %v4276 = vsel %vm4152, %v4236, 0.0
        %4277 = vadd.xlane.f32.xlu0 %v4276
        %v4278 = vpop.xlane.xlu0 %4277
        %v4279 = vsel %vm4152, %v4238, 0.0
        %4280 = vadd.xlane.f32.xlu0 %v4279
        %v4281 = vpop.xlane.xlu0 %4280
        %v4282 = vsel %vm4152, %v4240, 0.0
        %4283 = vadd.xlane.f32.xlu0 %v4282
        %v4284 = vpop.xlane.xlu0 %4283
        %v4285 = vsel %vm4152, %v4242, 0.0
        %4286 = vadd.xlane.f32.xlu0 %v4285
        %v4287 = vpop.xlane.xlu0 %4286
        %v4288 = vsel %vm4152, %v4244, 0.0
        %4289 = vadd.xlane.f32.xlu0 %v4288
        %v4290 = vpop.xlane.xlu0 %4289
        %v4291 = vsel %vm4152, %v4246, 0.0
        %4292 = vadd.xlane.f32.xlu0 %v4291
        %v4293 = vpop.xlane.xlu0 %4292
        %v4294 = vsel %vm4152, %v4248, 0.0
        %4295 = vadd.xlane.f32.xlu0 %v4294
        %v4296 = vpop.xlane.xlu0 %4295
        %v4297 = vrcp.pop %v4251
        %v4298 = vmul.f32 %v4251, %v4297
        %v4299 = vsub.f32 1.0, %v4298
        %v4300 = vmul.f32 %v4297, %v4299
        %v4301 = vadd.f32 %v4297, %v4300
        %vm4302 = vweird.f32 %v4251
        %vm4303 = vweird.f32 %v4297
        %vm4304 = vmor %vm4302, %vm4303
        %v4305 = vsel %vm4304, %v4297, %v4301
        %v4306 = vand.u32 2147483647, %v4251
        %vm4307 = vcmp.eq.f32.partialorder %v4306, 8.507059e+37
        %v4308 = vand.u32 %v4251, 2147483648
        %v4309 = vor.u32 1.1754944e-38, %v4308
        %v4310 = vsel %vm4307, %v4309, %v4305
        %v4311 = vmul.f32 %v4218, %v4310
        %v4312 = vrcp.pop %v4254
        %v4313 = vmul.f32 %v4254, %v4312
        %v4314 = vsub.f32 1.0, %v4313
        %v4315 = vmul.f32 %v4312, %v4314
        %v4316 = vadd.f32 %v4312, %v4315
        %vm4317 = vweird.f32 %v4254
        %vm4318 = vweird.f32 %v4312
        %vm4319 = vmor %vm4317, %vm4318
        %v4320 = vsel %vm4319, %v4312, %v4316
        %v4321 = vand.u32 2147483647, %v4254
        %vm4322 = vcmp.eq.f32.partialorder %v4321, 8.507059e+37
        %v4323 = vand.u32 %v4254, 2147483648
        %v4324 = vor.u32 1.1754944e-38, %v4323
        %v4325 = vsel %vm4322, %v4324, %v4320
        %v4326 = vmul.f32 %v4220, %v4325
        %v4327 = vrcp.pop %v4257
        %v4328 = vmul.f32 %v4257, %v4327
        %v4329 = vsub.f32 1.0, %v4328
        %v4330 = vmul.f32 %v4327, %v4329
        %v4331 = vadd.f32 %v4327, %v4330
        %vm4332 = vweird.f32 %v4257
        %vm4333 = vweird.f32 %v4327
        %vm4334 = vmor %vm4332, %vm4333
        %v4335 = vsel %vm4334, %v4327, %v4331
        %v4336 = vand.u32 2147483647, %v4257
        %vm4337 = vcmp.eq.f32.partialorder %v4336, 8.507059e+37
        %v4338 = vand.u32 %v4257, 2147483648
        %v4339 = vor.u32 1.1754944e-38, %v4338
        %v4340 = vsel %vm4337, %v4339, %v4335
        %v4341 = vmul.f32 %v4222, %v4340
        %v4342 = vrcp.pop %v4260
        %v4343 = vmul.f32 %v4260, %v4342
        %v4344 = vsub.f32 1.0, %v4343
        %v4345 = vmul.f32 %v4342, %v4344
        %v4346 = vadd.f32 %v4342, %v4345
        %vm4347 = vweird.f32 %v4260
        %vm4348 = vweird.f32 %v4342
        %vm4349 = vmor %vm4347, %vm4348
        %v4350 = vsel %vm4349, %v4342, %v4346
        %v4351 = vand.u32 2147483647, %v4260
        %vm4352 = vcmp.eq.f32.partialorder %v4351, 8.507059e+37
        %v4353 = vand.u32 %v4260, 2147483648
        %v4354 = vor.u32 1.1754944e-38, %v4353
        %v4355 = vsel %vm4352, %v4354, %v4350
        %v4356 = vmul.f32 %v4224, %v4355
        %v4357 = vrcp.pop %v4263
        %v4358 = vmul.f32 %v4263, %v4357
        %v4359 = vsub.f32 1.0, %v4358
        %v4360 = vmul.f32 %v4357, %v4359
        %v4361 = vadd.f32 %v4357, %v4360
        %vm4362 = vweird.f32 %v4263
        %vm4363 = vweird.f32 %v4357
        %vm4364 = vmor %vm4362, %vm4363
        %v4365 = vsel %vm4364, %v4357, %v4361
        %v4366 = vand.u32 2147483647, %v4263
        %vm4367 = vcmp.eq.f32.partialorder %v4366, 8.507059e+37
        %v4368 = vand.u32 %v4263, 2147483648
        %v4369 = vor.u32 1.1754944e-38, %v4368
        %v4370 = vsel %vm4367, %v4369, %v4365
        %v4371 = vmul.f32 %v4226, %v4370
        %v4372 = vrcp.pop %v4266
        %v4373 = vmul.f32 %v4266, %v4372
        %v4374 = vsub.f32 1.0, %v4373
        %v4375 = vmul.f32 %v4372, %v4374
        %v4376 = vadd.f32 %v4372, %v4375
        %vm4377 = vweird.f32 %v4266
        %vm4378 = vweird.f32 %v4372
        %vm4379 = vmor %vm4377, %vm4378
        %v4380 = vsel %vm4379, %v4372, %v4376
        %v4381 = vand.u32 2147483647, %v4266
        %vm4382 = vcmp.eq.f32.partialorder %v4381, 8.507059e+37
        %v4383 = vand.u32 %v4266, 2147483648
        %v4384 = vor.u32 1.1754944e-38, %v4383
        %v4385 = vsel %vm4382, %v4384, %v4380
        %v4386 = vmul.f32 %v4228, %v4385
        %v4387 = vrcp.pop %v4269
        %v4388 = vmul.f32 %v4269, %v4387
        %v4389 = vsub.f32 1.0, %v4388
        %v4390 = vmul.f32 %v4387, %v4389
        %v4391 = vadd.f32 %v4387, %v4390
        %vm4392 = vweird.f32 %v4269
        %vm4393 = vweird.f32 %v4387
        %vm4394 = vmor %vm4392, %vm4393
        %v4395 = vsel %vm4394, %v4387, %v4391
        %v4396 = vand.u32 2147483647, %v4269
        %vm4397 = vcmp.eq.f32.partialorder %v4396, 8.507059e+37
        %v4398 = vand.u32 %v4269, 2147483648
        %v4399 = vor.u32 1.1754944e-38, %v4398
        %v4400 = vsel %vm4397, %v4399, %v4395
        %v4401 = vmul.f32 %v4230, %v4400
        %v4402 = vrcp.pop %v4272
        %v4403 = vmul.f32 %v4272, %v4402
        %v4404 = vsub.f32 1.0, %v4403
        %v4405 = vmul.f32 %v4402, %v4404
        %v4406 = vadd.f32 %v4402, %v4405
        %vm4407 = vweird.f32 %v4272
        %vm4408 = vweird.f32 %v4402
        %vm4409 = vmor %vm4407, %vm4408
        %v4410 = vsel %vm4409, %v4402, %v4406
        %v4411 = vand.u32 2147483647, %v4272
        %vm4412 = vcmp.eq.f32.partialorder %v4411, 8.507059e+37
        %v4413 = vand.u32 %v4272, 2147483648
        %v4414 = vor.u32 1.1754944e-38, %v4413
        %v4415 = vsel %vm4412, %v4414, %v4410
        %v4416 = vmul.f32 %v4232, %v4415
        %v4417 = vrcp.pop %v4275
        %v4418 = vmul.f32 %v4275, %v4417
        %v4419 = vsub.f32 1.0, %v4418
        %v4420 = vmul.f32 %v4417, %v4419
        %v4421 = vadd.f32 %v4417, %v4420
        %vm4422 = vweird.f32 %v4275
        %vm4423 = vweird.f32 %v4417
        %vm4424 = vmor %vm4422, %vm4423
        %v4425 = vsel %vm4424, %v4417, %v4421
        %v4426 = vand.u32 2147483647, %v4275
        %vm4427 = vcmp.eq.f32.partialorder %v4426, 8.507059e+37
        %v4428 = vand.u32 %v4275, 2147483648
        %v4429 = vor.u32 1.1754944e-38, %v4428
        %v4430 = vsel %vm4427, %v4429, %v4425
        %v4431 = vmul.f32 %v4234, %v4430
        %v4432 = vrcp.pop %v4278
        %v4433 = vmul.f32 %v4278, %v4432
        %v4434 = vsub.f32 1.0, %v4433
        %v4435 = vmul.f32 %v4432, %v4434
        %v4436 = vadd.f32 %v4432, %v4435
        %vm4437 = vweird.f32 %v4278
        %vm4438 = vweird.f32 %v4432
        %vm4439 = vmor %vm4437, %vm4438
        %v4440 = vsel %vm4439, %v4432, %v4436
        %v4441 = vand.u32 2147483647, %v4278
        %vm4442 = vcmp.eq.f32.partialorder %v4441, 8.507059e+37
        %v4443 = vand.u32 %v4278, 2147483648
        %v4444 = vor.u32 1.1754944e-38, %v4443
        %v4445 = vsel %vm4442, %v4444, %v4440
        %v4446 = vmul.f32 %v4236, %v4445
        %v4447 = vrcp.pop %v4281
        %v4448 = vmul.f32 %v4281, %v4447
        %v4449 = vsub.f32 1.0, %v4448
        %v4450 = vmul.f32 %v4447, %v4449
        %v4451 = vadd.f32 %v4447, %v4450
        %vm4452 = vweird.f32 %v4281
        %vm4453 = vweird.f32 %v4447
        %vm4454 = vmor %vm4452, %vm4453
        %v4455 = vsel %vm4454, %v4447, %v4451
        %v4456 = vand.u32 2147483647, %v4281
        %vm4457 = vcmp.eq.f32.partialorder %v4456, 8.507059e+37
        %v4458 = vand.u32 %v4281, 2147483648
        %v4459 = vor.u32 1.1754944e-38, %v4458
        %v4460 = vsel %vm4457, %v4459, %v4455
        %v4461 = vmul.f32 %v4238, %v4460
        %v4462 = vrcp.pop %v4284
        %v4463 = vmul.f32 %v4284, %v4462
        %v4464 = vsub.f32 1.0, %v4463
        %v4465 = vmul.f32 %v4462, %v4464
        %v4466 = vadd.f32 %v4462, %v4465
        %vm4467 = vweird.f32 %v4284
        %vm4468 = vweird.f32 %v4462
        %vm4469 = vmor %vm4467, %vm4468
        %v4470 = vsel %vm4469, %v4462, %v4466
        %v4471 = vand.u32 2147483647, %v4284
        %vm4472 = vcmp.eq.f32.partialorder %v4471, 8.507059e+37
        %v4473 = vand.u32 %v4284, 2147483648
        %v4474 = vor.u32 1.1754944e-38, %v4473
        %v4475 = vsel %vm4472, %v4474, %v4470
        %v4476 = vmul.f32 %v4240, %v4475
        %v4477 = vrcp.pop %v4287
        %v4478 = vmul.f32 %v4287, %v4477
        %v4479 = vsub.f32 1.0, %v4478
        %v4480 = vmul.f32 %v4477, %v4479
        %v4481 = vadd.f32 %v4477, %v4480
        %vm4482 = vweird.f32 %v4287
        %vm4483 = vweird.f32 %v4477
        %vm4484 = vmor %vm4482, %vm4483
        %v4485 = vsel %vm4484, %v4477, %v4481
        %v4486 = vand.u32 2147483647, %v4287
        %vm4487 = vcmp.eq.f32.partialorder %v4486, 8.507059e+37
        %v4488 = vand.u32 %v4287, 2147483648
        %v4489 = vor.u32 1.1754944e-38, %v4488
        %v4490 = vsel %vm4487, %v4489, %v4485
        %v4491 = vmul.f32 %v4242, %v4490
        %v4492 = vrcp.pop %v4290
        %v4493 = vmul.f32 %v4290, %v4492
        %v4494 = vsub.f32 1.0, %v4493
        %v4495 = vmul.f32 %v4492, %v4494
        %v4496 = vadd.f32 %v4492, %v4495
        %vm4497 = vweird.f32 %v4290
        %vm4498 = vweird.f32 %v4492
        %vm4499 = vmor %vm4497, %vm4498
        %v4500 = vsel %vm4499, %v4492, %v4496
        %v4501 = vand.u32 2147483647, %v4290
        %vm4502 = vcmp.eq.f32.partialorder %v4501, 8.507059e+37
        %v4503 = vand.u32 %v4290, 2147483648
        %v4504 = vor.u32 1.1754944e-38, %v4503
        %v4505 = vsel %vm4502, %v4504, %v4500
        %v4506 = vmul.f32 %v4244, %v4505
        %v4507 = vrcp.pop %v4293
        %v4508 = vmul.f32 %v4293, %v4507
        %v4509 = vsub.f32 1.0, %v4508
        %v4510 = vmul.f32 %v4507, %v4509
        %v4511 = vadd.f32 %v4507, %v4510
        %vm4512 = vweird.f32 %v4293
        %vm4513 = vweird.f32 %v4507
        %vm4514 = vmor %vm4512, %vm4513
        %v4515 = vsel %vm4514, %v4507, %v4511
        %v4516 = vand.u32 2147483647, %v4293
        %vm4517 = vcmp.eq.f32.partialorder %v4516, 8.507059e+37
        %v4518 = vand.u32 %v4293, 2147483648
        %v4519 = vor.u32 1.1754944e-38, %v4518
        %v4520 = vsel %vm4517, %v4519, %v4515
        %v4521 = vmul.f32 %v4246, %v4520
        %v4522 = vrcp.pop %v4296
        %v4523 = vmul.f32 %v4296, %v4522
        %v4524 = vsub.f32 1.0, %v4523
        %v4525 = vmul.f32 %v4522, %v4524
        %v4526 = vadd.f32 %v4522, %v4525
        %vm4527 = vweird.f32 %v4296
        %vm4528 = vweird.f32 %v4522
        %vm4529 = vmor %vm4527, %vm4528
        %v4530 = vsel %vm4529, %v4522, %v4526
        %v4531 = vand.u32 2147483647, %v4296
        %vm4532 = vcmp.eq.f32.partialorder %v4531, 8.507059e+37
        %v4533 = vand.u32 %v4296, 2147483648
        %v4534 = vor.u32 1.1754944e-38, %v4533
        %v4535 = vsel %vm4532, %v4534, %v4530
        %v4536 = vmul.f32 %v4248, %v4535
        %v4537 = vpack.c.bf16 %v4311, %v4311
        %v4538 = vpack.c.bf16 %v4326, %v4326
        %v4539 = vpack.c.bf16 %v4341, %v4341
        %v4540 = vpack.c.bf16 %v4356, %v4356
        %v4541 = vpack.c.bf16 %v4371, %v4371
        %v4542 = vpack.c.bf16 %v4386, %v4386
        %v4543 = vpack.c.bf16 %v4401, %v4401
        %v4544 = vpack.c.bf16 %v4416, %v4416
        %v4545 = vpack.c.bf16 %v4431, %v4431
        %v4546 = vpack.c.bf16 %v4446, %v4446
        %v4547 = vpack.c.bf16 %v4461, %v4461
        %v4548 = vpack.c.bf16 %v4476, %v4476
        %v4549 = vpack.c.bf16 %v4491, %v4491
        %v4550 = vpack.c.bf16 %v4506, %v4506
        %v4551 = vpack.c.bf16 %v4521, %v4521
        %v4552 = vpack.c.bf16 %v4536, %v4536
        %v4554 = vsel %vm4152, %v4537, 0
        %vm4556 = vcmask 1043456
        %v4558 = vsel %vm4556, %v3796, 0
        %4560 = vmatpush.bf16.msra.mxu0 0
        %4561 = vmatpush.bf16.msra.mxu0 0
        %4562 = vmatpush.bf16.msra.mxu0 0
        %4563 = vmatpush.bf16.msra.mxu0 0
        %4564 = vmatpush.bf16.msra.mxu0 0
        %4565 = vmatpush.bf16.msra.mxu0 0
        %4566 = vmatpush.bf16.msra.mxu0 0
        %4567 = vmatpush.bf16.msra.mxu0 %v4558
        %4568 = vmatmul.bf16.gmra.mxu0 %v4554
        %v4569 = vpop.f32.mrf.mxu0
        %v4570 = vadd.f32 0.0, %v4569
        %v4571 = vpop.f32.mrf.mxu0
        %4572 = vdwg.mxu0
        %v4574 = vsel %vm4152, %v4538, 0
        %v4577 = vsel %vm4556, %v3797, 0
        %4579 = vmatpush.bf16.msra.mxu0 0
        %4580 = vmatpush.bf16.msra.mxu0 0
        %4581 = vmatpush.bf16.msra.mxu0 0
        %4582 = vmatpush.bf16.msra.mxu0 0
        %4583 = vmatpush.bf16.msra.mxu0 0
        %4584 = vmatpush.bf16.msra.mxu0 0
        %4585 = vmatpush.bf16.msra.mxu0 0
        %4586 = vmatpush.bf16.msra.mxu0 %v4577
        %4587 = vmatmul.bf16.gmra.mxu0 %v4574
        %v4588 = vpop.f32.mrf.mxu0
        %v4589 = vadd.f32 0.0, %v4588
        %v4590 = vpop.f32.mrf.mxu0
        %4591 = vdwg.mxu0
        %v4593 = vsel %vm4152, %v4539, 0
        %v4596 = vsel %vm4556, %v3798, 0
        %4598 = vmatpush.bf16.msra.mxu0 0
        %4599 = vmatpush.bf16.msra.mxu0 0
        %4600 = vmatpush.bf16.msra.mxu0 0
        %4601 = vmatpush.bf16.msra.mxu0 0
        %4602 = vmatpush.bf16.msra.mxu0 0
        %4603 = vmatpush.bf16.msra.mxu0 0
        %4604 = vmatpush.bf16.msra.mxu0 0
        %4605 = vmatpush.bf16.msra.mxu0 %v4596
        %4606 = vmatmul.bf16.gmra.mxu0 %v4593
        %v4607 = vpop.f32.mrf.mxu0
        %v4608 = vadd.f32 0.0, %v4607
        %v4609 = vpop.f32.mrf.mxu0
        %4610 = vdwg.mxu0
        %v4612 = vsel %vm4152, %v4540, 0
        %v4615 = vsel %vm4556, %v3799, 0
        %4617 = vmatpush.bf16.msra.mxu0 0
        %4618 = vmatpush.bf16.msra.mxu0 0
        %4619 = vmatpush.bf16.msra.mxu0 0
        %4620 = vmatpush.bf16.msra.mxu0 0
        %4621 = vmatpush.bf16.msra.mxu0 0
        %4622 = vmatpush.bf16.msra.mxu0 0
        %4623 = vmatpush.bf16.msra.mxu0 0
        %4624 = vmatpush.bf16.msra.mxu0 %v4615
        %4625 = vmatmul.bf16.gmra.mxu0 %v4612
        %v4626 = vpop.f32.mrf.mxu0
        %v4627 = vadd.f32 0.0, %v4626
        %v4628 = vpop.f32.mrf.mxu0
        %4629 = vdwg.mxu0
        %v4631 = vsel %vm4152, %v4541, 0
        %v4634 = vsel %vm4556, %v3800, 0
        %4636 = vmatpush.bf16.msra.mxu0 0
        %4637 = vmatpush.bf16.msra.mxu0 0
        %4638 = vmatpush.bf16.msra.mxu0 0
        %4639 = vmatpush.bf16.msra.mxu0 0
        %4640 = vmatpush.bf16.msra.mxu0 0
        %4641 = vmatpush.bf16.msra.mxu0 0
        %4642 = vmatpush.bf16.msra.mxu0 0
        %4643 = vmatpush.bf16.msra.mxu0 %v4634
        %4644 = vmatmul.bf16.gmra.mxu0 %v4631
        %v4645 = vpop.f32.mrf.mxu0
        %v4646 = vadd.f32 0.0, %v4645
        %v4647 = vpop.f32.mrf.mxu0
        %4648 = vdwg.mxu0
        %v4650 = vsel %vm4152, %v4542, 0
        %v4653 = vsel %vm4556, %v3801, 0
        %4655 = vmatpush.bf16.msra.mxu0 0
        %4656 = vmatpush.bf16.msra.mxu0 0
        %4657 = vmatpush.bf16.msra.mxu0 0
        %4658 = vmatpush.bf16.msra.mxu0 0
        %4659 = vmatpush.bf16.msra.mxu0 0
        %4660 = vmatpush.bf16.msra.mxu0 0
        %4661 = vmatpush.bf16.msra.mxu0 0
        %4662 = vmatpush.bf16.msra.mxu0 %v4653
        %4663 = vmatmul.bf16.gmra.mxu0 %v4650
        %v4664 = vpop.f32.mrf.mxu0
        %v4665 = vadd.f32 0.0, %v4664
        %v4666 = vpop.f32.mrf.mxu0
        %4667 = vdwg.mxu0
        %v4669 = vsel %vm4152, %v4543, 0
        %v4672 = vsel %vm4556, %v3802, 0
        %4674 = vmatpush.bf16.msra.mxu0 0
        %4675 = vmatpush.bf16.msra.mxu0 0
        %4676 = vmatpush.bf16.msra.mxu0 0
        %4677 = vmatpush.bf16.msra.mxu0 0
        %4678 = vmatpush.bf16.msra.mxu0 0
        %4679 = vmatpush.bf16.msra.mxu0 0
        %4680 = vmatpush.bf16.msra.mxu0 0
        %4681 = vmatpush.bf16.msra.mxu0 %v4672
        %4682 = vmatmul.bf16.gmra.mxu0 %v4669
        %v4683 = vpop.f32.mrf.mxu0
        %v4684 = vadd.f32 0.0, %v4683
        %v4685 = vpop.f32.mrf.mxu0
        %4686 = vdwg.mxu0
        %v4688 = vsel %vm4152, %v4544, 0
        %v4691 = vsel %vm4556, %v3803, 0
        %4693 = vmatpush.bf16.msra.mxu0 0
        %4694 = vmatpush.bf16.msra.mxu0 0
        %4695 = vmatpush.bf16.msra.mxu0 0
        %4696 = vmatpush.bf16.msra.mxu0 0
        %4697 = vmatpush.bf16.msra.mxu0 0
        %4698 = vmatpush.bf16.msra.mxu0 0
        %4699 = vmatpush.bf16.msra.mxu0 0
        %4700 = vmatpush.bf16.msra.mxu0 %v4691
        %4701 = vmatmul.bf16.gmra.mxu0 %v4688
        %v4702 = vpop.f32.mrf.mxu0
        %v4703 = vadd.f32 0.0, %v4702
        %v4704 = vpop.f32.mrf.mxu0
        %4705 = vdwg.mxu0
        %v4707 = vsel %vm4152, %v4545, 0
        %v4710 = vsel %vm4556, %v3804, 0
        %4712 = vmatpush.bf16.msra.mxu0 0
        %4713 = vmatpush.bf16.msra.mxu0 0
        %4714 = vmatpush.bf16.msra.mxu0 0
        %4715 = vmatpush.bf16.msra.mxu0 0
        %4716 = vmatpush.bf16.msra.mxu0 0
        %4717 = vmatpush.bf16.msra.mxu0 0
        %4718 = vmatpush.bf16.msra.mxu0 0
        %4719 = vmatpush.bf16.msra.mxu0 %v4710
        %4720 = vmatmul.bf16.gmra.mxu0 %v4707
        %v4721 = vpop.f32.mrf.mxu0
        %v4722 = vadd.f32 0.0, %v4721
        %v4723 = vpop.f32.mrf.mxu0
        %4724 = vdwg.mxu0
        %v4726 = vsel %vm4152, %v4546, 0
        %v4729 = vsel %vm4556, %v3805, 0
        %4731 = vmatpush.bf16.msra.mxu0 0
        %4732 = vmatpush.bf16.msra.mxu0 0
        %4733 = vmatpush.bf16.msra.mxu0 0
        %4734 = vmatpush.bf16.msra.mxu0 0
        %4735 = vmatpush.bf16.msra.mxu0 0
        %4736 = vmatpush.bf16.msra.mxu0 0
        %4737 = vmatpush.bf16.msra.mxu0 0
        %4738 = vmatpush.bf16.msra.mxu0 %v4729
        %4739 = vmatmul.bf16.gmra.mxu0 %v4726
        %v4740 = vpop.f32.mrf.mxu0
        %v4741 = vadd.f32 0.0, %v4740
        %v4742 = vpop.f32.mrf.mxu0
        %4743 = vdwg.mxu0
        %v4745 = vsel %vm4152, %v4547, 0
        %v4748 = vsel %vm4556, %v3806, 0
        %4750 = vmatpush.bf16.msra.mxu0 0
        %4751 = vmatpush.bf16.msra.mxu0 0
        %4752 = vmatpush.bf16.msra.mxu0 0
        %4753 = vmatpush.bf16.msra.mxu0 0
        %4754 = vmatpush.bf16.msra.mxu0 0
        %4755 = vmatpush.bf16.msra.mxu0 0
        %4756 = vmatpush.bf16.msra.mxu0 0
        %4757 = vmatpush.bf16.msra.mxu0 %v4748
        %4758 = vmatmul.bf16.gmra.mxu0 %v4745
        %v4759 = vpop.f32.mrf.mxu0
        %v4760 = vadd.f32 0.0, %v4759
        %v4761 = vpop.f32.mrf.mxu0
        %4762 = vdwg.mxu0
        %v4764 = vsel %vm4152, %v4548, 0
        %v4767 = vsel %vm4556, %v3807, 0
        %4769 = vmatpush.bf16.msra.mxu0 0
        %4770 = vmatpush.bf16.msra.mxu0 0
        %4771 = vmatpush.bf16.msra.mxu0 0
        %4772 = vmatpush.bf16.msra.mxu0 0
        %4773 = vmatpush.bf16.msra.mxu0 0
        %4774 = vmatpush.bf16.msra.mxu0 0
        %4775 = vmatpush.bf16.msra.mxu0 0
        %4776 = vmatpush.bf16.msra.mxu0 %v4767
        %4777 = vmatmul.bf16.gmra.mxu0 %v4764
        %v4778 = vpop.f32.mrf.mxu0
        %v4779 = vadd.f32 0.0, %v4778
        %v4780 = vpop.f32.mrf.mxu0
        %4781 = vdwg.mxu0
        %v4783 = vsel %vm4152, %v4549, 0
        %v4786 = vsel %vm4556, %v3808, 0
        %4788 = vmatpush.bf16.msra.mxu0 0
        %4789 = vmatpush.bf16.msra.mxu0 0
        %4790 = vmatpush.bf16.msra.mxu0 0
        %4791 = vmatpush.bf16.msra.mxu0 0
        %4792 = vmatpush.bf16.msra.mxu0 0
        %4793 = vmatpush.bf16.msra.mxu0 0
        %4794 = vmatpush.bf16.msra.mxu0 0
        %4795 = vmatpush.bf16.msra.mxu0 %v4786
        %4796 = vmatmul.bf16.gmra.mxu0 %v4783
        %v4797 = vpop.f32.mrf.mxu0
        %v4798 = vadd.f32 0.0, %v4797
        %v4799 = vpop.f32.mrf.mxu0
        %4800 = vdwg.mxu0
        %v4802 = vsel %vm4152, %v4550, 0
        %v4805 = vsel %vm4556, %v3809, 0
        %4807 = vmatpush.bf16.msra.mxu0 0
        %4808 = vmatpush.bf16.msra.mxu0 0
        %4809 = vmatpush.bf16.msra.mxu0 0
        %4810 = vmatpush.bf16.msra.mxu0 0
        %4811 = vmatpush.bf16.msra.mxu0 0
        %4812 = vmatpush.bf16.msra.mxu0 0
        %4813 = vmatpush.bf16.msra.mxu0 0
        %4814 = vmatpush.bf16.msra.mxu0 %v4805
        %4815 = vmatmul.bf16.gmra.mxu0 %v4802
        %v4816 = vpop.f32.mrf.mxu0
        %v4817 = vadd.f32 0.0, %v4816
        %v4818 = vpop.f32.mrf.mxu0
        %4819 = vdwg.mxu0
        %v4821 = vsel %vm4152, %v4551, 0
        %v4824 = vsel %vm4556, %v3810, 0
        %4826 = vmatpush.bf16.msra.mxu0 0
        %4827 = vmatpush.bf16.msra.mxu0 0
        %4828 = vmatpush.bf16.msra.mxu0 0
        %4829 = vmatpush.bf16.msra.mxu0 0
        %4830 = vmatpush.bf16.msra.mxu0 0
        %4831 = vmatpush.bf16.msra.mxu0 0
        %4832 = vmatpush.bf16.msra.mxu0 0
        %4833 = vmatpush.bf16.msra.mxu0 %v4824
        %4834 = vmatmul.bf16.gmra.mxu0 %v4821
        %v4835 = vpop.f32.mrf.mxu0
        %v4836 = vadd.f32 0.0, %v4835
        %v4837 = vpop.f32.mrf.mxu0
        %4838 = vdwg.mxu0
        %v4840 = vsel %vm4152, %v4552, 0
        %v4843 = vsel %vm4556, %v3811, 0
        %4845 = vmatpush.bf16.msra.mxu0 0
        %4846 = vmatpush.bf16.msra.mxu0 0
        %4847 = vmatpush.bf16.msra.mxu0 0
        %4848 = vmatpush.bf16.msra.mxu0 0
        %4849 = vmatpush.bf16.msra.mxu0 0
        %4850 = vmatpush.bf16.msra.mxu0 0
        %4851 = vmatpush.bf16.msra.mxu0 0
        %4852 = vmatpush.bf16.msra.mxu0 %v4843
        %4853 = vmatmul.bf16.gmra.mxu0 %v4840
        %v4854 = vpop.f32.mrf.mxu0
        %v4855 = vadd.f32 0.0, %v4854
        %v4856 = vpop.f32.mrf.mxu0
        %4857 = vdwg.mxu0
        %v4858 = vrot.slane %v4608, 4
        %v4859 = vsel %vm2316, %v4858, %v4570
        %v4860 = vrot.slane %v4570, 4
        %v4861 = vsel %vm2316, %v4608, %v4860
        %v4863 = vunpack.c.l.s4 1983009808
        %v4864 = vunpack.c.0.s8 %v4863
        %v4865 = vperm.slane %v4859, %v4864
        %v4867 = vunpack.c.l.s4 1983009808
        %v4868 = vunpack.c.0.s8 %v4867
        %v4869 = vperm.slane %v4861, %v4868
        %v4870 = vrot.slane %v4627, 4
        %v4871 = vsel %vm2316, %v4870, %v4589
        %v4872 = vrot.slane %v4589, 4
        %v4873 = vsel %vm2316, %v4627, %v4872
        %v4875 = vunpack.c.l.s4 1983009808
        %v4876 = vunpack.c.0.s8 %v4875
        %v4877 = vperm.slane %v4871, %v4876
        %v4879 = vunpack.c.l.s4 1983009808
        %v4880 = vunpack.c.0.s8 %v4879
        %v4881 = vperm.slane %v4873, %v4880
        %v4882 = vrot.slane %v4684, 4
        %v4883 = vsel %vm2316, %v4882, %v4646
        %v4884 = vrot.slane %v4646, 4
        %v4885 = vsel %vm2316, %v4684, %v4884
        %v4887 = vunpack.c.l.s4 1983009808
        %v4888 = vunpack.c.0.s8 %v4887
        %v4889 = vperm.slane %v4883, %v4888
        %v4891 = vunpack.c.l.s4 1983009808
        %v4892 = vunpack.c.0.s8 %v4891
        %v4893 = vperm.slane %v4885, %v4892
        %v4894 = vrot.slane %v4703, 4
        %v4895 = vsel %vm2316, %v4894, %v4665
        %v4896 = vrot.slane %v4665, 4
        %v4897 = vsel %vm2316, %v4703, %v4896
        %v4899 = vunpack.c.l.s4 1983009808
        %v4900 = vunpack.c.0.s8 %v4899
        %v4901 = vperm.slane %v4895, %v4900
        %v4903 = vunpack.c.l.s4 1983009808
        %v4904 = vunpack.c.0.s8 %v4903
        %v4905 = vperm.slane %v4897, %v4904
        %v4906 = vrot.slane %v4877, 4
        %v4907 = vsel %vm2316, %v4906, %v4865
        %v4908 = vrot.slane %v4865, 4
        %v4909 = vsel %vm2316, %v4877, %v4908
        %v4911 = vunpack.c.l.s4 1934713408
        %v4912 = vunpack.c.0.s8 %v4911
        %v4913 = vperm.slane %v4907, %v4912
        %v4915 = vunpack.c.l.s4 1934713408
        %v4916 = vunpack.c.0.s8 %v4915
        %v4917 = vperm.slane %v4909, %v4916
        %v4918 = vrot.slane %v4881, 4
        %v4919 = vsel %vm2316, %v4918, %v4869
        %v4920 = vrot.slane %v4869, 4
        %v4921 = vsel %vm2316, %v4881, %v4920
        %v4923 = vunpack.c.l.s4 1934713408
        %v4924 = vunpack.c.0.s8 %v4923
        %v4925 = vperm.slane %v4919, %v4924
        %v4927 = vunpack.c.l.s4 1934713408
        %v4928 = vunpack.c.0.s8 %v4927
        %v4929 = vperm.slane %v4921, %v4928
        %v4930 = vrot.slane %v4901, 4
        %v4931 = vsel %vm2316, %v4930, %v4889
        %v4932 = vrot.slane %v4889, 4
        %v4933 = vsel %vm2316, %v4901, %v4932
        %v4935 = vunpack.c.l.s4 1934713408
        %v4936 = vunpack.c.0.s8 %v4935
        %v4937 = vperm.slane %v4931, %v4936
        %v4939 = vunpack.c.l.s4 1934713408
        %v4940 = vunpack.c.0.s8 %v4939
        %v4941 = vperm.slane %v4933, %v4940
        %v4942 = vrot.slane %v4905, 4
        %v4943 = vsel %vm2316, %v4942, %v4893
        %v4944 = vrot.slane %v4893, 4
        %v4945 = vsel %vm2316, %v4905, %v4944
        %v4947 = vunpack.c.l.s4 1934713408
        %v4948 = vunpack.c.0.s8 %v4947
        %v4949 = vperm.slane %v4943, %v4948
        %v4951 = vunpack.c.l.s4 1934713408
        %v4952 = vunpack.c.0.s8 %v4951
        %v4953 = vperm.slane %v4945, %v4952
        %v4954 = vrot.slane %v4937, 4
        %v4955 = vsel %vm2316, %v4954, %v4913
        %v4956 = vrot.slane %v4913, 4
        %v4957 = vsel %vm2316, %v4937, %v4956
        %v4958 = vrot.slane %v4941, 4
        %v4959 = vsel %vm2316, %v4958, %v4917
        %v4960 = vrot.slane %v4917, 4
        %v4961 = vsel %vm2316, %v4941, %v4960
        %v4962 = vrot.slane %v4949, 4
        %v4963 = vsel %vm2316, %v4962, %v4925
        %v4964 = vrot.slane %v4925, 4
        %v4965 = vsel %vm2316, %v4949, %v4964
        %v4966 = vrot.slane %v4953, 4
        %v4967 = vsel %vm2316, %v4966, %v4929
        %v4968 = vrot.slane %v4929, 4
        %v4969 = vsel %vm2316, %v4953, %v4968
        %v4970 = vrot.slane %v4760, 4
        %v4971 = vsel %vm2316, %v4970, %v4722
        %v4972 = vrot.slane %v4722, 4
        %v4973 = vsel %vm2316, %v4760, %v4972
        %v4975 = vunpack.c.l.s4 1983009808
        %v4976 = vunpack.c.0.s8 %v4975
        %v4977 = vperm.slane %v4971, %v4976
        %v4979 = vunpack.c.l.s4 1983009808
        %v4980 = vunpack.c.0.s8 %v4979
        %v4981 = vperm.slane %v4973, %v4980
        %v4982 = vrot.slane %v4779, 4
        %v4983 = vsel %vm2316, %v4982, %v4741
        %v4984 = vrot.slane %v4741, 4
        %v4985 = vsel %vm2316, %v4779, %v4984
        %v4987 = vunpack.c.l.s4 1983009808
        %v4988 = vunpack.c.0.s8 %v4987
        %v4989 = vperm.slane %v4983, %v4988
        %v4991 = vunpack.c.l.s4 1983009808
        %v4992 = vunpack.c.0.s8 %v4991
        %v4993 = vperm.slane %v4985, %v4992
        %v4994 = vrot.slane %v4836, 4
        %v4995 = vsel %vm2316, %v4994, %v4798
        %v4996 = vrot.slane %v4798, 4
        %v4997 = vsel %vm2316, %v4836, %v4996
        %v4999 = vunpack.c.l.s4 1983009808
        %v5000 = vunpack.c.0.s8 %v4999
        %v5001 = vperm.slane %v4995, %v5000
        %v5003 = vunpack.c.l.s4 1983009808
        %v5004 = vunpack.c.0.s8 %v5003
        %v5005 = vperm.slane %v4997, %v5004
        %v5006 = vrot.slane %v4855, 4
        %v5007 = vsel %vm2316, %v5006, %v4817
        %v5008 = vrot.slane %v4817, 4
        %v5009 = vsel %vm2316, %v4855, %v5008
        %v5011 = vunpack.c.l.s4 1983009808
        %v5012 = vunpack.c.0.s8 %v5011
        %v5013 = vperm.slane %v5007, %v5012
        %v5015 = vunpack.c.l.s4 1983009808
        %v5016 = vunpack.c.0.s8 %v5015
        %v5017 = vperm.slane %v5009, %v5016
        %v5018 = vrot.slane %v4989, 4
        %v5019 = vsel %vm2316, %v5018, %v4977
        %v5020 = vrot.slane %v4977, 4
        %v5021 = vsel %vm2316, %v4989, %v5020
        %v5023 = vunpack.c.l.s4 1934713408
        %v5024 = vunpack.c.0.s8 %v5023
        %v5025 = vperm.slane %v5019, %v5024
        %v5027 = vunpack.c.l.s4 1934713408
        %v5028 = vunpack.c.0.s8 %v5027
        %v5029 = vperm.slane %v5021, %v5028
        %v5030 = vrot.slane %v4993, 4
        %v5031 = vsel %vm2316, %v5030, %v4981
        %v5032 = vrot.slane %v4981, 4
        %v5033 = vsel %vm2316, %v4993, %v5032
        %v5035 = vunpack.c.l.s4 1934713408
        %v5036 = vunpack.c.0.s8 %v5035
        %v5037 = vperm.slane %v5031, %v5036
        %v5039 = vunpack.c.l.s4 1934713408
        %v5040 = vunpack.c.0.s8 %v5039
        %v5041 = vperm.slane %v5033, %v5040
        %v5042 = vrot.slane %v5013, 4
        %v5043 = vsel %vm2316, %v5042, %v5001
        %v5044 = vrot.slane %v5001, 4
        %v5045 = vsel %vm2316, %v5013, %v5044
        %v5047 = vunpack.c.l.s4 1934713408
        %v5048 = vunpack.c.0.s8 %v5047
        %v5049 = vperm.slane %v5043, %v5048
        %v5051 = vunpack.c.l.s4 1934713408
        %v5052 = vunpack.c.0.s8 %v5051
        %v5053 = vperm.slane %v5045, %v5052
        %v5054 = vrot.slane %v5017, 4
        %v5055 = vsel %vm2316, %v5054, %v5005
        %v5056 = vrot.slane %v5005, 4
        %v5057 = vsel %vm2316, %v5017, %v5056
        %v5059 = vunpack.c.l.s4 1934713408
        %v5060 = vunpack.c.0.s8 %v5059
        %v5061 = vperm.slane %v5055, %v5060
        %v5063 = vunpack.c.l.s4 1934713408
        %v5064 = vunpack.c.0.s8 %v5063
        %v5065 = vperm.slane %v5057, %v5064
        %v5066 = vrot.slane %v5049, 4
        %v5067 = vsel %vm2316, %v5066, %v5025
        %v5068 = vrot.slane %v5025, 4
        %v5069 = vsel %vm2316, %v5049, %v5068
        %v5070 = vrot.slane %v5053, 4
        %v5071 = vsel %vm2316, %v5070, %v5029
        %v5072 = vrot.slane %v5029, 4
        %v5073 = vsel %vm2316, %v5053, %v5072
        %v5074 = vrot.slane %v5061, 4
        %v5075 = vsel %vm2316, %v5074, %v5037
        %v5076 = vrot.slane %v5037, 4
        %v5077 = vsel %vm2316, %v5061, %v5076
        %v5078 = vrot.slane %v5065, 4
        %v5079 = vsel %vm2316, %v5078, %v5041
        %v5080 = vrot.slane %v5041, 4
        %v5081 = vsel %vm2316, %v5065, %v5080
        %v5082 = vrot.slane %v4959, 4
        %v5083 = vsel %vm2316, %v5082, %v4955
        %v5084 = vrot.slane %v4955, 4
        %v5085 = vsel %vm2316, %v4959, %v5084
        %v5087 = vunpack.c.l.s4 1983009808
        %v5088 = vunpack.c.0.s8 %v5087
        %v5089 = vperm.slane %v5083, %v5088
        %v5091 = vunpack.c.l.s4 1983009808
        %v5092 = vunpack.c.0.s8 %v5091
        %v5093 = vperm.slane %v5085, %v5092
        %v5094 = vrot.slane %v4961, 4
        %v5095 = vsel %vm2316, %v5094, %v4957
        %v5096 = vrot.slane %v4957, 4
        %v5097 = vsel %vm2316, %v4961, %v5096
        %v5099 = vunpack.c.l.s4 1983009808
        %v5100 = vunpack.c.0.s8 %v5099
        %v5101 = vperm.slane %v5095, %v5100
        %v5103 = vunpack.c.l.s4 1983009808
        %v5104 = vunpack.c.0.s8 %v5103
        %v5105 = vperm.slane %v5097, %v5104
        %v5106 = vrot.slane %v4967, 4
        %v5107 = vsel %vm2316, %v5106, %v4963
        %v5108 = vrot.slane %v4963, 4
        %v5109 = vsel %vm2316, %v4967, %v5108
        %v5111 = vunpack.c.l.s4 1983009808
        %v5112 = vunpack.c.0.s8 %v5111
        %v5113 = vperm.slane %v5107, %v5112
        %v5115 = vunpack.c.l.s4 1983009808
        %v5116 = vunpack.c.0.s8 %v5115
        %v5117 = vperm.slane %v5109, %v5116
        %v5118 = vrot.slane %v4969, 4
        %v5119 = vsel %vm2316, %v5118, %v4965
        %v5120 = vrot.slane %v4965, 4
        %v5121 = vsel %vm2316, %v4969, %v5120
        %v5123 = vunpack.c.l.s4 1983009808
        %v5124 = vunpack.c.0.s8 %v5123
        %v5125 = vperm.slane %v5119, %v5124
        %v5127 = vunpack.c.l.s4 1983009808
        %v5128 = vunpack.c.0.s8 %v5127
        %v5129 = vperm.slane %v5121, %v5128
        %v5130 = vrot.slane %v5101, 4
        %v5131 = vsel %vm2316, %v5130, %v5089
        %v5132 = vrot.slane %v5089, 4
        %v5133 = vsel %vm2316, %v5101, %v5132
        %v5135 = vunpack.c.l.s4 1934713408
        %v5136 = vunpack.c.0.s8 %v5135
        %v5137 = vperm.slane %v5131, %v5136
        %v5139 = vunpack.c.l.s4 1934713408
        %v5140 = vunpack.c.0.s8 %v5139
        %v5141 = vperm.slane %v5133, %v5140
        %v5142 = vrot.slane %v5105, 4
        %v5143 = vsel %vm2316, %v5142, %v5093
        %v5144 = vrot.slane %v5093, 4
        %v5145 = vsel %vm2316, %v5105, %v5144
        %v5147 = vunpack.c.l.s4 1934713408
        %v5148 = vunpack.c.0.s8 %v5147
        %v5149 = vperm.slane %v5143, %v5148
        %v5151 = vunpack.c.l.s4 1934713408
        %v5152 = vunpack.c.0.s8 %v5151
        %v5153 = vperm.slane %v5145, %v5152
        %v5154 = vrot.slane %v5125, 4
        %v5155 = vsel %vm2316, %v5154, %v5113
        %v5156 = vrot.slane %v5113, 4
        %v5157 = vsel %vm2316, %v5125, %v5156
        %v5159 = vunpack.c.l.s4 1934713408
        %v5160 = vunpack.c.0.s8 %v5159
        %v5161 = vperm.slane %v5155, %v5160
        %v5163 = vunpack.c.l.s4 1934713408
        %v5164 = vunpack.c.0.s8 %v5163
        %v5165 = vperm.slane %v5157, %v5164
        %v5166 = vrot.slane %v5129, 4
        %v5167 = vsel %vm2316, %v5166, %v5117
        %v5168 = vrot.slane %v5117, 4
        %v5169 = vsel %vm2316, %v5129, %v5168
        %v5171 = vunpack.c.l.s4 1934713408
        %v5172 = vunpack.c.0.s8 %v5171
        %v5173 = vperm.slane %v5167, %v5172
        %v5175 = vunpack.c.l.s4 1934713408
        %v5176 = vunpack.c.0.s8 %v5175
        %v5177 = vperm.slane %v5169, %v5176
        %v5178 = vrot.slane %v5161, 4
        %v5179 = vsel %vm2316, %v5178, %v5137
        %v5180 = vrot.slane %v5137, 4
        %v5181 = vsel %vm2316, %v5161, %v5180
        %v5182 = vrot.slane %v5165, 4
        %v5183 = vsel %vm2316, %v5182, %v5141
        %v5184 = vrot.slane %v5141, 4
        %v5185 = vsel %vm2316, %v5165, %v5184
        %v5186 = vrot.slane %v5173, 4
        %v5187 = vsel %vm2316, %v5186, %v5149
        %v5188 = vrot.slane %v5149, 4
        %v5189 = vsel %vm2316, %v5173, %v5188
        %v5190 = vrot.slane %v5177, 4
        %v5191 = vsel %vm2316, %v5190, %v5153
        %v5192 = vrot.slane %v5153, 4
        %v5193 = vsel %vm2316, %v5177, %v5192
        %v5194 = vrot.slane %v5071, 4
        %v5195 = vsel %vm2316, %v5194, %v5067
        %v5196 = vrot.slane %v5067, 4
        %v5197 = vsel %vm2316, %v5071, %v5196
        %v5199 = vunpack.c.l.s4 1983009808
        %v5200 = vunpack.c.0.s8 %v5199
        %v5201 = vperm.slane %v5195, %v5200
        %v5203 = vunpack.c.l.s4 1983009808
        %v5204 = vunpack.c.0.s8 %v5203
        %v5205 = vperm.slane %v5197, %v5204
        %v5206 = vrot.slane %v5073, 4
        %v5207 = vsel %vm2316, %v5206, %v5069
        %v5208 = vrot.slane %v5069, 4
        %v5209 = vsel %vm2316, %v5073, %v5208
        %v5211 = vunpack.c.l.s4 1983009808
        %v5212 = vunpack.c.0.s8 %v5211
        %v5213 = vperm.slane %v5207, %v5212
        %v5215 = vunpack.c.l.s4 1983009808
        %v5216 = vunpack.c.0.s8 %v5215
        %v5217 = vperm.slane %v5209, %v5216
        %v5218 = vrot.slane %v5079, 4
        %v5219 = vsel %vm2316, %v5218, %v5075
        %v5220 = vrot.slane %v5075, 4
        %v5221 = vsel %vm2316, %v5079, %v5220
        %v5223 = vunpack.c.l.s4 1983009808
        %v5224 = vunpack.c.0.s8 %v5223
        %v5225 = vperm.slane %v5219, %v5224
        %v5227 = vunpack.c.l.s4 1983009808
        %v5228 = vunpack.c.0.s8 %v5227
        %v5229 = vperm.slane %v5221, %v5228
        %v5230 = vrot.slane %v5081, 4
        %v5231 = vsel %vm2316, %v5230, %v5077
        %v5232 = vrot.slane %v5077, 4
        %v5233 = vsel %vm2316, %v5081, %v5232
        %v5235 = vunpack.c.l.s4 1983009808
        %v5236 = vunpack.c.0.s8 %v5235
        %v5237 = vperm.slane %v5231, %v5236
        %v5239 = vunpack.c.l.s4 1983009808
        %v5240 = vunpack.c.0.s8 %v5239
        %v5241 = vperm.slane %v5233, %v5240
        %v5242 = vrot.slane %v5213, 4
        %v5243 = vsel %vm2316, %v5242, %v5201
        %v5244 = vrot.slane %v5201, 4
        %v5245 = vsel %vm2316, %v5213, %v5244
        %v5247 = vunpack.c.l.s4 1934713408
        %v5248 = vunpack.c.0.s8 %v5247
        %v5249 = vperm.slane %v5243, %v5248
        %v5251 = vunpack.c.l.s4 1934713408
        %v5252 = vunpack.c.0.s8 %v5251
        %v5253 = vperm.slane %v5245, %v5252
        %v5254 = vrot.slane %v5217, 4
        %v5255 = vsel %vm2316, %v5254, %v5205
        %v5256 = vrot.slane %v5205, 4
        %v5257 = vsel %vm2316, %v5217, %v5256
        %v5259 = vunpack.c.l.s4 1934713408
        %v5260 = vunpack.c.0.s8 %v5259
        %v5261 = vperm.slane %v5255, %v5260
        %v5263 = vunpack.c.l.s4 1934713408
        %v5264 = vunpack.c.0.s8 %v5263
        %v5265 = vperm.slane %v5257, %v5264
        %v5266 = vrot.slane %v5237, 4
        %v5267 = vsel %vm2316, %v5266, %v5225
        %v5268 = vrot.slane %v5225, 4
        %v5269 = vsel %vm2316, %v5237, %v5268
        %v5271 = vunpack.c.l.s4 1934713408
        %v5272 = vunpack.c.0.s8 %v5271
        %v5273 = vperm.slane %v5267, %v5272
        %v5275 = vunpack.c.l.s4 1934713408
        %v5276 = vunpack.c.0.s8 %v5275
        %v5277 = vperm.slane %v5269, %v5276
        %v5278 = vrot.slane %v5241, 4
        %v5279 = vsel %vm2316, %v5278, %v5229
        %v5280 = vrot.slane %v5229, 4
        %v5281 = vsel %vm2316, %v5241, %v5280
        %v5283 = vunpack.c.l.s4 1934713408
        %v5284 = vunpack.c.0.s8 %v5283
        %v5285 = vperm.slane %v5279, %v5284
        %v5287 = vunpack.c.l.s4 1934713408
        %v5288 = vunpack.c.0.s8 %v5287
        %v5289 = vperm.slane %v5281, %v5288
        %v5290 = vrot.slane %v5273, 4
        %v5291 = vsel %vm2316, %v5290, %v5249
        %v5292 = vrot.slane %v5249, 4
        %v5293 = vsel %vm2316, %v5273, %v5292
        %v5294 = vrot.slane %v5277, 4
        %v5295 = vsel %vm2316, %v5294, %v5253
        %v5296 = vrot.slane %v5253, 4
        %v5297 = vsel %vm2316, %v5277, %v5296
        %v5298 = vrot.slane %v5285, 4
        %v5299 = vsel %vm2316, %v5298, %v5261
        %v5300 = vrot.slane %v5261, 4
        %v5301 = vsel %vm2316, %v5285, %v5300
        %v5302 = vrot.slane %v5289, 4
        %v5303 = vsel %vm2316, %v5302, %v5265
        %v5304 = vrot.slane %v5265, 4
        %v5305 = vsel %vm2316, %v5289, %v5304
        %5308 = vrot.lane.b32.xlu0 %v5181, 28
        %v5309 = vpop.permute.xlu0 %5308
        %5310 = vrot.lane.b32.xlu0 %v5293, 28
        %v5311 = vpop.permute.xlu0 %5310
        %5316 = vrot.lane.b32.xlu0 %v5183, 56
        %v5317 = vpop.permute.xlu0 %5316
        %5318 = vrot.lane.b32.xlu0 %v5295, 56
        %v5319 = vpop.permute.xlu0 %5318
        %5324 = vrot.lane.b32.xlu0 %v5185, 84
        %v5325 = vpop.permute.xlu0 %5324
        %5326 = vrot.lane.b32.xlu0 %v5297, 84
        %v5327 = vpop.permute.xlu0 %5326
        %5332 = vrot.lane.b32.xlu0 %v5187, 112
        %v5333 = vpop.permute.xlu0 %5332
        %5334 = vrot.lane.b32.xlu0 %v5299, 112
        %v5335 = vpop.permute.xlu0 %5334
        %5340 = vrot.lane.b32.xlu0 %v5189, 12
        %v5341 = vpop.permute.xlu0 %5340
        %5342 = vrot.lane.b32.xlu0 %v5301, 12
        %v5343 = vpop.permute.xlu0 %5342
        %5348 = vrot.lane.b32.xlu0 %v5191, 40
        %v5349 = vpop.permute.xlu0 %5348
        %5350 = vrot.lane.b32.xlu0 %v5303, 40
        %v5351 = vpop.permute.xlu0 %5350
        %5356 = vrot.lane.b32.xlu0 %v5193, 68
        %v5357 = vpop.permute.xlu0 %5356
        %5358 = vrot.lane.b32.xlu0 %v5305, 68
        %v5359 = vpop.permute.xlu0 %5358
        %v5362 = vsel %vm3812, %v5179, %v5309
        %v5363 = vsel %vm3812, %v5291, %v5311
        %vm5364 = vcmask 457728
        %v5365 = vsel %vm5364, %v5362, %v5317
        %v5366 = vsel %vm5364, %v5363, %v5319
        %vm5367 = vcmask 687104
        %v5368 = vsel %vm5367, %v5365, %v5325
        %v5369 = vsel %vm5367, %v5366, %v5327
        %vm5370 = vcmask 916480
        %v5371 = vsel %vm5370, %v5368, %v5333
        %v5372 = vsel %vm5370, %v5369, %v5335
        %vm5373 = vcmask 97280
        %v5374 = vsel %vm5373, %v5333, %v5341
        %v5375 = vsel %vm5373, %v5335, %v5343
        %vm5376 = vcmask 326656
        %v5377 = vsel %vm5376, %v5374, %v5349
        %v5378 = vsel %vm5376, %v5375, %v5351
        %vm5379 = vcmask 556032
        %v5380 = vsel %vm5379, %v5377, %v5357
        %v5381 = vsel %vm5379, %v5378, %v5359
        %v5382 = vpack.c.bf16 %v5372, %v5371
        %v5383 = vpack.c.bf16 %v5381, %v5380
        %v5384 = vld [vmem:[%s637] sm:$0xff]
        %v5385 = vld [vmem:[%s637 + $0x8] sm:$0xff]
        %v5386 = vld [vmem:[%s637 + $0x10] sm:$0xff]
        %v5387 = vld [vmem:[%s637 + $0x18] sm:$0xff]
        %v5388 = vld [vmem:[%s637 + $0x20] sm:$0xff]
        %v5389 = vld [vmem:[%s637 + $0x28] sm:$0xff]
        %v5390 = vld [vmem:[%s637 + $0x30] sm:$0xff]
        %v5391 = vld [vmem:[%s637 + $0x38] sm:$0xff]
        %v5392 = vld [vmem:[%s637 + $0x40] sm:$0xff]
        %v5393 = vld [vmem:[%s637 + $0x48] sm:$0xff]
        %v5394 = vld [vmem:[%s637 + $0x50] sm:$0xff]
        %v5395 = vld [vmem:[%s637 + $0x58] sm:$0xff]
        %v5396 = vld [vmem:[%s637 + $0x60] sm:$0xff]
        %v5397 = vld [vmem:[%s637 + $0x68] sm:$0xff]
        %v5398 = vld [vmem:[%s637 + $0x70] sm:$0xff]
        %v5399 = vld [vmem:[%s637 + $0x78] sm:$0xff]
        %v5400 = vld [vmem:[%s637 + $0x80] sm:$0xff]
        %v5401 = vld [vmem:[%s637 + $0x88] sm:$0xff]
        %v5402 = vld [vmem:[%s637 + $0x90] sm:$0xff]
        %v5403 = vld [vmem:[%s637 + $0x98] sm:$0xff]
        %v5404 = vld [vmem:[%s637 + $0xa0] sm:$0xff]
        %v5405 = vld [vmem:[%s637 + $0xa8] sm:$0xff]
        %v5406 = vld [vmem:[%s637 + $0xb0] sm:$0xff]
        %v5407 = vld [vmem:[%s637 + $0xb8] sm:$0xff]
        %v5408 = vld [vmem:[%s637 + $0xc0] sm:$0xff]
        %v5409 = vld [vmem:[%s637 + $0xc8] sm:$0xff]
        %v5410 = vld [vmem:[%s637 + $0xd0] sm:$0xff]
        %v5411 = vld [vmem:[%s637 + $0xd8] sm:$0xff]
        %v5440 = vunpack.c.l.b16 %v5384
        %v5441 = vunpack.c.h.b16 %v5384
        %v5442 = vunpack.c.l.b16 %v5385
        %v5443 = vunpack.c.h.b16 %v5385
        %v5444 = vunpack.c.l.b16 %v5386
        %v5445 = vunpack.c.h.b16 %v5386
        %v5446 = vunpack.c.l.b16 %v5387
        %v5447 = vunpack.c.h.b16 %v5387
        %v5448 = vunpack.c.l.b16 %v5388
        %v5449 = vunpack.c.h.b16 %v5388
        %v5450 = vunpack.c.l.b16 %v5389
        %v5451 = vunpack.c.h.b16 %v5389
        %v5452 = vunpack.c.l.b16 %v5390
        %v5453 = vunpack.c.h.b16 %v5390
        %v5454 = vunpack.c.l.b16 %v5391
        %v5455 = vunpack.c.h.b16 %v5391
        %v5456 = vunpack.c.l.b16 %v5392
        %v5457 = vunpack.c.h.b16 %v5392
        %v5458 = vunpack.c.l.b16 %v5393
        %v5459 = vunpack.c.h.b16 %v5393
        %v5460 = vunpack.c.l.b16 %v5394
        %v5461 = vunpack.c.h.b16 %v5394
        %v5462 = vunpack.c.l.b16 %v5395
        %v5463 = vunpack.c.h.b16 %v5395
        %v5464 = vunpack.c.l.b16 %v5396
        %v5465 = vunpack.c.h.b16 %v5396
        %v5466 = vunpack.c.l.b16 %v5397
        %v5467 = vunpack.c.h.b16 %v5397
        %v5468 = vunpack.c.l.b16 %v5398
        %v5469 = vunpack.c.h.b16 %v5398
        %v5470 = vunpack.c.l.b16 %v5399
        %v5471 = vunpack.c.h.b16 %v5399
        %v5472 = vunpack.c.l.b16 %v5400
        %v5473 = vunpack.c.h.b16 %v5400
        %v5474 = vunpack.c.l.b16 %v5401
        %v5475 = vunpack.c.h.b16 %v5401
        %v5476 = vunpack.c.l.b16 %v5402
        %v5477 = vunpack.c.h.b16 %v5402
        %v5478 = vunpack.c.l.b16 %v5403
        %v5479 = vunpack.c.h.b16 %v5403
        %v5480 = vunpack.c.l.b16 %v5404
        %v5481 = vunpack.c.h.b16 %v5404
        %v5482 = vunpack.c.l.b16 %v5405
        %v5483 = vunpack.c.h.b16 %v5405
        %v5484 = vunpack.c.l.b16 %v5406
        %v5485 = vunpack.c.h.b16 %v5406
        %v5486 = vunpack.c.l.b16 %v5407
        %v5487 = vunpack.c.h.b16 %v5407
        %v5488 = vunpack.c.l.b16 %v5408
        %v5489 = vunpack.c.h.b16 %v5408
        %v5490 = vunpack.c.l.b16 %v5409
        %v5491 = vunpack.c.h.b16 %v5409
        %v5492 = vunpack.c.l.b16 %v5410
        %v5493 = vunpack.c.h.b16 %v5410
        %v5494 = vunpack.c.l.b16 %v5411
        %v5495 = vunpack.c.h.b16 %v5411
        %v5496 = vpack.c.b16 %v5442, %v5440
        %v5497 = vpack.c.b16 %v5443, %v5441
        %v5498 = vpack.c.b16 %v5446, %v5444
        %v5499 = vpack.c.b16 %v5447, %v5445
        %v5500 = vpack.c.b16 %v5450, %v5448
        %v5501 = vpack.c.b16 %v5451, %v5449
        %v5502 = vpack.c.b16 %v5454, %v5452
        %v5503 = vpack.c.b16 %v5455, %v5453
        %v5504 = vpack.c.b16 %v5458, %v5456
        %v5505 = vpack.c.b16 %v5459, %v5457
        %v5506 = vpack.c.b16 %v5462, %v5460
        %v5507 = vpack.c.b16 %v5463, %v5461
        %v5508 = vpack.c.b16 %v5466, %v5464
        %v5509 = vpack.c.b16 %v5467, %v5465
        %v5510 = vpack.c.b16 %v5470, %v5468
        %v5511 = vpack.c.b16 %v5471, %v5469
        %v5512 = vpack.c.b16 %v5474, %v5472
        %v5513 = vpack.c.b16 %v5475, %v5473
        %v5514 = vpack.c.b16 %v5478, %v5476
        %v5515 = vpack.c.b16 %v5479, %v5477
        %v5516 = vpack.c.b16 %v5482, %v5480
        %v5517 = vpack.c.b16 %v5483, %v5481
        %v5518 = vpack.c.b16 %v5486, %v5484
        %v5519 = vpack.c.b16 %v5487, %v5485
        %v5520 = vpack.c.b16 %v5490, %v5488
        %v5521 = vpack.c.b16 %v5491, %v5489
        %v5522 = vpack.c.b16 %v5494, %v5492
        %v5523 = vpack.c.b16 %v5495, %v5493
        %v5553 = vsel %vm1505, %v5383, 0
        %5555 = vmatpush.bf16.msra.mxu0 %v5510
        %5556 = vmatpush.bf16.msra.mxu0 %v5508
        %5557 = vmatpush.bf16.msra.mxu0 %v5506
        %5558 = vmatpush.bf16.msra.mxu0 %v5504
        %5559 = vmatpush.bf16.msra.mxu0 %v5502
        %5560 = vmatpush.bf16.msra.mxu0 %v5500
        %5561 = vmatpush.bf16.msra.mxu0 %v5498
        %5562 = vmatpush.bf16.msra.mxu0 %v5496
        %5563 = vmatmul.bf16.gmra.mxu0 %v5382
        %v5564 = vpop.f32.mrf.mxu0
        %v5565 = vadd.f32 0.0, %v5564
        %v5566 = vpop.f32.mrf.mxu0
        %v5567 = vadd.f32 0.0, %v5566
        %5568 = vdwg.mxu0
        %5569 = vmatpush.bf16.msra.mxu0 0
        %5570 = vmatpush.bf16.msra.mxu0 0
        %5571 = vmatpush.bf16.msra.mxu0 %v5522
        %5572 = vmatpush.bf16.msra.mxu0 %v5520
        %5573 = vmatpush.bf16.msra.mxu0 %v5518
        %5574 = vmatpush.bf16.msra.mxu0 %v5516
        %5575 = vmatpush.bf16.msra.mxu0 %v5514
        %5576 = vmatpush.bf16.msra.mxu0 %v5512
        %5577 = vmatmul.bf16.gmra.mxu0 %v5553
        %v5578 = vpop.f32.mrf.mxu0
        %v5579 = vadd.f32 %v5565, %v5578
        %v5580 = vpop.f32.mrf.mxu0
        %v5581 = vadd.f32 %v5567, %v5580
        %5582 = vdwg.mxu0
        %5583 = vmatpush.bf16.msra.mxu0 %v5511
        %5584 = vmatpush.bf16.msra.mxu0 %v5509
        %5585 = vmatpush.bf16.msra.mxu0 %v5507
        %5586 = vmatpush.bf16.msra.mxu0 %v5505
        %5587 = vmatpush.bf16.msra.mxu0 %v5503
        %5588 = vmatpush.bf16.msra.mxu0 %v5501
        %5589 = vmatpush.bf16.msra.mxu0 %v5499
        %5590 = vmatpush.bf16.msra.mxu0 %v5497
        %5591 = vmatmul.bf16.gmra.mxu0 %v5382
        %v5592 = vpop.f32.mrf.mxu0
        %v5593 = vadd.f32 0.0, %v5592
        %v5594 = vpop.f32.mrf.mxu0
        %v5595 = vadd.f32 0.0, %v5594
        %5596 = vdwg.mxu0
        %5597 = vmatpush.bf16.msra.mxu0 0
        %5598 = vmatpush.bf16.msra.mxu0 0
        %5599 = vmatpush.bf16.msra.mxu0 %v5523
        %5600 = vmatpush.bf16.msra.mxu0 %v5521
        %5601 = vmatpush.bf16.msra.mxu0 %v5519
        %5602 = vmatpush.bf16.msra.mxu0 %v5517
        %5603 = vmatpush.bf16.msra.mxu0 %v5515
        %5604 = vmatpush.bf16.msra.mxu0 %v5513
        %5605 = vmatmul.bf16.gmra.mxu0 %v5553
        %v5606 = vpop.f32.mrf.mxu0
        %v5607 = vadd.f32 %v5593, %v5606
        %v5608 = vpop.f32.mrf.mxu0
        %v5609 = vadd.f32 %v5595, %v5608
        %5610 = vdwg.mxu0
        %v5611 = vadd.f32 %v1498, %v5579
        %v5612 = vadd.f32 %v1499, %v5607
        %v5613 = vadd.f32 %v1500, %v5581
        %v5614 = vadd.f32 %v1501, %v5609
        %s5615 = scalar_lea.vmem %s617, 4
        %v5616 = vld [vmem:[%s5615] ss:$8 sm:$0x3]
        %v5618 = vperm.slane %v5616, 0
        %v5619 = vperm.slane %v5616, 1
        %v5622 = vadd.f32 %v5611, %v5618
        %v5623 = vadd.f32 %v5612, %v5619
        %v5624 = vadd.f32 %v5613, %v5618
        %v5625 = vadd.f32 %v5614, %v5619
        %s5626 = scalar_lea.vmem %s617, 2
        %v5627 = vld [vmem:[%s5626] ss:$8 sm:$0x3]
        %s5628 = scalar_lea.vmem %s617, 3
        %v5629 = vld [vmem:[%s5628] ss:$8 sm:$0x3]
        %v5630 = vsel %vm1505, %v5623, 0.0
        %v5631 = vadd.f32 %v5622, %v5630
        %5632 = vadd.xlane.f32.xlu0 %v5631
        %v5633 = vpop.xlane.xlu0 %5632
        %v5634 = vsel %vm1505, %v5625, 0.0
        %v5635 = vadd.f32 %v5624, %v5634
        %5636 = vadd.xlane.f32.xlu0 %v5635
        %v5637 = vpop.xlane.xlu0 %5636
        %v5638 = vmul.f32 %v5633, %v1520
        %v5639 = vmul.f32 %v5637, %v1520
        %v5640 = vsub.f32 %v5622, %v5638
        %v5641 = vsub.f32 %v5623, %v5638
        %v5642 = vsub.f32 %v5624, %v5639
        %v5643 = vsub.f32 %v5625, %v5639
        %v5644 = vmul.f32 %v5640, %v5640
        %v5645 = vmul.f32 %v5641, %v5641
        %v5646 = vmul.f32 %v5642, %v5642
        %v5647 = vmul.f32 %v5643, %v5643
        %v5648 = vsel %vm1505, %v5645, 0.0
        %v5649 = vadd.f32 %v5644, %v5648
        %5650 = vadd.xlane.f32.xlu0 %v5649
        %v5651 = vpop.xlane.xlu0 %5650
        %v5652 = vsel %vm1505, %v5647, 0.0
        %v5653 = vadd.f32 %v5646, %v5652
        %5654 = vadd.xlane.f32.xlu0 %v5653
        %v5655 = vpop.xlane.xlu0 %5654
        %v5656 = vmul.f32 %v5651, %v1520
        %v5657 = vmul.f32 %v5655, %v1520
        %v5658 = vadd.f32 %v5656, 1e-05
        %v5659 = vadd.f32 %v5657, 1e-05
        %v5660 = vrsqrt.pop %v5658
        %v5661 = vmul.f32 %v5660, %v5658
        %v5662 = vmul.f32 %v5661, %v5660
        %v5663 = vmul.f32 0.5, %v5662
        %v5664 = vsub.f32 1.5, %v5663
        %v5665 = vmul.f32 %v5660, %v5664
        %vm5666 = vweird.f32 %v5658
        %vm5667 = vweird.f32 %v5660
        %vm5668 = vmor %vm5666, %vm5667
        %v5669 = vsel %vm5668, %v5660, %v5665
        %v5670 = vrsqrt.pop %v5659
        %v5671 = vmul.f32 %v5670, %v5659
        %v5672 = vmul.f32 %v5671, %v5670
        %v5673 = vmul.f32 0.5, %v5672
        %v5674 = vsub.f32 1.5, %v5673
        %v5675 = vmul.f32 %v5670, %v5674
        %vm5676 = vweird.f32 %v5659
        %vm5677 = vweird.f32 %v5670
        %vm5678 = vmor %vm5676, %vm5677
        %v5679 = vsel %vm5678, %v5670, %v5675
        %v5680 = vmul.f32 %v5640, %v5669
        %v5681 = vmul.f32 %v5641, %v5669
        %v5682 = vmul.f32 %v5642, %v5679
        %v5683 = vmul.f32 %v5643, %v5679
        %v5685 = vperm.slane %v5627, 0
        %v5686 = vperm.slane %v5627, 1
        %v5689 = vmul.f32 %v5680, %v5685
        %v5690 = vmul.f32 %v5681, %v5686
        %v5691 = vmul.f32 %v5682, %v5685
        %v5692 = vmul.f32 %v5683, %v5686
        %v5694 = vperm.slane %v5629, 0
        %v5695 = vperm.slane %v5629, 1
        %v5698 = vadd.f32 %v5689, %v5694
        %v5699 = vadd.f32 %v5690, %v5695
        %v5700 = vadd.f32 %v5691, %v5694
        %v5701 = vadd.f32 %v5692, %v5695
        %v5702 = vpack.c.bf16 %v5700, %v5698
        %v5703 = vpack.c.bf16 %v5701, %v5699
        %v5704 = vld [vmem:[%s642] sm:$0xff]
        %v5705 = vld [vmem:[%s642 + $0x8] sm:$0xff]
        %v5706 = vld [vmem:[%s642 + $0x10] sm:$0xff]
        %v5707 = vld [vmem:[%s642 + $0x18] sm:$0xff]
        %v5708 = vld [vmem:[%s642 + $0x20] sm:$0xff]
        %v5709 = vld [vmem:[%s642 + $0x28] sm:$0xff]
        %v5710 = vld [vmem:[%s642 + $0x30] sm:$0xff]
        %v5711 = vld [vmem:[%s642 + $0x38] sm:$0xff]
        %v5712 = vld [vmem:[%s642 + $0x40] sm:$0xff]
        %v5713 = vld [vmem:[%s642 + $0x48] sm:$0xff]
        %v5714 = vld [vmem:[%s642 + $0x50] sm:$0xff]
        %v5715 = vld [vmem:[%s642 + $0x58] sm:$0xff]
        %v5716 = vld [vmem:[%s642 + $0x60] sm:$0xff]
        %v5717 = vld [vmem:[%s642 + $0x68] sm:$0xff]
        %v5718 = vld [vmem:[%s642 + $0x70] sm:$0xff]
        %v5719 = vld [vmem:[%s642 + $0x78] sm:$0xff]
        %v5720 = vld [vmem:[%s642 + $0x80] sm:$0xff]
        %v5721 = vld [vmem:[%s642 + $0x88] sm:$0xff]
        %v5722 = vld [vmem:[%s642 + $0x90] sm:$0xff]
        %v5723 = vld [vmem:[%s642 + $0x98] sm:$0xff]
        %v5724 = vld [vmem:[%s642 + $0xa0] sm:$0xff]
        %v5725 = vld [vmem:[%s642 + $0xa8] sm:$0xff]
        %v5726 = vld [vmem:[%s642 + $0xb0] sm:$0xff]
        %v5727 = vld [vmem:[%s642 + $0xb8] sm:$0xff]
        %v5728 = vld [vmem:[%s642 + $0xc0] sm:$0xff]
        %v5729 = vld [vmem:[%s642 + $0xc8] sm:$0xff]
        %v5730 = vld [vmem:[%s642 + $0xd0] sm:$0xff]
        %v5731 = vld [vmem:[%s642 + $0xd8] sm:$0xff]
        %v5732 = vld [vmem:[%s642 + $0xe0] sm:$0xff]
        %v5733 = vld [vmem:[%s642 + $0xe8] sm:$0xff]
        %v5734 = vld [vmem:[%s642 + $0xf0] sm:$0xff]
        %v5735 = vld [vmem:[%s642 + $0xf8] sm:$0xff]
        %v5736 = vld [vmem:[%s642 + $0x100] sm:$0xff]
        %v5737 = vld [vmem:[%s642 + $0x108] sm:$0xff]
        %v5738 = vld [vmem:[%s642 + $0x110] sm:$0xff]
        %v5739 = vld [vmem:[%s642 + $0x118] sm:$0xff]
        %v5740 = vld [vmem:[%s642 + $0x120] sm:$0xff]
        %v5741 = vld [vmem:[%s642 + $0x128] sm:$0xff]
        %v5742 = vld [vmem:[%s642 + $0x130] sm:$0xff]
        %v5743 = vld [vmem:[%s642 + $0x138] sm:$0xff]
        %v5744 = vld [vmem:[%s642 + $0x140] sm:$0xff]
        %v5745 = vld [vmem:[%s642 + $0x148] sm:$0xff]
        %v5746 = vld [vmem:[%s642 + $0x150] sm:$0xff]
        %v5747 = vld [vmem:[%s642 + $0x158] sm:$0xff]
        %v5748 = vld [vmem:[%s642 + $0x160] sm:$0xff]
        %v5749 = vld [vmem:[%s642 + $0x168] sm:$0xff]
        %v5750 = vld [vmem:[%s642 + $0x170] sm:$0xff]
        %v5751 = vld [vmem:[%s642 + $0x178] sm:$0xff]
        %v5752 = vld [vmem:[%s642 + $0x180] sm:$0xff]
        %v5753 = vld [vmem:[%s642 + $0x188] sm:$0xff]
        %v5754 = vld [vmem:[%s642 + $0x190] sm:$0xff]
        %v5755 = vld [vmem:[%s642 + $0x198] sm:$0xff]
        %v5756 = vld [vmem:[%s642 + $0x1a0] sm:$0xff]
        %v5757 = vld [vmem:[%s642 + $0x1a8] sm:$0xff]
        %v5758 = vld [vmem:[%s642 + $0x1b0] sm:$0xff]
        %v5759 = vld [vmem:[%s642 + $0x1b8] sm:$0xff]
        %v5760 = vld [vmem:[%s642 + $0x1c0] sm:$0xff]
        %v5761 = vld [vmem:[%s642 + $0x1c8] sm:$0xff]
        %v5762 = vld [vmem:[%s642 + $0x1d0] sm:$0xff]
        %v5763 = vld [vmem:[%s642 + $0x1d8] sm:$0xff]
        %v5764 = vld [vmem:[%s642 + $0x1e0] sm:$0xff]
        %v5765 = vld [vmem:[%s642 + $0x1e8] sm:$0xff]
        %v5766 = vld [vmem:[%s642 + $0x1f0] sm:$0xff]
        %v5767 = vld [vmem:[%s642 + $0x1f8] sm:$0xff]
        %v5768 = vld [vmem:[%s642 + $0x200] sm:$0xff]
        %v5769 = vld [vmem:[%s642 + $0x208] sm:$0xff]
        %v5770 = vld [vmem:[%s642 + $0x210] sm:$0xff]
        %v5771 = vld [vmem:[%s642 + $0x218] sm:$0xff]
        %v5772 = vld [vmem:[%s642 + $0x220] sm:$0xff]
        %v5773 = vld [vmem:[%s642 + $0x228] sm:$0xff]
        %v5774 = vld [vmem:[%s642 + $0x230] sm:$0xff]
        %v5775 = vld [vmem:[%s642 + $0x238] sm:$0xff]
        %v5776 = vld [vmem:[%s642 + $0x240] sm:$0xff]
        %v5777 = vld [vmem:[%s642 + $0x248] sm:$0xff]
        %v5778 = vld [vmem:[%s642 + $0x250] sm:$0xff]
        %v5779 = vld [vmem:[%s642 + $0x258] sm:$0xff]
        %v5780 = vld [vmem:[%s642 + $0x260] sm:$0xff]
        %v5781 = vld [vmem:[%s642 + $0x268] sm:$0xff]
        %v5782 = vld [vmem:[%s642 + $0x270] sm:$0xff]
        %v5783 = vld [vmem:[%s642 + $0x278] sm:$0xff]
        %v5784 = vld [vmem:[%s642 + $0x280] sm:$0xff]
        %v5785 = vld [vmem:[%s642 + $0x288] sm:$0xff]
        %v5786 = vld [vmem:[%s642 + $0x290] sm:$0xff]
        %v5787 = vld [vmem:[%s642 + $0x298] sm:$0xff]
        %v5788 = vld [vmem:[%s642 + $0x2a0] sm:$0xff]
        %v5789 = vld [vmem:[%s642 + $0x2a8] sm:$0xff]
        %v5790 = vld [vmem:[%s642 + $0x2b0] sm:$0xff]
        %v5791 = vld [vmem:[%s642 + $0x2b8] sm:$0xff]
        %v5792 = vld [vmem:[%s642 + $0x2c0] sm:$0xff]
        %v5793 = vld [vmem:[%s642 + $0x2c8] sm:$0xff]
        %v5794 = vld [vmem:[%s642 + $0x2d0] sm:$0xff]
        %v5795 = vld [vmem:[%s642 + $0x2d8] sm:$0xff]
        %v5796 = vld [vmem:[%s642 + $0x2e0] sm:$0xff]
        %v5797 = vld [vmem:[%s642 + $0x2e8] sm:$0xff]
        %v5798 = vld [vmem:[%s642 + $0x2f0] sm:$0xff]
        %v5799 = vld [vmem:[%s642 + $0x2f8] sm:$0xff]
        %v5800 = vld [vmem:[%s642 + $0x300] sm:$0xff]
        %v5801 = vld [vmem:[%s642 + $0x308] sm:$0xff]
        %v5802 = vld [vmem:[%s642 + $0x310] sm:$0xff]
        %v5803 = vld [vmem:[%s642 + $0x318] sm:$0xff]
        %v5804 = vld [vmem:[%s642 + $0x320] sm:$0xff]
        %v5805 = vld [vmem:[%s642 + $0x328] sm:$0xff]
        %v5806 = vld [vmem:[%s642 + $0x330] sm:$0xff]
        %v5807 = vld [vmem:[%s642 + $0x338] sm:$0xff]
        %v5808 = vld [vmem:[%s642 + $0x340] sm:$0xff]
        %v5809 = vld [vmem:[%s642 + $0x348] sm:$0xff]
        %v5810 = vld [vmem:[%s642 + $0x350] sm:$0xff]
        %v5811 = vld [vmem:[%s642 + $0x358] sm:$0xff]
        %v5812 = vld [vmem:[%s642 + $0x360] sm:$0xff]
        %v5813 = vld [vmem:[%s642 + $0x368] sm:$0xff]
        %v5814 = vld [vmem:[%s642 + $0x370] sm:$0xff]
        %v5815 = vld [vmem:[%s642 + $0x378] sm:$0xff]
        %v5816 = vunpack.c.0.s8 %v5704
        %v5817 = vunpack.c.0.s8 %v5705
        %v5818 = vunpack.c.0.s8 %v5706
        %v5819 = vunpack.c.0.s8 %v5707
        %v5820 = vunpack.c.0.s8 %v5708
        %v5821 = vunpack.c.0.s8 %v5709
        %v5822 = vunpack.c.0.s8 %v5710
        %v5823 = vunpack.c.0.s8 %v5711
        %v5824 = vunpack.c.0.s8 %v5712
        %v5825 = vunpack.c.0.s8 %v5713
        %v5826 = vunpack.c.0.s8 %v5714
        %v5827 = vunpack.c.0.s8 %v5715
        %v5828 = vunpack.c.0.s8 %v5716
        %v5829 = vunpack.c.0.s8 %v5717
        %v5830 = vunpack.c.0.s8 %v5718
        %v5831 = vunpack.c.0.s8 %v5719
        %v5832 = vunpack.c.1.s8 %v5704
        %v5833 = vunpack.c.1.s8 %v5705
        %v5834 = vunpack.c.1.s8 %v5706
        %v5835 = vunpack.c.1.s8 %v5707
        %v5836 = vunpack.c.1.s8 %v5708
        %v5837 = vunpack.c.1.s8 %v5709
        %v5838 = vunpack.c.1.s8 %v5710
        %v5839 = vunpack.c.1.s8 %v5711
        %v5840 = vunpack.c.1.s8 %v5712
        %v5841 = vunpack.c.1.s8 %v5713
        %v5842 = vunpack.c.1.s8 %v5714
        %v5843 = vunpack.c.1.s8 %v5715
        %v5844 = vunpack.c.1.s8 %v5716
        %v5845 = vunpack.c.1.s8 %v5717
        %v5846 = vunpack.c.1.s8 %v5718
        %v5847 = vunpack.c.1.s8 %v5719
        %v5848 = vunpack.c.2.s8 %v5704
        %v5849 = vunpack.c.2.s8 %v5705
        %v5850 = vunpack.c.2.s8 %v5706
        %v5851 = vunpack.c.2.s8 %v5707
        %v5852 = vunpack.c.2.s8 %v5708
        %v5853 = vunpack.c.2.s8 %v5709
        %v5854 = vunpack.c.2.s8 %v5710
        %v5855 = vunpack.c.2.s8 %v5711
        %v5856 = vunpack.c.2.s8 %v5712
        %v5857 = vunpack.c.2.s8 %v5713
        %v5858 = vunpack.c.2.s8 %v5714
        %v5859 = vunpack.c.2.s8 %v5715
        %v5860 = vunpack.c.2.s8 %v5716
        %v5861 = vunpack.c.2.s8 %v5717
        %v5862 = vunpack.c.2.s8 %v5718
        %v5863 = vunpack.c.2.s8 %v5719
        %v5864 = vunpack.c.3.s8 %v5704
        %v5865 = vunpack.c.3.s8 %v5705
        %v5866 = vunpack.c.3.s8 %v5706
        %v5867 = vunpack.c.3.s8 %v5707
        %v5868 = vunpack.c.3.s8 %v5708
        %v5869 = vunpack.c.3.s8 %v5709
        %v5870 = vunpack.c.3.s8 %v5710
        %v5871 = vunpack.c.3.s8 %v5711
        %v5872 = vunpack.c.3.s8 %v5712
        %v5873 = vunpack.c.3.s8 %v5713
        %v5874 = vunpack.c.3.s8 %v5714
        %v5875 = vunpack.c.3.s8 %v5715
        %v5876 = vunpack.c.3.s8 %v5716
        %v5877 = vunpack.c.3.s8 %v5717
        %v5878 = vunpack.c.3.s8 %v5718
        %v5879 = vunpack.c.3.s8 %v5719
        %v5880 = vunpack.c.0.s8 %v5720
        %v5881 = vunpack.c.0.s8 %v5721
        %v5882 = vunpack.c.0.s8 %v5722
        %v5883 = vunpack.c.0.s8 %v5723
        %v5884 = vunpack.c.0.s8 %v5724
        %v5885 = vunpack.c.0.s8 %v5725
        %v5886 = vunpack.c.0.s8 %v5726
        %v5887 = vunpack.c.0.s8 %v5727
        %v5888 = vunpack.c.0.s8 %v5728
        %v5889 = vunpack.c.0.s8 %v5729
        %v5890 = vunpack.c.0.s8 %v5730
        %v5891 = vunpack.c.0.s8 %v5731
        %v5892 = vunpack.c.0.s8 %v5732
        %v5893 = vunpack.c.0.s8 %v5733
        %v5894 = vunpack.c.0.s8 %v5734
        %v5895 = vunpack.c.0.s8 %v5735
        %v5896 = vunpack.c.1.s8 %v5720
        %v5897 = vunpack.c.1.s8 %v5721
        %v5898 = vunpack.c.1.s8 %v5722
        %v5899 = vunpack.c.1.s8 %v5723
        %v5900 = vunpack.c.1.s8 %v5724
        %v5901 = vunpack.c.1.s8 %v5725
        %v5902 = vunpack.c.1.s8 %v5726
        %v5903 = vunpack.c.1.s8 %v5727
        %v5904 = vunpack.c.1.s8 %v5728
        %v5905 = vunpack.c.1.s8 %v5729
        %v5906 = vunpack.c.1.s8 %v5730
        %v5907 = vunpack.c.1.s8 %v5731
        %v5908 = vunpack.c.1.s8 %v5732
        %v5909 = vunpack.c.1.s8 %v5733
        %v5910 = vunpack.c.1.s8 %v5734
        %v5911 = vunpack.c.1.s8 %v5735
        %v5912 = vunpack.c.2.s8 %v5720
        %v5913 = vunpack.c.2.s8 %v5721
        %v5914 = vunpack.c.2.s8 %v5722
        %v5915 = vunpack.c.2.s8 %v5723
        %v5916 = vunpack.c.2.s8 %v5724
        %v5917 = vunpack.c.2.s8 %v5725
        %v5918 = vunpack.c.2.s8 %v5726
        %v5919 = vunpack.c.2.s8 %v5727
        %v5920 = vunpack.c.2.s8 %v5728
        %v5921 = vunpack.c.2.s8 %v5729
        %v5922 = vunpack.c.2.s8 %v5730
        %v5923 = vunpack.c.2.s8 %v5731
        %v5924 = vunpack.c.2.s8 %v5732
        %v5925 = vunpack.c.2.s8 %v5733
        %v5926 = vunpack.c.2.s8 %v5734
        %v5927 = vunpack.c.2.s8 %v5735
        %v5928 = vunpack.c.3.s8 %v5720
        %v5929 = vunpack.c.3.s8 %v5721
        %v5930 = vunpack.c.3.s8 %v5722
        %v5931 = vunpack.c.3.s8 %v5723
        %v5932 = vunpack.c.3.s8 %v5724
        %v5933 = vunpack.c.3.s8 %v5725
        %v5934 = vunpack.c.3.s8 %v5726
        %v5935 = vunpack.c.3.s8 %v5727
        %v5936 = vunpack.c.3.s8 %v5728
        %v5937 = vunpack.c.3.s8 %v5729
        %v5938 = vunpack.c.3.s8 %v5730
        %v5939 = vunpack.c.3.s8 %v5731
        %v5940 = vunpack.c.3.s8 %v5732
        %v5941 = vunpack.c.3.s8 %v5733
        %v5942 = vunpack.c.3.s8 %v5734
        %v5943 = vunpack.c.3.s8 %v5735
        %v5944 = vunpack.c.0.s8 %v5736
        %v5945 = vunpack.c.0.s8 %v5737
        %v5946 = vunpack.c.0.s8 %v5738
        %v5947 = vunpack.c.0.s8 %v5739
        %v5948 = vunpack.c.0.s8 %v5740
        %v5949 = vunpack.c.0.s8 %v5741
        %v5950 = vunpack.c.0.s8 %v5742
        %v5951 = vunpack.c.0.s8 %v5743
        %v5952 = vunpack.c.0.s8 %v5744
        %v5953 = vunpack.c.0.s8 %v5745
        %v5954 = vunpack.c.0.s8 %v5746
        %v5955 = vunpack.c.0.s8 %v5747
        %v5956 = vunpack.c.0.s8 %v5748
        %v5957 = vunpack.c.0.s8 %v5749
        %v5958 = vunpack.c.0.s8 %v5750
        %v5959 = vunpack.c.0.s8 %v5751
        %v5960 = vunpack.c.1.s8 %v5736
        %v5961 = vunpack.c.1.s8 %v5737
        %v5962 = vunpack.c.1.s8 %v5738
        %v5963 = vunpack.c.1.s8 %v5739
        %v5964 = vunpack.c.1.s8 %v5740
        %v5965 = vunpack.c.1.s8 %v5741
        %v5966 = vunpack.c.1.s8 %v5742
        %v5967 = vunpack.c.1.s8 %v5743
        %v5968 = vunpack.c.1.s8 %v5744
        %v5969 = vunpack.c.1.s8 %v5745
        %v5970 = vunpack.c.1.s8 %v5746
        %v5971 = vunpack.c.1.s8 %v5747
        %v5972 = vunpack.c.1.s8 %v5748
        %v5973 = vunpack.c.1.s8 %v5749
        %v5974 = vunpack.c.1.s8 %v5750
        %v5975 = vunpack.c.1.s8 %v5751
        %v5976 = vunpack.c.2.s8 %v5736
        %v5977 = vunpack.c.2.s8 %v5737
        %v5978 = vunpack.c.2.s8 %v5738
        %v5979 = vunpack.c.2.s8 %v5739
        %v5980 = vunpack.c.2.s8 %v5740
        %v5981 = vunpack.c.2.s8 %v5741
        %v5982 = vunpack.c.2.s8 %v5742
        %v5983 = vunpack.c.2.s8 %v5743
        %v5984 = vunpack.c.2.s8 %v5744
        %v5985 = vunpack.c.2.s8 %v5745
        %v5986 = vunpack.c.2.s8 %v5746
        %v5987 = vunpack.c.2.s8 %v5747
        %v5988 = vunpack.c.2.s8 %v5748
        %v5989 = vunpack.c.2.s8 %v5749
        %v5990 = vunpack.c.2.s8 %v5750
        %v5991 = vunpack.c.2.s8 %v5751
        %v5992 = vunpack.c.3.s8 %v5736
        %v5993 = vunpack.c.3.s8 %v5737
        %v5994 = vunpack.c.3.s8 %v5738
        %v5995 = vunpack.c.3.s8 %v5739
        %v5996 = vunpack.c.3.s8 %v5740
        %v5997 = vunpack.c.3.s8 %v5741
        %v5998 = vunpack.c.3.s8 %v5742
        %v5999 = vunpack.c.3.s8 %v5743
        %v6000 = vunpack.c.3.s8 %v5744
        %v6001 = vunpack.c.3.s8 %v5745
        %v6002 = vunpack.c.3.s8 %v5746
        %v6003 = vunpack.c.3.s8 %v5747
        %v6004 = vunpack.c.3.s8 %v5748
        %v6005 = vunpack.c.3.s8 %v5749
        %v6006 = vunpack.c.3.s8 %v5750
        %v6007 = vunpack.c.3.s8 %v5751
        %v6008 = vunpack.c.0.s8 %v5752
        %v6009 = vunpack.c.0.s8 %v5753
        %v6010 = vunpack.c.0.s8 %v5754
        %v6011 = vunpack.c.0.s8 %v5755
        %v6012 = vunpack.c.0.s8 %v5756
        %v6013 = vunpack.c.0.s8 %v5757
        %v6014 = vunpack.c.0.s8 %v5758
        %v6015 = vunpack.c.0.s8 %v5759
        %v6016 = vunpack.c.0.s8 %v5760
        %v6017 = vunpack.c.0.s8 %v5761
        %v6018 = vunpack.c.0.s8 %v5762
        %v6019 = vunpack.c.0.s8 %v5763
        %v6020 = vunpack.c.0.s8 %v5764
        %v6021 = vunpack.c.0.s8 %v5765
        %v6022 = vunpack.c.0.s8 %v5766
        %v6023 = vunpack.c.0.s8 %v5767
        %v6024 = vunpack.c.1.s8 %v5752
        %v6025 = vunpack.c.1.s8 %v5753
        %v6026 = vunpack.c.1.s8 %v5754
        %v6027 = vunpack.c.1.s8 %v5755
        %v6028 = vunpack.c.1.s8 %v5756
        %v6029 = vunpack.c.1.s8 %v5757
        %v6030 = vunpack.c.1.s8 %v5758
        %v6031 = vunpack.c.1.s8 %v5759
        %v6032 = vunpack.c.1.s8 %v5760
        %v6033 = vunpack.c.1.s8 %v5761
        %v6034 = vunpack.c.1.s8 %v5762
        %v6035 = vunpack.c.1.s8 %v5763
        %v6036 = vunpack.c.1.s8 %v5764
        %v6037 = vunpack.c.1.s8 %v5765
        %v6038 = vunpack.c.1.s8 %v5766
        %v6039 = vunpack.c.1.s8 %v5767
        %v6040 = vunpack.c.2.s8 %v5752
        %v6041 = vunpack.c.2.s8 %v5753
        %v6042 = vunpack.c.2.s8 %v5754
        %v6043 = vunpack.c.2.s8 %v5755
        %v6044 = vunpack.c.2.s8 %v5756
        %v6045 = vunpack.c.2.s8 %v5757
        %v6046 = vunpack.c.2.s8 %v5758
        %v6047 = vunpack.c.2.s8 %v5759
        %v6048 = vunpack.c.2.s8 %v5760
        %v6049 = vunpack.c.2.s8 %v5761
        %v6050 = vunpack.c.2.s8 %v5762
        %v6051 = vunpack.c.2.s8 %v5763
        %v6052 = vunpack.c.2.s8 %v5764
        %v6053 = vunpack.c.2.s8 %v5765
        %v6054 = vunpack.c.2.s8 %v5766
        %v6055 = vunpack.c.2.s8 %v5767
        %v6056 = vunpack.c.3.s8 %v5752
        %v6057 = vunpack.c.3.s8 %v5753
        %v6058 = vunpack.c.3.s8 %v5754
        %v6059 = vunpack.c.3.s8 %v5755
        %v6060 = vunpack.c.3.s8 %v5756
        %v6061 = vunpack.c.3.s8 %v5757
        %v6062 = vunpack.c.3.s8 %v5758
        %v6063 = vunpack.c.3.s8 %v5759
        %v6064 = vunpack.c.3.s8 %v5760
        %v6065 = vunpack.c.3.s8 %v5761
        %v6066 = vunpack.c.3.s8 %v5762
        %v6067 = vunpack.c.3.s8 %v5763
        %v6068 = vunpack.c.3.s8 %v5764
        %v6069 = vunpack.c.3.s8 %v5765
        %v6070 = vunpack.c.3.s8 %v5766
        %v6071 = vunpack.c.3.s8 %v5767
        %v6072 = vunpack.c.0.s8 %v5768
        %v6073 = vunpack.c.0.s8 %v5769
        %v6074 = vunpack.c.0.s8 %v5770
        %v6075 = vunpack.c.0.s8 %v5771
        %v6076 = vunpack.c.0.s8 %v5772
        %v6077 = vunpack.c.0.s8 %v5773
        %v6078 = vunpack.c.0.s8 %v5774
        %v6079 = vunpack.c.0.s8 %v5775
        %v6080 = vunpack.c.0.s8 %v5776
        %v6081 = vunpack.c.0.s8 %v5777
        %v6082 = vunpack.c.0.s8 %v5778
        %v6083 = vunpack.c.0.s8 %v5779
        %v6084 = vunpack.c.0.s8 %v5780
        %v6085 = vunpack.c.0.s8 %v5781
        %v6086 = vunpack.c.0.s8 %v5782
        %v6087 = vunpack.c.0.s8 %v5783
        %v6088 = vunpack.c.1.s8 %v5768
        %v6089 = vunpack.c.1.s8 %v5769
        %v6090 = vunpack.c.1.s8 %v5770
        %v6091 = vunpack.c.1.s8 %v5771
        %v6092 = vunpack.c.1.s8 %v5772
        %v6093 = vunpack.c.1.s8 %v5773
        %v6094 = vunpack.c.1.s8 %v5774
        %v6095 = vunpack.c.1.s8 %v5775
        %v6096 = vunpack.c.1.s8 %v5776
        %v6097 = vunpack.c.1.s8 %v5777
        %v6098 = vunpack.c.1.s8 %v5778
        %v6099 = vunpack.c.1.s8 %v5779
        %v6100 = vunpack.c.1.s8 %v5780
        %v6101 = vunpack.c.1.s8 %v5781
        %v6102 = vunpack.c.1.s8 %v5782
        %v6103 = vunpack.c.1.s8 %v5783
        %v6104 = vunpack.c.2.s8 %v5768
        %v6105 = vunpack.c.2.s8 %v5769
        %v6106 = vunpack.c.2.s8 %v5770
        %v6107 = vunpack.c.2.s8 %v5771
        %v6108 = vunpack.c.2.s8 %v5772
        %v6109 = vunpack.c.2.s8 %v5773
        %v6110 = vunpack.c.2.s8 %v5774
        %v6111 = vunpack.c.2.s8 %v5775
        %v6112 = vunpack.c.2.s8 %v5776
        %v6113 = vunpack.c.2.s8 %v5777
        %v6114 = vunpack.c.2.s8 %v5778
        %v6115 = vunpack.c.2.s8 %v5779
        %v6116 = vunpack.c.2.s8 %v5780
        %v6117 = vunpack.c.2.s8 %v5781
        %v6118 = vunpack.c.2.s8 %v5782
        %v6119 = vunpack.c.2.s8 %v5783
        %v6120 = vunpack.c.3.s8 %v5768
        %v6121 = vunpack.c.3.s8 %v5769
        %v6122 = vunpack.c.3.s8 %v5770
        %v6123 = vunpack.c.3.s8 %v5771
        %v6124 = vunpack.c.3.s8 %v5772
        %v6125 = vunpack.c.3.s8 %v5773
        %v6126 = vunpack.c.3.s8 %v5774
        %v6127 = vunpack.c.3.s8 %v5775
        %v6128 = vunpack.c.3.s8 %v5776
        %v6129 = vunpack.c.3.s8 %v5777
        %v6130 = vunpack.c.3.s8 %v5778
        %v6131 = vunpack.c.3.s8 %v5779
        %v6132 = vunpack.c.3.s8 %v5780
        %v6133 = vunpack.c.3.s8 %v5781
        %v6134 = vunpack.c.3.s8 %v5782
        %v6135 = vunpack.c.3.s8 %v5783
        %v6136 = vunpack.c.0.s8 %v5784
        %v6137 = vunpack.c.0.s8 %v5785
        %v6138 = vunpack.c.0.s8 %v5786
        %v6139 = vunpack.c.0.s8 %v5787
        %v6140 = vunpack.c.0.s8 %v5788
        %v6141 = vunpack.c.0.s8 %v5789
        %v6142 = vunpack.c.0.s8 %v5790
        %v6143 = vunpack.c.0.s8 %v5791
        %v6144 = vunpack.c.0.s8 %v5792
        %v6145 = vunpack.c.0.s8 %v5793
        %v6146 = vunpack.c.0.s8 %v5794
        %v6147 = vunpack.c.0.s8 %v5795
        %v6148 = vunpack.c.0.s8 %v5796
        %v6149 = vunpack.c.0.s8 %v5797
        %v6150 = vunpack.c.0.s8 %v5798
        %v6151 = vunpack.c.0.s8 %v5799
        %v6152 = vunpack.c.1.s8 %v5784
        %v6153 = vunpack.c.1.s8 %v5785
        %v6154 = vunpack.c.1.s8 %v5786
        %v6155 = vunpack.c.1.s8 %v5787
        %v6156 = vunpack.c.1.s8 %v5788
        %v6157 = vunpack.c.1.s8 %v5789
        %v6158 = vunpack.c.1.s8 %v5790
        %v6159 = vunpack.c.1.s8 %v5791
        %v6160 = vunpack.c.1.s8 %v5792
        %v6161 = vunpack.c.1.s8 %v5793
        %v6162 = vunpack.c.1.s8 %v5794
        %v6163 = vunpack.c.1.s8 %v5795
        %v6164 = vunpack.c.1.s8 %v5796
        %v6165 = vunpack.c.1.s8 %v5797
        %v6166 = vunpack.c.1.s8 %v5798
        %v6167 = vunpack.c.1.s8 %v5799
        %v6168 = vunpack.c.2.s8 %v5784
        %v6169 = vunpack.c.2.s8 %v5785
        %v6170 = vunpack.c.2.s8 %v5786
        %v6171 = vunpack.c.2.s8 %v5787
        %v6172 = vunpack.c.2.s8 %v5788
        %v6173 = vunpack.c.2.s8 %v5789
        %v6174 = vunpack.c.2.s8 %v5790
        %v6175 = vunpack.c.2.s8 %v5791
        %v6176 = vunpack.c.2.s8 %v5792
        %v6177 = vunpack.c.2.s8 %v5793
        %v6178 = vunpack.c.2.s8 %v5794
        %v6179 = vunpack.c.2.s8 %v5795
        %v6180 = vunpack.c.2.s8 %v5796
        %v6181 = vunpack.c.2.s8 %v5797
        %v6182 = vunpack.c.2.s8 %v5798
        %v6183 = vunpack.c.2.s8 %v5799
        %v6184 = vunpack.c.3.s8 %v5784
        %v6185 = vunpack.c.3.s8 %v5785
        %v6186 = vunpack.c.3.s8 %v5786
        %v6187 = vunpack.c.3.s8 %v5787
        %v6188 = vunpack.c.3.s8 %v5788
        %v6189 = vunpack.c.3.s8 %v5789
        %v6190 = vunpack.c.3.s8 %v5790
        %v6191 = vunpack.c.3.s8 %v5791
        %v6192 = vunpack.c.3.s8 %v5792
        %v6193 = vunpack.c.3.s8 %v5793
        %v6194 = vunpack.c.3.s8 %v5794
        %v6195 = vunpack.c.3.s8 %v5795
        %v6196 = vunpack.c.3.s8 %v5796
        %v6197 = vunpack.c.3.s8 %v5797
        %v6198 = vunpack.c.3.s8 %v5798
        %v6199 = vunpack.c.3.s8 %v5799
        %v6200 = vunpack.c.0.s8 %v5800
        %v6201 = vunpack.c.0.s8 %v5801
        %v6202 = vunpack.c.0.s8 %v5802
        %v6203 = vunpack.c.0.s8 %v5803
        %v6204 = vunpack.c.0.s8 %v5804
        %v6205 = vunpack.c.0.s8 %v5805
        %v6206 = vunpack.c.0.s8 %v5806
        %v6207 = vunpack.c.0.s8 %v5807
        %v6208 = vunpack.c.0.s8 %v5808
        %v6209 = vunpack.c.0.s8 %v5809
        %v6210 = vunpack.c.0.s8 %v5810
        %v6211 = vunpack.c.0.s8 %v5811
        %v6212 = vunpack.c.0.s8 %v5812
        %v6213 = vunpack.c.0.s8 %v5813
        %v6214 = vunpack.c.0.s8 %v5814
        %v6215 = vunpack.c.0.s8 %v5815
        %v6216 = vunpack.c.1.s8 %v5800
        %v6217 = vunpack.c.1.s8 %v5801
        %v6218 = vunpack.c.1.s8 %v5802
        %v6219 = vunpack.c.1.s8 %v5803
        %v6220 = vunpack.c.1.s8 %v5804
        %v6221 = vunpack.c.1.s8 %v5805
        %v6222 = vunpack.c.1.s8 %v5806
        %v6223 = vunpack.c.1.s8 %v5807
        %v6224 = vunpack.c.1.s8 %v5808
        %v6225 = vunpack.c.1.s8 %v5809
        %v6226 = vunpack.c.1.s8 %v5810
        %v6227 = vunpack.c.1.s8 %v5811
        %v6228 = vunpack.c.1.s8 %v5812
        %v6229 = vunpack.c.1.s8 %v5813
        %v6230 = vunpack.c.1.s8 %v5814
        %v6231 = vunpack.c.1.s8 %v5815
        %v6232 = vunpack.c.2.s8 %v5800
        %v6233 = vunpack.c.2.s8 %v5801
        %v6234 = vunpack.c.2.s8 %v5802
        %v6235 = vunpack.c.2.s8 %v5803
        %v6236 = vunpack.c.2.s8 %v5804
        %v6237 = vunpack.c.2.s8 %v5805
        %v6238 = vunpack.c.2.s8 %v5806
        %v6239 = vunpack.c.2.s8 %v5807
        %v6240 = vunpack.c.2.s8 %v5808
        %v6241 = vunpack.c.2.s8 %v5809
        %v6242 = vunpack.c.2.s8 %v5810
        %v6243 = vunpack.c.2.s8 %v5811
        %v6244 = vunpack.c.2.s8 %v5812
        %v6245 = vunpack.c.2.s8 %v5813
        %v6246 = vunpack.c.2.s8 %v5814
        %v6247 = vunpack.c.2.s8 %v5815
        %v6248 = vunpack.c.3.s8 %v5800
        %v6249 = vunpack.c.3.s8 %v5801
        %v6250 = vunpack.c.3.s8 %v5802
        %v6251 = vunpack.c.3.s8 %v5803
        %v6252 = vunpack.c.3.s8 %v5804
        %v6253 = vunpack.c.3.s8 %v5805
        %v6254 = vunpack.c.3.s8 %v5806
        %v6255 = vunpack.c.3.s8 %v5807
        %v6256 = vunpack.c.3.s8 %v5808
        %v6257 = vunpack.c.3.s8 %v5809
        %v6258 = vunpack.c.3.s8 %v5810
        %v6259 = vunpack.c.3.s8 %v5811
        %v6260 = vunpack.c.3.s8 %v5812
        %v6261 = vunpack.c.3.s8 %v5813
        %v6262 = vunpack.c.3.s8 %v5814
        %v6263 = vunpack.c.3.s8 %v5815
        %v6264 = vcvt.s32.f32 %v5816
        %v6265 = vcvt.s32.f32 %v5817
        %v6266 = vcvt.s32.f32 %v5818
        %v6267 = vcvt.s32.f32 %v5819
        %v6268 = vcvt.s32.f32 %v5820
        %v6269 = vcvt.s32.f32 %v5821
        %v6270 = vcvt.s32.f32 %v5822
        %v6271 = vcvt.s32.f32 %v5823
        %v6272 = vcvt.s32.f32 %v5824
        %v6273 = vcvt.s32.f32 %v5825
        %v6274 = vcvt.s32.f32 %v5826
        %v6275 = vcvt.s32.f32 %v5827
        %v6276 = vcvt.s32.f32 %v5828
        %v6277 = vcvt.s32.f32 %v5829
        %v6278 = vcvt.s32.f32 %v5830
        %v6279 = vcvt.s32.f32 %v5831
        %v6280 = vcvt.s32.f32 %v5832
        %v6281 = vcvt.s32.f32 %v5833
        %v6282 = vcvt.s32.f32 %v5834
        %v6283 = vcvt.s32.f32 %v5835
        %v6284 = vcvt.s32.f32 %v5836
        %v6285 = vcvt.s32.f32 %v5837
        %v6286 = vcvt.s32.f32 %v5838
        %v6287 = vcvt.s32.f32 %v5839
        %v6288 = vcvt.s32.f32 %v5840
        %v6289 = vcvt.s32.f32 %v5841
        %v6290 = vcvt.s32.f32 %v5842
        %v6291 = vcvt.s32.f32 %v5843
        %v6292 = vcvt.s32.f32 %v5844
        %v6293 = vcvt.s32.f32 %v5845
        %v6294 = vcvt.s32.f32 %v5846
        %v6295 = vcvt.s32.f32 %v5847
        %v6296 = vcvt.s32.f32 %v5848
        %v6297 = vcvt.s32.f32 %v5849
        %v6298 = vcvt.s32.f32 %v5850
        %v6299 = vcvt.s32.f32 %v5851
        %v6300 = vcvt.s32.f32 %v5852
        %v6301 = vcvt.s32.f32 %v5853
        %v6302 = vcvt.s32.f32 %v5854
        %v6303 = vcvt.s32.f32 %v5855
        %v6304 = vcvt.s32.f32 %v5856
        %v6305 = vcvt.s32.f32 %v5857
        %v6306 = vcvt.s32.f32 %v5858
        %v6307 = vcvt.s32.f32 %v5859
        %v6308 = vcvt.s32.f32 %v5860
        %v6309 = vcvt.s32.f32 %v5861
        %v6310 = vcvt.s32.f32 %v5862
        %v6311 = vcvt.s32.f32 %v5863
        %v6312 = vcvt.s32.f32 %v5864
        %v6313 = vcvt.s32.f32 %v5865
        %v6314 = vcvt.s32.f32 %v5866
        %v6315 = vcvt.s32.f32 %v5867
        %v6316 = vcvt.s32.f32 %v5868
        %v6317 = vcvt.s32.f32 %v5869
        %v6318 = vcvt.s32.f32 %v5870
        %v6319 = vcvt.s32.f32 %v5871
        %v6320 = vcvt.s32.f32 %v5872
        %v6321 = vcvt.s32.f32 %v5873
        %v6322 = vcvt.s32.f32 %v5874
        %v6323 = vcvt.s32.f32 %v5875
        %v6324 = vcvt.s32.f32 %v5876
        %v6325 = vcvt.s32.f32 %v5877
        %v6326 = vcvt.s32.f32 %v5878
        %v6327 = vcvt.s32.f32 %v5879
        %v6328 = vcvt.s32.f32 %v5880
        %v6329 = vcvt.s32.f32 %v5881
        %v6330 = vcvt.s32.f32 %v5882
        %v6331 = vcvt.s32.f32 %v5883
        %v6332 = vcvt.s32.f32 %v5884
        %v6333 = vcvt.s32.f32 %v5885
        %v6334 = vcvt.s32.f32 %v5886
        %v6335 = vcvt.s32.f32 %v5887
        %v6336 = vcvt.s32.f32 %v5888
        %v6337 = vcvt.s32.f32 %v5889
        %v6338 = vcvt.s32.f32 %v5890
        %v6339 = vcvt.s32.f32 %v5891
        %v6340 = vcvt.s32.f32 %v5892
        %v6341 = vcvt.s32.f32 %v5893
        %v6342 = vcvt.s32.f32 %v5894
        %v6343 = vcvt.s32.f32 %v5895
        %v6344 = vcvt.s32.f32 %v5896
        %v6345 = vcvt.s32.f32 %v5897
        %v6346 = vcvt.s32.f32 %v5898
        %v6347 = vcvt.s32.f32 %v5899
        %v6348 = vcvt.s32.f32 %v5900
        %v6349 = vcvt.s32.f32 %v5901
        %v6350 = vcvt.s32.f32 %v5902
        %v6351 = vcvt.s32.f32 %v5903
        %v6352 = vcvt.s32.f32 %v5904
        %v6353 = vcvt.s32.f32 %v5905
        %v6354 = vcvt.s32.f32 %v5906
        %v6355 = vcvt.s32.f32 %v5907
        %v6356 = vcvt.s32.f32 %v5908
        %v6357 = vcvt.s32.f32 %v5909
        %v6358 = vcvt.s32.f32 %v5910
        %v6359 = vcvt.s32.f32 %v5911
        %v6360 = vcvt.s32.f32 %v5912
        %v6361 = vcvt.s32.f32 %v5913
        %v6362 = vcvt.s32.f32 %v5914
        %v6363 = vcvt.s32.f32 %v5915
        %v6364 = vcvt.s32.f32 %v5916
        %v6365 = vcvt.s32.f32 %v5917
        %v6366 = vcvt.s32.f32 %v5918
        %v6367 = vcvt.s32.f32 %v5919
        %v6368 = vcvt.s32.f32 %v5920
        %v6369 = vcvt.s32.f32 %v5921
        %v6370 = vcvt.s32.f32 %v5922
        %v6371 = vcvt.s32.f32 %v5923
        %v6372 = vcvt.s32.f32 %v5924
        %v6373 = vcvt.s32.f32 %v5925
        %v6374 = vcvt.s32.f32 %v5926
        %v6375 = vcvt.s32.f32 %v5927
        %v6376 = vcvt.s32.f32 %v5928
        %v6377 = vcvt.s32.f32 %v5929
        %v6378 = vcvt.s32.f32 %v5930
        %v6379 = vcvt.s32.f32 %v5931
        %v6380 = vcvt.s32.f32 %v5932
        %v6381 = vcvt.s32.f32 %v5933
        %v6382 = vcvt.s32.f32 %v5934
        %v6383 = vcvt.s32.f32 %v5935
        %v6384 = vcvt.s32.f32 %v5936
        %v6385 = vcvt.s32.f32 %v5937
        %v6386 = vcvt.s32.f32 %v5938
        %v6387 = vcvt.s32.f32 %v5939
        %v6388 = vcvt.s32.f32 %v5940
        %v6389 = vcvt.s32.f32 %v5941
        %v6390 = vcvt.s32.f32 %v5942
        %v6391 = vcvt.s32.f32 %v5943
        %v6392 = vcvt.s32.f32 %v5944
        %v6393 = vcvt.s32.f32 %v5945
        %v6394 = vcvt.s32.f32 %v5946
        %v6395 = vcvt.s32.f32 %v5947
        %v6396 = vcvt.s32.f32 %v5948
        %v6397 = vcvt.s32.f32 %v5949
        %v6398 = vcvt.s32.f32 %v5950
        %v6399 = vcvt.s32.f32 %v5951
        %v6400 = vcvt.s32.f32 %v5952
        %v6401 = vcvt.s32.f32 %v5953
        %v6402 = vcvt.s32.f32 %v5954
        %v6403 = vcvt.s32.f32 %v5955
        %v6404 = vcvt.s32.f32 %v5956
        %v6405 = vcvt.s32.f32 %v5957
        %v6406 = vcvt.s32.f32 %v5958
        %v6407 = vcvt.s32.f32 %v5959
        %v6408 = vcvt.s32.f32 %v5960
        %v6409 = vcvt.s32.f32 %v5961
        %v6410 = vcvt.s32.f32 %v5962
        %v6411 = vcvt.s32.f32 %v5963
        %v6412 = vcvt.s32.f32 %v5964
        %v6413 = vcvt.s32.f32 %v5965
        %v6414 = vcvt.s32.f32 %v5966
        %v6415 = vcvt.s32.f32 %v5967
        %v6416 = vcvt.s32.f32 %v5968
        %v6417 = vcvt.s32.f32 %v5969
        %v6418 = vcvt.s32.f32 %v5970
        %v6419 = vcvt.s32.f32 %v5971
        %v6420 = vcvt.s32.f32 %v5972
        %v6421 = vcvt.s32.f32 %v5973
        %v6422 = vcvt.s32.f32 %v5974
        %v6423 = vcvt.s32.f32 %v5975
        %v6424 = vcvt.s32.f32 %v5976
        %v6425 = vcvt.s32.f32 %v5977
        %v6426 = vcvt.s32.f32 %v5978
        %v6427 = vcvt.s32.f32 %v5979
        %v6428 = vcvt.s32.f32 %v5980
        %v6429 = vcvt.s32.f32 %v5981
        %v6430 = vcvt.s32.f32 %v5982
        %v6431 = vcvt.s32.f32 %v5983
        %v6432 = vcvt.s32.f32 %v5984
        %v6433 = vcvt.s32.f32 %v5985
        %v6434 = vcvt.s32.f32 %v5986
        %v6435 = vcvt.s32.f32 %v5987
        %v6436 = vcvt.s32.f32 %v5988
        %v6437 = vcvt.s32.f32 %v5989
        %v6438 = vcvt.s32.f32 %v5990
        %v6439 = vcvt.s32.f32 %v5991
        %v6440 = vcvt.s32.f32 %v5992
        %v6441 = vcvt.s32.f32 %v5993
        %v6442 = vcvt.s32.f32 %v5994
        %v6443 = vcvt.s32.f32 %v5995
        %v6444 = vcvt.s32.f32 %v5996
        %v6445 = vcvt.s32.f32 %v5997
        %v6446 = vcvt.s32.f32 %v5998
        %v6447 = vcvt.s32.f32 %v5999
        %v6448 = vcvt.s32.f32 %v6000
        %v6449 = vcvt.s32.f32 %v6001
        %v6450 = vcvt.s32.f32 %v6002
        %v6451 = vcvt.s32.f32 %v6003
        %v6452 = vcvt.s32.f32 %v6004
        %v6453 = vcvt.s32.f32 %v6005
        %v6454 = vcvt.s32.f32 %v6006
        %v6455 = vcvt.s32.f32 %v6007
        %v6456 = vcvt.s32.f32 %v6008
        %v6457 = vcvt.s32.f32 %v6009
        %v6458 = vcvt.s32.f32 %v6010
        %v6459 = vcvt.s32.f32 %v6011
        %v6460 = vcvt.s32.f32 %v6012
        %v6461 = vcvt.s32.f32 %v6013
        %v6462 = vcvt.s32.f32 %v6014
        %v6463 = vcvt.s32.f32 %v6015
        %v6464 = vcvt.s32.f32 %v6016
        %v6465 = vcvt.s32.f32 %v6017
        %v6466 = vcvt.s32.f32 %v6018
        %v6467 = vcvt.s32.f32 %v6019
        %v6468 = vcvt.s32.f32 %v6020
        %v6469 = vcvt.s32.f32 %v6021
        %v6470 = vcvt.s32.f32 %v6022
        %v6471 = vcvt.s32.f32 %v6023
        %v6472 = vcvt.s32.f32 %v6024
        %v6473 = vcvt.s32.f32 %v6025
        %v6474 = vcvt.s32.f32 %v6026
        %v6475 = vcvt.s32.f32 %v6027
        %v6476 = vcvt.s32.f32 %v6028
        %v6477 = vcvt.s32.f32 %v6029
        %v6478 = vcvt.s32.f32 %v6030
        %v6479 = vcvt.s32.f32 %v6031
        %v6480 = vcvt.s32.f32 %v6032
        %v6481 = vcvt.s32.f32 %v6033
        %v6482 = vcvt.s32.f32 %v6034
        %v6483 = vcvt.s32.f32 %v6035
        %v6484 = vcvt.s32.f32 %v6036
        %v6485 = vcvt.s32.f32 %v6037
        %v6486 = vcvt.s32.f32 %v6038
        %v6487 = vcvt.s32.f32 %v6039
        %v6488 = vcvt.s32.f32 %v6040
        %v6489 = vcvt.s32.f32 %v6041
        %v6490 = vcvt.s32.f32 %v6042
        %v6491 = vcvt.s32.f32 %v6043
        %v6492 = vcvt.s32.f32 %v6044
        %v6493 = vcvt.s32.f32 %v6045
        %v6494 = vcvt.s32.f32 %v6046
        %v6495 = vcvt.s32.f32 %v6047
        %v6496 = vcvt.s32.f32 %v6048
        %v6497 = vcvt.s32.f32 %v6049
        %v6498 = vcvt.s32.f32 %v6050
        %v6499 = vcvt.s32.f32 %v6051
        %v6500 = vcvt.s32.f32 %v6052
        %v6501 = vcvt.s32.f32 %v6053
        %v6502 = vcvt.s32.f32 %v6054
        %v6503 = vcvt.s32.f32 %v6055
        %v6504 = vcvt.s32.f32 %v6056
        %v6505 = vcvt.s32.f32 %v6057
        %v6506 = vcvt.s32.f32 %v6058
        %v6507 = vcvt.s32.f32 %v6059
        %v6508 = vcvt.s32.f32 %v6060
        %v6509 = vcvt.s32.f32 %v6061
        %v6510 = vcvt.s32.f32 %v6062
        %v6511 = vcvt.s32.f32 %v6063
        %v6512 = vcvt.s32.f32 %v6064
        %v6513 = vcvt.s32.f32 %v6065
        %v6514 = vcvt.s32.f32 %v6066
        %v6515 = vcvt.s32.f32 %v6067
        %v6516 = vcvt.s32.f32 %v6068
        %v6517 = vcvt.s32.f32 %v6069
        %v6518 = vcvt.s32.f32 %v6070
        %v6519 = vcvt.s32.f32 %v6071
        %v6520 = vcvt.s32.f32 %v6072
        %v6521 = vcvt.s32.f32 %v6073
        %v6522 = vcvt.s32.f32 %v6074
        %v6523 = vcvt.s32.f32 %v6075
        %v6524 = vcvt.s32.f32 %v6076
        %v6525 = vcvt.s32.f32 %v6077
        %v6526 = vcvt.s32.f32 %v6078
        %v6527 = vcvt.s32.f32 %v6079
        %v6528 = vcvt.s32.f32 %v6080
        %v6529 = vcvt.s32.f32 %v6081
        %v6530 = vcvt.s32.f32 %v6082
        %v6531 = vcvt.s32.f32 %v6083
        %v6532 = vcvt.s32.f32 %v6084
        %v6533 = vcvt.s32.f32 %v6085
        %v6534 = vcvt.s32.f32 %v6086
        %v6535 = vcvt.s32.f32 %v6087
        %v6536 = vcvt.s32.f32 %v6088
        %v6537 = vcvt.s32.f32 %v6089
        %v6538 = vcvt.s32.f32 %v6090
        %v6539 = vcvt.s32.f32 %v6091
        %v6540 = vcvt.s32.f32 %v6092
        %v6541 = vcvt.s32.f32 %v6093
        %v6542 = vcvt.s32.f32 %v6094
        %v6543 = vcvt.s32.f32 %v6095
        %v6544 = vcvt.s32.f32 %v6096
        %v6545 = vcvt.s32.f32 %v6097
        %v6546 = vcvt.s32.f32 %v6098
        %v6547 = vcvt.s32.f32 %v6099
        %v6548 = vcvt.s32.f32 %v6100
        %v6549 = vcvt.s32.f32 %v6101
        %v6550 = vcvt.s32.f32 %v6102
        %v6551 = vcvt.s32.f32 %v6103
        %v6552 = vcvt.s32.f32 %v6104
        %v6553 = vcvt.s32.f32 %v6105
        %v6554 = vcvt.s32.f32 %v6106
        %v6555 = vcvt.s32.f32 %v6107
        %v6556 = vcvt.s32.f32 %v6108
        %v6557 = vcvt.s32.f32 %v6109
        %v6558 = vcvt.s32.f32 %v6110
        %v6559 = vcvt.s32.f32 %v6111
        %v6560 = vcvt.s32.f32 %v6112
        %v6561 = vcvt.s32.f32 %v6113
        %v6562 = vcvt.s32.f32 %v6114
        %v6563 = vcvt.s32.f32 %v6115
        %v6564 = vcvt.s32.f32 %v6116
        %v6565 = vcvt.s32.f32 %v6117
        %v6566 = vcvt.s32.f32 %v6118
        %v6567 = vcvt.s32.f32 %v6119
        %v6568 = vcvt.s32.f32 %v6120
        %v6569 = vcvt.s32.f32 %v6121
        %v6570 = vcvt.s32.f32 %v6122
        %v6571 = vcvt.s32.f32 %v6123
        %v6572 = vcvt.s32.f32 %v6124
        %v6573 = vcvt.s32.f32 %v6125
        %v6574 = vcvt.s32.f32 %v6126
        %v6575 = vcvt.s32.f32 %v6127
        %v6576 = vcvt.s32.f32 %v6128
        %v6577 = vcvt.s32.f32 %v6129
        %v6578 = vcvt.s32.f32 %v6130
        %v6579 = vcvt.s32.f32 %v6131
        %v6580 = vcvt.s32.f32 %v6132
        %v6581 = vcvt.s32.f32 %v6133
        %v6582 = vcvt.s32.f32 %v6134
        %v6583 = vcvt.s32.f32 %v6135
        %v6584 = vcvt.s32.f32 %v6136
        %v6585 = vcvt.s32.f32 %v6137
        %v6586 = vcvt.s32.f32 %v6138
        %v6587 = vcvt.s32.f32 %v6139
        %v6588 = vcvt.s32.f32 %v6140
        %v6589 = vcvt.s32.f32 %v6141
        %v6590 = vcvt.s32.f32 %v6142
        %v6591 = vcvt.s32.f32 %v6143
        %v6592 = vcvt.s32.f32 %v6144
        %v6593 = vcvt.s32.f32 %v6145
        %v6594 = vcvt.s32.f32 %v6146
        %v6595 = vcvt.s32.f32 %v6147
        %v6596 = vcvt.s32.f32 %v6148
        %v6597 = vcvt.s32.f32 %v6149
        %v6598 = vcvt.s32.f32 %v6150
        %v6599 = vcvt.s32.f32 %v6151
        %v6600 = vcvt.s32.f32 %v6152
        %v6601 = vcvt.s32.f32 %v6153
        %v6602 = vcvt.s32.f32 %v6154
        %v6603 = vcvt.s32.f32 %v6155
        %v6604 = vcvt.s32.f32 %v6156
        %v6605 = vcvt.s32.f32 %v6157
        %v6606 = vcvt.s32.f32 %v6158
        %v6607 = vcvt.s32.f32 %v6159
        %v6608 = vcvt.s32.f32 %v6160
        %v6609 = vcvt.s32.f32 %v6161
        %v6610 = vcvt.s32.f32 %v6162
        %v6611 = vcvt.s32.f32 %v6163
        %v6612 = vcvt.s32.f32 %v6164
        %v6613 = vcvt.s32.f32 %v6165
        %v6614 = vcvt.s32.f32 %v6166
        %v6615 = vcvt.s32.f32 %v6167
        %v6616 = vcvt.s32.f32 %v6168
        %v6617 = vcvt.s32.f32 %v6169
        %v6618 = vcvt.s32.f32 %v6170
        %v6619 = vcvt.s32.f32 %v6171
        %v6620 = vcvt.s32.f32 %v6172
        %v6621 = vcvt.s32.f32 %v6173
        %v6622 = vcvt.s32.f32 %v6174
        %v6623 = vcvt.s32.f32 %v6175
        %v6624 = vcvt.s32.f32 %v6176
        %v6625 = vcvt.s32.f32 %v6177
        %v6626 = vcvt.s32.f32 %v6178
        %v6627 = vcvt.s32.f32 %v6179
        %v6628 = vcvt.s32.f32 %v6180
        %v6629 = vcvt.s32.f32 %v6181
        %v6630 = vcvt.s32.f32 %v6182
        %v6631 = vcvt.s32.f32 %v6183
        %v6632 = vcvt.s32.f32 %v6184
        %v6633 = vcvt.s32.f32 %v6185
        %v6634 = vcvt.s32.f32 %v6186
        %v6635 = vcvt.s32.f32 %v6187
        %v6636 = vcvt.s32.f32 %v6188
        %v6637 = vcvt.s32.f32 %v6189
        %v6638 = vcvt.s32.f32 %v6190
        %v6639 = vcvt.s32.f32 %v6191
        %v6640 = vcvt.s32.f32 %v6192
        %v6641 = vcvt.s32.f32 %v6193
        %v6642 = vcvt.s32.f32 %v6194
        %v6643 = vcvt.s32.f32 %v6195
        %v6644 = vcvt.s32.f32 %v6196
        %v6645 = vcvt.s32.f32 %v6197
        %v6646 = vcvt.s32.f32 %v6198
        %v6647 = vcvt.s32.f32 %v6199
        %v6648 = vcvt.s32.f32 %v6200
        %v6649 = vcvt.s32.f32 %v6201
        %v6650 = vcvt.s32.f32 %v6202
        %v6651 = vcvt.s32.f32 %v6203
        %v6652 = vcvt.s32.f32 %v6204
        %v6653 = vcvt.s32.f32 %v6205
        %v6654 = vcvt.s32.f32 %v6206
        %v6655 = vcvt.s32.f32 %v6207
        %v6656 = vcvt.s32.f32 %v6208
        %v6657 = vcvt.s32.f32 %v6209
        %v6658 = vcvt.s32.f32 %v6210
        %v6659 = vcvt.s32.f32 %v6211
        %v6660 = vcvt.s32.f32 %v6212
        %v6661 = vcvt.s32.f32 %v6213
        %v6662 = vcvt.s32.f32 %v6214
        %v6663 = vcvt.s32.f32 %v6215
        %v6664 = vcvt.s32.f32 %v6216
        %v6665 = vcvt.s32.f32 %v6217
        %v6666 = vcvt.s32.f32 %v6218
        %v6667 = vcvt.s32.f32 %v6219
        %v6668 = vcvt.s32.f32 %v6220
        %v6669 = vcvt.s32.f32 %v6221
        %v6670 = vcvt.s32.f32 %v6222
        %v6671 = vcvt.s32.f32 %v6223
        %v6672 = vcvt.s32.f32 %v6224
        %v6673 = vcvt.s32.f32 %v6225
        %v6674 = vcvt.s32.f32 %v6226
        %v6675 = vcvt.s32.f32 %v6227
        %v6676 = vcvt.s32.f32 %v6228
        %v6677 = vcvt.s32.f32 %v6229
        %v6678 = vcvt.s32.f32 %v6230
        %v6679 = vcvt.s32.f32 %v6231
        %v6680 = vcvt.s32.f32 %v6232
        %v6681 = vcvt.s32.f32 %v6233
        %v6682 = vcvt.s32.f32 %v6234
        %v6683 = vcvt.s32.f32 %v6235
        %v6684 = vcvt.s32.f32 %v6236
        %v6685 = vcvt.s32.f32 %v6237
        %v6686 = vcvt.s32.f32 %v6238
        %v6687 = vcvt.s32.f32 %v6239
        %v6688 = vcvt.s32.f32 %v6240
        %v6689 = vcvt.s32.f32 %v6241
        %v6690 = vcvt.s32.f32 %v6242
        %v6691 = vcvt.s32.f32 %v6243
        %v6692 = vcvt.s32.f32 %v6244
        %v6693 = vcvt.s32.f32 %v6245
        %v6694 = vcvt.s32.f32 %v6246
        %v6695 = vcvt.s32.f32 %v6247
        %v6696 = vcvt.s32.f32 %v6248
        %v6697 = vcvt.s32.f32 %v6249
        %v6698 = vcvt.s32.f32 %v6250
        %v6699 = vcvt.s32.f32 %v6251
        %v6700 = vcvt.s32.f32 %v6252
        %v6701 = vcvt.s32.f32 %v6253
        %v6702 = vcvt.s32.f32 %v6254
        %v6703 = vcvt.s32.f32 %v6255
        %v6704 = vcvt.s32.f32 %v6256
        %v6705 = vcvt.s32.f32 %v6257
        %v6706 = vcvt.s32.f32 %v6258
        %v6707 = vcvt.s32.f32 %v6259
        %v6708 = vcvt.s32.f32 %v6260
        %v6709 = vcvt.s32.f32 %v6261
        %v6710 = vcvt.s32.f32 %v6262
        %v6711 = vcvt.s32.f32 %v6263
        %v6712 = vpack.c.bf16 %v6280, %v6264
        %v6713 = vpack.c.bf16 %v6281, %v6265
        %v6714 = vpack.c.bf16 %v6282, %v6266
        %v6715 = vpack.c.bf16 %v6283, %v6267
        %v6716 = vpack.c.bf16 %v6284, %v6268
        %v6717 = vpack.c.bf16 %v6285, %v6269
        %v6718 = vpack.c.bf16 %v6286, %v6270
        %v6719 = vpack.c.bf16 %v6287, %v6271
        %v6720 = vpack.c.bf16 %v6288, %v6272
        %v6721 = vpack.c.bf16 %v6289, %v6273
        %v6722 = vpack.c.bf16 %v6290, %v6274
        %v6723 = vpack.c.bf16 %v6291, %v6275
        %v6724 = vpack.c.bf16 %v6292, %v6276
        %v6725 = vpack.c.bf16 %v6293, %v6277
        %v6726 = vpack.c.bf16 %v6294, %v6278
        %v6727 = vpack.c.bf16 %v6295, %v6279
        %v6728 = vpack.c.bf16 %v6312, %v6296
        %v6729 = vpack.c.bf16 %v6313, %v6297
        %v6730 = vpack.c.bf16 %v6314, %v6298
        %v6731 = vpack.c.bf16 %v6315, %v6299
        %v6732 = vpack.c.bf16 %v6316, %v6300
        %v6733 = vpack.c.bf16 %v6317, %v6301
        %v6734 = vpack.c.bf16 %v6318, %v6302
        %v6735 = vpack.c.bf16 %v6319, %v6303
        %v6736 = vpack.c.bf16 %v6320, %v6304
        %v6737 = vpack.c.bf16 %v6321, %v6305
        %v6738 = vpack.c.bf16 %v6322, %v6306
        %v6739 = vpack.c.bf16 %v6323, %v6307
        %v6740 = vpack.c.bf16 %v6324, %v6308
        %v6741 = vpack.c.bf16 %v6325, %v6309
        %v6742 = vpack.c.bf16 %v6326, %v6310
        %v6743 = vpack.c.bf16 %v6327, %v6311
        %v6744 = vpack.c.bf16 %v6344, %v6328
        %v6745 = vpack.c.bf16 %v6345, %v6329
        %v6746 = vpack.c.bf16 %v6346, %v6330
        %v6747 = vpack.c.bf16 %v6347, %v6331
        %v6748 = vpack.c.bf16 %v6348, %v6332
        %v6749 = vpack.c.bf16 %v6349, %v6333
        %v6750 = vpack.c.bf16 %v6350, %v6334
        %v6751 = vpack.c.bf16 %v6351, %v6335
        %v6752 = vpack.c.bf16 %v6352, %v6336
        %v6753 = vpack.c.bf16 %v6353, %v6337
        %v6754 = vpack.c.bf16 %v6354, %v6338
        %v6755 = vpack.c.bf16 %v6355, %v6339
        %v6756 = vpack.c.bf16 %v6356, %v6340
        %v6757 = vpack.c.bf16 %v6357, %v6341
        %v6758 = vpack.c.bf16 %v6358, %v6342
        %v6759 = vpack.c.bf16 %v6359, %v6343
        %v6760 = vpack.c.bf16 %v6376, %v6360
        %v6761 = vpack.c.bf16 %v6377, %v6361
        %v6762 = vpack.c.bf16 %v6378, %v6362
        %v6763 = vpack.c.bf16 %v6379, %v6363
        %v6764 = vpack.c.bf16 %v6380, %v6364
        %v6765 = vpack.c.bf16 %v6381, %v6365
        %v6766 = vpack.c.bf16 %v6382, %v6366
        %v6767 = vpack.c.bf16 %v6383, %v6367
        %v6768 = vpack.c.bf16 %v6384, %v6368
        %v6769 = vpack.c.bf16 %v6385, %v6369
        %v6770 = vpack.c.bf16 %v6386, %v6370
        %v6771 = vpack.c.bf16 %v6387, %v6371
        %v6772 = vpack.c.bf16 %v6388, %v6372
        %v6773 = vpack.c.bf16 %v6389, %v6373
        %v6774 = vpack.c.bf16 %v6390, %v6374
        %v6775 = vpack.c.bf16 %v6391, %v6375
        %v6776 = vpack.c.bf16 %v6408, %v6392
        %v6777 = vpack.c.bf16 %v6409, %v6393
        %v6778 = vpack.c.bf16 %v6410, %v6394
        %v6779 = vpack.c.bf16 %v6411, %v6395
        %v6780 = vpack.c.bf16 %v6412, %v6396
        %v6781 = vpack.c.bf16 %v6413, %v6397
        %v6782 = vpack.c.bf16 %v6414, %v6398
        %v6783 = vpack.c.bf16 %v6415, %v6399
        %v6784 = vpack.c.bf16 %v6416, %v6400
        %v6785 = vpack.c.bf16 %v6417, %v6401
        %v6786 = vpack.c.bf16 %v6418, %v6402
        %v6787 = vpack.c.bf16 %v6419, %v6403
        %v6788 = vpack.c.bf16 %v6420, %v6404
        %v6789 = vpack.c.bf16 %v6421, %v6405
        %v6790 = vpack.c.bf16 %v6422, %v6406
        %v6791 = vpack.c.bf16 %v6423, %v6407
        %v6792 = vpack.c.bf16 %v6440, %v6424
        %v6793 = vpack.c.bf16 %v6441, %v6425
        %v6794 = vpack.c.bf16 %v6442, %v6426
        %v6795 = vpack.c.bf16 %v6443, %v6427
        %v6796 = vpack.c.bf16 %v6444, %v6428
        %v6797 = vpack.c.bf16 %v6445, %v6429
        %v6798 = vpack.c.bf16 %v6446, %v6430
        %v6799 = vpack.c.bf16 %v6447, %v6431
        %v6800 = vpack.c.bf16 %v6448, %v6432
        %v6801 = vpack.c.bf16 %v6449, %v6433
        %v6802 = vpack.c.bf16 %v6450, %v6434
        %v6803 = vpack.c.bf16 %v6451, %v6435
        %v6804 = vpack.c.bf16 %v6452, %v6436
        %v6805 = vpack.c.bf16 %v6453, %v6437
        %v6806 = vpack.c.bf16 %v6454, %v6438
        %v6807 = vpack.c.bf16 %v6455, %v6439
        %v6808 = vpack.c.bf16 %v6472, %v6456
        %v6809 = vpack.c.bf16 %v6473, %v6457
        %v6810 = vpack.c.bf16 %v6474, %v6458
        %v6811 = vpack.c.bf16 %v6475, %v6459
        %v6812 = vpack.c.bf16 %v6476, %v6460
        %v6813 = vpack.c.bf16 %v6477, %v6461
        %v6814 = vpack.c.bf16 %v6478, %v6462
        %v6815 = vpack.c.bf16 %v6479, %v6463
        %v6816 = vpack.c.bf16 %v6480, %v6464
        %v6817 = vpack.c.bf16 %v6481, %v6465
        %v6818 = vpack.c.bf16 %v6482, %v6466
        %v6819 = vpack.c.bf16 %v6483, %v6467
        %v6820 = vpack.c.bf16 %v6484, %v6468
        %v6821 = vpack.c.bf16 %v6485, %v6469
        %v6822 = vpack.c.bf16 %v6486, %v6470
        %v6823 = vpack.c.bf16 %v6487, %v6471
        %v6824 = vpack.c.bf16 %v6504, %v6488
        %v6825 = vpack.c.bf16 %v6505, %v6489
        %v6826 = vpack.c.bf16 %v6506, %v6490
        %v6827 = vpack.c.bf16 %v6507, %v6491
        %v6828 = vpack.c.bf16 %v6508, %v6492
        %v6829 = vpack.c.bf16 %v6509, %v6493
        %v6830 = vpack.c.bf16 %v6510, %v6494
        %v6831 = vpack.c.bf16 %v6511, %v6495
        %v6832 = vpack.c.bf16 %v6512, %v6496
        %v6833 = vpack.c.bf16 %v6513, %v6497
        %v6834 = vpack.c.bf16 %v6514, %v6498
        %v6835 = vpack.c.bf16 %v6515, %v6499
        %v6836 = vpack.c.bf16 %v6516, %v6500
        %v6837 = vpack.c.bf16 %v6517, %v6501
        %v6838 = vpack.c.bf16 %v6518, %v6502
        %v6839 = vpack.c.bf16 %v6519, %v6503
        %v6840 = vpack.c.bf16 %v6536, %v6520
        %v6841 = vpack.c.bf16 %v6537, %v6521
        %v6842 = vpack.c.bf16 %v6538, %v6522
        %v6843 = vpack.c.bf16 %v6539, %v6523
        %v6844 = vpack.c.bf16 %v6540, %v6524
        %v6845 = vpack.c.bf16 %v6541, %v6525
        %v6846 = vpack.c.bf16 %v6542, %v6526
        %v6847 = vpack.c.bf16 %v6543, %v6527
        %v6848 = vpack.c.bf16 %v6544, %v6528
        %v6849 = vpack.c.bf16 %v6545, %v6529
        %v6850 = vpack.c.bf16 %v6546, %v6530
        %v6851 = vpack.c.bf16 %v6547, %v6531
        %v6852 = vpack.c.bf16 %v6548, %v6532
        %v6853 = vpack.c.bf16 %v6549, %v6533
        %v6854 = vpack.c.bf16 %v6550, %v6534
        %v6855 = vpack.c.bf16 %v6551, %v6535
        %v6856 = vpack.c.bf16 %v6568, %v6552
        %v6857 = vpack.c.bf16 %v6569, %v6553
        %v6858 = vpack.c.bf16 %v6570, %v6554
        %v6859 = vpack.c.bf16 %v6571, %v6555
        %v6860 = vpack.c.bf16 %v6572, %v6556
        %v6861 = vpack.c.bf16 %v6573, %v6557
        %v6862 = vpack.c.bf16 %v6574, %v6558
        %v6863 = vpack.c.bf16 %v6575, %v6559
        %v6864 = vpack.c.bf16 %v6576, %v6560
        %v6865 = vpack.c.bf16 %v6577, %v6561
        %v6866 = vpack.c.bf16 %v6578, %v6562
        %v6867 = vpack.c.bf16 %v6579, %v6563
        %v6868 = vpack.c.bf16 %v6580, %v6564
        %v6869 = vpack.c.bf16 %v6581, %v6565
        %v6870 = vpack.c.bf16 %v6582, %v6566
        %v6871 = vpack.c.bf16 %v6583, %v6567
        %v6872 = vpack.c.bf16 %v6600, %v6584
        %v6873 = vpack.c.bf16 %v6601, %v6585
        %v6874 = vpack.c.bf16 %v6602, %v6586
        %v6875 = vpack.c.bf16 %v6603, %v6587
        %v6876 = vpack.c.bf16 %v6604, %v6588
        %v6877 = vpack.c.bf16 %v6605, %v6589
        %v6878 = vpack.c.bf16 %v6606, %v6590
        %v6879 = vpack.c.bf16 %v6607, %v6591
        %v6880 = vpack.c.bf16 %v6608, %v6592
        %v6881 = vpack.c.bf16 %v6609, %v6593
        %v6882 = vpack.c.bf16 %v6610, %v6594
        %v6883 = vpack.c.bf16 %v6611, %v6595
        %v6884 = vpack.c.bf16 %v6612, %v6596
        %v6885 = vpack.c.bf16 %v6613, %v6597
        %v6886 = vpack.c.bf16 %v6614, %v6598
        %v6887 = vpack.c.bf16 %v6615, %v6599
        %v6888 = vpack.c.bf16 %v6632, %v6616
        %v6889 = vpack.c.bf16 %v6633, %v6617
        %v6890 = vpack.c.bf16 %v6634, %v6618
        %v6891 = vpack.c.bf16 %v6635, %v6619
        %v6892 = vpack.c.bf16 %v6636, %v6620
        %v6893 = vpack.c.bf16 %v6637, %v6621
        %v6894 = vpack.c.bf16 %v6638, %v6622
        %v6895 = vpack.c.bf16 %v6639, %v6623
        %v6896 = vpack.c.bf16 %v6640, %v6624
        %v6897 = vpack.c.bf16 %v6641, %v6625
        %v6898 = vpack.c.bf16 %v6642, %v6626
        %v6899 = vpack.c.bf16 %v6643, %v6627
        %v6900 = vpack.c.bf16 %v6644, %v6628
        %v6901 = vpack.c.bf16 %v6645, %v6629
        %v6902 = vpack.c.bf16 %v6646, %v6630
        %v6903 = vpack.c.bf16 %v6647, %v6631
        %v6904 = vpack.c.bf16 %v6664, %v6648
        %v6905 = vpack.c.bf16 %v6665, %v6649
        %v6906 = vpack.c.bf16 %v6666, %v6650
        %v6907 = vpack.c.bf16 %v6667, %v6651
        %v6908 = vpack.c.bf16 %v6668, %v6652
        %v6909 = vpack.c.bf16 %v6669, %v6653
        %v6910 = vpack.c.bf16 %v6670, %v6654
        %v6911 = vpack.c.bf16 %v6671, %v6655
        %v6912 = vpack.c.bf16 %v6672, %v6656
        %v6913 = vpack.c.bf16 %v6673, %v6657
        %v6914 = vpack.c.bf16 %v6674, %v6658
        %v6915 = vpack.c.bf16 %v6675, %v6659
        %v6916 = vpack.c.bf16 %v6676, %v6660
        %v6917 = vpack.c.bf16 %v6677, %v6661
        %v6918 = vpack.c.bf16 %v6678, %v6662
        %v6919 = vpack.c.bf16 %v6679, %v6663
        %v6920 = vpack.c.bf16 %v6696, %v6680
        %v6921 = vpack.c.bf16 %v6697, %v6681
        %v6922 = vpack.c.bf16 %v6698, %v6682
        %v6923 = vpack.c.bf16 %v6699, %v6683
        %v6924 = vpack.c.bf16 %v6700, %v6684
        %v6925 = vpack.c.bf16 %v6701, %v6685
        %v6926 = vpack.c.bf16 %v6702, %v6686
        %v6927 = vpack.c.bf16 %v6703, %v6687
        %v6928 = vpack.c.bf16 %v6704, %v6688
        %v6929 = vpack.c.bf16 %v6705, %v6689
        %v6930 = vpack.c.bf16 %v6706, %v6690
        %v6931 = vpack.c.bf16 %v6707, %v6691
        %v6932 = vpack.c.bf16 %v6708, %v6692
        %v6933 = vpack.c.bf16 %v6709, %v6693
        %v6934 = vpack.c.bf16 %v6710, %v6694
        %v6935 = vpack.c.bf16 %v6711, %v6695
        %v6937 = vsel %vm1505, %v5703, 0
        %6939 = vmatpush.bf16.msra.mxu0 %v6824
        %6940 = vmatpush.bf16.msra.mxu0 %v6808
        %6941 = vmatpush.bf16.msra.mxu0 %v6792
        %6942 = vmatpush.bf16.msra.mxu0 %v6776
        %6943 = vmatpush.bf16.msra.mxu0 %v6760
        %6944 = vmatpush.bf16.msra.mxu0 %v6744
        %6945 = vmatpush.bf16.msra.mxu0 %v6728
        %6946 = vmatpush.bf16.msra.mxu0 %v6712
        %6947 = vmatmul.bf16.gmra.mxu0 %v5702
        %v6948 = vpop.f32.mrf.mxu0
        %v6949 = vadd.f32 0.0, %v6948
        %v6950 = vpop.f32.mrf.mxu0
        %v6951 = vadd.f32 0.0, %v6950
        %6952 = vdwg.mxu0
        %6953 = vmatpush.bf16.msra.mxu0 0
        %6954 = vmatpush.bf16.msra.mxu0 0
        %6955 = vmatpush.bf16.msra.mxu0 %v6920
        %6956 = vmatpush.bf16.msra.mxu0 %v6904
        %6957 = vmatpush.bf16.msra.mxu0 %v6888
        %6958 = vmatpush.bf16.msra.mxu0 %v6872
        %6959 = vmatpush.bf16.msra.mxu0 %v6856
        %6960 = vmatpush.bf16.msra.mxu0 %v6840
        %6961 = vmatmul.bf16.gmra.mxu0 %v6937
        %v6962 = vpop.f32.mrf.mxu0
        %v6963 = vadd.f32 %v6949, %v6962
        %v6964 = vpop.f32.mrf.mxu0
        %v6965 = vadd.f32 %v6951, %v6964
        %6966 = vdwg.mxu0
        %6967 = vmatpush.bf16.msra.mxu0 %v6825
        %6968 = vmatpush.bf16.msra.mxu0 %v6809
        %6969 = vmatpush.bf16.msra.mxu0 %v6793
        %6970 = vmatpush.bf16.msra.mxu0 %v6777
        %6971 = vmatpush.bf16.msra.mxu0 %v6761
        %6972 = vmatpush.bf16.msra.mxu0 %v6745
        %6973 = vmatpush.bf16.msra.mxu0 %v6729
        %6974 = vmatpush.bf16.msra.mxu0 %v6713
        %6975 = vmatmul.bf16.gmra.mxu0 %v5702
        %v6976 = vpop.f32.mrf.mxu0
        %v6977 = vadd.f32 0.0, %v6976
        %v6978 = vpop.f32.mrf.mxu0
        %v6979 = vadd.f32 0.0, %v6978
        %6980 = vdwg.mxu0
        %6981 = vmatpush.bf16.msra.mxu0 0
        %6982 = vmatpush.bf16.msra.mxu0 0
        %6983 = vmatpush.bf16.msra.mxu0 %v6921
        %6984 = vmatpush.bf16.msra.mxu0 %v6905
        %6985 = vmatpush.bf16.msra.mxu0 %v6889
        %6986 = vmatpush.bf16.msra.mxu0 %v6873
        %6987 = vmatpush.bf16.msra.mxu0 %v6857
        %6988 = vmatpush.bf16.msra.mxu0 %v6841
        %6989 = vmatmul.bf16.gmra.mxu0 %v6937
        %v6990 = vpop.f32.mrf.mxu0
        %v6991 = vadd.f32 %v6977, %v6990
        %v6992 = vpop.f32.mrf.mxu0
        %v6993 = vadd.f32 %v6979, %v6992
        %6994 = vdwg.mxu0
        %6995 = vmatpush.bf16.msra.mxu0 %v6826
        %6996 = vmatpush.bf16.msra.mxu0 %v6810
        %6997 = vmatpush.bf16.msra.mxu0 %v6794
        %6998 = vmatpush.bf16.msra.mxu0 %v6778
        %6999 = vmatpush.bf16.msra.mxu0 %v6762
        %7000 = vmatpush.bf16.msra.mxu0 %v6746
        %7001 = vmatpush.bf16.msra.mxu0 %v6730
        %7002 = vmatpush.bf16.msra.mxu0 %v6714
        %7003 = vmatmul.bf16.gmra.mxu0 %v5702
        %v7004 = vpop.f32.mrf.mxu0
        %v7005 = vadd.f32 0.0, %v7004
        %v7006 = vpop.f32.mrf.mxu0
        %v7007 = vadd.f32 0.0, %v7006
        %7008 = vdwg.mxu0
        %7009 = vmatpush.bf16.msra.mxu0 0
        %7010 = vmatpush.bf16.msra.mxu0 0
        %7011 = vmatpush.bf16.msra.mxu0 %v6922
        %7012 = vmatpush.bf16.msra.mxu0 %v6906
        %7013 = vmatpush.bf16.msra.mxu0 %v6890
        %7014 = vmatpush.bf16.msra.mxu0 %v6874
        %7015 = vmatpush.bf16.msra.mxu0 %v6858
        %7016 = vmatpush.bf16.msra.mxu0 %v6842
        %7017 = vmatmul.bf16.gmra.mxu0 %v6937
        %v7018 = vpop.f32.mrf.mxu0
        %v7019 = vadd.f32 %v7005, %v7018
        %v7020 = vpop.f32.mrf.mxu0
        %v7021 = vadd.f32 %v7007, %v7020
        %7022 = vdwg.mxu0
        %7023 = vmatpush.bf16.msra.mxu0 %v6827
        %7024 = vmatpush.bf16.msra.mxu0 %v6811
        %7025 = vmatpush.bf16.msra.mxu0 %v6795
        %7026 = vmatpush.bf16.msra.mxu0 %v6779
        %7027 = vmatpush.bf16.msra.mxu0 %v6763
        %7028 = vmatpush.bf16.msra.mxu0 %v6747
        %7029 = vmatpush.bf16.msra.mxu0 %v6731
        %7030 = vmatpush.bf16.msra.mxu0 %v6715
        %7031 = vmatmul.bf16.gmra.mxu0 %v5702
        %v7032 = vpop.f32.mrf.mxu0
        %v7033 = vadd.f32 0.0, %v7032
        %v7034 = vpop.f32.mrf.mxu0
        %v7035 = vadd.f32 0.0, %v7034
        %7036 = vdwg.mxu0
        %7037 = vmatpush.bf16.msra.mxu0 0
        %7038 = vmatpush.bf16.msra.mxu0 0
        %7039 = vmatpush.bf16.msra.mxu0 %v6923
        %7040 = vmatpush.bf16.msra.mxu0 %v6907
        %7041 = vmatpush.bf16.msra.mxu0 %v6891
        %7042 = vmatpush.bf16.msra.mxu0 %v6875
        %7043 = vmatpush.bf16.msra.mxu0 %v6859
        %7044 = vmatpush.bf16.msra.mxu0 %v6843
        %7045 = vmatmul.bf16.gmra.mxu0 %v6937
        %v7046 = vpop.f32.mrf.mxu0
        %v7047 = vadd.f32 %v7033, %v7046
        %v7048 = vpop.f32.mrf.mxu0
        %v7049 = vadd.f32 %v7035, %v7048
        %7050 = vdwg.mxu0
        %7051 = vmatpush.bf16.msra.mxu0 %v6828
        %7052 = vmatpush.bf16.msra.mxu0 %v6812
        %7053 = vmatpush.bf16.msra.mxu0 %v6796
        %7054 = vmatpush.bf16.msra.mxu0 %v6780
        %7055 = vmatpush.bf16.msra.mxu0 %v6764
        %7056 = vmatpush.bf16.msra.mxu0 %v6748
        %7057 = vmatpush.bf16.msra.mxu0 %v6732
        %7058 = vmatpush.bf16.msra.mxu0 %v6716
        %7059 = vmatmul.bf16.gmra.mxu0 %v5702
        %v7060 = vpop.f32.mrf.mxu0
        %v7061 = vadd.f32 0.0, %v7060
        %v7062 = vpop.f32.mrf.mxu0
        %v7063 = vadd.f32 0.0, %v7062
        %7064 = vdwg.mxu0
        %7065 = vmatpush.bf16.msra.mxu0 0
        %7066 = vmatpush.bf16.msra.mxu0 0
        %7067 = vmatpush.bf16.msra.mxu0 %v6924
        %7068 = vmatpush.bf16.msra.mxu0 %v6908
        %7069 = vmatpush.bf16.msra.mxu0 %v6892
        %7070 = vmatpush.bf16.msra.mxu0 %v6876
        %7071 = vmatpush.bf16.msra.mxu0 %v6860
        %7072 = vmatpush.bf16.msra.mxu0 %v6844
        %7073 = vmatmul.bf16.gmra.mxu0 %v6937
        %v7074 = vpop.f32.mrf.mxu0
        %v7075 = vadd.f32 %v7061, %v7074
        %v7076 = vpop.f32.mrf.mxu0
        %v7077 = vadd.f32 %v7063, %v7076
        %7078 = vdwg.mxu0
        %7079 = vmatpush.bf16.msra.mxu0 %v6829
        %7080 = vmatpush.bf16.msra.mxu0 %v6813
        %7081 = vmatpush.bf16.msra.mxu0 %v6797
        %7082 = vmatpush.bf16.msra.mxu0 %v6781
        %7083 = vmatpush.bf16.msra.mxu0 %v6765
        %7084 = vmatpush.bf16.msra.mxu0 %v6749
        %7085 = vmatpush.bf16.msra.mxu0 %v6733
        %7086 = vmatpush.bf16.msra.mxu0 %v6717
        %7087 = vmatmul.bf16.gmra.mxu0 %v5702
        %v7088 = vpop.f32.mrf.mxu0
        %v7089 = vadd.f32 0.0, %v7088
        %v7090 = vpop.f32.mrf.mxu0
        %v7091 = vadd.f32 0.0, %v7090
        %7092 = vdwg.mxu0
        %7093 = vmatpush.bf16.msra.mxu0 0
        %7094 = vmatpush.bf16.msra.mxu0 0
        %7095 = vmatpush.bf16.msra.mxu0 %v6925
        %7096 = vmatpush.bf16.msra.mxu0 %v6909
        %7097 = vmatpush.bf16.msra.mxu0 %v6893
        %7098 = vmatpush.bf16.msra.mxu0 %v6877
        %7099 = vmatpush.bf16.msra.mxu0 %v6861
        %7100 = vmatpush.bf16.msra.mxu0 %v6845
        %7101 = vmatmul.bf16.gmra.mxu0 %v6937
        %v7102 = vpop.f32.mrf.mxu0
        %v7103 = vadd.f32 %v7089, %v7102
        %v7104 = vpop.f32.mrf.mxu0
        %v7105 = vadd.f32 %v7091, %v7104
        %7106 = vdwg.mxu0
        %7107 = vmatpush.bf16.msra.mxu0 %v6830
        %7108 = vmatpush.bf16.msra.mxu0 %v6814
        %7109 = vmatpush.bf16.msra.mxu0 %v6798
        %7110 = vmatpush.bf16.msra.mxu0 %v6782
        %7111 = vmatpush.bf16.msra.mxu0 %v6766
        %7112 = vmatpush.bf16.msra.mxu0 %v6750
        %7113 = vmatpush.bf16.msra.mxu0 %v6734
        %7114 = vmatpush.bf16.msra.mxu0 %v6718
        %7115 = vmatmul.bf16.gmra.mxu0 %v5702
        %v7116 = vpop.f32.mrf.mxu0
        %v7117 = vadd.f32 0.0, %v7116
        %v7118 = vpop.f32.mrf.mxu0
        %v7119 = vadd.f32 0.0, %v7118
        %7120 = vdwg.mxu0
        %7121 = vmatpush.bf16.msra.mxu0 0
        %7122 = vmatpush.bf16.msra.mxu0 0
        %7123 = vmatpush.bf16.msra.mxu0 %v6926
        %7124 = vmatpush.bf16.msra.mxu0 %v6910
        %7125 = vmatpush.bf16.msra.mxu0 %v6894
        %7126 = vmatpush.bf16.msra.mxu0 %v6878
        %7127 = vmatpush.bf16.msra.mxu0 %v6862
        %7128 = vmatpush.bf16.msra.mxu0 %v6846
        %7129 = vmatmul.bf16.gmra.mxu0 %v6937
        %v7130 = vpop.f32.mrf.mxu0
        %v7131 = vadd.f32 %v7117, %v7130
        %v7132 = vpop.f32.mrf.mxu0
        %v7133 = vadd.f32 %v7119, %v7132
        %7134 = vdwg.mxu0
        %7135 = vmatpush.bf16.msra.mxu0 %v6831
        %7136 = vmatpush.bf16.msra.mxu0 %v6815
        %7137 = vmatpush.bf16.msra.mxu0 %v6799
        %7138 = vmatpush.bf16.msra.mxu0 %v6783
        %7139 = vmatpush.bf16.msra.mxu0 %v6767
        %7140 = vmatpush.bf16.msra.mxu0 %v6751
        %7141 = vmatpush.bf16.msra.mxu0 %v6735
        %7142 = vmatpush.bf16.msra.mxu0 %v6719
        %7143 = vmatmul.bf16.gmra.mxu0 %v5702
        %v7144 = vpop.f32.mrf.mxu0
        %v7145 = vadd.f32 0.0, %v7144
        %v7146 = vpop.f32.mrf.mxu0
        %v7147 = vadd.f32 0.0, %v7146
        %7148 = vdwg.mxu0
        %7149 = vmatpush.bf16.msra.mxu0 0
        %7150 = vmatpush.bf16.msra.mxu0 0
        %7151 = vmatpush.bf16.msra.mxu0 %v6927
        %7152 = vmatpush.bf16.msra.mxu0 %v6911
        %7153 = vmatpush.bf16.msra.mxu0 %v6895
        %7154 = vmatpush.bf16.msra.mxu0 %v6879
        %7155 = vmatpush.bf16.msra.mxu0 %v6863
        %7156 = vmatpush.bf16.msra.mxu0 %v6847
        %7157 = vmatmul.bf16.gmra.mxu0 %v6937
        %v7158 = vpop.f32.mrf.mxu0
        %v7159 = vadd.f32 %v7145, %v7158
        %v7160 = vpop.f32.mrf.mxu0
        %v7161 = vadd.f32 %v7147, %v7160
        %7162 = vdwg.mxu0
        %7163 = vmatpush.bf16.msra.mxu0 %v6832
        %7164 = vmatpush.bf16.msra.mxu0 %v6816
        %7165 = vmatpush.bf16.msra.mxu0 %v6800
        %7166 = vmatpush.bf16.msra.mxu0 %v6784
        %7167 = vmatpush.bf16.msra.mxu0 %v6768
        %7168 = vmatpush.bf16.msra.mxu0 %v6752
        %7169 = vmatpush.bf16.msra.mxu0 %v6736
        %7170 = vmatpush.bf16.msra.mxu0 %v6720
        %7171 = vmatmul.bf16.gmra.mxu0 %v5702
        %v7172 = vpop.f32.mrf.mxu0
        %v7173 = vadd.f32 0.0, %v7172
        %v7174 = vpop.f32.mrf.mxu0
        %v7175 = vadd.f32 0.0, %v7174
        %7176 = vdwg.mxu0
        %7177 = vmatpush.bf16.msra.mxu0 0
        %7178 = vmatpush.bf16.msra.mxu0 0
        %7179 = vmatpush.bf16.msra.mxu0 %v6928
        %7180 = vmatpush.bf16.msra.mxu0 %v6912
        %7181 = vmatpush.bf16.msra.mxu0 %v6896
        %7182 = vmatpush.bf16.msra.mxu0 %v6880
        %7183 = vmatpush.bf16.msra.mxu0 %v6864
        %7184 = vmatpush.bf16.msra.mxu0 %v6848
        %7185 = vmatmul.bf16.gmra.mxu0 %v6937
        %v7186 = vpop.f32.mrf.mxu0
        %v7187 = vadd.f32 %v7173, %v7186
        %v7188 = vpop.f32.mrf.mxu0
        %v7189 = vadd.f32 %v7175, %v7188
        %7190 = vdwg.mxu0
        %7191 = vmatpush.bf16.msra.mxu0 %v6833
        %7192 = vmatpush.bf16.msra.mxu0 %v6817
        %7193 = vmatpush.bf16.msra.mxu0 %v6801
        %7194 = vmatpush.bf16.msra.mxu0 %v6785
        %7195 = vmatpush.bf16.msra.mxu0 %v6769
        %7196 = vmatpush.bf16.msra.mxu0 %v6753
        %7197 = vmatpush.bf16.msra.mxu0 %v6737
        %7198 = vmatpush.bf16.msra.mxu0 %v6721
        %7199 = vmatmul.bf16.gmra.mxu0 %v5702
        %v7200 = vpop.f32.mrf.mxu0
        %v7201 = vadd.f32 0.0, %v7200
        %v7202 = vpop.f32.mrf.mxu0
        %v7203 = vadd.f32 0.0, %v7202
        %7204 = vdwg.mxu0
        %7205 = vmatpush.bf16.msra.mxu0 0
        %7206 = vmatpush.bf16.msra.mxu0 0
        %7207 = vmatpush.bf16.msra.mxu0 %v6929
        %7208 = vmatpush.bf16.msra.mxu0 %v6913
        %7209 = vmatpush.bf16.msra.mxu0 %v6897
        %7210 = vmatpush.bf16.msra.mxu0 %v6881
        %7211 = vmatpush.bf16.msra.mxu0 %v6865
        %7212 = vmatpush.bf16.msra.mxu0 %v6849
        %7213 = vmatmul.bf16.gmra.mxu0 %v6937
        %v7214 = vpop.f32.mrf.mxu0
        %v7215 = vadd.f32 %v7201, %v7214
        %v7216 = vpop.f32.mrf.mxu0
        %v7217 = vadd.f32 %v7203, %v7216
        %7218 = vdwg.mxu0
        %7219 = vmatpush.bf16.msra.mxu0 %v6834
        %7220 = vmatpush.bf16.msra.mxu0 %v6818
        %7221 = vmatpush.bf16.msra.mxu0 %v6802
        %7222 = vmatpush.bf16.msra.mxu0 %v6786
        %7223 = vmatpush.bf16.msra.mxu0 %v6770
        %7224 = vmatpush.bf16.msra.mxu0 %v6754
        %7225 = vmatpush.bf16.msra.mxu0 %v6738
        %7226 = vmatpush.bf16.msra.mxu0 %v6722
        %7227 = vmatmul.bf16.gmra.mxu0 %v5702
        %v7228 = vpop.f32.mrf.mxu0
        %v7229 = vadd.f32 0.0, %v7228
        %v7230 = vpop.f32.mrf.mxu0
        %v7231 = vadd.f32 0.0, %v7230
        %7232 = vdwg.mxu0
        %7233 = vmatpush.bf16.msra.mxu0 0
        %7234 = vmatpush.bf16.msra.mxu0 0
        %7235 = vmatpush.bf16.msra.mxu0 %v6930
        %7236 = vmatpush.bf16.msra.mxu0 %v6914
        %7237 = vmatpush.bf16.msra.mxu0 %v6898
        %7238 = vmatpush.bf16.msra.mxu0 %v6882
        %7239 = vmatpush.bf16.msra.mxu0 %v6866
        %7240 = vmatpush.bf16.msra.mxu0 %v6850
        %7241 = vmatmul.bf16.gmra.mxu0 %v6937
        %v7242 = vpop.f32.mrf.mxu0
        %v7243 = vadd.f32 %v7229, %v7242
        %v7244 = vpop.f32.mrf.mxu0
        %v7245 = vadd.f32 %v7231, %v7244
        %7246 = vdwg.mxu0
        %7247 = vmatpush.bf16.msra.mxu0 %v6835
        %7248 = vmatpush.bf16.msra.mxu0 %v6819
        %7249 = vmatpush.bf16.msra.mxu0 %v6803
        %7250 = vmatpush.bf16.msra.mxu0 %v6787
        %7251 = vmatpush.bf16.msra.mxu0 %v6771
        %7252 = vmatpush.bf16.msra.mxu0 %v6755
        %7253 = vmatpush.bf16.msra.mxu0 %v6739
        %7254 = vmatpush.bf16.msra.mxu0 %v6723
        %7255 = vmatmul.bf16.gmra.mxu0 %v5702
        %v7256 = vpop.f32.mrf.mxu0
        %v7257 = vadd.f32 0.0, %v7256
        %v7258 = vpop.f32.mrf.mxu0
        %v7259 = vadd.f32 0.0, %v7258
        %7260 = vdwg.mxu0
        %7261 = vmatpush.bf16.msra.mxu0 0
        %7262 = vmatpush.bf16.msra.mxu0 0
        %7263 = vmatpush.bf16.msra.mxu0 %v6931
        %7264 = vmatpush.bf16.msra.mxu0 %v6915
        %7265 = vmatpush.bf16.msra.mxu0 %v6899
        %7266 = vmatpush.bf16.msra.mxu0 %v6883
        %7267 = vmatpush.bf16.msra.mxu0 %v6867
        %7268 = vmatpush.bf16.msra.mxu0 %v6851
        %7269 = vmatmul.bf16.gmra.mxu0 %v6937
        %v7270 = vpop.f32.mrf.mxu0
        %v7271 = vadd.f32 %v7257, %v7270
        %v7272 = vpop.f32.mrf.mxu0
        %v7273 = vadd.f32 %v7259, %v7272
        %7274 = vdwg.mxu0
        %7275 = vmatpush.bf16.msra.mxu0 %v6836
        %7276 = vmatpush.bf16.msra.mxu0 %v6820
        %7277 = vmatpush.bf16.msra.mxu0 %v6804
        %7278 = vmatpush.bf16.msra.mxu0 %v6788
        %7279 = vmatpush.bf16.msra.mxu0 %v6772
        %7280 = vmatpush.bf16.msra.mxu0 %v6756
        %7281 = vmatpush.bf16.msra.mxu0 %v6740
        %7282 = vmatpush.bf16.msra.mxu0 %v6724
        %7283 = vmatmul.bf16.gmra.mxu0 %v5702
        %v7284 = vpop.f32.mrf.mxu0
        %v7285 = vadd.f32 0.0, %v7284
        %v7286 = vpop.f32.mrf.mxu0
        %v7287 = vadd.f32 0.0, %v7286
        %7288 = vdwg.mxu0
        %7289 = vmatpush.bf16.msra.mxu0 0
        %7290 = vmatpush.bf16.msra.mxu0 0
        %7291 = vmatpush.bf16.msra.mxu0 %v6932
        %7292 = vmatpush.bf16.msra.mxu0 %v6916
        %7293 = vmatpush.bf16.msra.mxu0 %v6900
        %7294 = vmatpush.bf16.msra.mxu0 %v6884
        %7295 = vmatpush.bf16.msra.mxu0 %v6868
        %7296 = vmatpush.bf16.msra.mxu0 %v6852
        %7297 = vmatmul.bf16.gmra.mxu0 %v6937
        %v7298 = vpop.f32.mrf.mxu0
        %v7299 = vadd.f32 %v7285, %v7298
        %v7300 = vpop.f32.mrf.mxu0
        %v7301 = vadd.f32 %v7287, %v7300
        %7302 = vdwg.mxu0
        %7303 = vmatpush.bf16.msra.mxu0 %v6837
        %7304 = vmatpush.bf16.msra.mxu0 %v6821
        %7305 = vmatpush.bf16.msra.mxu0 %v6805
        %7306 = vmatpush.bf16.msra.mxu0 %v6789
        %7307 = vmatpush.bf16.msra.mxu0 %v6773
        %7308 = vmatpush.bf16.msra.mxu0 %v6757
        %7309 = vmatpush.bf16.msra.mxu0 %v6741
        %7310 = vmatpush.bf16.msra.mxu0 %v6725
        %7311 = vmatmul.bf16.gmra.mxu0 %v5702
        %v7312 = vpop.f32.mrf.mxu0
        %v7313 = vadd.f32 0.0, %v7312
        %v7314 = vpop.f32.mrf.mxu0
        %v7315 = vadd.f32 0.0, %v7314
        %7316 = vdwg.mxu0
        %7317 = vmatpush.bf16.msra.mxu0 0
        %7318 = vmatpush.bf16.msra.mxu0 0
        %7319 = vmatpush.bf16.msra.mxu0 %v6933
        %7320 = vmatpush.bf16.msra.mxu0 %v6917
        %7321 = vmatpush.bf16.msra.mxu0 %v6901
        %7322 = vmatpush.bf16.msra.mxu0 %v6885
        %7323 = vmatpush.bf16.msra.mxu0 %v6869
        %7324 = vmatpush.bf16.msra.mxu0 %v6853
        %7325 = vmatmul.bf16.gmra.mxu0 %v6937
        %v7326 = vpop.f32.mrf.mxu0
        %v7327 = vadd.f32 %v7313, %v7326
        %v7328 = vpop.f32.mrf.mxu0
        %v7329 = vadd.f32 %v7315, %v7328
        %7330 = vdwg.mxu0
        %7331 = vmatpush.bf16.msra.mxu0 %v6838
        %7332 = vmatpush.bf16.msra.mxu0 %v6822
        %7333 = vmatpush.bf16.msra.mxu0 %v6806
        %7334 = vmatpush.bf16.msra.mxu0 %v6790
        %7335 = vmatpush.bf16.msra.mxu0 %v6774
        %7336 = vmatpush.bf16.msra.mxu0 %v6758
        %7337 = vmatpush.bf16.msra.mxu0 %v6742
        %7338 = vmatpush.bf16.msra.mxu0 %v6726
        %7339 = vmatmul.bf16.gmra.mxu0 %v5702
        %v7340 = vpop.f32.mrf.mxu0
        %v7341 = vadd.f32 0.0, %v7340
        %v7342 = vpop.f32.mrf.mxu0
        %v7343 = vadd.f32 0.0, %v7342
        %7344 = vdwg.mxu0
        %7345 = vmatpush.bf16.msra.mxu0 0
        %7346 = vmatpush.bf16.msra.mxu0 0
        %7347 = vmatpush.bf16.msra.mxu0 %v6934
        %7348 = vmatpush.bf16.msra.mxu0 %v6918
        %7349 = vmatpush.bf16.msra.mxu0 %v6902
        %7350 = vmatpush.bf16.msra.mxu0 %v6886
        %7351 = vmatpush.bf16.msra.mxu0 %v6870
        %7352 = vmatpush.bf16.msra.mxu0 %v6854
        %7353 = vmatmul.bf16.gmra.mxu0 %v6937
        %v7354 = vpop.f32.mrf.mxu0
        %v7355 = vadd.f32 %v7341, %v7354
        %v7356 = vpop.f32.mrf.mxu0
        %v7357 = vadd.f32 %v7343, %v7356
        %7358 = vdwg.mxu0
        %7359 = vmatpush.bf16.msra.mxu0 %v6839
        %7360 = vmatpush.bf16.msra.mxu0 %v6823
        %7361 = vmatpush.bf16.msra.mxu0 %v6807
        %7362 = vmatpush.bf16.msra.mxu0 %v6791
        %7363 = vmatpush.bf16.msra.mxu0 %v6775
        %7364 = vmatpush.bf16.msra.mxu0 %v6759
        %7365 = vmatpush.bf16.msra.mxu0 %v6743
        %7366 = vmatpush.bf16.msra.mxu0 %v6727
        %7367 = vmatmul.bf16.gmra.mxu0 %v5702
        %v7368 = vpop.f32.mrf.mxu0
        %v7369 = vadd.f32 0.0, %v7368
        %v7370 = vpop.f32.mrf.mxu0
        %v7371 = vadd.f32 0.0, %v7370
        %7372 = vdwg.mxu0
        %7373 = vmatpush.bf16.msra.mxu0 0
        %7374 = vmatpush.bf16.msra.mxu0 0
        %7375 = vmatpush.bf16.msra.mxu0 %v6935
        %7376 = vmatpush.bf16.msra.mxu0 %v6919
        %7377 = vmatpush.bf16.msra.mxu0 %v6903
        %7378 = vmatpush.bf16.msra.mxu0 %v6887
        %7379 = vmatpush.bf16.msra.mxu0 %v6871
        %7380 = vmatpush.bf16.msra.mxu0 %v6855
        %7381 = vmatmul.bf16.gmra.mxu0 %v6937
        %v7382 = vpop.f32.mrf.mxu0
        %v7383 = vadd.f32 %v7369, %v7382
        %v7384 = vpop.f32.mrf.mxu0
        %v7385 = vadd.f32 %v7371, %v7384
        %7386 = vdwg.mxu0
        %v7387 = vld [vmem:[%s647] ss:$2 sm:$0xff]
        %s7388 = scalar_lea.vmem %s647, 16
        %v7389 = vld [vmem:[%s7388] ss:$2 sm:$0xff]
        %v7392 = vperm.slane %v7387, 0
        %v7393 = vperm.slane %v7387, 1
        %v7394 = vperm.slane %v7387, 2
        %v7395 = vperm.slane %v7387, 3
        %v7396 = vperm.slane %v7387, 4
        %v7397 = vperm.slane %v7387, 5
        %v7398 = vperm.slane %v7387, 6
        %v7399 = vperm.slane %v7387, 7
        %v7400 = vperm.slane %v7389, 0
        %v7401 = vperm.slane %v7389, 1
        %v7402 = vperm.slane %v7389, 2
        %v7403 = vperm.slane %v7389, 3
        %v7404 = vperm.slane %v7389, 4
        %v7405 = vperm.slane %v7389, 5
        %v7406 = vperm.slane %v7389, 6
        %v7407 = vperm.slane %v7389, 7
        %v7424 = vmul.f32 %v6963, %v7392
        %v7425 = vmul.f32 %v6991, %v7393
        %v7426 = vmul.f32 %v7019, %v7394
        %v7427 = vmul.f32 %v7047, %v7395
        %v7428 = vmul.f32 %v7075, %v7396
        %v7429 = vmul.f32 %v7103, %v7397
        %v7430 = vmul.f32 %v7131, %v7398
        %v7431 = vmul.f32 %v7159, %v7399
        %v7432 = vmul.f32 %v7187, %v7400
        %v7433 = vmul.f32 %v7215, %v7401
        %v7434 = vmul.f32 %v7243, %v7402
        %v7435 = vmul.f32 %v7271, %v7403
        %v7436 = vmul.f32 %v7299, %v7404
        %v7437 = vmul.f32 %v7327, %v7405
        %v7438 = vmul.f32 %v7355, %v7406
        %v7439 = vmul.f32 %v7383, %v7407
        %v7440 = vmul.f32 %v6965, %v7392
        %v7441 = vmul.f32 %v6993, %v7393
        %v7442 = vmul.f32 %v7021, %v7394
        %v7443 = vmul.f32 %v7049, %v7395
        %v7444 = vmul.f32 %v7077, %v7396
        %v7445 = vmul.f32 %v7105, %v7397
        %v7446 = vmul.f32 %v7133, %v7398
        %v7447 = vmul.f32 %v7161, %v7399
        %v7448 = vmul.f32 %v7189, %v7400
        %v7449 = vmul.f32 %v7217, %v7401
        %v7450 = vmul.f32 %v7245, %v7402
        %v7451 = vmul.f32 %v7273, %v7403
        %v7452 = vmul.f32 %v7301, %v7404
        %v7453 = vmul.f32 %v7329, %v7405
        %v7454 = vmul.f32 %v7357, %v7406
        %v7455 = vmul.f32 %v7385, %v7407
        %s7456 = scalar_lea.vmem %s647, 1
        %v7457 = vld [vmem:[%s7456] ss:$2 sm:$0xff]
        %s7458 = scalar_lea.vmem %s647, 17
        %v7459 = vld [vmem:[%s7458] ss:$2 sm:$0xff]
        %v7462 = vperm.slane %v7457, 0
        %v7463 = vperm.slane %v7457, 1
        %v7464 = vperm.slane %v7457, 2
        %v7465 = vperm.slane %v7457, 3
        %v7466 = vperm.slane %v7457, 4
        %v7467 = vperm.slane %v7457, 5
        %v7468 = vperm.slane %v7457, 6
        %v7469 = vperm.slane %v7457, 7
        %v7470 = vperm.slane %v7459, 0
        %v7471 = vperm.slane %v7459, 1
        %v7472 = vperm.slane %v7459, 2
        %v7473 = vperm.slane %v7459, 3
        %v7474 = vperm.slane %v7459, 4
        %v7475 = vperm.slane %v7459, 5
        %v7476 = vperm.slane %v7459, 6
        %v7477 = vperm.slane %v7459, 7
        %v7494 = vadd.f32 %v7424, %v7462
        %v7495 = vadd.f32 %v7425, %v7463
        %v7496 = vadd.f32 %v7426, %v7464
        %v7497 = vadd.f32 %v7427, %v7465
        %v7498 = vadd.f32 %v7428, %v7466
        %v7499 = vadd.f32 %v7429, %v7467
        %v7500 = vadd.f32 %v7430, %v7468
        %v7501 = vadd.f32 %v7431, %v7469
        %v7502 = vadd.f32 %v7432, %v7470
        %v7503 = vadd.f32 %v7433, %v7471
        %v7504 = vadd.f32 %v7434, %v7472
        %v7505 = vadd.f32 %v7435, %v7473
        %v7506 = vadd.f32 %v7436, %v7474
        %v7507 = vadd.f32 %v7437, %v7475
        %v7508 = vadd.f32 %v7438, %v7476
        %v7509 = vadd.f32 %v7439, %v7477
        %v7510 = vadd.f32 %v7440, %v7462
        %v7511 = vadd.f32 %v7441, %v7463
        %v7512 = vadd.f32 %v7442, %v7464
        %v7513 = vadd.f32 %v7443, %v7465
        %v7514 = vadd.f32 %v7444, %v7466
        %v7515 = vadd.f32 %v7445, %v7467
        %v7516 = vadd.f32 %v7446, %v7468
        %v7517 = vadd.f32 %v7447, %v7469
        %v7518 = vadd.f32 %v7448, %v7470
        %v7519 = vadd.f32 %v7449, %v7471
        %v7520 = vadd.f32 %v7450, %v7472
        %v7521 = vadd.f32 %v7451, %v7473
        %v7522 = vadd.f32 %v7452, %v7474
        %v7523 = vadd.f32 %v7453, %v7475
        %v7524 = vadd.f32 %v7454, %v7476
        %v7525 = vadd.f32 %v7455, %v7477
        %v7526 = vmul.f32 %v7494, %v7494
        %v7527 = vmul.f32 %v7495, %v7495
        %v7528 = vmul.f32 %v7496, %v7496
        %v7529 = vmul.f32 %v7497, %v7497
        %v7530 = vmul.f32 %v7498, %v7498
        %v7531 = vmul.f32 %v7499, %v7499
        %v7532 = vmul.f32 %v7500, %v7500
        %v7533 = vmul.f32 %v7501, %v7501
        %v7534 = vmul.f32 %v7502, %v7502
        %v7535 = vmul.f32 %v7503, %v7503
        %v7536 = vmul.f32 %v7504, %v7504
        %v7537 = vmul.f32 %v7505, %v7505
        %v7538 = vmul.f32 %v7506, %v7506
        %v7539 = vmul.f32 %v7507, %v7507
        %v7540 = vmul.f32 %v7508, %v7508
        %v7541 = vmul.f32 %v7509, %v7509
        %v7542 = vmul.f32 %v7510, %v7510
        %v7543 = vmul.f32 %v7511, %v7511
        %v7544 = vmul.f32 %v7512, %v7512
        %v7545 = vmul.f32 %v7513, %v7513
        %v7546 = vmul.f32 %v7514, %v7514
        %v7547 = vmul.f32 %v7515, %v7515
        %v7548 = vmul.f32 %v7516, %v7516
        %v7549 = vmul.f32 %v7517, %v7517
        %v7550 = vmul.f32 %v7518, %v7518
        %v7551 = vmul.f32 %v7519, %v7519
        %v7552 = vmul.f32 %v7520, %v7520
        %v7553 = vmul.f32 %v7521, %v7521
        %v7554 = vmul.f32 %v7522, %v7522
        %v7555 = vmul.f32 %v7523, %v7523
        %v7556 = vmul.f32 %v7524, %v7524
        %v7557 = vmul.f32 %v7525, %v7525
        %v7558 = vmul.f32 %v7494, %v7526
        %v7559 = vmul.f32 %v7495, %v7527
        %v7560 = vmul.f32 %v7496, %v7528
        %v7561 = vmul.f32 %v7497, %v7529
        %v7562 = vmul.f32 %v7498, %v7530
        %v7563 = vmul.f32 %v7499, %v7531
        %v7564 = vmul.f32 %v7500, %v7532
        %v7565 = vmul.f32 %v7501, %v7533
        %v7566 = vmul.f32 %v7502, %v7534
        %v7567 = vmul.f32 %v7503, %v7535
        %v7568 = vmul.f32 %v7504, %v7536
        %v7569 = vmul.f32 %v7505, %v7537
        %v7570 = vmul.f32 %v7506, %v7538
        %v7571 = vmul.f32 %v7507, %v7539
        %v7572 = vmul.f32 %v7508, %v7540
        %v7573 = vmul.f32 %v7509, %v7541
        %v7574 = vmul.f32 %v7510, %v7542
        %v7575 = vmul.f32 %v7511, %v7543
        %v7576 = vmul.f32 %v7512, %v7544
        %v7577 = vmul.f32 %v7513, %v7545
        %v7578 = vmul.f32 %v7514, %v7546
        %v7579 = vmul.f32 %v7515, %v7547
        %v7580 = vmul.f32 %v7516, %v7548
        %v7581 = vmul.f32 %v7517, %v7549
        %v7582 = vmul.f32 %v7518, %v7550
        %v7583 = vmul.f32 %v7519, %v7551
        %v7584 = vmul.f32 %v7520, %v7552
        %v7585 = vmul.f32 %v7521, %v7553
        %v7586 = vmul.f32 %v7522, %v7554
        %v7587 = vmul.f32 %v7523, %v7555
        %v7588 = vmul.f32 %v7524, %v7556
        %v7589 = vmul.f32 %v7525, %v7557
        %v7590 = vmul.f32 %v7558, 0.044715
        %v7591 = vmul.f32 %v7559, 0.044715
        %v7592 = vmul.f32 %v7560, 0.044715
        %v7593 = vmul.f32 %v7561, 0.044715
        %v7594 = vmul.f32 %v7562, 0.044715
        %v7595 = vmul.f32 %v7563, 0.044715
        %v7596 = vmul.f32 %v7564, 0.044715
        %v7597 = vmul.f32 %v7565, 0.044715
        %v7598 = vmul.f32 %v7566, 0.044715
        %v7599 = vmul.f32 %v7567, 0.044715
        %v7600 = vmul.f32 %v7568, 0.044715
        %v7601 = vmul.f32 %v7569, 0.044715
        %v7602 = vmul.f32 %v7570, 0.044715
        %v7603 = vmul.f32 %v7571, 0.044715
        %v7604 = vmul.f32 %v7572, 0.044715
        %v7605 = vmul.f32 %v7573, 0.044715
        %v7606 = vmul.f32 %v7574, 0.044715
        %v7607 = vmul.f32 %v7575, 0.044715
        %v7608 = vmul.f32 %v7576, 0.044715
        %v7609 = vmul.f32 %v7577, 0.044715
        %v7610 = vmul.f32 %v7578, 0.044715
        %v7611 = vmul.f32 %v7579, 0.044715
        %v7612 = vmul.f32 %v7580, 0.044715
        %v7613 = vmul.f32 %v7581, 0.044715
        %v7614 = vmul.f32 %v7582, 0.044715
        %v7615 = vmul.f32 %v7583, 0.044715
        %v7616 = vmul.f32 %v7584, 0.044715
        %v7617 = vmul.f32 %v7585, 0.044715
        %v7618 = vmul.f32 %v7586, 0.044715
        %v7619 = vmul.f32 %v7587, 0.044715
        %v7620 = vmul.f32 %v7588, 0.044715
        %v7621 = vmul.f32 %v7589, 0.044715
        %v7622 = vadd.f32 %v7494, %v7590
        %v7623 = vadd.f32 %v7495, %v7591
        %v7624 = vadd.f32 %v7496, %v7592
        %v7625 = vadd.f32 %v7497, %v7593
        %v7626 = vadd.f32 %v7498, %v7594
        %v7627 = vadd.f32 %v7499, %v7595
        %v7628 = vadd.f32 %v7500, %v7596
        %v7629 = vadd.f32 %v7501, %v7597
        %v7630 = vadd.f32 %v7502, %v7598
        %v7631 = vadd.f32 %v7503, %v7599
        %v7632 = vadd.f32 %v7504, %v7600
        %v7633 = vadd.f32 %v7505, %v7601
        %v7634 = vadd.f32 %v7506, %v7602
        %v7635 = vadd.f32 %v7507, %v7603
        %v7636 = vadd.f32 %v7508, %v7604
        %v7637 = vadd.f32 %v7509, %v7605
        %v7638 = vadd.f32 %v7510, %v7606
        %v7639 = vadd.f32 %v7511, %v7607
        %v7640 = vadd.f32 %v7512, %v7608
        %v7641 = vadd.f32 %v7513, %v7609
        %v7642 = vadd.f32 %v7514, %v7610
        %v7643 = vadd.f32 %v7515, %v7611
        %v7644 = vadd.f32 %v7516, %v7612
        %v7645 = vadd.f32 %v7517, %v7613
        %v7646 = vadd.f32 %v7518, %v7614
        %v7647 = vadd.f32 %v7519, %v7615
        %v7648 = vadd.f32 %v7520, %v7616
        %v7649 = vadd.f32 %v7521, %v7617
        %v7650 = vadd.f32 %v7522, %v7618
        %v7651 = vadd.f32 %v7523, %v7619
        %v7652 = vadd.f32 %v7524, %v7620
        %v7653 = vadd.f32 %v7525, %v7621
        %v7654 = vmul.f32 %v7622, 0.7978846
        %v7655 = vmul.f32 %v7623, 0.7978846
        %v7656 = vmul.f32 %v7624, 0.7978846
        %v7657 = vmul.f32 %v7625, 0.7978846
        %v7658 = vmul.f32 %v7626, 0.7978846
        %v7659 = vmul.f32 %v7627, 0.7978846
        %v7660 = vmul.f32 %v7628, 0.7978846
        %v7661 = vmul.f32 %v7629, 0.7978846
        %v7662 = vmul.f32 %v7630, 0.7978846
        %v7663 = vmul.f32 %v7631, 0.7978846
        %v7664 = vmul.f32 %v7632, 0.7978846
        %v7665 = vmul.f32 %v7633, 0.7978846
        %v7666 = vmul.f32 %v7634, 0.7978846
        %v7667 = vmul.f32 %v7635, 0.7978846
        %v7668 = vmul.f32 %v7636, 0.7978846
        %v7669 = vmul.f32 %v7637, 0.7978846
        %v7670 = vmul.f32 %v7638, 0.7978846
        %v7671 = vmul.f32 %v7639, 0.7978846
        %v7672 = vmul.f32 %v7640, 0.7978846
        %v7673 = vmul.f32 %v7641, 0.7978846
        %v7674 = vmul.f32 %v7642, 0.7978846
        %v7675 = vmul.f32 %v7643, 0.7978846
        %v7676 = vmul.f32 %v7644, 0.7978846
        %v7677 = vmul.f32 %v7645, 0.7978846
        %v7678 = vmul.f32 %v7646, 0.7978846
        %v7679 = vmul.f32 %v7647, 0.7978846
        %v7680 = vmul.f32 %v7648, 0.7978846
        %v7681 = vmul.f32 %v7649, 0.7978846
        %v7682 = vmul.f32 %v7650, 0.7978846
        %v7683 = vmul.f32 %v7651, 0.7978846
        %v7684 = vmul.f32 %v7652, 0.7978846
        %v7685 = vmul.f32 %v7653, 0.7978846
        %v7686 = vtanh.pop %v7654
        %v7687 = vtanh.pop %v7655
        %v7688 = vtanh.pop %v7656
        %v7689 = vtanh.pop %v7657
        %v7690 = vtanh.pop %v7658
        %v7691 = vtanh.pop %v7659
        %v7692 = vtanh.pop %v7660
        %v7693 = vtanh.pop %v7661
        %v7694 = vtanh.pop %v7662
        %v7695 = vtanh.pop %v7663
        %v7696 = vtanh.pop %v7664
        %v7697 = vtanh.pop %v7665
        %v7698 = vtanh.pop %v7666
        %v7699 = vtanh.pop %v7667
        %v7700 = vtanh.pop %v7668
        %v7701 = vtanh.pop %v7669
        %v7702 = vtanh.pop %v7670
        %v7703 = vtanh.pop %v7671
        %v7704 = vtanh.pop %v7672
        %v7705 = vtanh.pop %v7673
        %v7706 = vtanh.pop %v7674
        %v7707 = vtanh.pop %v7675
        %v7708 = vtanh.pop %v7676
        %v7709 = vtanh.pop %v7677
        %v7710 = vtanh.pop %v7678
        %v7711 = vtanh.pop %v7679
        %v7712 = vtanh.pop %v7680
        %v7713 = vtanh.pop %v7681
        %v7714 = vtanh.pop %v7682
        %v7715 = vtanh.pop %v7683
        %v7716 = vtanh.pop %v7684
        %v7717 = vtanh.pop %v7685
        %v7718 = vadd.f32 %v7686, 1.0
        %v7719 = vadd.f32 %v7687, 1.0
        %v7720 = vadd.f32 %v7688, 1.0
        %v7721 = vadd.f32 %v7689, 1.0
        %v7722 = vadd.f32 %v7690, 1.0
        %v7723 = vadd.f32 %v7691, 1.0
        %v7724 = vadd.f32 %v7692, 1.0
        %v7725 = vadd.f32 %v7693, 1.0
        %v7726 = vadd.f32 %v7694, 1.0
        %v7727 = vadd.f32 %v7695, 1.0
        %v7728 = vadd.f32 %v7696, 1.0
        %v7729 = vadd.f32 %v7697, 1.0
        %v7730 = vadd.f32 %v7698, 1.0
        %v7731 = vadd.f32 %v7699, 1.0
        %v7732 = vadd.f32 %v7700, 1.0
        %v7733 = vadd.f32 %v7701, 1.0
        %v7734 = vadd.f32 %v7702, 1.0
        %v7735 = vadd.f32 %v7703, 1.0
        %v7736 = vadd.f32 %v7704, 1.0
        %v7737 = vadd.f32 %v7705, 1.0
        %v7738 = vadd.f32 %v7706, 1.0
        %v7739 = vadd.f32 %v7707, 1.0
        %v7740 = vadd.f32 %v7708, 1.0
        %v7741 = vadd.f32 %v7709, 1.0
        %v7742 = vadd.f32 %v7710, 1.0
        %v7743 = vadd.f32 %v7711, 1.0
        %v7744 = vadd.f32 %v7712, 1.0
        %v7745 = vadd.f32 %v7713, 1.0
        %v7746 = vadd.f32 %v7714, 1.0
        %v7747 = vadd.f32 %v7715, 1.0
        %v7748 = vadd.f32 %v7716, 1.0
        %v7749 = vadd.f32 %v7717, 1.0
        %v7750 = vmul.f32 %v7718, 0.5
        %v7751 = vmul.f32 %v7719, 0.5
        %v7752 = vmul.f32 %v7720, 0.5
        %v7753 = vmul.f32 %v7721, 0.5
        %v7754 = vmul.f32 %v7722, 0.5
        %v7755 = vmul.f32 %v7723, 0.5
        %v7756 = vmul.f32 %v7724, 0.5
        %v7757 = vmul.f32 %v7725, 0.5
        %v7758 = vmul.f32 %v7726, 0.5
        %v7759 = vmul.f32 %v7727, 0.5
        %v7760 = vmul.f32 %v7728, 0.5
        %v7761 = vmul.f32 %v7729, 0.5
        %v7762 = vmul.f32 %v7730, 0.5
        %v7763 = vmul.f32 %v7731, 0.5
        %v7764 = vmul.f32 %v7732, 0.5
        %v7765 = vmul.f32 %v7733, 0.5
        %v7766 = vmul.f32 %v7734, 0.5
        %v7767 = vmul.f32 %v7735, 0.5
        %v7768 = vmul.f32 %v7736, 0.5
        %v7769 = vmul.f32 %v7737, 0.5
        %v7770 = vmul.f32 %v7738, 0.5
        %v7771 = vmul.f32 %v7739, 0.5
        %v7772 = vmul.f32 %v7740, 0.5
        %v7773 = vmul.f32 %v7741, 0.5
        %v7774 = vmul.f32 %v7742, 0.5
        %v7775 = vmul.f32 %v7743, 0.5
        %v7776 = vmul.f32 %v7744, 0.5
        %v7777 = vmul.f32 %v7745, 0.5
        %v7778 = vmul.f32 %v7746, 0.5
        %v7779 = vmul.f32 %v7747, 0.5
        %v7780 = vmul.f32 %v7748, 0.5
        %v7781 = vmul.f32 %v7749, 0.5
        %v7782 = vmul.f32 %v7494, %v7750
        %v7783 = vmul.f32 %v7495, %v7751
        %v7784 = vmul.f32 %v7496, %v7752
        %v7785 = vmul.f32 %v7497, %v7753
        %v7786 = vmul.f32 %v7498, %v7754
        %v7787 = vmul.f32 %v7499, %v7755
        %v7788 = vmul.f32 %v7500, %v7756
        %v7789 = vmul.f32 %v7501, %v7757
        %v7790 = vmul.f32 %v7502, %v7758
        %v7791 = vmul.f32 %v7503, %v7759
        %v7792 = vmul.f32 %v7504, %v7760
        %v7793 = vmul.f32 %v7505, %v7761
        %v7794 = vmul.f32 %v7506, %v7762
        %v7795 = vmul.f32 %v7507, %v7763
        %v7796 = vmul.f32 %v7508, %v7764
        %v7797 = vmul.f32 %v7509, %v7765
        %v7798 = vmul.f32 %v7510, %v7766
        %v7799 = vmul.f32 %v7511, %v7767
        %v7800 = vmul.f32 %v7512, %v7768
        %v7801 = vmul.f32 %v7513, %v7769
        %v7802 = vmul.f32 %v7514, %v7770
        %v7803 = vmul.f32 %v7515, %v7771
        %v7804 = vmul.f32 %v7516, %v7772
        %v7805 = vmul.f32 %v7517, %v7773
        %v7806 = vmul.f32 %v7518, %v7774
        %v7807 = vmul.f32 %v7519, %v7775
        %v7808 = vmul.f32 %v7520, %v7776
        %v7809 = vmul.f32 %v7521, %v7777
        %v7810 = vmul.f32 %v7522, %v7778
        %v7811 = vmul.f32 %v7523, %v7779
        %v7812 = vmul.f32 %v7524, %v7780
        %v7813 = vmul.f32 %v7525, %v7781
        %v7814 = vpack.c.bf16 %v7798, %v7782
        %v7815 = vpack.c.bf16 %v7799, %v7783
        %v7816 = vpack.c.bf16 %v7800, %v7784
        %v7817 = vpack.c.bf16 %v7801, %v7785
        %v7818 = vpack.c.bf16 %v7802, %v7786
        %v7819 = vpack.c.bf16 %v7803, %v7787
        %v7820 = vpack.c.bf16 %v7804, %v7788
        %v7821 = vpack.c.bf16 %v7805, %v7789
        %v7822 = vpack.c.bf16 %v7806, %v7790
        %v7823 = vpack.c.bf16 %v7807, %v7791
        %v7824 = vpack.c.bf16 %v7808, %v7792
        %v7825 = vpack.c.bf16 %v7809, %v7793
        %v7826 = vpack.c.bf16 %v7810, %v7794
        %v7827 = vpack.c.bf16 %v7811, %v7795
        %v7828 = vpack.c.bf16 %v7812, %v7796
        %v7829 = vpack.c.bf16 %v7813, %v7797
        %v7830 = vld [vmem:[%s652] sm:$0xff]
        %v7831 = vld [vmem:[%s652 + $0x8] sm:$0xff]
        %v7832 = vld [vmem:[%s652 + $0x10] sm:$0xff]
        %v7833 = vld [vmem:[%s652 + $0x18] sm:$0xff]
        %v7834 = vld [vmem:[%s652 + $0x20] sm:$0xff]
        %v7835 = vld [vmem:[%s652 + $0x28] sm:$0xff]
        %v7836 = vld [vmem:[%s652 + $0x30] sm:$0xff]
        %v7837 = vld [vmem:[%s652 + $0x38] sm:$0xff]
        %v7838 = vld [vmem:[%s652 + $0x40] sm:$0xff]
        %v7839 = vld [vmem:[%s652 + $0x48] sm:$0xff]
        %v7840 = vld [vmem:[%s652 + $0x50] sm:$0xff]
        %v7841 = vld [vmem:[%s652 + $0x58] sm:$0xff]
        %v7842 = vld [vmem:[%s652 + $0x60] sm:$0xff]
        %v7843 = vld [vmem:[%s652 + $0x68] sm:$0xff]
        %v7844 = vld [vmem:[%s652 + $0x70] sm:$0xff]
        %v7845 = vld [vmem:[%s652 + $0x78] sm:$0xff]
        %v7846 = vld [vmem:[%s652 + $0x80] sm:$0xff]
        %v7847 = vld [vmem:[%s652 + $0x88] sm:$0xff]
        %v7848 = vld [vmem:[%s652 + $0x90] sm:$0xff]
        %v7849 = vld [vmem:[%s652 + $0x98] sm:$0xff]
        %v7850 = vld [vmem:[%s652 + $0xa0] sm:$0xff]
        %v7851 = vld [vmem:[%s652 + $0xa8] sm:$0xff]
        %v7852 = vld [vmem:[%s652 + $0xb0] sm:$0xff]
        %v7853 = vld [vmem:[%s652 + $0xb8] sm:$0xff]
        %v7854 = vld [vmem:[%s652 + $0xc0] sm:$0xff]
        %v7855 = vld [vmem:[%s652 + $0xc8] sm:$0xff]
        %v7856 = vld [vmem:[%s652 + $0xd0] sm:$0xff]
        %v7857 = vld [vmem:[%s652 + $0xd8] sm:$0xff]
        %v7858 = vld [vmem:[%s652 + $0xe0] sm:$0xff]
        %v7859 = vld [vmem:[%s652 + $0xe8] sm:$0xff]
        %v7860 = vld [vmem:[%s652 + $0xf0] sm:$0xff]
        %v7861 = vld [vmem:[%s652 + $0xf8] sm:$0xff]
        %v7862 = vld [vmem:[%s652 + $0x100] sm:$0xff]
        %v7863 = vld [vmem:[%s652 + $0x108] sm:$0xff]
        %v7864 = vld [vmem:[%s652 + $0x110] sm:$0xff]
        %v7865 = vld [vmem:[%s652 + $0x118] sm:$0xff]
        %v7866 = vld [vmem:[%s652 + $0x120] sm:$0xff]
        %v7867 = vld [vmem:[%s652 + $0x128] sm:$0xff]
        %v7868 = vld [vmem:[%s652 + $0x130] sm:$0xff]
        %v7869 = vld [vmem:[%s652 + $0x138] sm:$0xff]
        %v7870 = vld [vmem:[%s652 + $0x140] sm:$0xff]
        %v7871 = vld [vmem:[%s652 + $0x148] sm:$0xff]
        %v7872 = vld [vmem:[%s652 + $0x150] sm:$0xff]
        %v7873 = vld [vmem:[%s652 + $0x158] sm:$0xff]
        %v7874 = vld [vmem:[%s652 + $0x160] sm:$0xff]
        %v7875 = vld [vmem:[%s652 + $0x168] sm:$0xff]
        %v7876 = vld [vmem:[%s652 + $0x170] sm:$0xff]
        %v7877 = vld [vmem:[%s652 + $0x178] sm:$0xff]
        %v7878 = vld [vmem:[%s652 + $0x180] sm:$0xff]
        %v7879 = vld [vmem:[%s652 + $0x188] sm:$0xff]
        %v7880 = vld [vmem:[%s652 + $0x190] sm:$0xff]
        %v7881 = vld [vmem:[%s652 + $0x198] sm:$0xff]
        %v7882 = vld [vmem:[%s652 + $0x1a0] sm:$0xff]
        %v7883 = vld [vmem:[%s652 + $0x1a8] sm:$0xff]
        %v7884 = vld [vmem:[%s652 + $0x1b0] sm:$0xff]
        %v7885 = vld [vmem:[%s652 + $0x1b8] sm:$0xff]
        %v7886 = vld [vmem:[%s652 + $0x1c0] sm:$0xff]
        %v7887 = vld [vmem:[%s652 + $0x1c8] sm:$0xff]
        %v7888 = vld [vmem:[%s652 + $0x1d0] sm:$0xff]
        %v7889 = vld [vmem:[%s652 + $0x1d8] sm:$0xff]
        %v7890 = vld [vmem:[%s652 + $0x1e0] sm:$0xff]
        %v7891 = vld [vmem:[%s652 + $0x1e8] sm:$0xff]
        %v7892 = vld [vmem:[%s652 + $0x1f0] sm:$0xff]
        %v7893 = vld [vmem:[%s652 + $0x1f8] sm:$0xff]
        %v7894 = vld [vmem:[%s652 + $0x200] sm:$0xff]
        %v7895 = vld [vmem:[%s652 + $0x208] sm:$0xff]
        %v7896 = vld [vmem:[%s652 + $0x210] sm:$0xff]
        %v7897 = vld [vmem:[%s652 + $0x218] sm:$0xff]
        %v7898 = vld [vmem:[%s652 + $0x220] sm:$0xff]
        %v7899 = vld [vmem:[%s652 + $0x228] sm:$0xff]
        %v7900 = vld [vmem:[%s652 + $0x230] sm:$0xff]
        %v7901 = vld [vmem:[%s652 + $0x238] sm:$0xff]
        %v7902 = vld [vmem:[%s652 + $0x240] sm:$0xff]
        %v7903 = vld [vmem:[%s652 + $0x248] sm:$0xff]
        %v7904 = vld [vmem:[%s652 + $0x250] sm:$0xff]
        %v7905 = vld [vmem:[%s652 + $0x258] sm:$0xff]
        %v7906 = vld [vmem:[%s652 + $0x260] sm:$0xff]
        %v7907 = vld [vmem:[%s652 + $0x268] sm:$0xff]
        %v7908 = vld [vmem:[%s652 + $0x270] sm:$0xff]
        %v7909 = vld [vmem:[%s652 + $0x278] sm:$0xff]
        %v7910 = vld [vmem:[%s652 + $0x280] sm:$0xff]
        %v7911 = vld [vmem:[%s652 + $0x288] sm:$0xff]
        %v7912 = vld [vmem:[%s652 + $0x290] sm:$0xff]
        %v7913 = vld [vmem:[%s652 + $0x298] sm:$0xff]
        %v7914 = vld [vmem:[%s652 + $0x2a0] sm:$0xff]
        %v7915 = vld [vmem:[%s652 + $0x2a8] sm:$0xff]
        %v7916 = vld [vmem:[%s652 + $0x2b0] sm:$0xff]
        %v7917 = vld [vmem:[%s652 + $0x2b8] sm:$0xff]
        %v7918 = vld [vmem:[%s652 + $0x2c0] sm:$0xff]
        %v7919 = vld [vmem:[%s652 + $0x2c8] sm:$0xff]
        %v7920 = vld [vmem:[%s652 + $0x2d0] sm:$0xff]
        %v7921 = vld [vmem:[%s652 + $0x2d8] sm:$0xff]
        %v7922 = vld [vmem:[%s652 + $0x2e0] sm:$0xff]
        %v7923 = vld [vmem:[%s652 + $0x2e8] sm:$0xff]
        %v7924 = vld [vmem:[%s652 + $0x2f0] sm:$0xff]
        %v7925 = vld [vmem:[%s652 + $0x2f8] sm:$0xff]
        %v7926 = vld [vmem:[%s652 + $0x300] sm:$0xff]
        %v7927 = vld [vmem:[%s652 + $0x308] sm:$0xff]
        %v7928 = vld [vmem:[%s652 + $0x310] sm:$0xff]
        %v7929 = vld [vmem:[%s652 + $0x318] sm:$0xff]
        %v7930 = vld [vmem:[%s652 + $0x320] sm:$0xff]
        %v7931 = vld [vmem:[%s652 + $0x328] sm:$0xff]
        %v7932 = vld [vmem:[%s652 + $0x330] sm:$0xff]
        %v7933 = vld [vmem:[%s652 + $0x338] sm:$0xff]
        %v7934 = vld [vmem:[%s652 + $0x340] sm:$0xff]
        %v7935 = vld [vmem:[%s652 + $0x348] sm:$0xff]
        %v7936 = vld [vmem:[%s652 + $0x350] sm:$0xff]
        %v7937 = vld [vmem:[%s652 + $0x358] sm:$0xff]
        %v7938 = vld [vmem:[%s652 + $0x360] sm:$0xff]
        %v7939 = vld [vmem:[%s652 + $0x368] sm:$0xff]
        %v7940 = vld [vmem:[%s652 + $0x370] sm:$0xff]
        %v7941 = vld [vmem:[%s652 + $0x378] sm:$0xff]
        %v7942 = vld [vmem:[%s652 + $0x380] sm:$0xff]
        %v7943 = vld [vmem:[%s652 + $0x388] sm:$0xff]
        %v7944 = vld [vmem:[%s652 + $0x390] sm:$0xff]
        %v7945 = vld [vmem:[%s652 + $0x398] sm:$0xff]
        %v7946 = vld [vmem:[%s652 + $0x3a0] sm:$0xff]
        %v7947 = vld [vmem:[%s652 + $0x3a8] sm:$0xff]
        %v7948 = vld [vmem:[%s652 + $0x3b0] sm:$0xff]
        %v7949 = vld [vmem:[%s652 + $0x3b8] sm:$0xff]
        %v7950 = vld [vmem:[%s652 + $0x3c0] sm:$0xff]
        %v7951 = vld [vmem:[%s652 + $0x3c8] sm:$0xff]
        %v7952 = vld [vmem:[%s652 + $0x3d0] sm:$0xff]
        %v7953 = vld [vmem:[%s652 + $0x3d8] sm:$0xff]
        %v7954 = vld [vmem:[%s652 + $0x3e0] sm:$0xff]
        %v7955 = vld [vmem:[%s652 + $0x3e8] sm:$0xff]
        %v7956 = vld [vmem:[%s652 + $0x3f0] sm:$0xff]
        %v7957 = vld [vmem:[%s652 + $0x3f8] sm:$0xff]
        %v7958 = vunpack.c.0.s8 %v7830
        %v7959 = vunpack.c.0.s8 %v7831
        %v7960 = vunpack.c.1.s8 %v7830
        %v7961 = vunpack.c.1.s8 %v7831
        %v7962 = vunpack.c.2.s8 %v7830
        %v7963 = vunpack.c.2.s8 %v7831
        %v7964 = vunpack.c.3.s8 %v7830
        %v7965 = vunpack.c.3.s8 %v7831
        %v7966 = vunpack.c.0.s8 %v7832
        %v7967 = vunpack.c.0.s8 %v7833
        %v7968 = vunpack.c.1.s8 %v7832
        %v7969 = vunpack.c.1.s8 %v7833
        %v7970 = vunpack.c.2.s8 %v7832
        %v7971 = vunpack.c.2.s8 %v7833
        %v7972 = vunpack.c.3.s8 %v7832
        %v7973 = vunpack.c.3.s8 %v7833
        %v7974 = vunpack.c.0.s8 %v7834
        %v7975 = vunpack.c.0.s8 %v7835
        %v7976 = vunpack.c.1.s8 %v7834
        %v7977 = vunpack.c.1.s8 %v7835
        %v7978 = vunpack.c.2.s8 %v7834
        %v7979 = vunpack.c.2.s8 %v7835
        %v7980 = vunpack.c.3.s8 %v7834
        %v7981 = vunpack.c.3.s8 %v7835
        %v7982 = vunpack.c.0.s8 %v7836
        %v7983 = vunpack.c.0.s8 %v7837
        %v7984 = vunpack.c.1.s8 %v7836
        %v7985 = vunpack.c.1.s8 %v7837
        %v7986 = vunpack.c.2.s8 %v7836
        %v7987 = vunpack.c.2.s8 %v7837
        %v7988 = vunpack.c.3.s8 %v7836
        %v7989 = vunpack.c.3.s8 %v7837
        %v7990 = vunpack.c.0.s8 %v7838
        %v7991 = vunpack.c.0.s8 %v7839
        %v7992 = vunpack.c.1.s8 %v7838
        %v7993 = vunpack.c.1.s8 %v7839
        %v7994 = vunpack.c.2.s8 %v7838
        %v7995 = vunpack.c.2.s8 %v7839
        %v7996 = vunpack.c.3.s8 %v7838
        %v7997 = vunpack.c.3.s8 %v7839
        %v7998 = vunpack.c.0.s8 %v7840
        %v7999 = vunpack.c.0.s8 %v7841
        %v8000 = vunpack.c.1.s8 %v7840
        %v8001 = vunpack.c.1.s8 %v7841
        %v8002 = vunpack.c.2.s8 %v7840
        %v8003 = vunpack.c.2.s8 %v7841
        %v8004 = vunpack.c.3.s8 %v7840
        %v8005 = vunpack.c.3.s8 %v7841
        %v8006 = vunpack.c.0.s8 %v7842
        %v8007 = vunpack.c.0.s8 %v7843
        %v8008 = vunpack.c.1.s8 %v7842
        %v8009 = vunpack.c.1.s8 %v7843
        %v8010 = vunpack.c.2.s8 %v7842
        %v8011 = vunpack.c.2.s8 %v7843
        %v8012 = vunpack.c.3.s8 %v7842
        %v8013 = vunpack.c.3.s8 %v7843
        %v8014 = vunpack.c.0.s8 %v7844
        %v8015 = vunpack.c.0.s8 %v7845
        %v8016 = vunpack.c.1.s8 %v7844
        %v8017 = vunpack.c.1.s8 %v7845
        %v8018 = vunpack.c.2.s8 %v7844
        %v8019 = vunpack.c.2.s8 %v7845
        %v8020 = vunpack.c.3.s8 %v7844
        %v8021 = vunpack.c.3.s8 %v7845
        %v8022 = vunpack.c.0.s8 %v7846
        %v8023 = vunpack.c.0.s8 %v7847
        %v8024 = vunpack.c.1.s8 %v7846
        %v8025 = vunpack.c.1.s8 %v7847
        %v8026 = vunpack.c.2.s8 %v7846
        %v8027 = vunpack.c.2.s8 %v7847
        %v8028 = vunpack.c.3.s8 %v7846
        %v8029 = vunpack.c.3.s8 %v7847
        %v8030 = vunpack.c.0.s8 %v7848
        %v8031 = vunpack.c.0.s8 %v7849
        %v8032 = vunpack.c.1.s8 %v7848
        %v8033 = vunpack.c.1.s8 %v7849
        %v8034 = vunpack.c.2.s8 %v7848
        %v8035 = vunpack.c.2.s8 %v7849
        %v8036 = vunpack.c.3.s8 %v7848
        %v8037 = vunpack.c.3.s8 %v7849
        %v8038 = vunpack.c.0.s8 %v7850
        %v8039 = vunpack.c.0.s8 %v7851
        %v8040 = vunpack.c.1.s8 %v7850
        %v8041 = vunpack.c.1.s8 %v7851
        %v8042 = vunpack.c.2.s8 %v7850
        %v8043 = vunpack.c.2.s8 %v7851
        %v8044 = vunpack.c.3.s8 %v7850
        %v8045 = vunpack.c.3.s8 %v7851
        %v8046 = vunpack.c.0.s8 %v7852
        %v8047 = vunpack.c.0.s8 %v7853
        %v8048 = vunpack.c.1.s8 %v7852
        %v8049 = vunpack.c.1.s8 %v7853
        %v8050 = vunpack.c.2.s8 %v7852
        %v8051 = vunpack.c.2.s8 %v7853
        %v8052 = vunpack.c.3.s8 %v7852
        %v8053 = vunpack.c.3.s8 %v7853
        %v8054 = vunpack.c.0.s8 %v7854
        %v8055 = vunpack.c.0.s8 %v7855
        %v8056 = vunpack.c.1.s8 %v7854
        %v8057 = vunpack.c.1.s8 %v7855
        %v8058 = vunpack.c.2.s8 %v7854
        %v8059 = vunpack.c.2.s8 %v7855
        %v8060 = vunpack.c.3.s8 %v7854
        %v8061 = vunpack.c.3.s8 %v7855
        %v8062 = vunpack.c.0.s8 %v7856
        %v8063 = vunpack.c.0.s8 %v7857
        %v8064 = vunpack.c.1.s8 %v7856
        %v8065 = vunpack.c.1.s8 %v7857
        %v8066 = vunpack.c.2.s8 %v7856
        %v8067 = vunpack.c.2.s8 %v7857
        %v8068 = vunpack.c.3.s8 %v7856
        %v8069 = vunpack.c.3.s8 %v7857
        %v8070 = vunpack.c.0.s8 %v7858
        %v8071 = vunpack.c.0.s8 %v7859
        %v8072 = vunpack.c.1.s8 %v7858
        %v8073 = vunpack.c.1.s8 %v7859
        %v8074 = vunpack.c.2.s8 %v7858
        %v8075 = vunpack.c.2.s8 %v7859
        %v8076 = vunpack.c.3.s8 %v7858
        %v8077 = vunpack.c.3.s8 %v7859
        %v8078 = vunpack.c.0.s8 %v7860
        %v8079 = vunpack.c.0.s8 %v7861
        %v8080 = vunpack.c.1.s8 %v7860
        %v8081 = vunpack.c.1.s8 %v7861
        %v8082 = vunpack.c.2.s8 %v7860
        %v8083 = vunpack.c.2.s8 %v7861
        %v8084 = vunpack.c.3.s8 %v7860
        %v8085 = vunpack.c.3.s8 %v7861
        %v8086 = vunpack.c.0.s8 %v7862
        %v8087 = vunpack.c.0.s8 %v7863
        %v8088 = vunpack.c.1.s8 %v7862
        %v8089 = vunpack.c.1.s8 %v7863
        %v8090 = vunpack.c.2.s8 %v7862
        %v8091 = vunpack.c.2.s8 %v7863
        %v8092 = vunpack.c.3.s8 %v7862
        %v8093 = vunpack.c.3.s8 %v7863
        %v8094 = vunpack.c.0.s8 %v7864
        %v8095 = vunpack.c.0.s8 %v7865
        %v8096 = vunpack.c.1.s8 %v7864
        %v8097 = vunpack.c.1.s8 %v7865
        %v8098 = vunpack.c.2.s8 %v7864
        %v8099 = vunpack.c.2.s8 %v7865
        %v8100 = vunpack.c.3.s8 %v7864
        %v8101 = vunpack.c.3.s8 %v7865
        %v8102 = vunpack.c.0.s8 %v7866
        %v8103 = vunpack.c.0.s8 %v7867
        %v8104 = vunpack.c.1.s8 %v7866
        %v8105 = vunpack.c.1.s8 %v7867
        %v8106 = vunpack.c.2.s8 %v7866
        %v8107 = vunpack.c.2.s8 %v7867
        %v8108 = vunpack.c.3.s8 %v7866
        %v8109 = vunpack.c.3.s8 %v7867
        %v8110 = vunpack.c.0.s8 %v7868
        %v8111 = vunpack.c.0.s8 %v7869
        %v8112 = vunpack.c.1.s8 %v7868
        %v8113 = vunpack.c.1.s8 %v7869
        %v8114 = vunpack.c.2.s8 %v7868
        %v8115 = vunpack.c.2.s8 %v7869
        %v8116 = vunpack.c.3.s8 %v7868
        %v8117 = vunpack.c.3.s8 %v7869
        %v8118 = vunpack.c.0.s8 %v7870
        %v8119 = vunpack.c.0.s8 %v7871
        %v8120 = vunpack.c.1.s8 %v7870
        %v8121 = vunpack.c.1.s8 %v7871
        %v8122 = vunpack.c.2.s8 %v7870
        %v8123 = vunpack.c.2.s8 %v7871
        %v8124 = vunpack.c.3.s8 %v7870
        %v8125 = vunpack.c.3.s8 %v7871
        %v8126 = vunpack.c.0.s8 %v7872
        %v8127 = vunpack.c.0.s8 %v7873
        %v8128 = vunpack.c.1.s8 %v7872
        %v8129 = vunpack.c.1.s8 %v7873
        %v8130 = vunpack.c.2.s8 %v7872
        %v8131 = vunpack.c.2.s8 %v7873
        %v8132 = vunpack.c.3.s8 %v7872
        %v8133 = vunpack.c.3.s8 %v7873
        %v8134 = vunpack.c.0.s8 %v7874
        %v8135 = vunpack.c.0.s8 %v7875
        %v8136 = vunpack.c.1.s8 %v7874
        %v8137 = vunpack.c.1.s8 %v7875
        %v8138 = vunpack.c.2.s8 %v7874
        %v8139 = vunpack.c.2.s8 %v7875
        %v8140 = vunpack.c.3.s8 %v7874
        %v8141 = vunpack.c.3.s8 %v7875
        %v8142 = vunpack.c.0.s8 %v7876
        %v8143 = vunpack.c.0.s8 %v7877
        %v8144 = vunpack.c.1.s8 %v7876
        %v8145 = vunpack.c.1.s8 %v7877
        %v8146 = vunpack.c.2.s8 %v7876
        %v8147 = vunpack.c.2.s8 %v7877
        %v8148 = vunpack.c.3.s8 %v7876
        %v8149 = vunpack.c.3.s8 %v7877
        %v8150 = vunpack.c.0.s8 %v7878
        %v8151 = vunpack.c.0.s8 %v7879
        %v8152 = vunpack.c.1.s8 %v7878
        %v8153 = vunpack.c.1.s8 %v7879
        %v8154 = vunpack.c.2.s8 %v7878
        %v8155 = vunpack.c.2.s8 %v7879
        %v8156 = vunpack.c.3.s8 %v7878
        %v8157 = vunpack.c.3.s8 %v7879
        %v8158 = vunpack.c.0.s8 %v7880
        %v8159 = vunpack.c.0.s8 %v7881
        %v8160 = vunpack.c.1.s8 %v7880
        %v8161 = vunpack.c.1.s8 %v7881
        %v8162 = vunpack.c.2.s8 %v7880
        %v8163 = vunpack.c.2.s8 %v7881
        %v8164 = vunpack.c.3.s8 %v7880
        %v8165 = vunpack.c.3.s8 %v7881
        %v8166 = vunpack.c.0.s8 %v7882
        %v8167 = vunpack.c.0.s8 %v7883
        %v8168 = vunpack.c.1.s8 %v7882
        %v8169 = vunpack.c.1.s8 %v7883
        %v8170 = vunpack.c.2.s8 %v7882
        %v8171 = vunpack.c.2.s8 %v7883
        %v8172 = vunpack.c.3.s8 %v7882
        %v8173 = vunpack.c.3.s8 %v7883
        %v8174 = vunpack.c.0.s8 %v7884
        %v8175 = vunpack.c.0.s8 %v7885
        %v8176 = vunpack.c.1.s8 %v7884
        %v8177 = vunpack.c.1.s8 %v7885
        %v8178 = vunpack.c.2.s8 %v7884
        %v8179 = vunpack.c.2.s8 %v7885
        %v8180 = vunpack.c.3.s8 %v7884
        %v8181 = vunpack.c.3.s8 %v7885
        %v8182 = vunpack.c.0.s8 %v7886
        %v8183 = vunpack.c.0.s8 %v7887
        %v8184 = vunpack.c.1.s8 %v7886
        %v8185 = vunpack.c.1.s8 %v7887
        %v8186 = vunpack.c.2.s8 %v7886
        %v8187 = vunpack.c.2.s8 %v7887
        %v8188 = vunpack.c.3.s8 %v7886
        %v8189 = vunpack.c.3.s8 %v7887
        %v8190 = vunpack.c.0.s8 %v7888
        %v8191 = vunpack.c.0.s8 %v7889
        %v8192 = vunpack.c.1.s8 %v7888
        %v8193 = vunpack.c.1.s8 %v7889
        %v8194 = vunpack.c.2.s8 %v7888
        %v8195 = vunpack.c.2.s8 %v7889
        %v8196 = vunpack.c.3.s8 %v7888
        %v8197 = vunpack.c.3.s8 %v7889
        %v8198 = vunpack.c.0.s8 %v7890
        %v8199 = vunpack.c.0.s8 %v7891
        %v8200 = vunpack.c.1.s8 %v7890
        %v8201 = vunpack.c.1.s8 %v7891
        %v8202 = vunpack.c.2.s8 %v7890
        %v8203 = vunpack.c.2.s8 %v7891
        %v8204 = vunpack.c.3.s8 %v7890
        %v8205 = vunpack.c.3.s8 %v7891
        %v8206 = vunpack.c.0.s8 %v7892
        %v8207 = vunpack.c.0.s8 %v7893
        %v8208 = vunpack.c.1.s8 %v7892
        %v8209 = vunpack.c.1.s8 %v7893
        %v8210 = vunpack.c.2.s8 %v7892
        %v8211 = vunpack.c.2.s8 %v7893
        %v8212 = vunpack.c.3.s8 %v7892
        %v8213 = vunpack.c.3.s8 %v7893
        %v8214 = vunpack.c.0.s8 %v7894
        %v8215 = vunpack.c.0.s8 %v7895
        %v8216 = vunpack.c.1.s8 %v7894
        %v8217 = vunpack.c.1.s8 %v7895
        %v8218 = vunpack.c.2.s8 %v7894
        %v8219 = vunpack.c.2.s8 %v7895
        %v8220 = vunpack.c.3.s8 %v7894
        %v8221 = vunpack.c.3.s8 %v7895
        %v8222 = vunpack.c.0.s8 %v7896
        %v8223 = vunpack.c.0.s8 %v7897
        %v8224 = vunpack.c.1.s8 %v7896
        %v8225 = vunpack.c.1.s8 %v7897
        %v8226 = vunpack.c.2.s8 %v7896
        %v8227 = vunpack.c.2.s8 %v7897
        %v8228 = vunpack.c.3.s8 %v7896
        %v8229 = vunpack.c.3.s8 %v7897
        %v8230 = vunpack.c.0.s8 %v7898
        %v8231 = vunpack.c.0.s8 %v7899
        %v8232 = vunpack.c.1.s8 %v7898
        %v8233 = vunpack.c.1.s8 %v7899
        %v8234 = vunpack.c.2.s8 %v7898
        %v8235 = vunpack.c.2.s8 %v7899
        %v8236 = vunpack.c.3.s8 %v7898
        %v8237 = vunpack.c.3.s8 %v7899
        %v8238 = vunpack.c.0.s8 %v7900
        %v8239 = vunpack.c.0.s8 %v7901
        %v8240 = vunpack.c.1.s8 %v7900
        %v8241 = vunpack.c.1.s8 %v7901
        %v8242 = vunpack.c.2.s8 %v7900
        %v8243 = vunpack.c.2.s8 %v7901
        %v8244 = vunpack.c.3.s8 %v7900
        %v8245 = vunpack.c.3.s8 %v7901
        %v8246 = vunpack.c.0.s8 %v7902
        %v8247 = vunpack.c.0.s8 %v7903
        %v8248 = vunpack.c.1.s8 %v7902
        %v8249 = vunpack.c.1.s8 %v7903
        %v8250 = vunpack.c.2.s8 %v7902
        %v8251 = vunpack.c.2.s8 %v7903
        %v8252 = vunpack.c.3.s8 %v7902
        %v8253 = vunpack.c.3.s8 %v7903
        %v8254 = vunpack.c.0.s8 %v7904
        %v8255 = vunpack.c.0.s8 %v7905
        %v8256 = vunpack.c.1.s8 %v7904
        %v8257 = vunpack.c.1.s8 %v7905
        %v8258 = vunpack.c.2.s8 %v7904
        %v8259 = vunpack.c.2.s8 %v7905
        %v8260 = vunpack.c.3.s8 %v7904
        %v8261 = vunpack.c.3.s8 %v7905
        %v8262 = vunpack.c.0.s8 %v7906
        %v8263 = vunpack.c.0.s8 %v7907
        %v8264 = vunpack.c.1.s8 %v7906
        %v8265 = vunpack.c.1.s8 %v7907
        %v8266 = vunpack.c.2.s8 %v7906
        %v8267 = vunpack.c.2.s8 %v7907
        %v8268 = vunpack.c.3.s8 %v7906
        %v8269 = vunpack.c.3.s8 %v7907
        %v8270 = vunpack.c.0.s8 %v7908
        %v8271 = vunpack.c.0.s8 %v7909
        %v8272 = vunpack.c.1.s8 %v7908
        %v8273 = vunpack.c.1.s8 %v7909
        %v8274 = vunpack.c.2.s8 %v7908
        %v8275 = vunpack.c.2.s8 %v7909
        %v8276 = vunpack.c.3.s8 %v7908
        %v8277 = vunpack.c.3.s8 %v7909
        %v8278 = vunpack.c.0.s8 %v7910
        %v8279 = vunpack.c.0.s8 %v7911
        %v8280 = vunpack.c.1.s8 %v7910
        %v8281 = vunpack.c.1.s8 %v7911
        %v8282 = vunpack.c.2.s8 %v7910
        %v8283 = vunpack.c.2.s8 %v7911
        %v8284 = vunpack.c.3.s8 %v7910
        %v8285 = vunpack.c.3.s8 %v7911
        %v8286 = vunpack.c.0.s8 %v7912
        %v8287 = vunpack.c.0.s8 %v7913
        %v8288 = vunpack.c.1.s8 %v7912
        %v8289 = vunpack.c.1.s8 %v7913
        %v8290 = vunpack.c.2.s8 %v7912
        %v8291 = vunpack.c.2.s8 %v7913
        %v8292 = vunpack.c.3.s8 %v7912
        %v8293 = vunpack.c.3.s8 %v7913
        %v8294 = vunpack.c.0.s8 %v7914
        %v8295 = vunpack.c.0.s8 %v7915
        %v8296 = vunpack.c.1.s8 %v7914
        %v8297 = vunpack.c.1.s8 %v7915
        %v8298 = vunpack.c.2.s8 %v7914
        %v8299 = vunpack.c.2.s8 %v7915
        %v8300 = vunpack.c.3.s8 %v7914
        %v8301 = vunpack.c.3.s8 %v7915
        %v8302 = vunpack.c.0.s8 %v7916
        %v8303 = vunpack.c.0.s8 %v7917
        %v8304 = vunpack.c.1.s8 %v7916
        %v8305 = vunpack.c.1.s8 %v7917
        %v8306 = vunpack.c.2.s8 %v7916
        %v8307 = vunpack.c.2.s8 %v7917
        %v8308 = vunpack.c.3.s8 %v7916
        %v8309 = vunpack.c.3.s8 %v7917
        %v8310 = vunpack.c.0.s8 %v7918
        %v8311 = vunpack.c.0.s8 %v7919
        %v8312 = vunpack.c.1.s8 %v7918
        %v8313 = vunpack.c.1.s8 %v7919
        %v8314 = vunpack.c.2.s8 %v7918
        %v8315 = vunpack.c.2.s8 %v7919
        %v8316 = vunpack.c.3.s8 %v7918
        %v8317 = vunpack.c.3.s8 %v7919
        %v8318 = vunpack.c.0.s8 %v7920
        %v8319 = vunpack.c.0.s8 %v7921
        %v8320 = vunpack.c.1.s8 %v7920
        %v8321 = vunpack.c.1.s8 %v7921
        %v8322 = vunpack.c.2.s8 %v7920
        %v8323 = vunpack.c.2.s8 %v7921
        %v8324 = vunpack.c.3.s8 %v7920
        %v8325 = vunpack.c.3.s8 %v7921
        %v8326 = vunpack.c.0.s8 %v7922
        %v8327 = vunpack.c.0.s8 %v7923
        %v8328 = vunpack.c.1.s8 %v7922
        %v8329 = vunpack.c.1.s8 %v7923
        %v8330 = vunpack.c.2.s8 %v7922
        %v8331 = vunpack.c.2.s8 %v7923
        %v8332 = vunpack.c.3.s8 %v7922
        %v8333 = vunpack.c.3.s8 %v7923
        %v8334 = vunpack.c.0.s8 %v7924
        %v8335 = vunpack.c.0.s8 %v7925
        %v8336 = vunpack.c.1.s8 %v7924
        %v8337 = vunpack.c.1.s8 %v7925
        %v8338 = vunpack.c.2.s8 %v7924
        %v8339 = vunpack.c.2.s8 %v7925
        %v8340 = vunpack.c.3.s8 %v7924
        %v8341 = vunpack.c.3.s8 %v7925
        %v8342 = vunpack.c.0.s8 %v7926
        %v8343 = vunpack.c.0.s8 %v7927
        %v8344 = vunpack.c.1.s8 %v7926
        %v8345 = vunpack.c.1.s8 %v7927
        %v8346 = vunpack.c.2.s8 %v7926
        %v8347 = vunpack.c.2.s8 %v7927
        %v8348 = vunpack.c.3.s8 %v7926
        %v8349 = vunpack.c.3.s8 %v7927
        %v8350 = vunpack.c.0.s8 %v7928
        %v8351 = vunpack.c.0.s8 %v7929
        %v8352 = vunpack.c.1.s8 %v7928
        %v8353 = vunpack.c.1.s8 %v7929
        %v8354 = vunpack.c.2.s8 %v7928
        %v8355 = vunpack.c.2.s8 %v7929
        %v8356 = vunpack.c.3.s8 %v7928
        %v8357 = vunpack.c.3.s8 %v7929
        %v8358 = vunpack.c.0.s8 %v7930
        %v8359 = vunpack.c.0.s8 %v7931
        %v8360 = vunpack.c.1.s8 %v7930
        %v8361 = vunpack.c.1.s8 %v7931
        %v8362 = vunpack.c.2.s8 %v7930
        %v8363 = vunpack.c.2.s8 %v7931
        %v8364 = vunpack.c.3.s8 %v7930
        %v8365 = vunpack.c.3.s8 %v7931
        %v8366 = vunpack.c.0.s8 %v7932
        %v8367 = vunpack.c.0.s8 %v7933
        %v8368 = vunpack.c.1.s8 %v7932
        %v8369 = vunpack.c.1.s8 %v7933
        %v8370 = vunpack.c.2.s8 %v7932
        %v8371 = vunpack.c.2.s8 %v7933
        %v8372 = vunpack.c.3.s8 %v7932
        %v8373 = vunpack.c.3.s8 %v7933
        %v8374 = vunpack.c.0.s8 %v7934
        %v8375 = vunpack.c.0.s8 %v7935
        %v8376 = vunpack.c.1.s8 %v7934
        %v8377 = vunpack.c.1.s8 %v7935
        %v8378 = vunpack.c.2.s8 %v7934
        %v8379 = vunpack.c.2.s8 %v7935
        %v8380 = vunpack.c.3.s8 %v7934
        %v8381 = vunpack.c.3.s8 %v7935
        %v8382 = vunpack.c.0.s8 %v7936
        %v8383 = vunpack.c.0.s8 %v7937
        %v8384 = vunpack.c.1.s8 %v7936
        %v8385 = vunpack.c.1.s8 %v7937
        %v8386 = vunpack.c.2.s8 %v7936
        %v8387 = vunpack.c.2.s8 %v7937
        %v8388 = vunpack.c.3.s8 %v7936
        %v8389 = vunpack.c.3.s8 %v7937
        %v8390 = vunpack.c.0.s8 %v7938
        %v8391 = vunpack.c.0.s8 %v7939
        %v8392 = vunpack.c.1.s8 %v7938
        %v8393 = vunpack.c.1.s8 %v7939
        %v8394 = vunpack.c.2.s8 %v7938
        %v8395 = vunpack.c.2.s8 %v7939
        %v8396 = vunpack.c.3.s8 %v7938
        %v8397 = vunpack.c.3.s8 %v7939
        %v8398 = vunpack.c.0.s8 %v7940
        %v8399 = vunpack.c.0.s8 %v7941
        %v8400 = vunpack.c.1.s8 %v7940
        %v8401 = vunpack.c.1.s8 %v7941
        %v8402 = vunpack.c.2.s8 %v7940
        %v8403 = vunpack.c.2.s8 %v7941
        %v8404 = vunpack.c.3.s8 %v7940
        %v8405 = vunpack.c.3.s8 %v7941
        %v8406 = vunpack.c.0.s8 %v7942
        %v8407 = vunpack.c.0.s8 %v7943
        %v8408 = vunpack.c.1.s8 %v7942
        %v8409 = vunpack.c.1.s8 %v7943
        %v8410 = vunpack.c.2.s8 %v7942
        %v8411 = vunpack.c.2.s8 %v7943
        %v8412 = vunpack.c.3.s8 %v7942
        %v8413 = vunpack.c.3.s8 %v7943
        %v8414 = vunpack.c.0.s8 %v7944
        %v8415 = vunpack.c.0.s8 %v7945
        %v8416 = vunpack.c.1.s8 %v7944
        %v8417 = vunpack.c.1.s8 %v7945
        %v8418 = vunpack.c.2.s8 %v7944
        %v8419 = vunpack.c.2.s8 %v7945
        %v8420 = vunpack.c.3.s8 %v7944
        %v8421 = vunpack.c.3.s8 %v7945
        %v8422 = vunpack.c.0.s8 %v7946
        %v8423 = vunpack.c.0.s8 %v7947
        %v8424 = vunpack.c.1.s8 %v7946
        %v8425 = vunpack.c.1.s8 %v7947
        %v8426 = vunpack.c.2.s8 %v7946
        %v8427 = vunpack.c.2.s8 %v7947
        %v8428 = vunpack.c.3.s8 %v7946
        %v8429 = vunpack.c.3.s8 %v7947
        %v8430 = vunpack.c.0.s8 %v7948
        %v8431 = vunpack.c.0.s8 %v7949
        %v8432 = vunpack.c.1.s8 %v7948
        %v8433 = vunpack.c.1.s8 %v7949
        %v8434 = vunpack.c.2.s8 %v7948
        %v8435 = vunpack.c.2.s8 %v7949
        %v8436 = vunpack.c.3.s8 %v7948
        %v8437 = vunpack.c.3.s8 %v7949
        %v8438 = vunpack.c.0.s8 %v7950
        %v8439 = vunpack.c.0.s8 %v7951
        %v8440 = vunpack.c.1.s8 %v7950
        %v8441 = vunpack.c.1.s8 %v7951
        %v8442 = vunpack.c.2.s8 %v7950
        %v8443 = vunpack.c.2.s8 %v7951
        %v8444 = vunpack.c.3.s8 %v7950
        %v8445 = vunpack.c.3.s8 %v7951
        %v8446 = vunpack.c.0.s8 %v7952
        %v8447 = vunpack.c.0.s8 %v7953
        %v8448 = vunpack.c.1.s8 %v7952
        %v8449 = vunpack.c.1.s8 %v7953
        %v8450 = vunpack.c.2.s8 %v7952
        %v8451 = vunpack.c.2.s8 %v7953
        %v8452 = vunpack.c.3.s8 %v7952
        %v8453 = vunpack.c.3.s8 %v7953
        %v8454 = vunpack.c.0.s8 %v7954
        %v8455 = vunpack.c.0.s8 %v7955
        %v8456 = vunpack.c.1.s8 %v7954
        %v8457 = vunpack.c.1.s8 %v7955
        %v8458 = vunpack.c.2.s8 %v7954
        %v8459 = vunpack.c.2.s8 %v7955
        %v8460 = vunpack.c.3.s8 %v7954
        %v8461 = vunpack.c.3.s8 %v7955
        %v8462 = vunpack.c.0.s8 %v7956
        %v8463 = vunpack.c.0.s8 %v7957
        %v8464 = vunpack.c.1.s8 %v7956
        %v8465 = vunpack.c.1.s8 %v7957
        %v8466 = vunpack.c.2.s8 %v7956
        %v8467 = vunpack.c.2.s8 %v7957
        %v8468 = vunpack.c.3.s8 %v7956
        %v8469 = vunpack.c.3.s8 %v7957
        %v8470 = vcvt.s32.f32 %v7958
        %v8471 = vcvt.s32.f32 %v7959
        %v8472 = vcvt.s32.f32 %v7960
        %v8473 = vcvt.s32.f32 %v7961
        %v8474 = vcvt.s32.f32 %v7962
        %v8475 = vcvt.s32.f32 %v7963
        %v8476 = vcvt.s32.f32 %v7964
        %v8477 = vcvt.s32.f32 %v7965
        %v8478 = vcvt.s32.f32 %v7966
        %v8479 = vcvt.s32.f32 %v7967
        %v8480 = vcvt.s32.f32 %v7968
        %v8481 = vcvt.s32.f32 %v7969
        %v8482 = vcvt.s32.f32 %v7970
        %v8483 = vcvt.s32.f32 %v7971
        %v8484 = vcvt.s32.f32 %v7972
        %v8485 = vcvt.s32.f32 %v7973
        %v8486 = vcvt.s32.f32 %v7974
        %v8487 = vcvt.s32.f32 %v7975
        %v8488 = vcvt.s32.f32 %v7976
        %v8489 = vcvt.s32.f32 %v7977
        %v8490 = vcvt.s32.f32 %v7978
        %v8491 = vcvt.s32.f32 %v7979
        %v8492 = vcvt.s32.f32 %v7980
        %v8493 = vcvt.s32.f32 %v7981
        %v8494 = vcvt.s32.f32 %v7982
        %v8495 = vcvt.s32.f32 %v7983
        %v8496 = vcvt.s32.f32 %v7984
        %v8497 = vcvt.s32.f32 %v7985
        %v8498 = vcvt.s32.f32 %v7986
        %v8499 = vcvt.s32.f32 %v7987
        %v8500 = vcvt.s32.f32 %v7988
        %v8501 = vcvt.s32.f32 %v7989
        %v8502 = vcvt.s32.f32 %v7990
        %v8503 = vcvt.s32.f32 %v7991
        %v8504 = vcvt.s32.f32 %v7992
        %v8505 = vcvt.s32.f32 %v7993
        %v8506 = vcvt.s32.f32 %v7994
        %v8507 = vcvt.s32.f32 %v7995
        %v8508 = vcvt.s32.f32 %v7996
        %v8509 = vcvt.s32.f32 %v7997
        %v8510 = vcvt.s32.f32 %v7998
        %v8511 = vcvt.s32.f32 %v7999
        %v8512 = vcvt.s32.f32 %v8000
        %v8513 = vcvt.s32.f32 %v8001
        %v8514 = vcvt.s32.f32 %v8002
        %v8515 = vcvt.s32.f32 %v8003
        %v8516 = vcvt.s32.f32 %v8004
        %v8517 = vcvt.s32.f32 %v8005
        %v8518 = vcvt.s32.f32 %v8006
        %v8519 = vcvt.s32.f32 %v8007
        %v8520 = vcvt.s32.f32 %v8008
        %v8521 = vcvt.s32.f32 %v8009
        %v8522 = vcvt.s32.f32 %v8010
        %v8523 = vcvt.s32.f32 %v8011
        %v8524 = vcvt.s32.f32 %v8012
        %v8525 = vcvt.s32.f32 %v8013
        %v8526 = vcvt.s32.f32 %v8014
        %v8527 = vcvt.s32.f32 %v8015
        %v8528 = vcvt.s32.f32 %v8016
        %v8529 = vcvt.s32.f32 %v8017
        %v8530 = vcvt.s32.f32 %v8018
        %v8531 = vcvt.s32.f32 %v8019
        %v8532 = vcvt.s32.f32 %v8020
        %v8533 = vcvt.s32.f32 %v8021
        %v8534 = vcvt.s32.f32 %v8022
        %v8535 = vcvt.s32.f32 %v8023
        %v8536 = vcvt.s32.f32 %v8024
        %v8537 = vcvt.s32.f32 %v8025
        %v8538 = vcvt.s32.f32 %v8026
        %v8539 = vcvt.s32.f32 %v8027
        %v8540 = vcvt.s32.f32 %v8028
        %v8541 = vcvt.s32.f32 %v8029
        %v8542 = vcvt.s32.f32 %v8030
        %v8543 = vcvt.s32.f32 %v8031
        %v8544 = vcvt.s32.f32 %v8032
        %v8545 = vcvt.s32.f32 %v8033
        %v8546 = vcvt.s32.f32 %v8034
        %v8547 = vcvt.s32.f32 %v8035
        %v8548 = vcvt.s32.f32 %v8036
        %v8549 = vcvt.s32.f32 %v8037
        %v8550 = vcvt.s32.f32 %v8038
        %v8551 = vcvt.s32.f32 %v8039
        %v8552 = vcvt.s32.f32 %v8040
        %v8553 = vcvt.s32.f32 %v8041
        %v8554 = vcvt.s32.f32 %v8042
        %v8555 = vcvt.s32.f32 %v8043
        %v8556 = vcvt.s32.f32 %v8044
        %v8557 = vcvt.s32.f32 %v8045
        %v8558 = vcvt.s32.f32 %v8046
        %v8559 = vcvt.s32.f32 %v8047
        %v8560 = vcvt.s32.f32 %v8048
        %v8561 = vcvt.s32.f32 %v8049
        %v8562 = vcvt.s32.f32 %v8050
        %v8563 = vcvt.s32.f32 %v8051
        %v8564 = vcvt.s32.f32 %v8052
        %v8565 = vcvt.s32.f32 %v8053
        %v8566 = vcvt.s32.f32 %v8054
        %v8567 = vcvt.s32.f32 %v8055
        %v8568 = vcvt.s32.f32 %v8056
        %v8569 = vcvt.s32.f32 %v8057
        %v8570 = vcvt.s32.f32 %v8058
        %v8571 = vcvt.s32.f32 %v8059
        %v8572 = vcvt.s32.f32 %v8060
        %v8573 = vcvt.s32.f32 %v8061
        %v8574 = vcvt.s32.f32 %v8062
        %v8575 = vcvt.s32.f32 %v8063
        %v8576 = vcvt.s32.f32 %v8064
        %v8577 = vcvt.s32.f32 %v8065
        %v8578 = vcvt.s32.f32 %v8066
        %v8579 = vcvt.s32.f32 %v8067
        %v8580 = vcvt.s32.f32 %v8068
        %v8581 = vcvt.s32.f32 %v8069
        %v8582 = vcvt.s32.f32 %v8070
        %v8583 = vcvt.s32.f32 %v8071
        %v8584 = vcvt.s32.f32 %v8072
        %v8585 = vcvt.s32.f32 %v8073
        %v8586 = vcvt.s32.f32 %v8074
        %v8587 = vcvt.s32.f32 %v8075
        %v8588 = vcvt.s32.f32 %v8076
        %v8589 = vcvt.s32.f32 %v8077
        %v8590 = vcvt.s32.f32 %v8078
        %v8591 = vcvt.s32.f32 %v8079
        %v8592 = vcvt.s32.f32 %v8080
        %v8593 = vcvt.s32.f32 %v8081
        %v8594 = vcvt.s32.f32 %v8082
        %v8595 = vcvt.s32.f32 %v8083
        %v8596 = vcvt.s32.f32 %v8084
        %v8597 = vcvt.s32.f32 %v8085
        %v8598 = vcvt.s32.f32 %v8086
        %v8599 = vcvt.s32.f32 %v8087
        %v8600 = vcvt.s32.f32 %v8088
        %v8601 = vcvt.s32.f32 %v8089
        %v8602 = vcvt.s32.f32 %v8090
        %v8603 = vcvt.s32.f32 %v8091
        %v8604 = vcvt.s32.f32 %v8092
        %v8605 = vcvt.s32.f32 %v8093
        %v8606 = vcvt.s32.f32 %v8094
        %v8607 = vcvt.s32.f32 %v8095
        %v8608 = vcvt.s32.f32 %v8096
        %v8609 = vcvt.s32.f32 %v8097
        %v8610 = vcvt.s32.f32 %v8098
        %v8611 = vcvt.s32.f32 %v8099
        %v8612 = vcvt.s32.f32 %v8100
        %v8613 = vcvt.s32.f32 %v8101
        %v8614 = vcvt.s32.f32 %v8102
        %v8615 = vcvt.s32.f32 %v8103
        %v8616 = vcvt.s32.f32 %v8104
        %v8617 = vcvt.s32.f32 %v8105
        %v8618 = vcvt.s32.f32 %v8106
        %v8619 = vcvt.s32.f32 %v8107
        %v8620 = vcvt.s32.f32 %v8108
        %v8621 = vcvt.s32.f32 %v8109
        %v8622 = vcvt.s32.f32 %v8110
        %v8623 = vcvt.s32.f32 %v8111
        %v8624 = vcvt.s32.f32 %v8112
        %v8625 = vcvt.s32.f32 %v8113
        %v8626 = vcvt.s32.f32 %v8114
        %v8627 = vcvt.s32.f32 %v8115
        %v8628 = vcvt.s32.f32 %v8116
        %v8629 = vcvt.s32.f32 %v8117
        %v8630 = vcvt.s32.f32 %v8118
        %v8631 = vcvt.s32.f32 %v8119
        %v8632 = vcvt.s32.f32 %v8120
        %v8633 = vcvt.s32.f32 %v8121
        %v8634 = vcvt.s32.f32 %v8122
        %v8635 = vcvt.s32.f32 %v8123
        %v8636 = vcvt.s32.f32 %v8124
        %v8637 = vcvt.s32.f32 %v8125
        %v8638 = vcvt.s32.f32 %v8126
        %v8639 = vcvt.s32.f32 %v8127
        %v8640 = vcvt.s32.f32 %v8128
        %v8641 = vcvt.s32.f32 %v8129
        %v8642 = vcvt.s32.f32 %v8130
        %v8643 = vcvt.s32.f32 %v8131
        %v8644 = vcvt.s32.f32 %v8132
        %v8645 = vcvt.s32.f32 %v8133
        %v8646 = vcvt.s32.f32 %v8134
        %v8647 = vcvt.s32.f32 %v8135
        %v8648 = vcvt.s32.f32 %v8136
        %v8649 = vcvt.s32.f32 %v8137
        %v8650 = vcvt.s32.f32 %v8138
        %v8651 = vcvt.s32.f32 %v8139
        %v8652 = vcvt.s32.f32 %v8140
        %v8653 = vcvt.s32.f32 %v8141
        %v8654 = vcvt.s32.f32 %v8142
        %v8655 = vcvt.s32.f32 %v8143
        %v8656 = vcvt.s32.f32 %v8144
        %v8657 = vcvt.s32.f32 %v8145
        %v8658 = vcvt.s32.f32 %v8146
        %v8659 = vcvt.s32.f32 %v8147
        %v8660 = vcvt.s32.f32 %v8148
        %v8661 = vcvt.s32.f32 %v8149
        %v8662 = vcvt.s32.f32 %v8150
        %v8663 = vcvt.s32.f32 %v8151
        %v8664 = vcvt.s32.f32 %v8152
        %v8665 = vcvt.s32.f32 %v8153
        %v8666 = vcvt.s32.f32 %v8154
        %v8667 = vcvt.s32.f32 %v8155
        %v8668 = vcvt.s32.f32 %v8156
        %v8669 = vcvt.s32.f32 %v8157
        %v8670 = vcvt.s32.f32 %v8158
        %v8671 = vcvt.s32.f32 %v8159
        %v8672 = vcvt.s32.f32 %v8160
        %v8673 = vcvt.s32.f32 %v8161
        %v8674 = vcvt.s32.f32 %v8162
        %v8675 = vcvt.s32.f32 %v8163
        %v8676 = vcvt.s32.f32 %v8164
        %v8677 = vcvt.s32.f32 %v8165
        %v8678 = vcvt.s32.f32 %v8166
        %v8679 = vcvt.s32.f32 %v8167
        %v8680 = vcvt.s32.f32 %v8168
        %v8681 = vcvt.s32.f32 %v8169
        %v8682 = vcvt.s32.f32 %v8170
        %v8683 = vcvt.s32.f32 %v8171
        %v8684 = vcvt.s32.f32 %v8172
        %v8685 = vcvt.s32.f32 %v8173
        %v8686 = vcvt.s32.f32 %v8174
        %v8687 = vcvt.s32.f32 %v8175
        %v8688 = vcvt.s32.f32 %v8176
        %v8689 = vcvt.s32.f32 %v8177
        %v8690 = vcvt.s32.f32 %v8178
        %v8691 = vcvt.s32.f32 %v8179
        %v8692 = vcvt.s32.f32 %v8180
        %v8693 = vcvt.s32.f32 %v8181
        %v8694 = vcvt.s32.f32 %v8182
        %v8695 = vcvt.s32.f32 %v8183
        %v8696 = vcvt.s32.f32 %v8184
        %v8697 = vcvt.s32.f32 %v8185
        %v8698 = vcvt.s32.f32 %v8186
        %v8699 = vcvt.s32.f32 %v8187
        %v8700 = vcvt.s32.f32 %v8188
        %v8701 = vcvt.s32.f32 %v8189
        %v8702 = vcvt.s32.f32 %v8190
        %v8703 = vcvt.s32.f32 %v8191
        %v8704 = vcvt.s32.f32 %v8192
        %v8705 = vcvt.s32.f32 %v8193
        %v8706 = vcvt.s32.f32 %v8194
        %v8707 = vcvt.s32.f32 %v8195
        %v8708 = vcvt.s32.f32 %v8196
        %v8709 = vcvt.s32.f32 %v8197
        %v8710 = vcvt.s32.f32 %v8198
        %v8711 = vcvt.s32.f32 %v8199
        %v8712 = vcvt.s32.f32 %v8200
        %v8713 = vcvt.s32.f32 %v8201
        %v8714 = vcvt.s32.f32 %v8202
        %v8715 = vcvt.s32.f32 %v8203
        %v8716 = vcvt.s32.f32 %v8204
        %v8717 = vcvt.s32.f32 %v8205
        %v8718 = vcvt.s32.f32 %v8206
        %v8719 = vcvt.s32.f32 %v8207
        %v8720 = vcvt.s32.f32 %v8208
        %v8721 = vcvt.s32.f32 %v8209
        %v8722 = vcvt.s32.f32 %v8210
        %v8723 = vcvt.s32.f32 %v8211
        %v8724 = vcvt.s32.f32 %v8212
        %v8725 = vcvt.s32.f32 %v8213
        %v8726 = vcvt.s32.f32 %v8214
        %v8727 = vcvt.s32.f32 %v8215
        %v8728 = vcvt.s32.f32 %v8216
        %v8729 = vcvt.s32.f32 %v8217
        %v8730 = vcvt.s32.f32 %v8218
        %v8731 = vcvt.s32.f32 %v8219
        %v8732 = vcvt.s32.f32 %v8220
        %v8733 = vcvt.s32.f32 %v8221
        %v8734 = vcvt.s32.f32 %v8222
        %v8735 = vcvt.s32.f32 %v8223
        %v8736 = vcvt.s32.f32 %v8224
        %v8737 = vcvt.s32.f32 %v8225
        %v8738 = vcvt.s32.f32 %v8226
        %v8739 = vcvt.s32.f32 %v8227
        %v8740 = vcvt.s32.f32 %v8228
        %v8741 = vcvt.s32.f32 %v8229
        %v8742 = vcvt.s32.f32 %v8230
        %v8743 = vcvt.s32.f32 %v8231
        %v8744 = vcvt.s32.f32 %v8232
        %v8745 = vcvt.s32.f32 %v8233
        %v8746 = vcvt.s32.f32 %v8234
        %v8747 = vcvt.s32.f32 %v8235
        %v8748 = vcvt.s32.f32 %v8236
        %v8749 = vcvt.s32.f32 %v8237
        %v8750 = vcvt.s32.f32 %v8238
        %v8751 = vcvt.s32.f32 %v8239
        %v8752 = vcvt.s32.f32 %v8240
        %v8753 = vcvt.s32.f32 %v8241
        %v8754 = vcvt.s32.f32 %v8242
        %v8755 = vcvt.s32.f32 %v8243
        %v8756 = vcvt.s32.f32 %v8244
        %v8757 = vcvt.s32.f32 %v8245
        %v8758 = vcvt.s32.f32 %v8246
        %v8759 = vcvt.s32.f32 %v8247
        %v8760 = vcvt.s32.f32 %v8248
        %v8761 = vcvt.s32.f32 %v8249
        %v8762 = vcvt.s32.f32 %v8250
        %v8763 = vcvt.s32.f32 %v8251
        %v8764 = vcvt.s32.f32 %v8252
        %v8765 = vcvt.s32.f32 %v8253
        %v8766 = vcvt.s32.f32 %v8254
        %v8767 = vcvt.s32.f32 %v8255
        %v8768 = vcvt.s32.f32 %v8256
        %v8769 = vcvt.s32.f32 %v8257
        %v8770 = vcvt.s32.f32 %v8258
        %v8771 = vcvt.s32.f32 %v8259
        %v8772 = vcvt.s32.f32 %v8260
        %v8773 = vcvt.s32.f32 %v8261
        %v8774 = vcvt.s32.f32 %v8262
        %v8775 = vcvt.s32.f32 %v8263
        %v8776 = vcvt.s32.f32 %v8264
        %v8777 = vcvt.s32.f32 %v8265
        %v8778 = vcvt.s32.f32 %v8266
        %v8779 = vcvt.s32.f32 %v8267
        %v8780 = vcvt.s32.f32 %v8268
        %v8781 = vcvt.s32.f32 %v8269
        %v8782 = vcvt.s32.f32 %v8270
        %v8783 = vcvt.s32.f32 %v8271
        %v8784 = vcvt.s32.f32 %v8272
        %v8785 = vcvt.s32.f32 %v8273
        %v8786 = vcvt.s32.f32 %v8274
        %v8787 = vcvt.s32.f32 %v8275
        %v8788 = vcvt.s32.f32 %v8276
        %v8789 = vcvt.s32.f32 %v8277
        %v8790 = vcvt.s32.f32 %v8278
        %v8791 = vcvt.s32.f32 %v8279
        %v8792 = vcvt.s32.f32 %v8280
        %v8793 = vcvt.s32.f32 %v8281
        %v8794 = vcvt.s32.f32 %v8282
        %v8795 = vcvt.s32.f32 %v8283
        %v8796 = vcvt.s32.f32 %v8284
        %v8797 = vcvt.s32.f32 %v8285
        %v8798 = vcvt.s32.f32 %v8286
        %v8799 = vcvt.s32.f32 %v8287
        %v8800 = vcvt.s32.f32 %v8288
        %v8801 = vcvt.s32.f32 %v8289
        %v8802 = vcvt.s32.f32 %v8290
        %v8803 = vcvt.s32.f32 %v8291
        %v8804 = vcvt.s32.f32 %v8292
        %v8805 = vcvt.s32.f32 %v8293
        %v8806 = vcvt.s32.f32 %v8294
        %v8807 = vcvt.s32.f32 %v8295
        %v8808 = vcvt.s32.f32 %v8296
        %v8809 = vcvt.s32.f32 %v8297
        %v8810 = vcvt.s32.f32 %v8298
        %v8811 = vcvt.s32.f32 %v8299
        %v8812 = vcvt.s32.f32 %v8300
        %v8813 = vcvt.s32.f32 %v8301
        %v8814 = vcvt.s32.f32 %v8302
        %v8815 = vcvt.s32.f32 %v8303
        %v8816 = vcvt.s32.f32 %v8304
        %v8817 = vcvt.s32.f32 %v8305
        %v8818 = vcvt.s32.f32 %v8306
        %v8819 = vcvt.s32.f32 %v8307
        %v8820 = vcvt.s32.f32 %v8308
        %v8821 = vcvt.s32.f32 %v8309
        %v8822 = vcvt.s32.f32 %v8310
        %v8823 = vcvt.s32.f32 %v8311
        %v8824 = vcvt.s32.f32 %v8312
        %v8825 = vcvt.s32.f32 %v8313
        %v8826 = vcvt.s32.f32 %v8314
        %v8827 = vcvt.s32.f32 %v8315
        %v8828 = vcvt.s32.f32 %v8316
        %v8829 = vcvt.s32.f32 %v8317
        %v8830 = vcvt.s32.f32 %v8318
        %v8831 = vcvt.s32.f32 %v8319
        %v8832 = vcvt.s32.f32 %v8320
        %v8833 = vcvt.s32.f32 %v8321
        %v8834 = vcvt.s32.f32 %v8322
        %v8835 = vcvt.s32.f32 %v8323
        %v8836 = vcvt.s32.f32 %v8324
        %v8837 = vcvt.s32.f32 %v8325
        %v8838 = vcvt.s32.f32 %v8326
        %v8839 = vcvt.s32.f32 %v8327
        %v8840 = vcvt.s32.f32 %v8328
        %v8841 = vcvt.s32.f32 %v8329
        %v8842 = vcvt.s32.f32 %v8330
        %v8843 = vcvt.s32.f32 %v8331
        %v8844 = vcvt.s32.f32 %v8332
        %v8845 = vcvt.s32.f32 %v8333
        %v8846 = vcvt.s32.f32 %v8334
        %v8847 = vcvt.s32.f32 %v8335
        %v8848 = vcvt.s32.f32 %v8336
        %v8849 = vcvt.s32.f32 %v8337
        %v8850 = vcvt.s32.f32 %v8338
        %v8851 = vcvt.s32.f32 %v8339
        %v8852 = vcvt.s32.f32 %v8340
        %v8853 = vcvt.s32.f32 %v8341
        %v8854 = vcvt.s32.f32 %v8342
        %v8855 = vcvt.s32.f32 %v8343
        %v8856 = vcvt.s32.f32 %v8344
        %v8857 = vcvt.s32.f32 %v8345
        %v8858 = vcvt.s32.f32 %v8346
        %v8859 = vcvt.s32.f32 %v8347
        %v8860 = vcvt.s32.f32 %v8348
        %v8861 = vcvt.s32.f32 %v8349
        %v8862 = vcvt.s32.f32 %v8350
        %v8863 = vcvt.s32.f32 %v8351
        %v8864 = vcvt.s32.f32 %v8352
        %v8865 = vcvt.s32.f32 %v8353
        %v8866 = vcvt.s32.f32 %v8354
        %v8867 = vcvt.s32.f32 %v8355
        %v8868 = vcvt.s32.f32 %v8356
        %v8869 = vcvt.s32.f32 %v8357
        %v8870 = vcvt.s32.f32 %v8358
        %v8871 = vcvt.s32.f32 %v8359
        %v8872 = vcvt.s32.f32 %v8360
        %v8873 = vcvt.s32.f32 %v8361
        %v8874 = vcvt.s32.f32 %v8362
        %v8875 = vcvt.s32.f32 %v8363
        %v8876 = vcvt.s32.f32 %v8364
        %v8877 = vcvt.s32.f32 %v8365
        %v8878 = vcvt.s32.f32 %v8366
        %v8879 = vcvt.s32.f32 %v8367
        %v8880 = vcvt.s32.f32 %v8368
        %v8881 = vcvt.s32.f32 %v8369
        %v8882 = vcvt.s32.f32 %v8370
        %v8883 = vcvt.s32.f32 %v8371
        %v8884 = vcvt.s32.f32 %v8372
        %v8885 = vcvt.s32.f32 %v8373
        %v8886 = vcvt.s32.f32 %v8374
        %v8887 = vcvt.s32.f32 %v8375
        %v8888 = vcvt.s32.f32 %v8376
        %v8889 = vcvt.s32.f32 %v8377
        %v8890 = vcvt.s32.f32 %v8378
        %v8891 = vcvt.s32.f32 %v8379
        %v8892 = vcvt.s32.f32 %v8380
        %v8893 = vcvt.s32.f32 %v8381
        %v8894 = vcvt.s32.f32 %v8382
        %v8895 = vcvt.s32.f32 %v8383
        %v8896 = vcvt.s32.f32 %v8384
        %v8897 = vcvt.s32.f32 %v8385
        %v8898 = vcvt.s32.f32 %v8386
        %v8899 = vcvt.s32.f32 %v8387
        %v8900 = vcvt.s32.f32 %v8388
        %v8901 = vcvt.s32.f32 %v8389
        %v8902 = vcvt.s32.f32 %v8390
        %v8903 = vcvt.s32.f32 %v8391
        %v8904 = vcvt.s32.f32 %v8392
        %v8905 = vcvt.s32.f32 %v8393
        %v8906 = vcvt.s32.f32 %v8394
        %v8907 = vcvt.s32.f32 %v8395
        %v8908 = vcvt.s32.f32 %v8396
        %v8909 = vcvt.s32.f32 %v8397
        %v8910 = vcvt.s32.f32 %v8398
        %v8911 = vcvt.s32.f32 %v8399
        %v8912 = vcvt.s32.f32 %v8400
        %v8913 = vcvt.s32.f32 %v8401
        %v8914 = vcvt.s32.f32 %v8402
        %v8915 = vcvt.s32.f32 %v8403
        %v8916 = vcvt.s32.f32 %v8404
        %v8917 = vcvt.s32.f32 %v8405
        %v8918 = vcvt.s32.f32 %v8406
        %v8919 = vcvt.s32.f32 %v8407
        %v8920 = vcvt.s32.f32 %v8408
        %v8921 = vcvt.s32.f32 %v8409
        %v8922 = vcvt.s32.f32 %v8410
        %v8923 = vcvt.s32.f32 %v8411
        %v8924 = vcvt.s32.f32 %v8412
        %v8925 = vcvt.s32.f32 %v8413
        %v8926 = vcvt.s32.f32 %v8414
        %v8927 = vcvt.s32.f32 %v8415
        %v8928 = vcvt.s32.f32 %v8416
        %v8929 = vcvt.s32.f32 %v8417
        %v8930 = vcvt.s32.f32 %v8418
        %v8931 = vcvt.s32.f32 %v8419
        %v8932 = vcvt.s32.f32 %v8420
        %v8933 = vcvt.s32.f32 %v8421
        %v8934 = vcvt.s32.f32 %v8422
        %v8935 = vcvt.s32.f32 %v8423
        %v8936 = vcvt.s32.f32 %v8424
        %v8937 = vcvt.s32.f32 %v8425
        %v8938 = vcvt.s32.f32 %v8426
        %v8939 = vcvt.s32.f32 %v8427
        %v8940 = vcvt.s32.f32 %v8428
        %v8941 = vcvt.s32.f32 %v8429
        %v8942 = vcvt.s32.f32 %v8430
        %v8943 = vcvt.s32.f32 %v8431
        %v8944 = vcvt.s32.f32 %v8432
        %v8945 = vcvt.s32.f32 %v8433
        %v8946 = vcvt.s32.f32 %v8434
        %v8947 = vcvt.s32.f32 %v8435
        %v8948 = vcvt.s32.f32 %v8436
        %v8949 = vcvt.s32.f32 %v8437
        %v8950 = vcvt.s32.f32 %v8438
        %v8951 = vcvt.s32.f32 %v8439
        %v8952 = vcvt.s32.f32 %v8440
        %v8953 = vcvt.s32.f32 %v8441
        %v8954 = vcvt.s32.f32 %v8442
        %v8955 = vcvt.s32.f32 %v8443
        %v8956 = vcvt.s32.f32 %v8444
        %v8957 = vcvt.s32.f32 %v8445
        %v8958 = vcvt.s32.f32 %v8446
        %v8959 = vcvt.s32.f32 %v8447
        %v8960 = vcvt.s32.f32 %v8448
        %v8961 = vcvt.s32.f32 %v8449
        %v8962 = vcvt.s32.f32 %v8450
        %v8963 = vcvt.s32.f32 %v8451
        %v8964 = vcvt.s32.f32 %v8452
        %v8965 = vcvt.s32.f32 %v8453
        %v8966 = vcvt.s32.f32 %v8454
        %v8967 = vcvt.s32.f32 %v8455
        %v8968 = vcvt.s32.f32 %v8456
        %v8969 = vcvt.s32.f32 %v8457
        %v8970 = vcvt.s32.f32 %v8458
        %v8971 = vcvt.s32.f32 %v8459
        %v8972 = vcvt.s32.f32 %v8460
        %v8973 = vcvt.s32.f32 %v8461
        %v8974 = vcvt.s32.f32 %v8462
        %v8975 = vcvt.s32.f32 %v8463
        %v8976 = vcvt.s32.f32 %v8464
        %v8977 = vcvt.s32.f32 %v8465
        %v8978 = vcvt.s32.f32 %v8466
        %v8979 = vcvt.s32.f32 %v8467
        %v8980 = vcvt.s32.f32 %v8468
        %v8981 = vcvt.s32.f32 %v8469
        %v8982 = vpack.c.bf16 %v8472, %v8470
        %v8983 = vpack.c.bf16 %v8473, %v8471
        %v8984 = vpack.c.bf16 %v8476, %v8474
        %v8985 = vpack.c.bf16 %v8477, %v8475
        %v8986 = vpack.c.bf16 %v8480, %v8478
        %v8987 = vpack.c.bf16 %v8481, %v8479
        %v8988 = vpack.c.bf16 %v8484, %v8482
        %v8989 = vpack.c.bf16 %v8485, %v8483
        %v8990 = vpack.c.bf16 %v8488, %v8486
        %v8991 = vpack.c.bf16 %v8489, %v8487
        %v8992 = vpack.c.bf16 %v8492, %v8490
        %v8993 = vpack.c.bf16 %v8493, %v8491
        %v8994 = vpack.c.bf16 %v8496, %v8494
        %v8995 = vpack.c.bf16 %v8497, %v8495
        %v8996 = vpack.c.bf16 %v8500, %v8498
        %v8997 = vpack.c.bf16 %v8501, %v8499
        %v8998 = vpack.c.bf16 %v8504, %v8502
        %v8999 = vpack.c.bf16 %v8505, %v8503
        %v9000 = vpack.c.bf16 %v8508, %v8506
        %v9001 = vpack.c.bf16 %v8509, %v8507
        %v9002 = vpack.c.bf16 %v8512, %v8510
        %v9003 = vpack.c.bf16 %v8513, %v8511
        %v9004 = vpack.c.bf16 %v8516, %v8514
        %v9005 = vpack.c.bf16 %v8517, %v8515
        %v9006 = vpack.c.bf16 %v8520, %v8518
        %v9007 = vpack.c.bf16 %v8521, %v8519
        %v9008 = vpack.c.bf16 %v8524, %v8522
        %v9009 = vpack.c.bf16 %v8525, %v8523
        %v9010 = vpack.c.bf16 %v8528, %v8526
        %v9011 = vpack.c.bf16 %v8529, %v8527
        %v9012 = vpack.c.bf16 %v8532, %v8530
        %v9013 = vpack.c.bf16 %v8533, %v8531
        %v9014 = vpack.c.bf16 %v8536, %v8534
        %v9015 = vpack.c.bf16 %v8537, %v8535
        %v9016 = vpack.c.bf16 %v8540, %v8538
        %v9017 = vpack.c.bf16 %v8541, %v8539
        %v9018 = vpack.c.bf16 %v8544, %v8542
        %v9019 = vpack.c.bf16 %v8545, %v8543
        %v9020 = vpack.c.bf16 %v8548, %v8546
        %v9021 = vpack.c.bf16 %v8549, %v8547
        %v9022 = vpack.c.bf16 %v8552, %v8550
        %v9023 = vpack.c.bf16 %v8553, %v8551
        %v9024 = vpack.c.bf16 %v8556, %v8554
        %v9025 = vpack.c.bf16 %v8557, %v8555
        %v9026 = vpack.c.bf16 %v8560, %v8558
        %v9027 = vpack.c.bf16 %v8561, %v8559
        %v9028 = vpack.c.bf16 %v8564, %v8562
        %v9029 = vpack.c.bf16 %v8565, %v8563
        %v9030 = vpack.c.bf16 %v8568, %v8566
        %v9031 = vpack.c.bf16 %v8569, %v8567
        %v9032 = vpack.c.bf16 %v8572, %v8570
        %v9033 = vpack.c.bf16 %v8573, %v8571
        %v9034 = vpack.c.bf16 %v8576, %v8574
        %v9035 = vpack.c.bf16 %v8577, %v8575
        %v9036 = vpack.c.bf16 %v8580, %v8578
        %v9037 = vpack.c.bf16 %v8581, %v8579
        %v9038 = vpack.c.bf16 %v8584, %v8582
        %v9039 = vpack.c.bf16 %v8585, %v8583
        %v9040 = vpack.c.bf16 %v8588, %v8586
        %v9041 = vpack.c.bf16 %v8589, %v8587
        %v9042 = vpack.c.bf16 %v8592, %v8590
        %v9043 = vpack.c.bf16 %v8593, %v8591
        %v9044 = vpack.c.bf16 %v8596, %v8594
        %v9045 = vpack.c.bf16 %v8597, %v8595
        %v9046 = vpack.c.bf16 %v8600, %v8598
        %v9047 = vpack.c.bf16 %v8601, %v8599
        %v9048 = vpack.c.bf16 %v8604, %v8602
        %v9049 = vpack.c.bf16 %v8605, %v8603
        %v9050 = vpack.c.bf16 %v8608, %v8606
        %v9051 = vpack.c.bf16 %v8609, %v8607
        %v9052 = vpack.c.bf16 %v8612, %v8610
        %v9053 = vpack.c.bf16 %v8613, %v8611
        %v9054 = vpack.c.bf16 %v8616, %v8614
        %v9055 = vpack.c.bf16 %v8617, %v8615
        %v9056 = vpack.c.bf16 %v8620, %v8618
        %v9057 = vpack.c.bf16 %v8621, %v8619
        %v9058 = vpack.c.bf16 %v8624, %v8622
        %v9059 = vpack.c.bf16 %v8625, %v8623
        %v9060 = vpack.c.bf16 %v8628, %v8626
        %v9061 = vpack.c.bf16 %v8629, %v8627
        %v9062 = vpack.c.bf16 %v8632, %v8630
        %v9063 = vpack.c.bf16 %v8633, %v8631
        %v9064 = vpack.c.bf16 %v8636, %v8634
        %v9065 = vpack.c.bf16 %v8637, %v8635
        %v9066 = vpack.c.bf16 %v8640, %v8638
        %v9067 = vpack.c.bf16 %v8641, %v8639
        %v9068 = vpack.c.bf16 %v8644, %v8642
        %v9069 = vpack.c.bf16 %v8645, %v8643
        %v9070 = vpack.c.bf16 %v8648, %v8646
        %v9071 = vpack.c.bf16 %v8649, %v8647
        %v9072 = vpack.c.bf16 %v8652, %v8650
        %v9073 = vpack.c.bf16 %v8653, %v8651
        %v9074 = vpack.c.bf16 %v8656, %v8654
        %v9075 = vpack.c.bf16 %v8657, %v8655
        %v9076 = vpack.c.bf16 %v8660, %v8658
        %v9077 = vpack.c.bf16 %v8661, %v8659
        %v9078 = vpack.c.bf16 %v8664, %v8662
        %v9079 = vpack.c.bf16 %v8665, %v8663
        %v9080 = vpack.c.bf16 %v8668, %v8666
        %v9081 = vpack.c.bf16 %v8669, %v8667
        %v9082 = vpack.c.bf16 %v8672, %v8670
        %v9083 = vpack.c.bf16 %v8673, %v8671
        %v9084 = vpack.c.bf16 %v8676, %v8674
        %v9085 = vpack.c.bf16 %v8677, %v8675
        %v9086 = vpack.c.bf16 %v8680, %v8678
        %v9087 = vpack.c.bf16 %v8681, %v8679
        %v9088 = vpack.c.bf16 %v8684, %v8682
        %v9089 = vpack.c.bf16 %v8685, %v8683
        %v9090 = vpack.c.bf16 %v8688, %v8686
        %v9091 = vpack.c.bf16 %v8689, %v8687
        %v9092 = vpack.c.bf16 %v8692, %v8690
        %v9093 = vpack.c.bf16 %v8693, %v8691
        %v9094 = vpack.c.bf16 %v8696, %v8694
        %v9095 = vpack.c.bf16 %v8697, %v8695
        %v9096 = vpack.c.bf16 %v8700, %v8698
        %v9097 = vpack.c.bf16 %v8701, %v8699
        %v9098 = vpack.c.bf16 %v8704, %v8702
        %v9099 = vpack.c.bf16 %v8705, %v8703
        %v9100 = vpack.c.bf16 %v8708, %v8706
        %v9101 = vpack.c.bf16 %v8709, %v8707
        %v9102 = vpack.c.bf16 %v8712, %v8710
        %v9103 = vpack.c.bf16 %v8713, %v8711
        %v9104 = vpack.c.bf16 %v8716, %v8714
        %v9105 = vpack.c.bf16 %v8717, %v8715
        %v9106 = vpack.c.bf16 %v8720, %v8718
        %v9107 = vpack.c.bf16 %v8721, %v8719
        %v9108 = vpack.c.bf16 %v8724, %v8722
        %v9109 = vpack.c.bf16 %v8725, %v8723
        %v9110 = vpack.c.bf16 %v8728, %v8726
        %v9111 = vpack.c.bf16 %v8729, %v8727
        %v9112 = vpack.c.bf16 %v8732, %v8730
        %v9113 = vpack.c.bf16 %v8733, %v8731
        %v9114 = vpack.c.bf16 %v8736, %v8734
        %v9115 = vpack.c.bf16 %v8737, %v8735
        %v9116 = vpack.c.bf16 %v8740, %v8738
        %v9117 = vpack.c.bf16 %v8741, %v8739
        %v9118 = vpack.c.bf16 %v8744, %v8742
        %v9119 = vpack.c.bf16 %v8745, %v8743
        %v9120 = vpack.c.bf16 %v8748, %v8746
        %v9121 = vpack.c.bf16 %v8749, %v8747
        %v9122 = vpack.c.bf16 %v8752, %v8750
        %v9123 = vpack.c.bf16 %v8753, %v8751
        %v9124 = vpack.c.bf16 %v8756, %v8754
        %v9125 = vpack.c.bf16 %v8757, %v8755
        %v9126 = vpack.c.bf16 %v8760, %v8758
        %v9127 = vpack.c.bf16 %v8761, %v8759
        %v9128 = vpack.c.bf16 %v8764, %v8762
        %v9129 = vpack.c.bf16 %v8765, %v8763
        %v9130 = vpack.c.bf16 %v8768, %v8766
        %v9131 = vpack.c.bf16 %v8769, %v8767
        %v9132 = vpack.c.bf16 %v8772, %v8770
        %v9133 = vpack.c.bf16 %v8773, %v8771
        %v9134 = vpack.c.bf16 %v8776, %v8774
        %v9135 = vpack.c.bf16 %v8777, %v8775
        %v9136 = vpack.c.bf16 %v8780, %v8778
        %v9137 = vpack.c.bf16 %v8781, %v8779
        %v9138 = vpack.c.bf16 %v8784, %v8782
        %v9139 = vpack.c.bf16 %v8785, %v8783
        %v9140 = vpack.c.bf16 %v8788, %v8786
        %v9141 = vpack.c.bf16 %v8789, %v8787
        %v9142 = vpack.c.bf16 %v8792, %v8790
        %v9143 = vpack.c.bf16 %v8793, %v8791
        %v9144 = vpack.c.bf16 %v8796, %v8794
        %v9145 = vpack.c.bf16 %v8797, %v8795
        %v9146 = vpack.c.bf16 %v8800, %v8798
        %v9147 = vpack.c.bf16 %v8801, %v8799
        %v9148 = vpack.c.bf16 %v8804, %v8802
        %v9149 = vpack.c.bf16 %v8805, %v8803
        %v9150 = vpack.c.bf16 %v8808, %v8806
        %v9151 = vpack.c.bf16 %v8809, %v8807
        %v9152 = vpack.c.bf16 %v8812, %v8810
        %v9153 = vpack.c.bf16 %v8813, %v8811
        %v9154 = vpack.c.bf16 %v8816, %v8814
        %v9155 = vpack.c.bf16 %v8817, %v8815
        %v9156 = vpack.c.bf16 %v8820, %v8818
        %v9157 = vpack.c.bf16 %v8821, %v8819
        %v9158 = vpack.c.bf16 %v8824, %v8822
        %v9159 = vpack.c.bf16 %v8825, %v8823
        %v9160 = vpack.c.bf16 %v8828, %v8826
        %v9161 = vpack.c.bf16 %v8829, %v8827
        %v9162 = vpack.c.bf16 %v8832, %v8830
        %v9163 = vpack.c.bf16 %v8833, %v8831
        %v9164 = vpack.c.bf16 %v8836, %v8834
        %v9165 = vpack.c.bf16 %v8837, %v8835
        %v9166 = vpack.c.bf16 %v8840, %v8838
        %v9167 = vpack.c.bf16 %v8841, %v8839
        %v9168 = vpack.c.bf16 %v8844, %v8842
        %v9169 = vpack.c.bf16 %v8845, %v8843
        %v9170 = vpack.c.bf16 %v8848, %v8846
        %v9171 = vpack.c.bf16 %v8849, %v8847
        %v9172 = vpack.c.bf16 %v8852, %v8850
        %v9173 = vpack.c.bf16 %v8853, %v8851
        %v9174 = vpack.c.bf16 %v8856, %v8854
        %v9175 = vpack.c.bf16 %v8857, %v8855
        %v9176 = vpack.c.bf16 %v8860, %v8858
        %v9177 = vpack.c.bf16 %v8861, %v8859
        %v9178 = vpack.c.bf16 %v8864, %v8862
        %v9179 = vpack.c.bf16 %v8865, %v8863
        %v9180 = vpack.c.bf16 %v8868, %v8866
        %v9181 = vpack.c.bf16 %v8869, %v8867
        %v9182 = vpack.c.bf16 %v8872, %v8870
        %v9183 = vpack.c.bf16 %v8873, %v8871
        %v9184 = vpack.c.bf16 %v8876, %v8874
        %v9185 = vpack.c.bf16 %v8877, %v8875
        %v9186 = vpack.c.bf16 %v8880, %v8878
        %v9187 = vpack.c.bf16 %v8881, %v8879
        %v9188 = vpack.c.bf16 %v8884, %v8882
        %v9189 = vpack.c.bf16 %v8885, %v8883
        %v9190 = vpack.c.bf16 %v8888, %v8886
        %v9191 = vpack.c.bf16 %v8889, %v8887
        %v9192 = vpack.c.bf16 %v8892, %v8890
        %v9193 = vpack.c.bf16 %v8893, %v8891
        %v9194 = vpack.c.bf16 %v8896, %v8894
        %v9195 = vpack.c.bf16 %v8897, %v8895
        %v9196 = vpack.c.bf16 %v8900, %v8898
        %v9197 = vpack.c.bf16 %v8901, %v8899
        %v9198 = vpack.c.bf16 %v8904, %v8902
        %v9199 = vpack.c.bf16 %v8905, %v8903
        %v9200 = vpack.c.bf16 %v8908, %v8906
        %v9201 = vpack.c.bf16 %v8909, %v8907
        %v9202 = vpack.c.bf16 %v8912, %v8910
        %v9203 = vpack.c.bf16 %v8913, %v8911
        %v9204 = vpack.c.bf16 %v8916, %v8914
        %v9205 = vpack.c.bf16 %v8917, %v8915
        %v9206 = vpack.c.bf16 %v8920, %v8918
        %v9207 = vpack.c.bf16 %v8921, %v8919
        %v9208 = vpack.c.bf16 %v8924, %v8922
        %v9209 = vpack.c.bf16 %v8925, %v8923
        %v9210 = vpack.c.bf16 %v8928, %v8926
        %v9211 = vpack.c.bf16 %v8929, %v8927
        %v9212 = vpack.c.bf16 %v8932, %v8930
        %v9213 = vpack.c.bf16 %v8933, %v8931
        %v9214 = vpack.c.bf16 %v8936, %v8934
        %v9215 = vpack.c.bf16 %v8937, %v8935
        %v9216 = vpack.c.bf16 %v8940, %v8938
        %v9217 = vpack.c.bf16 %v8941, %v8939
        %v9218 = vpack.c.bf16 %v8944, %v8942
        %v9219 = vpack.c.bf16 %v8945, %v8943
        %v9220 = vpack.c.bf16 %v8948, %v8946
        %v9221 = vpack.c.bf16 %v8949, %v8947
        %v9222 = vpack.c.bf16 %v8952, %v8950
        %v9223 = vpack.c.bf16 %v8953, %v8951
        %v9224 = vpack.c.bf16 %v8956, %v8954
        %v9225 = vpack.c.bf16 %v8957, %v8955
        %v9226 = vpack.c.bf16 %v8960, %v8958
        %v9227 = vpack.c.bf16 %v8961, %v8959
        %v9228 = vpack.c.bf16 %v8964, %v8962
        %v9229 = vpack.c.bf16 %v8965, %v8963
        %v9230 = vpack.c.bf16 %v8968, %v8966
        %v9231 = vpack.c.bf16 %v8969, %v8967
        %v9232 = vpack.c.bf16 %v8972, %v8970
        %v9233 = vpack.c.bf16 %v8973, %v8971
        %v9234 = vpack.c.bf16 %v8976, %v8974
        %v9235 = vpack.c.bf16 %v8977, %v8975
        %v9236 = vpack.c.bf16 %v8980, %v8978
        %v9237 = vpack.c.bf16 %v8981, %v8979
        %9238 = vmatpush.bf16.msra.mxu0 %v8996
        %9239 = vmatpush.bf16.msra.mxu0 %v8994
        %9240 = vmatpush.bf16.msra.mxu0 %v8992
        %9241 = vmatpush.bf16.msra.mxu0 %v8990
        %9242 = vmatpush.bf16.msra.mxu0 %v8988
        %9243 = vmatpush.bf16.msra.mxu0 %v8986
        %9244 = vmatpush.bf16.msra.mxu0 %v8984
        %9245 = vmatpush.bf16.msra.mxu0 %v8982
        %9246 = vmatmul.bf16.gmra.mxu0 %v7814
        %v9247 = vpop.f32.mrf.mxu0
        %v9248 = vadd.f32 0.0, %v9247
        %v9249 = vpop.f32.mrf.mxu0
        %v9250 = vadd.f32 0.0, %v9249
        %9251 = vdwg.mxu0
        %9252 = vmatpush.bf16.msra.mxu0 %v9012
        %9253 = vmatpush.bf16.msra.mxu0 %v9010
        %9254 = vmatpush.bf16.msra.mxu0 %v9008
        %9255 = vmatpush.bf16.msra.mxu0 %v9006
        %9256 = vmatpush.bf16.msra.mxu0 %v9004
        %9257 = vmatpush.bf16.msra.mxu0 %v9002
        %9258 = vmatpush.bf16.msra.mxu0 %v9000
        %9259 = vmatpush.bf16.msra.mxu0 %v8998
        %9260 = vmatmul.bf16.gmra.mxu0 %v7815
        %v9261 = vpop.f32.mrf.mxu0
        %v9262 = vadd.f32 %v9248, %v9261
        %v9263 = vpop.f32.mrf.mxu0
        %v9264 = vadd.f32 %v9250, %v9263
        %9265 = vdwg.mxu0
        %9266 = vmatpush.bf16.msra.mxu0 %v9028
        %9267 = vmatpush.bf16.msra.mxu0 %v9026
        %9268 = vmatpush.bf16.msra.mxu0 %v9024
        %9269 = vmatpush.bf16.msra.mxu0 %v9022
        %9270 = vmatpush.bf16.msra.mxu0 %v9020
        %9271 = vmatpush.bf16.msra.mxu0 %v9018
        %9272 = vmatpush.bf16.msra.mxu0 %v9016
        %9273 = vmatpush.bf16.msra.mxu0 %v9014
        %9274 = vmatmul.bf16.gmra.mxu0 %v7816
        %v9275 = vpop.f32.mrf.mxu0
        %v9276 = vadd.f32 %v9262, %v9275
        %v9277 = vpop.f32.mrf.mxu0
        %v9278 = vadd.f32 %v9264, %v9277
        %9279 = vdwg.mxu0
        %9280 = vmatpush.bf16.msra.mxu0 %v9044
        %9281 = vmatpush.bf16.msra.mxu0 %v9042
        %9282 = vmatpush.bf16.msra.mxu0 %v9040
        %9283 = vmatpush.bf16.msra.mxu0 %v9038
        %9284 = vmatpush.bf16.msra.mxu0 %v9036
        %9285 = vmatpush.bf16.msra.mxu0 %v9034
        %9286 = vmatpush.bf16.msra.mxu0 %v9032
        %9287 = vmatpush.bf16.msra.mxu0 %v9030
        %9288 = vmatmul.bf16.gmra.mxu0 %v7817
        %v9289 = vpop.f32.mrf.mxu0
        %v9290 = vadd.f32 %v9276, %v9289
        %v9291 = vpop.f32.mrf.mxu0
        %v9292 = vadd.f32 %v9278, %v9291
        %9293 = vdwg.mxu0
        %9294 = vmatpush.bf16.msra.mxu0 %v9060
        %9295 = vmatpush.bf16.msra.mxu0 %v9058
        %9296 = vmatpush.bf16.msra.mxu0 %v9056
        %9297 = vmatpush.bf16.msra.mxu0 %v9054
        %9298 = vmatpush.bf16.msra.mxu0 %v9052
        %9299 = vmatpush.bf16.msra.mxu0 %v9050
        %9300 = vmatpush.bf16.msra.mxu0 %v9048
        %9301 = vmatpush.bf16.msra.mxu0 %v9046
        %9302 = vmatmul.bf16.gmra.mxu0 %v7818
        %v9303 = vpop.f32.mrf.mxu0
        %v9304 = vadd.f32 %v9290, %v9303
        %v9305 = vpop.f32.mrf.mxu0
        %v9306 = vadd.f32 %v9292, %v9305
        %9307 = vdwg.mxu0
        %9308 = vmatpush.bf16.msra.mxu0 %v9076
        %9309 = vmatpush.bf16.msra.mxu0 %v9074
        %9310 = vmatpush.bf16.msra.mxu0 %v9072
        %9311 = vmatpush.bf16.msra.mxu0 %v9070
        %9312 = vmatpush.bf16.msra.mxu0 %v9068
        %9313 = vmatpush.bf16.msra.mxu0 %v9066
        %9314 = vmatpush.bf16.msra.mxu0 %v9064
        %9315 = vmatpush.bf16.msra.mxu0 %v9062
        %9316 = vmatmul.bf16.gmra.mxu0 %v7819
        %v9317 = vpop.f32.mrf.mxu0
        %v9318 = vadd.f32 %v9304, %v9317
        %v9319 = vpop.f32.mrf.mxu0
        %v9320 = vadd.f32 %v9306, %v9319
        %9321 = vdwg.mxu0
        %9322 = vmatpush.bf16.msra.mxu0 %v9092
        %9323 = vmatpush.bf16.msra.mxu0 %v9090
        %9324 = vmatpush.bf16.msra.mxu0 %v9088
        %9325 = vmatpush.bf16.msra.mxu0 %v9086
        %9326 = vmatpush.bf16.msra.mxu0 %v9084
        %9327 = vmatpush.bf16.msra.mxu0 %v9082
        %9328 = vmatpush.bf16.msra.mxu0 %v9080
        %9329 = vmatpush.bf16.msra.mxu0 %v9078
        %9330 = vmatmul.bf16.gmra.mxu0 %v7820
        %v9331 = vpop.f32.mrf.mxu0
        %v9332 = vadd.f32 %v9318, %v9331
        %v9333 = vpop.f32.mrf.mxu0
        %v9334 = vadd.f32 %v9320, %v9333
        %9335 = vdwg.mxu0
        %9336 = vmatpush.bf16.msra.mxu0 %v9108
        %9337 = vmatpush.bf16.msra.mxu0 %v9106
        %9338 = vmatpush.bf16.msra.mxu0 %v9104
        %9339 = vmatpush.bf16.msra.mxu0 %v9102
        %9340 = vmatpush.bf16.msra.mxu0 %v9100
        %9341 = vmatpush.bf16.msra.mxu0 %v9098
        %9342 = vmatpush.bf16.msra.mxu0 %v9096
        %9343 = vmatpush.bf16.msra.mxu0 %v9094
        %9344 = vmatmul.bf16.gmra.mxu0 %v7821
        %v9345 = vpop.f32.mrf.mxu0
        %v9346 = vadd.f32 %v9332, %v9345
        %v9347 = vpop.f32.mrf.mxu0
        %v9348 = vadd.f32 %v9334, %v9347
        %9349 = vdwg.mxu0
        %9350 = vmatpush.bf16.msra.mxu0 %v9124
        %9351 = vmatpush.bf16.msra.mxu0 %v9122
        %9352 = vmatpush.bf16.msra.mxu0 %v9120
        %9353 = vmatpush.bf16.msra.mxu0 %v9118
        %9354 = vmatpush.bf16.msra.mxu0 %v9116
        %9355 = vmatpush.bf16.msra.mxu0 %v9114
        %9356 = vmatpush.bf16.msra.mxu0 %v9112
        %9357 = vmatpush.bf16.msra.mxu0 %v9110
        %9358 = vmatmul.bf16.gmra.mxu0 %v7822
        %v9359 = vpop.f32.mrf.mxu0
        %v9360 = vadd.f32 %v9346, %v9359
        %v9361 = vpop.f32.mrf.mxu0
        %v9362 = vadd.f32 %v9348, %v9361
        %9363 = vdwg.mxu0
        %9364 = vmatpush.bf16.msra.mxu0 %v9140
        %9365 = vmatpush.bf16.msra.mxu0 %v9138
        %9366 = vmatpush.bf16.msra.mxu0 %v9136
        %9367 = vmatpush.bf16.msra.mxu0 %v9134
        %9368 = vmatpush.bf16.msra.mxu0 %v9132
        %9369 = vmatpush.bf16.msra.mxu0 %v9130
        %9370 = vmatpush.bf16.msra.mxu0 %v9128
        %9371 = vmatpush.bf16.msra.mxu0 %v9126
        %9372 = vmatmul.bf16.gmra.mxu0 %v7823
        %v9373 = vpop.f32.mrf.mxu0
        %v9374 = vadd.f32 %v9360, %v9373
        %v9375 = vpop.f32.mrf.mxu0
        %v9376 = vadd.f32 %v9362, %v9375
        %9377 = vdwg.mxu0
        %9378 = vmatpush.bf16.msra.mxu0 %v9156
        %9379 = vmatpush.bf16.msra.mxu0 %v9154
        %9380 = vmatpush.bf16.msra.mxu0 %v9152
        %9381 = vmatpush.bf16.msra.mxu0 %v9150
        %9382 = vmatpush.bf16.msra.mxu0 %v9148
        %9383 = vmatpush.bf16.msra.mxu0 %v9146
        %9384 = vmatpush.bf16.msra.mxu0 %v9144
        %9385 = vmatpush.bf16.msra.mxu0 %v9142
        %9386 = vmatmul.bf16.gmra.mxu0 %v7824
        %v9387 = vpop.f32.mrf.mxu0
        %v9388 = vadd.f32 %v9374, %v9387
        %v9389 = vpop.f32.mrf.mxu0
        %v9390 = vadd.f32 %v9376, %v9389
        %9391 = vdwg.mxu0
        %9392 = vmatpush.bf16.msra.mxu0 %v9172
        %9393 = vmatpush.bf16.msra.mxu0 %v9170
        %9394 = vmatpush.bf16.msra.mxu0 %v9168
        %9395 = vmatpush.bf16.msra.mxu0 %v9166
        %9396 = vmatpush.bf16.msra.mxu0 %v9164
        %9397 = vmatpush.bf16.msra.mxu0 %v9162
        %9398 = vmatpush.bf16.msra.mxu0 %v9160
        %9399 = vmatpush.bf16.msra.mxu0 %v9158
        %9400 = vmatmul.bf16.gmra.mxu0 %v7825
        %v9401 = vpop.f32.mrf.mxu0
        %v9402 = vadd.f32 %v9388, %v9401
        %v9403 = vpop.f32.mrf.mxu0
        %v9404 = vadd.f32 %v9390, %v9403
        %9405 = vdwg.mxu0
        %9406 = vmatpush.bf16.msra.mxu0 %v9188
        %9407 = vmatpush.bf16.msra.mxu0 %v9186
        %9408 = vmatpush.bf16.msra.mxu0 %v9184
        %9409 = vmatpush.bf16.msra.mxu0 %v9182
        %9410 = vmatpush.bf16.msra.mxu0 %v9180
        %9411 = vmatpush.bf16.msra.mxu0 %v9178
        %9412 = vmatpush.bf16.msra.mxu0 %v9176
        %9413 = vmatpush.bf16.msra.mxu0 %v9174
        %9414 = vmatmul.bf16.gmra.mxu0 %v7826
        %v9415 = vpop.f32.mrf.mxu0
        %v9416 = vadd.f32 %v9402, %v9415
        %v9417 = vpop.f32.mrf.mxu0
        %v9418 = vadd.f32 %v9404, %v9417
        %9419 = vdwg.mxu0
        %9420 = vmatpush.bf16.msra.mxu0 %v9204
        %9421 = vmatpush.bf16.msra.mxu0 %v9202
        %9422 = vmatpush.bf16.msra.mxu0 %v9200
        %9423 = vmatpush.bf16.msra.mxu0 %v9198
        %9424 = vmatpush.bf16.msra.mxu0 %v9196
        %9425 = vmatpush.bf16.msra.mxu0 %v9194
        %9426 = vmatpush.bf16.msra.mxu0 %v9192
        %9427 = vmatpush.bf16.msra.mxu0 %v9190
        %9428 = vmatmul.bf16.gmra.mxu0 %v7827
        %v9429 = vpop.f32.mrf.mxu0
        %v9430 = vadd.f32 %v9416, %v9429
        %v9431 = vpop.f32.mrf.mxu0
        %v9432 = vadd.f32 %v9418, %v9431
        %9433 = vdwg.mxu0
        %9434 = vmatpush.bf16.msra.mxu0 %v9220
        %9435 = vmatpush.bf16.msra.mxu0 %v9218
        %9436 = vmatpush.bf16.msra.mxu0 %v9216
        %9437 = vmatpush.bf16.msra.mxu0 %v9214
        %9438 = vmatpush.bf16.msra.mxu0 %v9212
        %9439 = vmatpush.bf16.msra.mxu0 %v9210
        %9440 = vmatpush.bf16.msra.mxu0 %v9208
        %9441 = vmatpush.bf16.msra.mxu0 %v9206
        %9442 = vmatmul.bf16.gmra.mxu0 %v7828
        %v9443 = vpop.f32.mrf.mxu0
        %v9444 = vadd.f32 %v9430, %v9443
        %v9445 = vpop.f32.mrf.mxu0
        %v9446 = vadd.f32 %v9432, %v9445
        %9447 = vdwg.mxu0
        %9448 = vmatpush.bf16.msra.mxu0 %v9236
        %9449 = vmatpush.bf16.msra.mxu0 %v9234
        %9450 = vmatpush.bf16.msra.mxu0 %v9232
        %9451 = vmatpush.bf16.msra.mxu0 %v9230
        %9452 = vmatpush.bf16.msra.mxu0 %v9228
        %9453 = vmatpush.bf16.msra.mxu0 %v9226
        %9454 = vmatpush.bf16.msra.mxu0 %v9224
        %9455 = vmatpush.bf16.msra.mxu0 %v9222
        %9456 = vmatmul.bf16.gmra.mxu0 %v7829
        %v9457 = vpop.f32.mrf.mxu0
        %v9458 = vadd.f32 %v9444, %v9457
        %v9459 = vpop.f32.mrf.mxu0
        %v9460 = vadd.f32 %v9446, %v9459
        %9461 = vdwg.mxu0
        %9462 = vmatpush.bf16.msra.mxu0 %v8997
        %9463 = vmatpush.bf16.msra.mxu0 %v8995
        %9464 = vmatpush.bf16.msra.mxu0 %v8993
        %9465 = vmatpush.bf16.msra.mxu0 %v8991
        %9466 = vmatpush.bf16.msra.mxu0 %v8989
        %9467 = vmatpush.bf16.msra.mxu0 %v8987
        %9468 = vmatpush.bf16.msra.mxu0 %v8985
        %9469 = vmatpush.bf16.msra.mxu0 %v8983
        %9470 = vmatmul.bf16.gmra.mxu0 %v7814
        %v9471 = vpop.f32.mrf.mxu0
        %v9472 = vadd.f32 0.0, %v9471
        %v9473 = vpop.f32.mrf.mxu0
        %v9474 = vadd.f32 0.0, %v9473
        %9475 = vdwg.mxu0
        %9476 = vmatpush.bf16.msra.mxu0 %v9013
        %9477 = vmatpush.bf16.msra.mxu0 %v9011
        %9478 = vmatpush.bf16.msra.mxu0 %v9009
        %9479 = vmatpush.bf16.msra.mxu0 %v9007
        %9480 = vmatpush.bf16.msra.mxu0 %v9005
        %9481 = vmatpush.bf16.msra.mxu0 %v9003
        %9482 = vmatpush.bf16.msra.mxu0 %v9001
        %9483 = vmatpush.bf16.msra.mxu0 %v8999
        %9484 = vmatmul.bf16.gmra.mxu0 %v7815
        %v9485 = vpop.f32.mrf.mxu0
        %v9486 = vadd.f32 %v9472, %v9485
        %v9487 = vpop.f32.mrf.mxu0
        %v9488 = vadd.f32 %v9474, %v9487
        %9489 = vdwg.mxu0
        %9490 = vmatpush.bf16.msra.mxu0 %v9029
        %9491 = vmatpush.bf16.msra.mxu0 %v9027
        %9492 = vmatpush.bf16.msra.mxu0 %v9025
        %9493 = vmatpush.bf16.msra.mxu0 %v9023
        %9494 = vmatpush.bf16.msra.mxu0 %v9021
        %9495 = vmatpush.bf16.msra.mxu0 %v9019
        %9496 = vmatpush.bf16.msra.mxu0 %v9017
        %9497 = vmatpush.bf16.msra.mxu0 %v9015
        %9498 = vmatmul.bf16.gmra.mxu0 %v7816
        %v9499 = vpop.f32.mrf.mxu0
        %v9500 = vadd.f32 %v9486, %v9499
        %v9501 = vpop.f32.mrf.mxu0
        %v9502 = vadd.f32 %v9488, %v9501
        %9503 = vdwg.mxu0
        %9504 = vmatpush.bf16.msra.mxu0 %v9045
        %9505 = vmatpush.bf16.msra.mxu0 %v9043
        %9506 = vmatpush.bf16.msra.mxu0 %v9041
        %9507 = vmatpush.bf16.msra.mxu0 %v9039
        %9508 = vmatpush.bf16.msra.mxu0 %v9037
        %9509 = vmatpush.bf16.msra.mxu0 %v9035
        %9510 = vmatpush.bf16.msra.mxu0 %v9033
        %9511 = vmatpush.bf16.msra.mxu0 %v9031
        %9512 = vmatmul.bf16.gmra.mxu0 %v7817
        %v9513 = vpop.f32.mrf.mxu0
        %v9514 = vadd.f32 %v9500, %v9513
        %v9515 = vpop.f32.mrf.mxu0
        %v9516 = vadd.f32 %v9502, %v9515
        %9517 = vdwg.mxu0
        %9518 = vmatpush.bf16.msra.mxu0 %v9061
        %9519 = vmatpush.bf16.msra.mxu0 %v9059
        %9520 = vmatpush.bf16.msra.mxu0 %v9057
        %9521 = vmatpush.bf16.msra.mxu0 %v9055
        %9522 = vmatpush.bf16.msra.mxu0 %v9053
        %9523 = vmatpush.bf16.msra.mxu0 %v9051
        %9524 = vmatpush.bf16.msra.mxu0 %v9049
        %9525 = vmatpush.bf16.msra.mxu0 %v9047
        %9526 = vmatmul.bf16.gmra.mxu0 %v7818
        %v9527 = vpop.f32.mrf.mxu0
        %v9528 = vadd.f32 %v9514, %v9527
        %v9529 = vpop.f32.mrf.mxu0
        %v9530 = vadd.f32 %v9516, %v9529
        %9531 = vdwg.mxu0
        %9532 = vmatpush.bf16.msra.mxu0 %v9077
        %9533 = vmatpush.bf16.msra.mxu0 %v9075
        %9534 = vmatpush.bf16.msra.mxu0 %v9073
        %9535 = vmatpush.bf16.msra.mxu0 %v9071
        %9536 = vmatpush.bf16.msra.mxu0 %v9069
        %9537 = vmatpush.bf16.msra.mxu0 %v9067
        %9538 = vmatpush.bf16.msra.mxu0 %v9065
        %9539 = vmatpush.bf16.msra.mxu0 %v9063
        %9540 = vmatmul.bf16.gmra.mxu0 %v7819
        %v9541 = vpop.f32.mrf.mxu0
        %v9542 = vadd.f32 %v9528, %v9541
        %v9543 = vpop.f32.mrf.mxu0
        %v9544 = vadd.f32 %v9530, %v9543
        %9545 = vdwg.mxu0
        %9546 = vmatpush.bf16.msra.mxu0 %v9093
        %9547 = vmatpush.bf16.msra.mxu0 %v9091
        %9548 = vmatpush.bf16.msra.mxu0 %v9089
        %9549 = vmatpush.bf16.msra.mxu0 %v9087
        %9550 = vmatpush.bf16.msra.mxu0 %v9085
        %9551 = vmatpush.bf16.msra.mxu0 %v9083
        %9552 = vmatpush.bf16.msra.mxu0 %v9081
        %9553 = vmatpush.bf16.msra.mxu0 %v9079
        %9554 = vmatmul.bf16.gmra.mxu0 %v7820
        %v9555 = vpop.f32.mrf.mxu0
        %v9556 = vadd.f32 %v9542, %v9555
        %v9557 = vpop.f32.mrf.mxu0
        %v9558 = vadd.f32 %v9544, %v9557
        %9559 = vdwg.mxu0
        %9560 = vmatpush.bf16.msra.mxu0 %v9109
        %9561 = vmatpush.bf16.msra.mxu0 %v9107
        %9562 = vmatpush.bf16.msra.mxu0 %v9105
        %9563 = vmatpush.bf16.msra.mxu0 %v9103
        %9564 = vmatpush.bf16.msra.mxu0 %v9101
        %9565 = vmatpush.bf16.msra.mxu0 %v9099
        %9566 = vmatpush.bf16.msra.mxu0 %v9097
        %9567 = vmatpush.bf16.msra.mxu0 %v9095
        %9568 = vmatmul.bf16.gmra.mxu0 %v7821
        %v9569 = vpop.f32.mrf.mxu0
        %v9570 = vadd.f32 %v9556, %v9569
        %v9571 = vpop.f32.mrf.mxu0
        %v9572 = vadd.f32 %v9558, %v9571
        %9573 = vdwg.mxu0
        %9574 = vmatpush.bf16.msra.mxu0 %v9125
        %9575 = vmatpush.bf16.msra.mxu0 %v9123
        %9576 = vmatpush.bf16.msra.mxu0 %v9121
        %9577 = vmatpush.bf16.msra.mxu0 %v9119
        %9578 = vmatpush.bf16.msra.mxu0 %v9117
        %9579 = vmatpush.bf16.msra.mxu0 %v9115
        %9580 = vmatpush.bf16.msra.mxu0 %v9113
        %9581 = vmatpush.bf16.msra.mxu0 %v9111
        %9582 = vmatmul.bf16.gmra.mxu0 %v7822
        %v9583 = vpop.f32.mrf.mxu0
        %v9584 = vadd.f32 %v9570, %v9583
        %v9585 = vpop.f32.mrf.mxu0
        %v9586 = vadd.f32 %v9572, %v9585
        %9587 = vdwg.mxu0
        %9588 = vmatpush.bf16.msra.mxu0 %v9141
        %9589 = vmatpush.bf16.msra.mxu0 %v9139
        %9590 = vmatpush.bf16.msra.mxu0 %v9137
        %9591 = vmatpush.bf16.msra.mxu0 %v9135
        %9592 = vmatpush.bf16.msra.mxu0 %v9133
        %9593 = vmatpush.bf16.msra.mxu0 %v9131
        %9594 = vmatpush.bf16.msra.mxu0 %v9129
        %9595 = vmatpush.bf16.msra.mxu0 %v9127
        %9596 = vmatmul.bf16.gmra.mxu0 %v7823
        %v9597 = vpop.f32.mrf.mxu0
        %v9598 = vadd.f32 %v9584, %v9597
        %v9599 = vpop.f32.mrf.mxu0
        %v9600 = vadd.f32 %v9586, %v9599
        %9601 = vdwg.mxu0
        %9602 = vmatpush.bf16.msra.mxu0 %v9157
        %9603 = vmatpush.bf16.msra.mxu0 %v9155
        %9604 = vmatpush.bf16.msra.mxu0 %v9153
        %9605 = vmatpush.bf16.msra.mxu0 %v9151
        %9606 = vmatpush.bf16.msra.mxu0 %v9149
        %9607 = vmatpush.bf16.msra.mxu0 %v9147
        %9608 = vmatpush.bf16.msra.mxu0 %v9145
        %9609 = vmatpush.bf16.msra.mxu0 %v9143
        %9610 = vmatmul.bf16.gmra.mxu0 %v7824
        %v9611 = vpop.f32.mrf.mxu0
        %v9612 = vadd.f32 %v9598, %v9611
        %v9613 = vpop.f32.mrf.mxu0
        %v9614 = vadd.f32 %v9600, %v9613
        %9615 = vdwg.mxu0
        %9616 = vmatpush.bf16.msra.mxu0 %v9173
        %9617 = vmatpush.bf16.msra.mxu0 %v9171
        %9618 = vmatpush.bf16.msra.mxu0 %v9169
        %9619 = vmatpush.bf16.msra.mxu0 %v9167
        %9620 = vmatpush.bf16.msra.mxu0 %v9165
        %9621 = vmatpush.bf16.msra.mxu0 %v9163
        %9622 = vmatpush.bf16.msra.mxu0 %v9161
        %9623 = vmatpush.bf16.msra.mxu0 %v9159
        %9624 = vmatmul.bf16.gmra.mxu0 %v7825
        %v9625 = vpop.f32.mrf.mxu0
        %v9626 = vadd.f32 %v9612, %v9625
        %v9627 = vpop.f32.mrf.mxu0
        %v9628 = vadd.f32 %v9614, %v9627
        %9629 = vdwg.mxu0
        %9630 = vmatpush.bf16.msra.mxu0 %v9189
        %9631 = vmatpush.bf16.msra.mxu0 %v9187
        %9632 = vmatpush.bf16.msra.mxu0 %v9185
        %9633 = vmatpush.bf16.msra.mxu0 %v9183
        %9634 = vmatpush.bf16.msra.mxu0 %v9181
        %9635 = vmatpush.bf16.msra.mxu0 %v9179
        %9636 = vmatpush.bf16.msra.mxu0 %v9177
        %9637 = vmatpush.bf16.msra.mxu0 %v9175
        %9638 = vmatmul.bf16.gmra.mxu0 %v7826
        %v9639 = vpop.f32.mrf.mxu0
        %v9640 = vadd.f32 %v9626, %v9639
        %v9641 = vpop.f32.mrf.mxu0
        %v9642 = vadd.f32 %v9628, %v9641
        %9643 = vdwg.mxu0
        %9644 = vmatpush.bf16.msra.mxu0 %v9205
        %9645 = vmatpush.bf16.msra.mxu0 %v9203
        %9646 = vmatpush.bf16.msra.mxu0 %v9201
        %9647 = vmatpush.bf16.msra.mxu0 %v9199
        %9648 = vmatpush.bf16.msra.mxu0 %v9197
        %9649 = vmatpush.bf16.msra.mxu0 %v9195
        %9650 = vmatpush.bf16.msra.mxu0 %v9193
        %9651 = vmatpush.bf16.msra.mxu0 %v9191
        %9652 = vmatmul.bf16.gmra.mxu0 %v7827
        %v9653 = vpop.f32.mrf.mxu0
        %v9654 = vadd.f32 %v9640, %v9653
        %v9655 = vpop.f32.mrf.mxu0
        %v9656 = vadd.f32 %v9642, %v9655
        %9657 = vdwg.mxu0
        %9658 = vmatpush.bf16.msra.mxu0 %v9221
        %9659 = vmatpush.bf16.msra.mxu0 %v9219
        %9660 = vmatpush.bf16.msra.mxu0 %v9217
        %9661 = vmatpush.bf16.msra.mxu0 %v9215
        %9662 = vmatpush.bf16.msra.mxu0 %v9213
        %9663 = vmatpush.bf16.msra.mxu0 %v9211
        %9664 = vmatpush.bf16.msra.mxu0 %v9209
        %9665 = vmatpush.bf16.msra.mxu0 %v9207
        %9666 = vmatmul.bf16.gmra.mxu0 %v7828
        %v9667 = vpop.f32.mrf.mxu0
        %v9668 = vadd.f32 %v9654, %v9667
        %v9669 = vpop.f32.mrf.mxu0
        %v9670 = vadd.f32 %v9656, %v9669
        %9671 = vdwg.mxu0
        %9672 = vmatpush.bf16.msra.mxu0 %v9237
        %9673 = vmatpush.bf16.msra.mxu0 %v9235
        %9674 = vmatpush.bf16.msra.mxu0 %v9233
        %9675 = vmatpush.bf16.msra.mxu0 %v9231
        %9676 = vmatpush.bf16.msra.mxu0 %v9229
        %9677 = vmatpush.bf16.msra.mxu0 %v9227
        %9678 = vmatpush.bf16.msra.mxu0 %v9225
        %9679 = vmatpush.bf16.msra.mxu0 %v9223
        %9680 = vmatmul.bf16.gmra.mxu0 %v7829
        %v9681 = vpop.f32.mrf.mxu0
        %v9682 = vadd.f32 %v9668, %v9681
        %v9683 = vpop.f32.mrf.mxu0
        %v9684 = vadd.f32 %v9670, %v9683
        %9685 = vdwg.mxu0
        %s9686 = scalar_lea.vmem %s617, 6
        %v9687 = vld [vmem:[%s9686] ss:$8 sm:$0x3]
        %v9689 = vperm.slane %v9687, 0
        %v9690 = vperm.slane %v9687, 1
        %v9693 = vmul.f32 %v9458, %v9689
        %v9694 = vmul.f32 %v9682, %v9690
        %v9695 = vmul.f32 %v9460, %v9689
        %v9696 = vmul.f32 %v9684, %v9690
        %v9697 = vadd.f32 %v5622, %v9693
        %v9698 = vadd.f32 %v5623, %v9694
        %v9699 = vadd.f32 %v5624, %v9695
        %v9700 = vadd.f32 %v5625, %v9696
        %s9701 = scalar_lea.vmem %s617, 5
        %v9702 = vld [vmem:[%s9701] ss:$8 sm:$0x3]
        %v9704 = vperm.slane %v9702, 0
        %v9705 = vperm.slane %v9702, 1
        %v9708 = vadd.f32 %v9697, %v9704
        %v9709 = vadd.f32 %v9698, %v9705
        %v9710 = vadd.f32 %v9699, %v9704
        %v9711 = vadd.f32 %v9700, %v9705
        %9712 = vst [vmem:[#allocation2] sm:$0xff] %v9708
        %9713 = vst.msk [vmem:[#allocation2 + $0x8] sm:$0xff] %vm1505, %v9709
        %9714 = vst [vmem:[#allocation2 + $0x10] sm:$0xff] %v9710
        %9715 = vst.msk [vmem:[#allocation2 + $0x18] sm:$0xff] %vm1505, %v9711
        %p9716 = scmp.eq.s32.totalorder %s30, 5
        // Predicated region
        $region89: #{tpu_custom_call.1} parent=75 // pred_check
          %p9717 = pneg %p9716
        $region90: #{tpu_custom_call.1} parent=75 // pred_check_branch
          %9719 = sbr.rel (%p9717) target = $region92
        $region91: #{tpu_custom_call.1} parent=75 // pred_region
          %v9720 = vld [vmem:[%s3] ss:$2 sm:$0x3]
          %s9721 = scalar_lea.vmem %s3, 1
          %v9722 = vld [vmem:[%s9721] ss:$2 sm:$0x3]
          %v9727 = vrot.slane %v9710, 7
          %vm9728 = vcmask 1041409
          %v9729 = vsel %vm9728, %v9727, %v9708
          %v9730 = vrot.slane %v9711, 7
          %v9731 = vsel %vm9728, %v9730, %v9709
          %vm9734 = vcmask 1041408
          %v9735 = vsel %vm9734, %v9729, 0.0
          %vm9736 = vcmask 779264
          %v9737 = vsel %vm9736, %v9731, 0.0
          %v9738 = vadd.f32 %v9735, %v9737
          %9739 = vadd.xlane.f32.xlu0 %v9738
          %v9740 = vpop.xlane.xlu0 %9739
          %v9741 = vmul.f32 %v9740, %v1520
          %v9743 = vrot.slane %v9741, 1
          %v9746 = vsub.f32 %v9708, %v9741
          %v9747 = vsub.f32 %v9709, %v9741
          %v9748 = vsub.f32 %v9710, %v9743
          %v9749 = vsub.f32 %v9711, %v9743
          %v9750 = vmul.f32 %v9746, %v9746
          %v9751 = vmul.f32 %v9747, %v9747
          %v9752 = vmul.f32 %v9748, %v9748
          %v9753 = vmul.f32 %v9749, %v9749
          %v9758 = vrot.slane %v9752, 7
          %v9759 = vsel %vm9728, %v9758, %v9750
          %v9760 = vrot.slane %v9753, 7
          %v9761 = vsel %vm9728, %v9760, %v9751
          %v9764 = vsel %vm9734, %v9759, 0.0
          %v9765 = vsel %vm9736, %v9761, 0.0
          %v9766 = vadd.f32 %v9764, %v9765
          %9767 = vadd.xlane.f32.xlu0 %v9766
          %v9768 = vpop.xlane.xlu0 %9767
          %v9769 = vmul.f32 %v9768, %v1520
          %v9770 = vadd.f32 %v9769, 1e-05
          %v9771 = vrsqrt.pop %v9770
          %v9772 = vmul.f32 %v9771, %v9770
          %v9773 = vmul.f32 %v9772, %v9771
          %v9774 = vmul.f32 0.5, %v9773
          %v9775 = vsub.f32 1.5, %v9774
          %v9776 = vmul.f32 %v9771, %v9775
          %vm9777 = vweird.f32 %v9770
          %vm9778 = vweird.f32 %v9771
          %vm9779 = vmor %vm9777, %vm9778
          %v9780 = vsel %vm9779, %v9771, %v9776
          %v9782 = vrot.slane %v9780, 1
          %v9785 = vmul.f32 %v9746, %v9780
          %v9786 = vmul.f32 %v9747, %v9780
          %v9787 = vmul.f32 %v9748, %v9782
          %v9788 = vmul.f32 %v9749, %v9782
          %v9790 = vperm.slane %v9720, 0
          %v9791 = vperm.slane %v9720, 1
          %v9794 = vmul.f32 %v9785, %v9790
          %v9795 = vmul.f32 %v9786, %v9791
          %v9796 = vmul.f32 %v9787, %v9790
          %v9797 = vmul.f32 %v9788, %v9791
          %v9799 = vperm.slane %v9722, 0
          %v9800 = vperm.slane %v9722, 1
          %v9803 = vadd.f32 %v9794, %v9799
          %v9804 = vadd.f32 %v9795, %v9800
          %v9805 = vadd.f32 %v9796, %v9799
          %v9806 = vadd.f32 %v9797, %v9800
          %v9807 = vld [vmem:[%s4] sm:$0xff]
          %v9808 = vld [vmem:[%s4 + $0x8] sm:$0xff]
          %v9809 = vld [vmem:[%s4 + $0x10] sm:$0xff]
          %v9810 = vld [vmem:[%s4 + $0x18] sm:$0xff]
          %v9811 = vld [vmem:[%s4 + $0x20] sm:$0xff]
          %v9812 = vld [vmem:[%s4 + $0x28] sm:$0xff]
          %v9813 = vld [vmem:[%s4 + $0x30] sm:$0xff]
          %v9814 = vld [vmem:[%s4 + $0x38] sm:$0xff]
          %v9815 = vld [vmem:[%s4 + $0x40] sm:$0xff]
          %v9816 = vld [vmem:[%s4 + $0x48] sm:$0xff]
          %v9817 = vld [vmem:[%s4 + $0x50] sm:$0xff]
          %v9818 = vld [vmem:[%s4 + $0x58] sm:$0xff]
          %v9819 = vld [vmem:[%s4 + $0x60] sm:$0xff]
          %v9820 = vld [vmem:[%s4 + $0x68] sm:$0xff]
          %v9821 = vld [vmem:[%s4 + $0x70] sm:$0xff]
          %v9822 = vld [vmem:[%s4 + $0x78] sm:$0xff]
          %v9823 = vld [vmem:[%s4 + $0x80] sm:$0xff]
          %v9824 = vld [vmem:[%s4 + $0x88] sm:$0xff]
          %v9825 = vld [vmem:[%s4 + $0x90] sm:$0xff]
          %v9826 = vld [vmem:[%s4 + $0x98] sm:$0xff]
          %v9827 = vld [vmem:[%s4 + $0xa0] sm:$0xff]
          %v9828 = vld [vmem:[%s4 + $0xa8] sm:$0xff]
          %v9829 = vld [vmem:[%s4 + $0xb0] sm:$0xff]
          %v9830 = vld [vmem:[%s4 + $0xb8] sm:$0xff]
          %v9831 = vld [vmem:[%s4 + $0xc0] sm:$0xff]
          %v9832 = vld [vmem:[%s4 + $0xc8] sm:$0xff]
          %v9833 = vld [vmem:[%s4 + $0xd0] sm:$0xff]
          %v9834 = vld [vmem:[%s4 + $0xd8] sm:$0xff]
          %v9835 = vld [vmem:[%s5] sm:$0x1]
          %v9837 = vperm.slane %v9835, 0
          %v9843 = vrot.slane %v9805, 7
          %v9844 = vsel %vm9728, %v9843, %v9803
          %v9845 = vrot.slane %v9806, 7
          %v9846 = vsel %vm9728, %v9845, %v9804
          %v9848 = vsel %vm1505, %v9846, 0
          %9850 = vmatpush.msra.mxu0 %v9822
          %9851 = vmatpush.msra.mxu0 %v9821
          %9852 = vmatpush.msra.mxu0 %v9820
          %9853 = vmatpush.msra.mxu0 %v9819
          %9854 = vmatpush.msra.mxu0 %v9818
          %9855 = vmatpush.msra.mxu0 %v9817
          %9856 = vmatpush.msra.mxu0 %v9816
          %9857 = vmatpush.msra.mxu0 %v9815
          %9858 = vmatpush.msra.mxu0 %v9814
          %9859 = vmatpush.msra.mxu0 %v9813
          %9860 = vmatpush.msra.mxu0 %v9812
          %9861 = vmatpush.msra.mxu0 %v9811
          %9862 = vmatpush.msra.mxu0 %v9810
          %9863 = vmatpush.msra.mxu0 %v9809
          %9864 = vmatpush.msra.mxu0 %v9808
          %9865 = vmatpush.msra.mxu0 %v9807
          %9866 = vmatmul.f32.gmra.mxu0 %v9844
          %v9867 = vpop.f32.mrf.mxu0
          %v9868 = vadd.f32 %v9837, %v9867
          %9869 = vdwg.mxu0
          %9870 = vmatpush.msra.mxu0 0.0
          %9871 = vmatpush.msra.mxu0 0.0
          %9872 = vmatpush.msra.mxu0 0.0
          %9873 = vmatpush.msra.mxu0 0.0
          %9874 = vmatpush.msra.mxu0 %v9834
          %9875 = vmatpush.msra.mxu0 %v9833
          %9876 = vmatpush.msra.mxu0 %v9832
          %9877 = vmatpush.msra.mxu0 %v9831
          %9878 = vmatpush.msra.mxu0 %v9830
          %9879 = vmatpush.msra.mxu0 %v9829
          %9880 = vmatpush.msra.mxu0 %v9828
          %9881 = vmatpush.msra.mxu0 %v9827
          %9882 = vmatpush.msra.mxu0 %v9826
          %9883 = vmatpush.msra.mxu0 %v9825
          %9884 = vmatpush.msra.mxu0 %v9824
          %9885 = vmatpush.msra.mxu0 %v9823
          %9886 = vmatmul.f32.gmra.mxu0 %v9848
          %v9887 = vpop.f32.mrf.mxu0
          %v9888 = vadd.f32 %v9868, %v9887
          %9889 = vdwg.mxu0
          %vm9890 = vcmask 336896
          %9891 = vst.msk [vmem:[#allocation8] sm:$0x3] %vm9890, %v9888
          %v9892 = vsel %vm9890, %v9888, -inf
          %9893 = vmax.xlane.f32.xlu0 %v9892
          %v9894 = vpop.xlane.xlu0 %9893
          %v9895 = vsub.f32 %v9888, %v9894
          %v9896 = vmul.f32 %v9895, 1.442695
          %v9897 = vpow.pop %v9896
          %v9898 = vsel %vm9890, %v9897, 0.0
          %9899 = vadd.xlane.f32.xlu0 %v9898
          %v9900 = vpop.xlane.xlu0 %9899
          %v9901 = vlog2.pop %v9900
          %v9902 = vmul.f32 %v9901, 0.6931472
          %v9903 = vadd.f32 %v9894, %v9902
          %vm9904 = vcmask 1024
          %9905 = vst.msk [vmem:[%s15] sm:$0x3] %vm9904, %v9903
        $region92: #{tpu_custom_call.1} parent=75 // pred_fallthru
          _
        // Predicated region
        $region93: #{tpu_custom_call.1} parent=75 // pred_check
          %p9906 = pneg %p377
        $region94: #{tpu_custom_call.1} parent=75 // pred_check_branch
          %9908 = sbr.rel (%p9906) target = $region96
        $region95: #{tpu_custom_call.1} parent=75 // pred_region
          %9910 = vsyncadd [#allocation5], 0
          %s9912 = sshll.u32 [#allocation8], 4
          %s9913 = int_to_ptr.vmem [resolvable:$true] %s9912
          %s9914 = sshll.u32 %s14, 4
          %s9915 = int_to_ptr.hbm [resolvable:$true] %s9914
          %9917 = dma.vmem_to_hbm [thread:$0]  %s9913, 32, %s9915, [#allocation5]
        $region96: #{tpu_custom_call.1} parent=75 // pred_fallthru
          _
        // Predicated region
        $region97: #{tpu_custom_call.1} parent=75 // pred_check
          %p9918 = pneg %p398
        $region98: #{tpu_custom_call.1} parent=75 // pred_check_branch
          %9920 = sbr.rel (%p9918) target = $region100
        $region99: #{tpu_custom_call.1} parent=75 // pred_region
          _
        $region100: #{tpu_custom_call.1} parent=75 // pred_fallthru
          _
        // Predicated region
        $region101: #{tpu_custom_call.1} parent=75 // pred_check
          %p9921 = pneg %p377
        $region102: #{tpu_custom_call.1} parent=75 // pred_check_branch
          %9923 = sbr.rel (%p9921) target = $region104
        $region103: #{tpu_custom_call.1} parent=75 // pred_region
          %9925 = dma.done [#allocation5], 32
        $region104: #{tpu_custom_call.1} parent=75 // pred_fallthru
          _
        // Predicated region
        $region105: #{tpu_custom_call.1} parent=75 // pred_check
          %p9926 = pneg %p398
        $region106: #{tpu_custom_call.1} parent=75 // pred_check_branch
          %9928 = sbr.rel (%p9926) target = $region108
        $region107: #{tpu_custom_call.1} parent=75 // pred_region
          _
        $region108: #{tpu_custom_call.1} parent=75 // pred_fallthru
          _
      $region76: #{tpu_custom_call.1} parent=5 // pred_fallthru
        _
      %p9929 = scmp.le.s32.totalorder 2, %s25
      // Predicated region
      $region109: #{tpu_custom_call.1} parent=5 // pred_check
        %p9930 = pneg %p9929
      $region110: #{tpu_custom_call.1} parent=5 // pred_check_branch
        %9932 = sbr.rel (%p9930) target = $region112
      $region111: #{tpu_custom_call.1} parent=5 // pred_region
        %s9933 = ssub.s32 %s25, 2
      $region112: #{tpu_custom_call.1} parent=5 // pred_fallthru
        _
    $region6: #{tpu_custom_call.1} parent=1 // loop_footer
      %s29 = sadd.s32 1, %s25
    $region7: #{tpu_custom_call.1} parent=1 // loop_footer_branch
      %24 = sbr.rel target = $region3
    $region8: #{tpu_custom_call.1} parent=1 // loop_exit
      _
    %9934 = vsyncpa [#allocation4], 1
    %s9935 = scalar_lea.sflag [#allocation4], 1
    %9936 = vsyncpa %s9935, 1
    %9937 = vsyncpa [#allocation7], 1
    %9938 = vsyncpa [#allocation5], 1
    %s9939 = scalar_lea.sflag [#allocation5], 1
    %9940 = vsyncpa %s9939, 1

</llo_original>
